<compile_context>
chip_gen: v5e
topology: v5e:2x2
jax: 0.10.0
libtpu: 0.0.40
codegen_flags: <defaults>
</compile_context>

<pallas_src>
import functools

import jax
import jax.numpy as jnp
from jax import lax
from jax.experimental import pallas as pl
from jax.experimental.pallas import tpu as pltpu


# ----------------------------------------------------------------------------
# Kernel 1: both detection heads + label alignment + ONNX_TRT scoring, fused.
# Grid: (batch,).  Channels/classes on sublanes, detections on lanes.
#   x (B, Cin, N); stacked / block-diagonal weights (constant index_map ->
#   VMEM resident); outputs boxes (B, 4, 2N) xyxy, best score (B, 1, 2N),
#   class id (B, 1, 2N).
# ----------------------------------------------------------------------------
def head_score_kernel(x_ref, w1_ref, b1_ref, w2_ref, b2_ref, scale_ref,
                      shift_ref, boxes_ref, score_ref, cls_ref, *,
                      d_pad, n_models):
    xT = x_ref[0].astype(jnp.bfloat16)                           # (Cin, N)
    # One stacked first-layer matmul for both models: (2*hid, Cin) @ (Cin, N)
    hT = jnp.dot(w1_ref[...], xT,
                 preferred_element_type=jnp.float32) + b1_ref[...]
    hT = jnp.maximum(hT, 0.0).astype(jnp.bfloat16)               # (2*hid, N)
    # One block-diagonal second-layer matmul: (2*d_pad, 2*hid) @ (2*hid, N)
    yT = jnp.dot(w2_ref[...], hT,
                 preferred_element_type=jnp.float32) + b2_ref[...]
    yT = jax.nn.sigmoid(yT)                                      # EUP path
    # scale == 0 on the other model's class rows / pad rows reproduces the
    # torch.zeros / torch.cat label-space alignment exactly.
    yT = yT * scale_ref[...] + shift_ref[...]                    # (2*d_pad, N)

    boxes_parts, score_parts, cls_parts = [], [], []
    for m in range(n_models):
        y = yT[m * d_pad:(m + 1) * d_pad, :]                     # aligned slice
        xy = y[0:2, :]
        wh = y[2:4, :]
        conf = y[4:5, :]
        # Single concatenated (4, N) box tile -> one store per model block.
        boxes_parts.append(
            jnp.concatenate([xy - 0.5 * wh, xy + 0.5 * wh], axis=0))
        # Class rows start at sublane-tile boundary 8; pad rows are exact 0
        # (scale == 0) so they never win the max (real scores are > 0).
        cls_scores = y[8:d_pad, :] * conf                        # (d_pad-8, N)
        best = jnp.max(cls_scores, axis=0, keepdims=True)        # (1, N)
        sub = lax.broadcasted_iota(jnp.int32, cls_scores.shape, 0)
        best_idx = jnp.min(
            jnp.where(cls_scores == best, sub, cls_scores.shape[0]),
            axis=0, keepdims=True)                               # (1, N) int32
        score_parts.append(best)
        cls_parts.append(best_idx)

    # Lane-dense full-block stores (models concatenated along lanes).
    boxes_ref[0] = jnp.concatenate(boxes_parts, axis=1)          # (4, 2N)
    score_ref[0] = jnp.concatenate(score_parts, axis=1)          # (1, 2N)
    cls_ref[0] = jnp.concatenate(cls_parts, axis=1)              # (1, 2N)


def fused_heads(xr, w1s, b1s, w2bd, b2s, scale, shift, *, d_pad, n_models):
    b, cin, n = xr.shape
    hid2 = w1s.shape[0]
    d2 = w2bd.shape[0]
    ntot = n_models * n
    kern = functools.partial(head_score_kernel, d_pad=d_pad, n_models=n_models)
    return pl.pallas_call(
        kern,
        out_shape=(jax.ShapeDtypeStruct((b, 4, ntot), jnp.float32),
                   jax.ShapeDtypeStruct((b, 1, ntot), jnp.float32),
                   jax.ShapeDtypeStruct((b, 1, ntot), jnp.int32)),
        grid_spec=pltpu.PrefetchScalarGridSpec(
            num_scalar_prefetch=0,
            grid=(b,),
            in_specs=[
                pl.BlockSpec((1, cin, n), lambda bb: (bb, 0, 0)),
                # Weights: constant index_map -> fetched once, VMEM resident.
                pl.BlockSpec((hid2, cin), lambda bb: (0, 0)),
                pl.BlockSpec((hid2, 1), lambda bb: (0, 0)),
                pl.BlockSpec((d2, hid2), lambda bb: (0, 0)),
                pl.BlockSpec((d2, 1), lambda bb: (0, 0)),
                pl.BlockSpec((d2, 1), lambda bb: (0, 0)),
                pl.BlockSpec((d2, 1), lambda bb: (0, 0)),
            ],
            out_specs=(pl.BlockSpec((1, 4, ntot), lambda bb: (bb, 0, 0)),
                       pl.BlockSpec((1, 1, ntot), lambda bb: (bb, 0, 0)),
                       pl.BlockSpec((1, 1, ntot), lambda bb: (bb, 0, 0))),
        ),
        compiler_params=pltpu.CompilerParams(
            dimension_semantics=("parallel",)),
    )(xr, w1s, b1s, w2bd, b2s, scale, shift)


# ----------------------------------------------------------------------------
# Kernel 2: greedy NMS keep-mask on score-sorted boxes.
#   * Strict-upper-triangular, divide-free suppression mask built in row
#     blocks into a VMEM scratch (never touches HBM).
#   * Blocked greedy scan: one dynamic (8, K) sublane load per outer step,
#     8 unrolled inner steps with static slices (exact greedy semantics).
# Output: keep mask (B, 1, K) in {0., 1.}.
# ----------------------------------------------------------------------------
def nms_keep_kernel(bkx4_ref, b4xk_ref, score_ref, keep_ref, sup_ref, *,
                    iou_thres, score_thres, row_block):
    bi = bkx4_ref[0]                                             # (K, 4)
    bj = b4xk_ref[0]                                             # (4, K)
    k = bi.shape[0]

    bjx1 = bj[0:1, :]; bjy1 = bj[1:2, :]
    bjx2 = bj[2:3, :]; bjy2 = bj[3:4, :]
    area_j = (bjx2 - bjx1) * (bjy2 - bjy1)                       # (1, K)

    # Row-blocked mask build: bounded temporaries (row_block x K), strict
    # upper-triangle folded in at build time (no per-scan-iteration compare).
    for rb in range(0, k, row_block):
        bi_blk = bi[rb:rb + row_block, :]                        # (R, 4)
        bix1 = bi_blk[:, 0:1]; biy1 = bi_blk[:, 1:2]
        bix2 = bi_blk[:, 2:3]; biy2 = bi_blk[:, 3:4]
        ix1 = jnp.maximum(bix1, bjx1); iy1 = jnp.maximum(biy1, bjy1)
        ix2 = jnp.minimum(bix2, bjx2); iy2 = jnp.minimum(biy2, bjy2)
        inter = jnp.maximum(ix2 - ix1, 0.0) * jnp.maximum(iy2 - iy1, 0.0)
        area_i = (bix2 - bix1) * (biy2 - biy1)                   # (R, 1)
        union = area_i + area_j - inter
        row = rb + lax.broadcasted_iota(jnp.int32, (row_block, k), 0)
        col = lax.broadcasted_iota(jnp.int32, (row_block, k), 1)
        # iou > thres  <=>  inter > thres * union  (no divide).
        sup_ref[rb:rb + row_block, :] = jnp.where(
            (inter > iou_thres * union) & (col > row), 1.0, 0.0)

    idx = lax.broadcasted_iota(jnp.int32, (1, k), 1)
    keep0 = (score_ref[0] > score_thres).astype(jnp.float32)     # (1, K)

    def body(blk, keep):
        base = pl.multiple_of(blk * 8, 8)
        rows = sup_ref[pl.ds(base, 8), :]                        # (8, K)
        for r in range(8):                                       # unrolled
            i = blk * 8 + r
            sup_i = rows[r:r + 1, :]                             # static slice
            keep_i = jnp.max(jnp.where(idx == i, keep, 0.0),
                             axis=1, keepdims=True)              # (1, 1)
            keep = jnp.where((sup_i > 0.5) & (keep_i > 0.5), 0.0, keep)
        return keep

    keep_ref[0] = lax.fori_loop(0, k // 8, body, keep0)


def nms_keep(boxes_kx4, boxes_4xk, scores_sorted, *, iou_thres, score_thres):
    b, k, _ = boxes_kx4.shape
    assert k % 8 == 0
    row_block = 128 if k % 128 == 0 else 8
    kern = functools.partial(nms_keep_kernel, iou_thres=iou_thres,
                             score_thres=score_thres, row_block=row_block)
    return pl.pallas_call(
        kern,
        out_shape=jax.ShapeDtypeStruct((b, 1, k), jnp.float32),
        grid_spec=pltpu.PrefetchScalarGridSpec(
            num_scalar_prefetch=0,
            grid=(b,),
            in_specs=[pl.BlockSpec((1, k, 4), lambda bb: (bb, 0, 0)),
                      pl.BlockSpec((1, 4, k), lambda bb: (bb, 0, 0)),
                      pl.BlockSpec((1, 1, k), lambda bb: (bb, 0, 0))],
            out_specs=pl.BlockSpec((1, 1, k), lambda bb: (bb, 0, 0)),
            scratch_shapes=[pltpu.VMEM((k, k), jnp.float32)],
        ),
        compiler_params=pltpu.CompilerParams(
            dimension_semantics=("parallel",)),
    )(boxes_kx4, boxes_4xk, scores_sorted)


# ----------------------------------------------------------------------------
# Parameter setup (deterministic, synthetic stand-ins for model1 / model2).
# TODO(synk): the real YOLO backbones are stood in by 2-layer heads.
# ----------------------------------------------------------------------------
def make_params(key, cin, hidden, nc):
    k1, k2, k3, k4 = jax.random.split(key, 4)
    dout = 5 + nc
    w1 = jax.random.normal(k1, (cin, hidden), jnp.float32) * 0.5
    b1 = jax.random.normal(k2, (1, hidden), jnp.float32) * 0.1
    w2 = jax.random.normal(k3, (hidden, dout), jnp.float32) * 0.5
    b2 = jax.random.normal(k4, (1, dout), jnp.float32) * 0.1
    return w1, b1, w2, b2


def _pack_one(params, nc_self, cls_offset, d_pad, img_size):
    """Transpose + zero-pad one detector into the sublane-aligned layout:
    rows 0-3 box, row 4 conf, rows 5-7 pad, rows 8.. aligned class space."""
    w1, b1, w2, b2 = params
    hid = w1.shape[1]
    lo, hi = 8 + cls_offset, 8 + cls_offset + nc_self
    w2p = jnp.zeros((hid, d_pad), jnp.float32)
    w2p = w2p.at[:, 0:5].set(w2[:, 0:5]).at[:, lo:hi].set(w2[:, 5:])
    b2p = jnp.zeros((1, d_pad), jnp.float32)
    b2p = b2p.at[:, 0:5].set(b2[:, 0:5]).at[:, lo:hi].set(b2[:, 5:])
    # Box affine; scale == 0 on the other model's class rows / pad -> zeros.
    scale = jnp.zeros((d_pad,), jnp.float32)
    scale = scale.at[0:4].set(jnp.array(
        [img_size, img_size, 0.5 * img_size, 0.5 * img_size], jnp.float32))
    scale = scale.at[4].set(1.0).at[lo:hi].set(1.0)
    shift = jnp.zeros((d_pad,), jnp.float32).at[2:4].set(2.0)
    return w1.T, b1.T, w2p.T, b2p.T, scale[:, None], shift[:, None]


def pack_two_detectors(params1, params2, nc1, nc2, img_size):
    """Fuse both detectors: stacked layer-1, block-diagonal layer-2 (bf16)."""
    nc_tot = nc1 + nc2
    d_pad = -(-(8 + nc_tot) // 8) * 8
    w1t1, b1t1, w2t1, b2t1, sc1, sh1 = _pack_one(params1, nc1, 0, d_pad, img_size)
    w1t2, b1t2, w2t2, b2t2, sc2, sh2 = _pack_one(params2, nc2, nc1, d_pad, img_size)
    hid = w1t1.shape[0]
    w1s = jnp.concatenate([w1t1, w1t2], axis=0).astype(jnp.bfloat16)  # (2h, Cin)
    b1s = jnp.concatenate([b1t1, b1t2], axis=0)                       # (2h, 1)
    w2bd = jnp.zeros((2 * d_pad, 2 * hid), jnp.float32)
    w2bd = w2bd.at[0:d_pad, 0:hid].set(w2t1).at[d_pad:, hid:].set(w2t2)
    w2bd = w2bd.astype(jnp.bfloat16)                                  # (2d, 2h)
    b2s = jnp.concatenate([b2t1, b2t2], axis=0)
    scale = jnp.concatenate([sc1, sc2], axis=0)
    shift = jnp.concatenate([sh1, sh2], axis=0)
    return w1s, b1s, w2bd, b2s, scale, shift, d_pad


# ----------------------------------------------------------------------------
# Full End2EndRVTwoModels.forward equivalent.
# ----------------------------------------------------------------------------
def end2end_rv_two_models(x_nchw, params1, params2, *, nc1, nc2, max_obj=100,
                          iou_thres=0.45, score_thres=0.25):
    b, cin, h, w = x_nchw.shape
    n = h * w
    img_size = float(max(h, w))

    # NCHW -> (B, Cin, H*W): detections land on the lane axis, no transpose.
    xr = x_nchw.reshape(b, cin, n)

    w1s, b1s, w2bd, b2s, scale, shift, d_pad = pack_two_detectors(
        params1, params2, nc1, nc2, img_size)

    # x1 = model1(x), x2 = model2(x), label alignment, scores*=conf,
    # best class, xywh->xyxy -- one fused Pallas call, one step per batch.
    boxes, score3, cls3 = fused_heads(xr, w1s, b1s, w2bd, b2s, scale, shift,
                                      d_pad=d_pad, n_models=2)
    scores = score3[:, 0, :]                              # (B, Ntot)
    classes = cls3[:, 0, :]                               # (B, Ntot)
    ntot = scores.shape[1]

    # Sort / top-k prefilter BEFORE the suppression stage (XLA glue).
    # TODO(synk): the sorted-index gather / transpose could be moved in-kernel
    # via scalar prefetch; kept in XLA here for lowering robustness.
    k = min(ntot, max(128, -(-4 * max_obj // 128) * 128))
    srt_scores, srt_idx = lax.top_k(scores, k)            # (B, K) descending
    boxes_4xk = jnp.take_along_axis(
        boxes, jnp.broadcast_to(srt_idx[:, None, :], (b, 4, k)), axis=2)
    boxes_kx4 = jnp.transpose(boxes_4xk, (0, 2, 1))
    srt_classes = jnp.take_along_axis(classes, srt_idx, axis=1)

    # Greedy NMS keep mask (suppression mask + scan stay on-chip).
    # TODO(synk): exact TRT EfficientNMS_TRT plugin is per-class; this does
    # best-class, class-agnostic greedy NMS with the same thresholds/outputs.
    keep = nms_keep(boxes_kx4, boxes_4xk, srt_scores[:, None, :],
                    iou_thres=iou_thres, score_thres=score_thres)[:, 0, :]

    kept_scores = jnp.where(keep > 0.5, srt_scores, -1.0)
    top_scores, pos = lax.top_k(kept_scores, max_obj)
    valid = top_scores > 0.0
    det_boxes = jnp.take_along_axis(
        boxes_kx4, jnp.broadcast_to(pos[:, :, None], (b, max_obj, 4)), axis=1)
    det_boxes = jnp.where(valid[:, :, None], det_boxes, 0.0)
    det_scores = jnp.where(valid, top_scores, 0.0)
    det_classes = jnp.where(
        valid, jnp.take_along_axis(srt_classes, pos, axis=1), 0).astype(jnp.int32)
    num_det = jnp.sum(valid, axis=1).astype(jnp.int32)[:, None]
    return num_det, det_boxes, det_scores, det_classes


if __name__ == "__main__":
    key = jax.random.PRNGKey(0)
    kx, k1, k2 = jax.random.split(key, 3)
    B, Cin, H, W = 2, 4, 16, 16          # input x: (2, 4, 16, 16) NCHW
    nc1, nc2 = 3, 4                      # len(model1.names), len(model2.names)
    hidden = 32

    x = jax.random.normal(kx, (B, Cin, H, W), jnp.float32)
    params1 = make_params(k1, Cin, hidden, nc1)
    params2 = make_params(k2, Cin, hidden, nc2)

    fwd = jax.jit(functools.partial(end2end_rv_two_models, nc1=nc1, nc2=nc2,
                                    max_obj=100, iou_thres=0.45,
                                    score_thres=0.25))
    out = fwd(x, params1, params2)
    jax.block_until_ready(out)
    num_det, det_boxes, det_scores, det_classes = out
    assert num_det.shape == (B, 1)
    assert det_boxes.shape == (B, 100, 4)
    assert det_scores.shape == (B, 100)
    assert det_classes.shape == (B, 100)
    print("KERNEL_OK")
</pallas_src>

<mosaic_0001>
module attributes {stable_mosaic.version = 11 : i64} {
  func.func @head_score_kernel(%arg0: i32, %arg1: memref<1x4x256xf32, #tpu.memory_space<vmem>>, %arg2: memref<64x4xbf16, #tpu.memory_space<vmem>>, %arg3: memref<64x1xf32, #tpu.memory_space<vmem>>, %arg4: memref<32x64xbf16, #tpu.memory_space<vmem>>, %arg5: memref<32x1xf32, #tpu.memory_space<vmem>>, %arg6: memref<32x1xf32, #tpu.memory_space<vmem>>, %arg7: memref<32x1xf32, #tpu.memory_space<vmem>>, %arg8: memref<1x4x512xf32, #tpu.memory_space<vmem>>, %arg9: memref<1x1x512xf32, #tpu.memory_space<vmem>>, %arg10: memref<1x1x512xi32, #tpu.memory_space<vmem>>) attributes {dimension_semantics = [#tpu.dimension_semantics<parallel>], iteration_bounds = array<i64: 2>, scalar_prefetch = 0 : i64, scratch_operands = 0 : i64, tpu.core_type = #tpu.core_type<tc>, window_params = [{transform_indices = @transform_0, window_bounds = array<i64: 1, 4, 256>}, {pipeline_mode = #tpu.pipeline_mode<synchronous>, transform_indices = @transform_1, window_bounds = array<i64: 64, 4>}, {pipeline_mode = #tpu.pipeline_mode<synchronous>, transform_indices = @transform_2, window_bounds = array<i64: 64, 1>}, {pipeline_mode = #tpu.pipeline_mode<synchronous>, transform_indices = @transform_3, window_bounds = array<i64: 32, 64>}, {pipeline_mode = #tpu.pipeline_mode<synchronous>, transform_indices = @transform_4, window_bounds = array<i64: 32, 1>}, {pipeline_mode = #tpu.pipeline_mode<synchronous>, transform_indices = @transform_5, window_bounds = array<i64: 32, 1>}, {pipeline_mode = #tpu.pipeline_mode<synchronous>, transform_indices = @transform_6, window_bounds = array<i64: 32, 1>}, {transform_indices = @transform_7, window_bounds = array<i64: 1, 4, 512>}, {transform_indices = @transform_8, window_bounds = array<i64: 1, 1, 512>}, {transform_indices = @transform_9, window_bounds = array<i64: 1, 1, 512>}]} {
    %c0 = arith.constant 0 : index
    %c0_0 = arith.constant 0 : index
    %c0_1 = arith.constant 0 : index
    %0 = vector.load %arg1[%c0, %c0_0, %c0_1] : memref<1x4x256xf32, #tpu.memory_space<vmem>>, vector<1x4x256xf32>
    %1 = vector.shape_cast %0 : vector<1x4x256xf32> to vector<4x256xf32>
    %2 = arith.truncf %1 : vector<4x256xf32> to vector<4x256xbf16>
    %c0_2 = arith.constant 0 : index
    %c0_3 = arith.constant 0 : index
    %3 = vector.load %arg2[%c0_2, %c0_3] : memref<64x4xbf16, #tpu.memory_space<vmem>>, vector<64x4xbf16>
    %cst = arith.constant dense<0.000000e+00> : vector<64x256xf32>
    %4 = tpu.matmul %3, %2, %cst {dimension_numbers = #tpu.dot_dimension_numbers<[1], [0], [0], [1], [0, 0, 1, 1], [], []>} : vector<64x4xbf16>, vector<4x256xbf16>, vector<64x256xf32> -> vector<64x256xf32>
    %c0_4 = arith.constant 0 : index
    %c0_5 = arith.constant 0 : index
    %5 = vector.load %arg3[%c0_4, %c0_5] : memref<64x1xf32, #tpu.memory_space<vmem>>, vector<64x1xf32>
    %6 = vector.broadcast %5 : vector<64x1xf32> to vector<64x256xf32>
    %7 = arith.addf %4, %6 : vector<64x256xf32>
    %cst_6 = arith.constant 0.000000e+00 : f32
    %8 = vector.broadcast %cst_6 : f32 to vector<64x256xf32>
    %9 = arith.maximumf %7, %8 : vector<64x256xf32>
    %10 = arith.truncf %9 : vector<64x256xf32> to vector<64x256xbf16>
    %c0_7 = arith.constant 0 : index
    %c0_8 = arith.constant 0 : index
    %11 = vector.load %arg4[%c0_7, %c0_8] : memref<32x64xbf16, #tpu.memory_space<vmem>>, vector<32x64xbf16>
    %cst_9 = arith.constant dense<0.000000e+00> : vector<32x256xf32>
    %12 = tpu.matmul %11, %10, %cst_9 {dimension_numbers = #tpu.dot_dimension_numbers<[1], [0], [0], [1], [0, 0, 1, 1], [], []>} : vector<32x64xbf16>, vector<64x256xbf16>, vector<32x256xf32> -> vector<32x256xf32>
    %c0_10 = arith.constant 0 : index
    %c0_11 = arith.constant 0 : index
    %13 = vector.load %arg5[%c0_10, %c0_11] : memref<32x1xf32, #tpu.memory_space<vmem>>, vector<32x1xf32>
    %14 = vector.broadcast %13 : vector<32x1xf32> to vector<32x256xf32>
    %15 = arith.addf %12, %14 : vector<32x256xf32>
    %16 = arith.negf %15 : vector<32x256xf32>
    %17 = math.exp %16 : vector<32x256xf32>
    %cst_12 = arith.constant 1.000000e+00 : f32
    %18 = vector.broadcast %cst_12 : f32 to vector<32x256xf32>
    %19 = arith.addf %18, %17 : vector<32x256xf32>
    %20 = arith.divf %18, %19 : vector<32x256xf32>
    %c0_13 = arith.constant 0 : index
    %c0_14 = arith.constant 0 : index
    %21 = vector.load %arg6[%c0_13, %c0_14] : memref<32x1xf32, #tpu.memory_space<vmem>>, vector<32x1xf32>
    %22 = vector.broadcast %21 : vector<32x1xf32> to vector<32x256xf32>
    %23 = arith.mulf %20, %22 : vector<32x256xf32>
    %c0_15 = arith.constant 0 : index
    %c0_16 = arith.constant 0 : index
    %24 = vector.load %arg7[%c0_15, %c0_16] : memref<32x1xf32, #tpu.memory_space<vmem>>, vector<32x1xf32>
    %25 = vector.broadcast %24 : vector<32x1xf32> to vector<32x256xf32>
    %26 = arith.addf %23, %25 : vector<32x256xf32>
    %27 = vector.extract_strided_slice %26 {offsets = [0, 0], sizes = [16, 256], strides = [1, 1]} : vector<32x256xf32> to vector<16x256xf32>
    %28 = vector.extract_strided_slice %27 {offsets = [0, 0], sizes = [2, 256], strides = [1, 1]} : vector<16x256xf32> to vector<2x256xf32>
    %29 = vector.extract_strided_slice %27 {offsets = [2, 0], sizes = [2, 256], strides = [1, 1]} : vector<16x256xf32> to vector<2x256xf32>
    %30 = vector.extract_strided_slice %27 {offsets = [4, 0], sizes = [1, 256], strides = [1, 1]} : vector<16x256xf32> to vector<1x256xf32>
    %cst_17 = arith.constant 5.000000e-01 : f32
    %31 = vector.broadcast %cst_17 : f32 to vector<2x256xf32>
    %32 = arith.mulf %31, %29 : vector<2x256xf32>
    %33 = arith.subf %28, %32 : vector<2x256xf32>
    %cst_18 = arith.constant 5.000000e-01 : f32
    %34 = vector.broadcast %cst_18 : f32 to vector<2x256xf32>
    %35 = arith.mulf %34, %29 : vector<2x256xf32>
    %36 = arith.addf %28, %35 : vector<2x256xf32>
    %37 = tpu.concatenate %33, %36 in 0 : vector<2x256xf32>, vector<2x256xf32> -> vector<4x256xf32>
    %38 = vector.extract_strided_slice %27 {offsets = [8, 0], sizes = [8, 256], strides = [1, 1]} : vector<16x256xf32> to vector<8x256xf32>
    %39 = vector.broadcast %30 : vector<1x256xf32> to vector<8x256xf32>
    %40 = arith.mulf %38, %39 : vector<8x256xf32>
    %cst_19 = arith.constant dense<0xFF800000> : vector<256xf32>
    %41 = vector.multi_reduction <maximumf>, %40, %cst_19 [0] : vector<8x256xf32> to vector<256xf32>
    %42 = vector.shape_cast %41 : vector<256xf32> to vector<1x256xf32>
    %43 = tpu.iota {dimensions = array<i32: 0>} : vector<8x256xi32>
    %44 = vector.broadcast %42 : vector<1x256xf32> to vector<8x256xf32>
    %45 = arith.cmpf oeq, %40, %44 : vector<8x256xf32>
    %c8_i32 = arith.constant 8 : i32
    %46 = vector.broadcast %c8_i32 : i32 to vector<8x256xi32>
    %47 = arith.select %45, %43, %46 : vector<8x256xi1>, vector<8x256xi32>
    %cst_20 = arith.constant dense<2147483647> : vector<256xi32>
    %48 = vector.multi_reduction <minsi>, %47, %cst_20 [0] : vector<8x256xi32> to vector<256xi32>
    %49 = vector.shape_cast %48 : vector<256xi32> to vector<1x256xi32>
    %50 = vector.extract_strided_slice %26 {offsets = [16, 0], sizes = [16, 256], strides = [1, 1]} : vector<32x256xf32> to vector<16x256xf32>
    %51 = vector.extract_strided_slice %50 {offsets = [0, 0], sizes = [2, 256], strides = [1, 1]} : vector<16x256xf32> to vector<2x256xf32>
    %52 = vector.extract_strided_slice %50 {offsets = [2, 0], sizes = [2, 256], strides = [1, 1]} : vector<16x256xf32> to vector<2x256xf32>
    %53 = vector.extract_strided_slice %50 {offsets = [4, 0], sizes = [1, 256], strides = [1, 1]} : vector<16x256xf32> to vector<1x256xf32>
    %cst_21 = arith.constant 5.000000e-01 : f32
    %54 = vector.broadcast %cst_21 : f32 to vector<2x256xf32>
    %55 = arith.mulf %54, %52 : vector<2x256xf32>
    %56 = arith.subf %51, %55 : vector<2x256xf32>
    %cst_22 = arith.constant 5.000000e-01 : f32
    %57 = vector.broadcast %cst_22 : f32 to vector<2x256xf32>
    %58 = arith.mulf %57, %52 : vector<2x256xf32>
    %59 = arith.addf %51, %58 : vector<2x256xf32>
    %60 = tpu.concatenate %56, %59 in 0 : vector<2x256xf32>, vector<2x256xf32> -> vector<4x256xf32>
    %61 = vector.extract_strided_slice %50 {offsets = [8, 0], sizes = [8, 256], strides = [1, 1]} : vector<16x256xf32> to vector<8x256xf32>
    %62 = vector.broadcast %53 : vector<1x256xf32> to vector<8x256xf32>
    %63 = arith.mulf %61, %62 : vector<8x256xf32>
    %cst_23 = arith.constant dense<0xFF800000> : vector<256xf32>
    %64 = vector.multi_reduction <maximumf>, %63, %cst_23 [0] : vector<8x256xf32> to vector<256xf32>
    %65 = vector.shape_cast %64 : vector<256xf32> to vector<1x256xf32>
    %66 = tpu.iota {dimensions = array<i32: 0>} : vector<8x256xi32>
    %67 = vector.broadcast %65 : vector<1x256xf32> to vector<8x256xf32>
    %68 = arith.cmpf oeq, %63, %67 : vector<8x256xf32>
    %c8_i32_24 = arith.constant 8 : i32
    %69 = vector.broadcast %c8_i32_24 : i32 to vector<8x256xi32>
    %70 = arith.select %68, %66, %69 : vector<8x256xi1>, vector<8x256xi32>
    %cst_25 = arith.constant dense<2147483647> : vector<256xi32>
    %71 = vector.multi_reduction <minsi>, %70, %cst_25 [0] : vector<8x256xi32> to vector<256xi32>
    %72 = vector.shape_cast %71 : vector<256xi32> to vector<1x256xi32>
    %73 = tpu.concatenate %37, %60 in 1 : vector<4x256xf32>, vector<4x256xf32> -> vector<4x512xf32>
    %c0_26 = arith.constant 0 : index
    %c0_27 = arith.constant 0 : index
    %c0_28 = arith.constant 0 : index
    %74 = vector.load %arg8[%c0_26, %c0_27, %c0_28] : memref<1x4x512xf32, #tpu.memory_space<vmem>>, vector<1x4x512xf32>
    %75 = vector.shape_cast %74 : vector<1x4x512xf32> to vector<4x512xf32>
    %76 = vector.shape_cast %73 : vector<4x512xf32> to vector<1x4x512xf32>
    tpu.vector_store %arg8[%c0_26, %c0_27, %c0_28], %76 {strides = array<i32>} : memref<1x4x512xf32, #tpu.memory_space<vmem>>, vector<1x4x512xf32>,
    %77 = tpu.concatenate %42, %65 in 1 : vector<1x256xf32>, vector<1x256xf32> -> vector<1x512xf32>
    %c0_29 = arith.constant 0 : index
    %c0_30 = arith.constant 0 : index
    %c0_31 = arith.constant 0 : index
    %78 = vector.load %arg9[%c0_29, %c0_30, %c0_31] : memref<1x1x512xf32, #tpu.memory_space<vmem>>, vector<1x1x512xf32>
    %79 = vector.shape_cast %78 : vector<1x1x512xf32> to vector<1x512xf32>
    %80 = vector.shape_cast %77 : vector<1x512xf32> to vector<1x1x512xf32>
    tpu.vector_store %arg9[%c0_29, %c0_30, %c0_31], %80 {strides = array<i32>} : memref<1x1x512xf32, #tpu.memory_space<vmem>>, vector<1x1x512xf32>,
    %81 = tpu.concatenate %49, %72 in 1 : vector<1x256xi32>, vector<1x256xi32> -> vector<1x512xi32>
    %c0_32 = arith.constant 0 : index
    %c0_33 = arith.constant 0 : index
    %c0_34 = arith.constant 0 : index
    %82 = vector.load %arg10[%c0_32, %c0_33, %c0_34] : memref<1x1x512xi32, #tpu.memory_space<vmem>>, vector<1x1x512xi32>
    %83 = vector.shape_cast %82 : vector<1x1x512xi32> to vector<1x512xi32>
    %84 = vector.shape_cast %81 : vector<1x512xi32> to vector<1x1x512xi32>
    tpu.vector_store %arg10[%c0_32, %c0_33, %c0_34], %84 {strides = array<i32>} : memref<1x1x512xi32, #tpu.memory_space<vmem>>, vector<1x1x512xi32>,
    return
  }
  func.func @transform_0(%arg0: i32) -> (i32, i32, i32) {
    %c0_i32 = arith.constant 0 : i32
    %c0_i32_0 = arith.constant 0 : i32
    %c0_i32_1 = arith.constant 0 : i32
    return %arg0, %c0_i32, %c0_i32_0 : i32, i32, i32
  }
  func.func @transform_1(%arg0: i32) -> (i32, i32) {
    %c0_i32 = arith.constant 0 : i32
    %c0_i32_0 = arith.constant 0 : i32
    %c0_i32_1 = arith.constant 0 : i32
    return %c0_i32, %c0_i32_0 : i32, i32
  }
  func.func @transform_2(%arg0: i32) -> (i32, i32) {
    %c0_i32 = arith.constant 0 : i32
    %c0_i32_0 = arith.constant 0 : i32
    %c0_i32_1 = arith.constant 0 : i32
    return %c0_i32, %c0_i32_0 : i32, i32
  }
  func.func @transform_3(%arg0: i32) -> (i32, i32) {
    %c0_i32 = arith.constant 0 : i32
    %c0_i32_0 = arith.constant 0 : i32
    %c0_i32_1 = arith.constant 0 : i32
    return %c0_i32, %c0_i32_0 : i32, i32
  }
  func.func @transform_4(%arg0: i32) -> (i32, i32) {
    %c0_i32 = arith.constant 0 : i32
    %c0_i32_0 = arith.constant 0 : i32
    %c0_i32_1 = arith.constant 0 : i32
    return %c0_i32, %c0_i32_0 : i32, i32
  }
  func.func @transform_5(%arg0: i32) -> (i32, i32) {
    %c0_i32 = arith.constant 0 : i32
    %c0_i32_0 = arith.constant 0 : i32
    %c0_i32_1 = arith.constant 0 : i32
    return %c0_i32, %c0_i32_0 : i32, i32
  }
  func.func @transform_6(%arg0: i32) -> (i32, i32) {
    %c0_i32 = arith.constant 0 : i32
    %c0_i32_0 = arith.constant 0 : i32
    %c0_i32_1 = arith.constant 0 : i32
    return %c0_i32, %c0_i32_0 : i32, i32
  }
  func.func @transform_7(%arg0: i32) -> (i32, i32, i32) {
    %c0_i32 = arith.constant 0 : i32
    %c0_i32_0 = arith.constant 0 : i32
    %c0_i32_1 = arith.constant 0 : i32
    return %arg0, %c0_i32, %c0_i32_0 : i32, i32, i32
  }
  func.func @transform_8(%arg0: i32) -> (i32, i32, i32) {
    %c0_i32 = arith.constant 0 : i32
    %c0_i32_0 = arith.constant 0 : i32
    %c0_i32_1 = arith.constant 0 : i32
    return %arg0, %c0_i32, %c0_i32_0 : i32, i32, i32
  }
  func.func @transform_9(%arg0: i32) -> (i32, i32, i32) {
    %c0_i32 = arith.constant 0 : i32
    %c0_i32_0 = arith.constant 0 : i32
    %c0_i32_1 = arith.constant 0 : i32
    return %arg0, %c0_i32, %c0_i32_0 : i32, i32, i32
  }
}

module attributes {stable_mosaic.version = 11 : i64} {
  func.func @nms_keep_kernel(%arg0: i32, %arg1: memref<1x512x4xf32, #tpu.memory_space<vmem>>, %arg2: memref<1x4x512xf32, #tpu.memory_space<vmem>>, %arg3: memref<1x1x512xf32, #tpu.memory_space<vmem>>, %arg4: memref<1x1x512xf32, #tpu.memory_space<vmem>>, %arg5: memref<512x512xf32, #tpu.memory_space<vmem>>) attributes {dimension_semantics = [#tpu.dimension_semantics<parallel>], iteration_bounds = array<i64: 2>, scalar_prefetch = 0 : i64, scratch_operands = 1 : i64, tpu.core_type = #tpu.core_type<tc>, window_params = [{transform_indices = @transform_0, window_bounds = array<i64: 1, 512, 4>}, {transform_indices = @transform_1, window_bounds = array<i64: 1, 4, 512>}, {transform_indices = @transform_2, window_bounds = array<i64: 1, 1, 512>}, {transform_indices = @transform_3, window_bounds = array<i64: 1, 1, 512>}]} {
    %c0 = arith.constant 0 : index
    %c0_0 = arith.constant 0 : index
    %c0_1 = arith.constant 0 : index
    %0 = vector.load %arg1[%c0, %c0_0, %c0_1] : memref<1x512x4xf32, #tpu.memory_space<vmem>>, vector<1x512x4xf32>
    %1 = vector.shape_cast %0 : vector<1x512x4xf32> to vector<512x4xf32>
    %c0_2 = arith.constant 0 : index
    %c0_3 = arith.constant 0 : index
    %c0_4 = arith.constant 0 : index
    %2 = vector.load %arg2[%c0_2, %c0_3, %c0_4] : memref<1x4x512xf32, #tpu.memory_space<vmem>>, vector<1x4x512xf32>
    %3 = vector.shape_cast %2 : vector<1x4x512xf32> to vector<4x512xf32>
    %4 = vector.extract_strided_slice %3 {offsets = [0, 0], sizes = [1, 512], strides = [1, 1]} : vector<4x512xf32> to vector<1x512xf32>
    %5 = vector.extract_strided_slice %3 {offsets = [1, 0], sizes = [1, 512], strides = [1, 1]} : vector<4x512xf32> to vector<1x512xf32>
    %6 = vector.extract_strided_slice %3 {offsets = [2, 0], sizes = [1, 512], strides = [1, 1]} : vector<4x512xf32> to vector<1x512xf32>
    %7 = vector.extract_strided_slice %3 {offsets = [3, 0], sizes = [1, 512], strides = [1, 1]} : vector<4x512xf32> to vector<1x512xf32>
    %8 = arith.subf %6, %4 : vector<1x512xf32>
    %9 = arith.subf %7, %5 : vector<1x512xf32>
    %10 = arith.mulf %8, %9 : vector<1x512xf32>
    %11 = vector.extract_strided_slice %1 {offsets = [0, 0], sizes = [128, 4], strides = [1, 1]} : vector<512x4xf32> to vector<128x4xf32>
    %12 = vector.extract_strided_slice %11 {offsets = [0, 0], sizes = [128, 1], strides = [1, 1]} : vector<128x4xf32> to vector<128x1xf32>
    %13 = vector.extract_strided_slice %11 {offsets = [0, 1], sizes = [128, 1], strides = [1, 1]} : vector<128x4xf32> to vector<128x1xf32>
    %14 = vector.extract_strided_slice %11 {offsets = [0, 2], sizes = [128, 1], strides = [1, 1]} : vector<128x4xf32> to vector<128x1xf32>
    %15 = vector.extract_strided_slice %11 {offsets = [0, 3], sizes = [128, 1], strides = [1, 1]} : vector<128x4xf32> to vector<128x1xf32>
    %16 = vector.broadcast %12 : vector<128x1xf32> to vector<128x512xf32>
    %17 = vector.broadcast %4 : vector<1x512xf32> to vector<128x512xf32>
    %18 = arith.maximumf %16, %17 : vector<128x512xf32>
    %19 = vector.broadcast %13 : vector<128x1xf32> to vector<128x512xf32>
    %20 = vector.broadcast %5 : vector<1x512xf32> to vector<128x512xf32>
    %21 = arith.maximumf %19, %20 : vector<128x512xf32>
    %22 = vector.broadcast %14 : vector<128x1xf32> to vector<128x512xf32>
    %23 = vector.broadcast %6 : vector<1x512xf32> to vector<128x512xf32>
    %24 = arith.minimumf %22, %23 : vector<128x512xf32>
    %25 = vector.broadcast %15 : vector<128x1xf32> to vector<128x512xf32>
    %26 = vector.broadcast %7 : vector<1x512xf32> to vector<128x512xf32>
    %27 = arith.minimumf %25, %26 : vector<128x512xf32>
    %28 = arith.subf %24, %18 : vector<128x512xf32>
    %cst = arith.constant 0.000000e+00 : f32
    %29 = vector.broadcast %cst : f32 to vector<128x512xf32>
    %30 = arith.maximumf %28, %29 : vector<128x512xf32>
    %31 = arith.subf %27, %21 : vector<128x512xf32>
    %cst_5 = arith.constant 0.000000e+00 : f32
    %32 = vector.broadcast %cst_5 : f32 to vector<128x512xf32>
    %33 = arith.maximumf %31, %32 : vector<128x512xf32>
    %34 = arith.mulf %30, %33 : vector<128x512xf32>
    %35 = arith.subf %14, %12 : vector<128x1xf32>
    %36 = arith.subf %15, %13 : vector<128x1xf32>
    %37 = arith.mulf %35, %36 : vector<128x1xf32>
    %38 = vector.broadcast %37 : vector<128x1xf32> to vector<128x512xf32>
    %39 = vector.broadcast %10 : vector<1x512xf32> to vector<128x512xf32>
    %40 = arith.addf %38, %39 : vector<128x512xf32>
    %41 = arith.subf %40, %34 : vector<128x512xf32>
    %42 = tpu.iota {dimensions = array<i32: 0>} : vector<128x512xi32>
    %c0_i32 = arith.constant 0 : i32
    %43 = vector.broadcast %c0_i32 : i32 to vector<128x512xi32>
    %44 = arith.addi %43, %42 : vector<128x512xi32>
    %45 = tpu.iota {dimensions = array<i32: 1>} : vector<128x512xi32>
    %cst_6 = arith.constant 4.500000e-01 : f32
    %46 = vector.broadcast %cst_6 : f32 to vector<128x512xf32>
    %47 = arith.mulf %46, %41 : vector<128x512xf32>
    %48 = arith.cmpf ogt, %34, %47 : vector<128x512xf32>
    %49 = arith.cmpi sgt, %45, %44 : vector<128x512xi32>
    %50 = arith.andi %48, %49 : vector<128x512xi1>
    %cst_7 = arith.constant 1.000000e+00 : f32
    %cst_8 = arith.constant 0.000000e+00 : f32
    %51 = vector.broadcast %cst_7 : f32 to vector<128x512xf32>
    %52 = vector.broadcast %cst_8 : f32 to vector<128x512xf32>
    %53 = arith.select %50, %51, %52 : vector<128x512xi1>, vector<128x512xf32>
    %c0_9 = arith.constant 0 : index
    %c0_10 = arith.constant 0 : index
    %54 = vector.load %arg5[%c0_9, %c0_10] : memref<512x512xf32, #tpu.memory_space<vmem>>, vector<128x512xf32>
    tpu.vector_store %arg5[%c0_9, %c0_10], %53 {strides = array<i32>} : memref<512x512xf32, #tpu.memory_space<vmem>>, vector<128x512xf32>,
    %55 = vector.extract_strided_slice %1 {offsets = [128, 0], sizes = [128, 4], strides = [1, 1]} : vector<512x4xf32> to vector<128x4xf32>
    %56 = vector.extract_strided_slice %55 {offsets = [0, 0], sizes = [128, 1], strides = [1, 1]} : vector<128x4xf32> to vector<128x1xf32>
    %57 = vector.extract_strided_slice %55 {offsets = [0, 1], sizes = [128, 1], strides = [1, 1]} : vector<128x4xf32> to vector<128x1xf32>
    %58 = vector.extract_strided_slice %55 {offsets = [0, 2], sizes = [128, 1], strides = [1, 1]} : vector<128x4xf32> to vector<128x1xf32>
    %59 = vector.extract_strided_slice %55 {offsets = [0, 3], sizes = [128, 1], strides = [1, 1]} : vector<128x4xf32> to vector<128x1xf32>
    %60 = vector.broadcast %56 : vector<128x1xf32> to vector<128x512xf32>
    %61 = vector.broadcast %4 : vector<1x512xf32> to vector<128x512xf32>
    %62 = arith.maximumf %60, %61 : vector<128x512xf32>
    %63 = vector.broadcast %57 : vector<128x1xf32> to vector<128x512xf32>
    %64 = vector.broadcast %5 : vector<1x512xf32> to vector<128x512xf32>
    %65 = arith.maximumf %63, %64 : vector<128x512xf32>
    %66 = vector.broadcast %58 : vector<128x1xf32> to vector<128x512xf32>
    %67 = vector.broadcast %6 : vector<1x512xf32> to vector<128x512xf32>
    %68 = arith.minimumf %66, %67 : vector<128x512xf32>
    %69 = vector.broadcast %59 : vector<128x1xf32> to vector<128x512xf32>
    %70 = vector.broadcast %7 : vector<1x512xf32> to vector<128x512xf32>
    %71 = arith.minimumf %69, %70 : vector<128x512xf32>
    %72 = arith.subf %68, %62 : vector<128x512xf32>
    %cst_11 = arith.constant 0.000000e+00 : f32
    %73 = vector.broadcast %cst_11 : f32 to vector<128x512xf32>
    %74 = arith.maximumf %72, %73 : vector<128x512xf32>
    %75 = arith.subf %71, %65 : vector<128x512xf32>
    %cst_12 = arith.constant 0.000000e+00 : f32
    %76 = vector.broadcast %cst_12 : f32 to vector<128x512xf32>
    %77 = arith.maximumf %75, %76 : vector<128x512xf32>
    %78 = arith.mulf %74, %77 : vector<128x512xf32>
    %79 = arith.subf %58, %56 : vector<128x1xf32>
    %80 = arith.subf %59, %57 : vector<128x1xf32>
    %81 = arith.mulf %79, %80 : vector<128x1xf32>
    %82 = vector.broadcast %81 : vector<128x1xf32> to vector<128x512xf32>
    %83 = vector.broadcast %10 : vector<1x512xf32> to vector<128x512xf32>
    %84 = arith.addf %82, %83 : vector<128x512xf32>
    %85 = arith.subf %84, %78 : vector<128x512xf32>
    %86 = tpu.iota {dimensions = array<i32: 0>} : vector<128x512xi32>
    %c128_i32 = arith.constant 128 : i32
    %87 = vector.broadcast %c128_i32 : i32 to vector<128x512xi32>
    %88 = arith.addi %87, %86 : vector<128x512xi32>
    %89 = tpu.iota {dimensions = array<i32: 1>} : vector<128x512xi32>
    %cst_13 = arith.constant 4.500000e-01 : f32
    %90 = vector.broadcast %cst_13 : f32 to vector<128x512xf32>
    %91 = arith.mulf %90, %85 : vector<128x512xf32>
    %92 = arith.cmpf ogt, %78, %91 : vector<128x512xf32>
    %93 = arith.cmpi sgt, %89, %88 : vector<128x512xi32>
    %94 = arith.andi %92, %93 : vector<128x512xi1>
    %cst_14 = arith.constant 1.000000e+00 : f32
    %cst_15 = arith.constant 0.000000e+00 : f32
    %95 = vector.broadcast %cst_14 : f32 to vector<128x512xf32>
    %96 = vector.broadcast %cst_15 : f32 to vector<128x512xf32>
    %97 = arith.select %94, %95, %96 : vector<128x512xi1>, vector<128x512xf32>
    %c128 = arith.constant 128 : index
    %c0_16 = arith.constant 0 : index
    %98 = vector.load %arg5[%c128, %c0_16] : memref<512x512xf32, #tpu.memory_space<vmem>>, vector<128x512xf32>
    tpu.vector_store %arg5[%c128, %c0_16], %97 {strides = array<i32>} : memref<512x512xf32, #tpu.memory_space<vmem>>, vector<128x512xf32>,
    %99 = vector.extract_strided_slice %1 {offsets = [256, 0], sizes = [128, 4], strides = [1, 1]} : vector<512x4xf32> to vector<128x4xf32>
    %100 = vector.extract_strided_slice %99 {offsets = [0, 0], sizes = [128, 1], strides = [1, 1]} : vector<128x4xf32> to vector<128x1xf32>
    %101 = vector.extract_strided_slice %99 {offsets = [0, 1], sizes = [128, 1], strides = [1, 1]} : vector<128x4xf32> to vector<128x1xf32>
    %102 = vector.extract_strided_slice %99 {offsets = [0, 2], sizes = [128, 1], strides = [1, 1]} : vector<128x4xf32> to vector<128x1xf32>
    %103 = vector.extract_strided_slice %99 {offsets = [0, 3], sizes = [128, 1], strides = [1, 1]} : vector<128x4xf32> to vector<128x1xf32>
    %104 = vector.broadcast %100 : vector<128x1xf32> to vector<128x512xf32>
    %105 = vector.broadcast %4 : vector<1x512xf32> to vector<128x512xf32>
    %106 = arith.maximumf %104, %105 : vector<128x512xf32>
    %107 = vector.broadcast %101 : vector<128x1xf32> to vector<128x512xf32>
    %108 = vector.broadcast %5 : vector<1x512xf32> to vector<128x512xf32>
    %109 = arith.maximumf %107, %108 : vector<128x512xf32>
    %110 = vector.broadcast %102 : vector<128x1xf32> to vector<128x512xf32>
    %111 = vector.broadcast %6 : vector<1x512xf32> to vector<128x512xf32>
    %112 = arith.minimumf %110, %111 : vector<128x512xf32>
    %113 = vector.broadcast %103 : vector<128x1xf32> to vector<128x512xf32>
    %114 = vector.broadcast %7 : vector<1x512xf32> to vector<128x512xf32>
    %115 = arith.minimumf %113, %114 : vector<128x512xf32>
    %116 = arith.subf %112, %106 : vector<128x512xf32>
    %cst_17 = arith.constant 0.000000e+00 : f32
    %117 = vector.broadcast %cst_17 : f32 to vector<128x512xf32>
    %118 = arith.maximumf %116, %117 : vector<128x512xf32>
    %119 = arith.subf %115, %109 : vector<128x512xf32>
    %cst_18 = arith.constant 0.000000e+00 : f32
    %120 = vector.broadcast %cst_18 : f32 to vector<128x512xf32>
    %121 = arith.maximumf %119, %120 : vector<128x512xf32>
    %122 = arith.mulf %118, %121 : vector<128x512xf32>
    %123 = arith.subf %102, %100 : vector<128x1xf32>
    %124 = arith.subf %103, %101 : vector<128x1xf32>
    %125 = arith.mulf %123, %124 : vector<128x1xf32>
    %126 = vector.broadcast %125 : vector<128x1xf32> to vector<128x512xf32>
    %127 = vector.broadcast %10 : vector<1x512xf32> to vector<128x512xf32>
    %128 = arith.addf %126, %127 : vector<128x512xf32>
    %129 = arith.subf %128, %122 : vector<128x512xf32>
    %130 = tpu.iota {dimensions = array<i32: 0>} : vector<128x512xi32>
    %c256_i32 = arith.constant 256 : i32
    %131 = vector.broadcast %c256_i32 : i32 to vector<128x512xi32>
    %132 = arith.addi %131, %130 : vector<128x512xi32>
    %133 = tpu.iota {dimensions = array<i32: 1>} : vector<128x512xi32>
    %cst_19 = arith.constant 4.500000e-01 : f32
    %134 = vector.broadcast %cst_19 : f32 to vector<128x512xf32>
    %135 = arith.mulf %134, %129 : vector<128x512xf32>
    %136 = arith.cmpf ogt, %122, %135 : vector<128x512xf32>
    %137 = arith.cmpi sgt, %133, %132 : vector<128x512xi32>
    %138 = arith.andi %136, %137 : vector<128x512xi1>
    %cst_20 = arith.constant 1.000000e+00 : f32
    %cst_21 = arith.constant 0.000000e+00 : f32
    %139 = vector.broadcast %cst_20 : f32 to vector<128x512xf32>
    %140 = vector.broadcast %cst_21 : f32 to vector<128x512xf32>
    %141 = arith.select %138, %139, %140 : vector<128x512xi1>, vector<128x512xf32>
    %c256 = arith.constant 256 : index
    %c0_22 = arith.constant 0 : index
    %142 = vector.load %arg5[%c256, %c0_22] : memref<512x512xf32, #tpu.memory_space<vmem>>, vector<128x512xf32>
    tpu.vector_store %arg5[%c256, %c0_22], %141 {strides = array<i32>} : memref<512x512xf32, #tpu.memory_space<vmem>>, vector<128x512xf32>,
    %143 = vector.extract_strided_slice %1 {offsets = [384, 0], sizes = [128, 4], strides = [1, 1]} : vector<512x4xf32> to vector<128x4xf32>
    %144 = vector.extract_strided_slice %143 {offsets = [0, 0], sizes = [128, 1], strides = [1, 1]} : vector<128x4xf32> to vector<128x1xf32>
    %145 = vector.extract_strided_slice %143 {offsets = [0, 1], sizes = [128, 1], strides = [1, 1]} : vector<128x4xf32> to vector<128x1xf32>
    %146 = vector.extract_strided_slice %143 {offsets = [0, 2], sizes = [128, 1], strides = [1, 1]} : vector<128x4xf32> to vector<128x1xf32>
    %147 = vector.extract_strided_slice %143 {offsets = [0, 3], sizes = [128, 1], strides = [1, 1]} : vector<128x4xf32> to vector<128x1xf32>
    %148 = vector.broadcast %144 : vector<128x1xf32> to vector<128x512xf32>
    %149 = vector.broadcast %4 : vector<1x512xf32> to vector<128x512xf32>
    %150 = arith.maximumf %148, %149 : vector<128x512xf32>
    %151 = vector.broadcast %145 : vector<128x1xf32> to vector<128x512xf32>
    %152 = vector.broadcast %5 : vector<1x512xf32> to vector<128x512xf32>
    %153 = arith.maximumf %151, %152 : vector<128x512xf32>
    %154 = vector.broadcast %146 : vector<128x1xf32> to vector<128x512xf32>
    %155 = vector.broadcast %6 : vector<1x512xf32> to vector<128x512xf32>
    %156 = arith.minimumf %154, %155 : vector<128x512xf32>
    %157 = vector.broadcast %147 : vector<128x1xf32> to vector<128x512xf32>
    %158 = vector.broadcast %7 : vector<1x512xf32> to vector<128x512xf32>
    %159 = arith.minimumf %157, %158 : vector<128x512xf32>
    %160 = arith.subf %156, %150 : vector<128x512xf32>
    %cst_23 = arith.constant 0.000000e+00 : f32
    %161 = vector.broadcast %cst_23 : f32 to vector<128x512xf32>
    %162 = arith.maximumf %160, %161 : vector<128x512xf32>
    %163 = arith.subf %159, %153 : vector<128x512xf32>
    %cst_24 = arith.constant 0.000000e+00 : f32
    %164 = vector.broadcast %cst_24 : f32 to vector<128x512xf32>
    %165 = arith.maximumf %163, %164 : vector<128x512xf32>
    %166 = arith.mulf %162, %165 : vector<128x512xf32>
    %167 = arith.subf %146, %144 : vector<128x1xf32>
    %168 = arith.subf %147, %145 : vector<128x1xf32>
    %169 = arith.mulf %167, %168 : vector<128x1xf32>
    %170 = vector.broadcast %169 : vector<128x1xf32> to vector<128x512xf32>
    %171 = vector.broadcast %10 : vector<1x512xf32> to vector<128x512xf32>
    %172 = arith.addf %170, %171 : vector<128x512xf32>
    %173 = arith.subf %172, %166 : vector<128x512xf32>
    %174 = tpu.iota {dimensions = array<i32: 0>} : vector<128x512xi32>
    %c384_i32 = arith.constant 384 : i32
    %175 = vector.broadcast %c384_i32 : i32 to vector<128x512xi32>
    %176 = arith.addi %175, %174 : vector<128x512xi32>
    %177 = tpu.iota {dimensions = array<i32: 1>} : vector<128x512xi32>
    %cst_25 = arith.constant 4.500000e-01 : f32
    %178 = vector.broadcast %cst_25 : f32 to vector<128x512xf32>
    %179 = arith.mulf %178, %173 : vector<128x512xf32>
    %180 = arith.cmpf ogt, %166, %179 : vector<128x512xf32>
    %181 = arith.cmpi sgt, %177, %176 : vector<128x512xi32>
    %182 = arith.andi %180, %181 : vector<128x512xi1>
    %cst_26 = arith.constant 1.000000e+00 : f32
    %cst_27 = arith.constant 0.000000e+00 : f32
    %183 = vector.broadcast %cst_26 : f32 to vector<128x512xf32>
    %184 = vector.broadcast %cst_27 : f32 to vector<128x512xf32>
    %185 = arith.select %182, %183, %184 : vector<128x512xi1>, vector<128x512xf32>
    %c384 = arith.constant 384 : index
    %c0_28 = arith.constant 0 : index
    %186 = vector.load %arg5[%c384, %c0_28] : memref<512x512xf32, #tpu.memory_space<vmem>>, vector<128x512xf32>
    tpu.vector_store %arg5[%c384, %c0_28], %185 {strides = array<i32>} : memref<512x512xf32, #tpu.memory_space<vmem>>, vector<128x512xf32>,
    %187 = tpu.iota {dimensions = array<i32: 1>} : vector<1x512xi32>
    %c0_29 = arith.constant 0 : index
    %c0_30 = arith.constant 0 : index
    %c0_31 = arith.constant 0 : index
    %188 = vector.load %arg3[%c0_29, %c0_30, %c0_31] : memref<1x1x512xf32, #tpu.memory_space<vmem>>, vector<1x1x512xf32>
    %189 = vector.shape_cast %188 : vector<1x1x512xf32> to vector<1x512xf32>
    %cst_32 = arith.constant 2.500000e-01 : f32
    %190 = vector.broadcast %cst_32 : f32 to vector<1x512xf32>
    %191 = arith.cmpf ogt, %189, %190 : vector<1x512xf32>
    %192 = arith.extui %191 : vector<1x512xi1> to vector<1x512xi32>
    %193 = arith.sitofp %192 : vector<1x512xi32> to vector<1x512xf32>
    %c0_i32_33 = arith.constant 0 : i32
    %c64_i32 = arith.constant 64 : i32
    %194 = arith.addi %c0_i32_33, %c64_i32 : i32
    %c1_i32 = arith.constant 1 : i32
    %195 = scf.for %arg6 = %c0_i32_33 to %194 step %c1_i32 iter_args(%arg7 = %193) -> (vector<1x512xf32>)  : i32 {
      %c8_i32 = arith.constant 8 : i32
      %199 = arith.muli %arg6, %c8_i32 : i32
      %200 = tpu.assume_multiple %199, 8 : i32
      %201 = arith.index_cast %200 : i32 to index
      %c0_38 = arith.constant 0 : index
      %202 = vector.load %arg5[%201, %c0_38] : memref<512x512xf32, #tpu.memory_space<vmem>>, vector<8x512xf32>
      %c8_i32_39 = arith.constant 8 : i32
      %203 = arith.muli %arg6, %c8_i32_39 : i32
      %c0_i32_40 = arith.constant 0 : i32
      %204 = arith.addi %203, %c0_i32_40 : i32
      %205 = vector.extract_strided_slice %202 {offsets = [0, 0], sizes = [1, 512], strides = [1, 1]} : vector<8x512xf32> to vector<1x512xf32>
      %206 = vector.broadcast %204 : i32 to vector<1x512xi32>
      %207 = arith.cmpi eq, %187, %206 : vector<1x512xi32>
      %cst_41 = arith.constant 0.000000e+00 : f32
      %208 = vector.broadcast %cst_41 : f32 to vector<1x512xf32>
      %209 = arith.select %207, %arg7, %208 : vector<1x512xi1>, vector<1x512xf32>
      %cst_42 = arith.constant dense<0xFF800000> : vector<1xf32>
      %210 = vector.multi_reduction <maximumf>, %209, %cst_42 [1] : vector<1x512xf32> to vector<1xf32>
      %211 = vector.shape_cast %210 : vector<1xf32> to vector<1x1xf32>
      %cst_43 = arith.constant 5.000000e-01 : f32
      %212 = vector.broadcast %cst_43 : f32 to vector<1x512xf32>
      %213 = arith.cmpf ogt, %205, %212 : vector<1x512xf32>
      %cst_44 = arith.constant 5.000000e-01 : f32
      %214 = vector.broadcast %cst_44 : f32 to vector<1x1xf32>
      %215 = arith.cmpf ogt, %211, %214 : vector<1x1xf32>
      %216 = vector.broadcast %215 : vector<1x1xi1> to vector<1x512xi1>
      %217 = arith.andi %213, %216 : vector<1x512xi1>
      %cst_45 = arith.constant 0.000000e+00 : f32
      %218 = vector.broadcast %cst_45 : f32 to vector<1x512xf32>
      %219 = arith.select %217, %218, %arg7 : vector<1x512xi1>, vector<1x512xf32>
      %c8_i32_46 = arith.constant 8 : i32
      %220 = arith.muli %arg6, %c8_i32_46 : i32
      %c1_i32_47 = arith.constant 1 : i32
      %221 = arith.addi %220, %c1_i32_47 : i32
      %222 = vector.extract_strided_slice %202 {offsets = [1, 0], sizes = [1, 512], strides = [1, 1]} : vector<8x512xf32> to vector<1x512xf32>
      %223 = vector.broadcast %221 : i32 to vector<1x512xi32>
      %224 = arith.cmpi eq, %187, %223 : vector<1x512xi32>
      %cst_48 = arith.constant 0.000000e+00 : f32
      %225 = vector.broadcast %cst_48 : f32 to vector<1x512xf32>
      %226 = arith.select %224, %219, %225 : vector<1x512xi1>, vector<1x512xf32>
      %cst_49 = arith.constant dense<0xFF800000> : vector<1xf32>
      %227 = vector.multi_reduction <maximumf>, %226, %cst_49 [1] : vector<1x512xf32> to vector<1xf32>
      %228 = vector.shape_cast %227 : vector<1xf32> to vector<1x1xf32>
      %cst_50 = arith.constant 5.000000e-01 : f32
      %229 = vector.broadcast %cst_50 : f32 to vector<1x512xf32>
      %230 = arith.cmpf ogt, %222, %229 : vector<1x512xf32>
      %cst_51 = arith.constant 5.000000e-01 : f32
      %231 = vector.broadcast %cst_51 : f32 to vector<1x1xf32>
      %232 = arith.cmpf ogt, %228, %231 : vector<1x1xf32>
      %233 = vector.broadcast %232 : vector<1x1xi1> to vector<1x512xi1>
      %234 = arith.andi %230, %233 : vector<1x512xi1>
      %cst_52 = arith.constant 0.000000e+00 : f32
      %235 = vector.broadcast %cst_52 : f32 to vector<1x512xf32>
      %236 = arith.select %234, %235, %219 : vector<1x512xi1>, vector<1x512xf32>
      %c8_i32_53 = arith.constant 8 : i32
      %237 = arith.muli %arg6, %c8_i32_53 : i32
      %c2_i32 = arith.constant 2 : i32
      %238 = arith.addi %237, %c2_i32 : i32
      %239 = vector.extract_strided_slice %202 {offsets = [2, 0], sizes = [1, 512], strides = [1, 1]} : vector<8x512xf32> to vector<1x512xf32>
      %240 = vector.broadcast %238 : i32 to vector<1x512xi32>
      %241 = arith.cmpi eq, %187, %240 : vector<1x512xi32>
      %cst_54 = arith.constant 0.000000e+00 : f32
      %242 = vector.broadcast %cst_54 : f32 to vector<1x512xf32>
      %243 = arith.select %241, %236, %242 : vector<1x512xi1>, vector<1x512xf32>
      %cst_55 = arith.constant dense<0xFF800000> : vector<1xf32>
      %244 = vector.multi_reduction <maximumf>, %243, %cst_55 [1] : vector<1x512xf32> to vector<1xf32>
      %245 = vector.shape_cast %244 : vector<1xf32> to vector<1x1xf32>
      %cst_56 = arith.constant 5.000000e-01 : f32
      %246 = vector.broadcast %cst_56 : f32 to vector<1x512xf32>
      %247 = arith.cmpf ogt, %239, %246 : vector<1x512xf32>
      %cst_57 = arith.constant 5.000000e-01 : f32
      %248 = vector.broadcast %cst_57 : f32 to vector<1x1xf32>
      %249 = arith.cmpf ogt, %245, %248 : vector<1x1xf32>
      %250 = vector.broadcast %249 : vector<1x1xi1> to vector<1x512xi1>
      %251 = arith.andi %247, %250 : vector<1x512xi1>
      %cst_58 = arith.constant 0.000000e+00 : f32
      %252 = vector.broadcast %cst_58 : f32 to vector<1x512xf32>
      %253 = arith.select %251, %252, %236 : vector<1x512xi1>, vector<1x512xf32>
      %c8_i32_59 = arith.constant 8 : i32
      %254 = arith.muli %arg6, %c8_i32_59 : i32
      %c3_i32 = arith.constant 3 : i32
      %255 = arith.addi %254, %c3_i32 : i32
      %256 = vector.extract_strided_slice %202 {offsets = [3, 0], sizes = [1, 512], strides = [1, 1]} : vector<8x512xf32> to vector<1x512xf32>
      %257 = vector.broadcast %255 : i32 to vector<1x512xi32>
      %258 = arith.cmpi eq, %187, %257 : vector<1x512xi32>
      %cst_60 = arith.constant 0.000000e+00 : f32
      %259 = vector.broadcast %cst_60 : f32 to vector<1x512xf32>
      %260 = arith.select %258, %253, %259 : vector<1x512xi1>, vector<1x512xf32>
      %cst_61 = arith.constant dense<0xFF800000> : vector<1xf32>
      %261 = vector.multi_reduction <maximumf>, %260, %cst_61 [1] : vector<1x512xf32> to vector<1xf32>
      %262 = vector.shape_cast %261 : vector<1xf32> to vector<1x1xf32>
      %cst_62 = arith.constant 5.000000e-01 : f32
      %263 = vector.broadcast %cst_62 : f32 to vector<1x512xf32>
      %264 = arith.cmpf ogt, %256, %263 : vector<1x512xf32>
      %cst_63 = arith.constant 5.000000e-01 : f32
      %265 = vector.broadcast %cst_63 : f32 to vector<1x1xf32>
      %266 = arith.cmpf ogt, %262, %265 : vector<1x1xf32>
      %267 = vector.broadcast %266 : vector<1x1xi1> to vector<1x512xi1>
      %268 = arith.andi %264, %267 : vector<1x512xi1>
      %cst_64 = arith.constant 0.000000e+00 : f32
      %269 = vector.broadcast %cst_64 : f32 to vector<1x512xf32>
      %270 = arith.select %268, %269, %253 : vector<1x512xi1>, vector<1x512xf32>
      %c8_i32_65 = arith.constant 8 : i32
      %271 = arith.muli %arg6, %c8_i32_65 : i32
      %c4_i32 = arith.constant 4 : i32
      %272 = arith.addi %271, %c4_i32 : i32
      %273 = vector.extract_strided_slice %202 {offsets = [4, 0], sizes = [1, 512], strides = [1, 1]} : vector<8x512xf32> to vector<1x512xf32>
      %274 = vector.broadcast %272 : i32 to vector<1x512xi32>
      %275 = arith.cmpi eq, %187, %274 : vector<1x512xi32>
      %cst_66 = arith.constant 0.000000e+00 : f32
      %276 = vector.broadcast %cst_66 : f32 to vector<1x512xf32>
      %277 = arith.select %275, %270, %276 : vector<1x512xi1>, vector<1x512xf32>
      %cst_67 = arith.constant dense<0xFF800000> : vector<1xf32>
      %278 = vector.multi_reduction <maximumf>, %277, %cst_67 [1] : vector<1x512xf32> to vector<1xf32>
      %279 = vector.shape_cast %278 : vector<1xf32> to vector<1x1xf32>
      %cst_68 = arith.constant 5.000000e-01 : f32
      %280 = vector.broadcast %cst_68 : f32 to vector<1x512xf32>
      %281 = arith.cmpf ogt, %273, %280 : vector<1x512xf32>
      %cst_69 = arith.constant 5.000000e-01 : f32
      %282 = vector.broadcast %cst_69 : f32 to vector<1x1xf32>
      %283 = arith.cmpf ogt, %279, %282 : vector<1x1xf32>
      %284 = vector.broadcast %283 : vector<1x1xi1> to vector<1x512xi1>
      %285 = arith.andi %281, %284 : vector<1x512xi1>
      %cst_70 = arith.constant 0.000000e+00 : f32
      %286 = vector.broadcast %cst_70 : f32 to vector<1x512xf32>
      %287 = arith.select %285, %286, %270 : vector<1x512xi1>, vector<1x512xf32>
      %c8_i32_71 = arith.constant 8 : i32
      %288 = arith.muli %arg6, %c8_i32_71 : i32
      %c5_i32 = arith.constant 5 : i32
      %289 = arith.addi %288, %c5_i32 : i32
      %290 = vector.extract_strided_slice %202 {offsets = [5, 0], sizes = [1, 512], strides = [1, 1]} : vector<8x512xf32> to vector<1x512xf32>
      %291 = vector.broadcast %289 : i32 to vector<1x512xi32>
      %292 = arith.cmpi eq, %187, %291 : vector<1x512xi32>
      %cst_72 = arith.constant 0.000000e+00 : f32
      %293 = vector.broadcast %cst_72 : f32 to vector<1x512xf32>
      %294 = arith.select %292, %287, %293 : vector<1x512xi1>, vector<1x512xf32>
      %cst_73 = arith.constant dense<0xFF800000> : vector<1xf32>
      %295 = vector.multi_reduction <maximumf>, %294, %cst_73 [1] : vector<1x512xf32> to vector<1xf32>
      %296 = vector.shape_cast %295 : vector<1xf32> to vector<1x1xf32>
      %cst_74 = arith.constant 5.000000e-01 : f32
      %297 = vector.broadcast %cst_74 : f32 to vector<1x512xf32>
      %298 = arith.cmpf ogt, %290, %297 : vector<1x512xf32>
      %cst_75 = arith.constant 5.000000e-01 : f32
      %299 = vector.broadcast %cst_75 : f32 to vector<1x1xf32>
      %300 = arith.cmpf ogt, %296, %299 : vector<1x1xf32>
      %301 = vector.broadcast %300 : vector<1x1xi1> to vector<1x512xi1>
      %302 = arith.andi %298, %301 : vector<1x512xi1>
      %cst_76 = arith.constant 0.000000e+00 : f32
      %303 = vector.broadcast %cst_76 : f32 to vector<1x512xf32>
      %304 = arith.select %302, %303, %287 : vector<1x512xi1>, vector<1x512xf32>
      %c8_i32_77 = arith.constant 8 : i32
      %305 = arith.muli %arg6, %c8_i32_77 : i32
      %c6_i32 = arith.constant 6 : i32
      %306 = arith.addi %305, %c6_i32 : i32
      %307 = vector.extract_strided_slice %202 {offsets = [6, 0], sizes = [1, 512], strides = [1, 1]} : vector<8x512xf32> to vector<1x512xf32>
      %308 = vector.broadcast %306 : i32 to vector<1x512xi32>
      %309 = arith.cmpi eq, %187, %308 : vector<1x512xi32>
      %cst_78 = arith.constant 0.000000e+00 : f32
      %310 = vector.broadcast %cst_78 : f32 to vector<1x512xf32>
      %311 = arith.select %309, %304, %310 : vector<1x512xi1>, vector<1x512xf32>
      %cst_79 = arith.constant dense<0xFF800000> : vector<1xf32>
      %312 = vector.multi_reduction <maximumf>, %311, %cst_79 [1] : vector<1x512xf32> to vector<1xf32>
      %313 = vector.shape_cast %312 : vector<1xf32> to vector<1x1xf32>
      %cst_80 = arith.constant 5.000000e-01 : f32
      %314 = vector.broadcast %cst_80 : f32 to vector<1x512xf32>
      %315 = arith.cmpf ogt, %307, %314 : vector<1x512xf32>
      %cst_81 = arith.constant 5.000000e-01 : f32
      %316 = vector.broadcast %cst_81 : f32 to vector<1x1xf32>
      %317 = arith.cmpf ogt, %313, %316 : vector<1x1xf32>
      %318 = vector.broadcast %317 : vector<1x1xi1> to vector<1x512xi1>
      %319 = arith.andi %315, %318 : vector<1x512xi1>
      %cst_82 = arith.constant 0.000000e+00 : f32
      %320 = vector.broadcast %cst_82 : f32 to vector<1x512xf32>
      %321 = arith.select %319, %320, %304 : vector<1x512xi1>, vector<1x512xf32>
      %c8_i32_83 = arith.constant 8 : i32
      %322 = arith.muli %arg6, %c8_i32_83 : i32
      %c7_i32 = arith.constant 7 : i32
      %323 = arith.addi %322, %c7_i32 : i32
      %324 = vector.extract_strided_slice %202 {offsets = [7, 0], sizes = [1, 512], strides = [1, 1]} : vector<8x512xf32> to vector<1x512xf32>
      %325 = vector.broadcast %323 : i32 to vector<1x512xi32>
      %326 = arith.cmpi eq, %187, %325 : vector<1x512xi32>
      %cst_84 = arith.constant 0.000000e+00 : f32
      %327 = vector.broadcast %cst_84 : f32 to vector<1x512xf32>
      %328 = arith.select %326, %321, %327 : vector<1x512xi1>, vector<1x512xf32>
      %cst_85 = arith.constant dense<0xFF800000> : vector<1xf32>
      %329 = vector.multi_reduction <maximumf>, %328, %cst_85 [1] : vector<1x512xf32> to vector<1xf32>
      %330 = vector.shape_cast %329 : vector<1xf32> to vector<1x1xf32>
      %cst_86 = arith.constant 5.000000e-01 : f32
      %331 = vector.broadcast %cst_86 : f32 to vector<1x512xf32>
      %332 = arith.cmpf ogt, %324, %331 : vector<1x512xf32>
      %cst_87 = arith.constant 5.000000e-01 : f32
      %333 = vector.broadcast %cst_87 : f32 to vector<1x1xf32>
      %334 = arith.cmpf ogt, %330, %333 : vector<1x1xf32>
      %335 = vector.broadcast %334 : vector<1x1xi1> to vector<1x512xi1>
      %336 = arith.andi %332, %335 : vector<1x512xi1>
      %cst_88 = arith.constant 0.000000e+00 : f32
      %337 = vector.broadcast %cst_88 : f32 to vector<1x512xf32>
      %338 = arith.select %336, %337, %321 : vector<1x512xi1>, vector<1x512xf32>
      scf.yield %338 : vector<1x512xf32>
    }
    %c64_i32_34 = arith.constant 64 : i32
    %c0_35 = arith.constant 0 : index
    %c0_36 = arith.constant 0 : index
    %c0_37 = arith.constant 0 : index
    %196 = vector.load %arg4[%c0_35, %c0_36, %c0_37] : memref<1x1x512xf32, #tpu.memory_space<vmem>>, vector<1x1x512xf32>
    %197 = vector.shape_cast %196 : vector<1x1x512xf32> to vector<1x512xf32>
    %198 = vector.shape_cast %195 : vector<1x512xf32> to vector<1x1x512xf32>
    tpu.vector_store %arg4[%c0_35, %c0_36, %c0_37], %198 {strides = array<i32>} : memref<1x1x512xf32, #tpu.memory_space<vmem>>, vector<1x1x512xf32>,
    return
  }
  func.func @transform_0(%arg0: i32) -> (i32, i32, i32) {
    %c0_i32 = arith.constant 0 : i32
    %c0_i32_0 = arith.constant 0 : i32
    %c0_i32_1 = arith.constant 0 : i32
    return %arg0, %c0_i32, %c0_i32_0 : i32, i32, i32
  }
  func.func @transform_1(%arg0: i32) -> (i32, i32, i32) {
    %c0_i32 = arith.constant 0 : i32
    %c0_i32_0 = arith.constant 0 : i32
    %c0_i32_1 = arith.constant 0 : i32
    return %arg0, %c0_i32, %c0_i32_0 : i32, i32, i32
  }
  func.func @transform_2(%arg0: i32) -> (i32, i32, i32) {
    %c0_i32 = arith.constant 0 : i32
    %c0_i32_0 = arith.constant 0 : i32
    %c0_i32_1 = arith.constant 0 : i32
    return %arg0, %c0_i32, %c0_i32_0 : i32, i32, i32
  }
  func.func @transform_3(%arg0: i32) -> (i32, i32, i32) {
    %c0_i32 = arith.constant 0 : i32
    %c0_i32_0 = arith.constant 0 : i32
    %c0_i32_1 = arith.constant 0 : i32
    return %arg0, %c0_i32, %c0_i32_0 : i32, i32, i32
  }
}

</mosaic_0001>

<llo_original>
// kernel: end2end_rv_two_models.2
$region0: #{end2end_rv_two_models.2}
  #allocation0 [shape = 'u32[]', space=smem, size = 0x4, offset = 0x4, fixed_abs, tag = 'smem constant byte address 0x4 - core index']
  #allocation1 [shape = 'u32[72,128]{1,0:T(1,128)}', space=vmem, size = 0x9000, scoped, tag = 'internal scratch']
  %s0 = inlined_call_operand.vmem [shape: f32[2,4,256], index: 0, kind: input, shape index: {}]
  %s1 = inlined_call_operand.vmem [shape: bf16[64,4], index: 1, kind: input, shape index: {}]
  %s2 = inlined_call_operand.vmem [shape: f32[64,1], index: 2, kind: input, shape index: {}]
  %s3 = inlined_call_operand.vmem [shape: bf16[32,64], index: 3, kind: input, shape index: {}]
  %s4 = inlined_call_operand.vmem [shape: f32[32,1], index: 4, kind: input, shape index: {}]
  %s5 = inlined_call_operand.hbm [shape: f32[32,1], index: 5, kind: input, shape index: {}]
  %s6 = inlined_call_operand.hbm [shape: f32[32,1], index: 6, kind: input, shape index: {}]
  %s7 = inlined_call_operand.vmem [shape: f32[2,4,512], index: 7, kind: output, shape index: {0}]
  %s8 = inlined_call_operand.vmem [shape: f32[2,1,512], index: 8, kind: output, shape index: {1}]
  %s9 = inlined_call_operand.vmem [shape: s32[2,1,512], index: 9, kind: output, shape index: {2}]
  %10 = xla_tuple %s7, %s8, %s9
  %s11 = sld [smem:[#allocation0]]
  $region85: #{end2end_rv_two_models.2} parent=0
    _
  %s13 = ssub.s32 1, %s11
  %s14 = scalar_select 0, %s13, %s11
  $region1: #{end2end_rv_two_models.2} parent=0
    #allocation2 [shape = 'u8[16384]{0}', space=vmem, size = 0x4000, scoped, tag = 'input window, operand 5, single buffered']
    #allocation3 [shape = 's32[2]{0}', space=sflag, size = 0x8, scoped, tag = 'scoped memory for end2end_rv_two_models.2']
    #allocation4 [shape = 'u8[16384]{0}', space=vmem, size = 0x4000, scoped, tag = 'input window, operand 6, single buffered']
    #allocation5 [shape = 's32[1]{0}', space=sflag, size = 0x4, scoped, tag = 'scoped memory for end2end_rv_two_models.2']
    %15 = vsyncpa [#allocation3], 0
    %16 = vsyncpa [#allocation5], 0
    loop: start=0, step=1, limit=4
    $region2: #{end2end_rv_two_models.2} parent=1 // loop_pre_header
      _
    $region3: #{end2end_rv_two_models.2} parent=1 // loop_header
      %s18 = sphi 0, %s22
      %p19 = scmp.ge.s32.totalorder %s18, 4
      %s28 = sphi 0, %s30
      %s31 = sphi 0, %s28
      %s32 = sphi 0, %s31
      %s48 = sphi 0, %s32
      %s52 = sphi 0, %s52
      %s54 = sphi 0, %s52
      %s55 = sphi 0, %s54
      %s69 = sphi 0, %s55
      %s73 = sphi 0, %s73
      %s75 = sphi 0, %s73
      %s76 = sphi 0, %s75
      %s90 = sphi 0, %s76
      %s94 = sphi 0, %s94
      %s96 = sphi 0, %s94
      %s97 = sphi 0, %s96
      %s111 = sphi 0, %s97
      %s115 = sphi 0, %s115
      %s117 = sphi 0, %s115
      %s118 = sphi 0, %s117
      %s132 = sphi 0, %s118
      %s136 = sphi 0, %s136
      %s138 = sphi 0, %s136
      %s139 = sphi 0, %s138
      %s153 = sphi 0, %s139
      %s157 = sphi 0, %s157
      %s159 = sphi 0, %s157
      %s160 = sphi 0, %s159
      %s174 = sphi 0, %s160
      %s180 = sphi 0, %s182
      %s183 = sphi 0, %s180
      %s184 = sphi 0, %s183
      %s200 = sphi 0, %s184
      %s206 = sphi 0, %s208
      %s209 = sphi 0, %s206
      %s210 = sphi 0, %s209
      %s226 = sphi 0, %s210
      %s232 = sphi 0, %s234
      %s235 = sphi 0, %s232
      %s236 = sphi 0, %s235
      %s252 = sphi 0, %s236
    $region4: #{end2end_rv_two_models.2} parent=1 // loop_header_branch
      %21 = sbr.rel (%p19) target = $region8
    $region5: #{end2end_rv_two_models.2} parent=1 // loop_body
      %s23 = ssub.s32 %s18, 1
      %s24 = ssub.s32 %s18, 2
      %s25 = sadd.s32 %s18, 1
      %s26 = ssub.s32 %s18, %s25
      %p27 = scmp.eq.s32.totalorder %s26, 0
      %s29 = sadd.s32 %s28, 1
      %s30 = scalar_select %p27, %s28, %s29
      %p33 = pneg %p27
      %p34 = scmp.eq.s32.totalorder %s18, 1
      %p35 = por %p33, %p34
      %p36 = scmp.ne.s32.totalorder %s28, %s31
      %p37 = scmp.eq.s32.totalorder %s18, 0
      %p38 = por %p36, %p37
      %p39 = scmp.ne.s32.totalorder %s28, %s31
      %p40 = scmp.eq.s32.totalorder %s23, 1
      %p41 = por %p39, %p40
      %p42 = scmp.ne.s32.totalorder %s31, %s32
      %p43 = scmp.eq.s32.totalorder %s23, 0
      %p44 = por %p42, %p43
      %p45 = scmp.ne.s32.totalorder %s31, %s32
      %p46 = scmp.eq.s32.totalorder %s24, 1
      %p47 = por %p45, %p46
      %p49 = scmp.ne.s32.totalorder %s32, %s48
      %p50 = scmp.eq.s32.totalorder %s24, 0
      %p51 = por %p49, %p50
      %s53 = sadd.s32 %s52, 1
      %p56 = scmp.eq.s32.totalorder %s18, 1
      %p57 = scmp.ne.s32.totalorder %s52, %s54
      %p58 = scmp.eq.s32.totalorder %s18, 0
      %p59 = por %p57, %p58
      %p60 = scmp.ne.s32.totalorder %s52, %s54
      %p61 = scmp.eq.s32.totalorder %s23, 1
      %p62 = por %p60, %p61
      %p63 = scmp.ne.s32.totalorder %s54, %s55
      %p64 = scmp.eq.s32.totalorder %s23, 0
      %p65 = por %p63, %p64
      %p66 = scmp.ne.s32.totalorder %s54, %s55
      %p67 = scmp.eq.s32.totalorder %s24, 1
      %p68 = por %p66, %p67
      %p70 = scmp.ne.s32.totalorder %s55, %s69
      %p71 = scmp.eq.s32.totalorder %s24, 0
      %p72 = por %p70, %p71
      %s74 = sadd.s32 %s73, 1
      %p77 = scmp.eq.s32.totalorder %s18, 1
      %p78 = scmp.ne.s32.totalorder %s73, %s75
      %p79 = scmp.eq.s32.totalorder %s18, 0
      %p80 = por %p78, %p79
      %p81 = scmp.ne.s32.totalorder %s73, %s75
      %p82 = scmp.eq.s32.totalorder %s23, 1
      %p83 = por %p81, %p82
      %p84 = scmp.ne.s32.totalorder %s75, %s76
      %p85 = scmp.eq.s32.totalorder %s23, 0
      %p86 = por %p84, %p85
      %p87 = scmp.ne.s32.totalorder %s75, %s76
      %p88 = scmp.eq.s32.totalorder %s24, 1
      %p89 = por %p87, %p88
      %p91 = scmp.ne.s32.totalorder %s76, %s90
      %p92 = scmp.eq.s32.totalorder %s24, 0
      %p93 = por %p91, %p92
      %s95 = sadd.s32 %s94, 1
      %p98 = scmp.eq.s32.totalorder %s18, 1
      %p99 = scmp.ne.s32.totalorder %s94, %s96
      %p100 = scmp.eq.s32.totalorder %s18, 0
      %p101 = por %p99, %p100
      %p102 = scmp.ne.s32.totalorder %s94, %s96
      %p103 = scmp.eq.s32.totalorder %s23, 1
      %p104 = por %p102, %p103
      %p105 = scmp.ne.s32.totalorder %s96, %s97
      %p106 = scmp.eq.s32.totalorder %s23, 0
      %p107 = por %p105, %p106
      %p108 = scmp.ne.s32.totalorder %s96, %s97
      %p109 = scmp.eq.s32.totalorder %s24, 1
      %p110 = por %p108, %p109
      %p112 = scmp.ne.s32.totalorder %s97, %s111
      %p113 = scmp.eq.s32.totalorder %s24, 0
      %p114 = por %p112, %p113
      %s116 = sadd.s32 %s115, 1
      %p119 = scmp.eq.s32.totalorder %s18, 1
      %p120 = scmp.ne.s32.totalorder %s115, %s117
      %p121 = scmp.eq.s32.totalorder %s18, 0
      %p122 = por %p120, %p121
      %p123 = scmp.ne.s32.totalorder %s115, %s117
      %p124 = scmp.eq.s32.totalorder %s23, 1
      %p125 = por %p123, %p124
      %p126 = scmp.ne.s32.totalorder %s117, %s118
      %p127 = scmp.eq.s32.totalorder %s23, 0
      %p128 = por %p126, %p127
      %p129 = scmp.ne.s32.totalorder %s117, %s118
      %p130 = scmp.eq.s32.totalorder %s24, 1
      %p131 = por %p129, %p130
      %p133 = scmp.ne.s32.totalorder %s118, %s132
      %p134 = scmp.eq.s32.totalorder %s24, 0
      %p135 = por %p133, %p134
      %s137 = sadd.s32 %s136, 1
      %p140 = scmp.eq.s32.totalorder %s18, 1
      %p141 = scmp.ne.s32.totalorder %s136, %s138
      %p142 = scmp.eq.s32.totalorder %s18, 0
      %p143 = por %p141, %p142
      %p144 = scmp.ne.s32.totalorder %s136, %s138
      %p145 = scmp.eq.s32.totalorder %s23, 1
      %p146 = por %p144, %p145
      %p147 = scmp.ne.s32.totalorder %s138, %s139
      %p148 = scmp.eq.s32.totalorder %s23, 0
      %p149 = por %p147, %p148
      %p150 = scmp.ne.s32.totalorder %s138, %s139
      %p151 = scmp.eq.s32.totalorder %s24, 1
      %p152 = por %p150, %p151
      %p154 = scmp.ne.s32.totalorder %s139, %s153
      %p155 = scmp.eq.s32.totalorder %s24, 0
      %p156 = por %p154, %p155
      %s158 = sadd.s32 %s157, 1
      %p161 = scmp.eq.s32.totalorder %s18, 1
      %p162 = scmp.ne.s32.totalorder %s157, %s159
      %p163 = scmp.eq.s32.totalorder %s18, 0
      %p164 = por %p162, %p163
      %p165 = scmp.ne.s32.totalorder %s157, %s159
      %p166 = scmp.eq.s32.totalorder %s23, 1
      %p167 = por %p165, %p166
      %p168 = scmp.ne.s32.totalorder %s159, %s160
      %p169 = scmp.eq.s32.totalorder %s23, 0
      %p170 = por %p168, %p169
      %p171 = scmp.ne.s32.totalorder %s159, %s160
      %p172 = scmp.eq.s32.totalorder %s24, 1
      %p173 = por %p171, %p172
      %p175 = scmp.ne.s32.totalorder %s160, %s174
      %p176 = scmp.eq.s32.totalorder %s24, 0
      %p177 = por %p175, %p176
      %s178 = ssub.s32 %s18, %s25
      %p179 = scmp.eq.s32.totalorder %s178, 0
      %s181 = sadd.s32 %s180, 1
      %s182 = scalar_select %p179, %s180, %s181
      %p185 = pneg %p179
      %p186 = scmp.eq.s32.totalorder %s18, 1
      %p187 = por %p185, %p186
      %p188 = scmp.ne.s32.totalorder %s180, %s183
      %p189 = scmp.eq.s32.totalorder %s18, 0
      %p190 = por %p188, %p189
      %p191 = scmp.ne.s32.totalorder %s180, %s183
      %p192 = scmp.eq.s32.totalorder %s23, 1
      %p193 = por %p191, %p192
      %p194 = scmp.ne.s32.totalorder %s183, %s184
      %p195 = scmp.eq.s32.totalorder %s23, 0
      %p196 = por %p194, %p195
      %p197 = scmp.ne.s32.totalorder %s183, %s184
      %p198 = scmp.eq.s32.totalorder %s24, 1
      %p199 = por %p197, %p198
      %p201 = scmp.ne.s32.totalorder %s184, %s200
      %p202 = scmp.eq.s32.totalorder %s24, 0
      %p203 = por %p201, %p202
      %s204 = ssub.s32 %s18, %s25
      %p205 = scmp.eq.s32.totalorder %s204, 0
      %s207 = sadd.s32 %s206, 1
      %s208 = scalar_select %p205, %s206, %s207
      %p211 = pneg %p205
      %p212 = scmp.eq.s32.totalorder %s18, 1
      %p213 = por %p211, %p212
      %p214 = scmp.ne.s32.totalorder %s206, %s209
      %p215 = scmp.eq.s32.totalorder %s18, 0
      %p216 = por %p214, %p215
      %p217 = scmp.ne.s32.totalorder %s206, %s209
      %p218 = scmp.eq.s32.totalorder %s23, 1
      %p219 = por %p217, %p218
      %p220 = scmp.ne.s32.totalorder %s209, %s210
      %p221 = scmp.eq.s32.totalorder %s23, 0
      %p222 = por %p220, %p221
      %p223 = scmp.ne.s32.totalorder %s209, %s210
      %p224 = scmp.eq.s32.totalorder %s24, 1
      %p225 = por %p223, %p224
      %p227 = scmp.ne.s32.totalorder %s210, %s226
      %p228 = scmp.eq.s32.totalorder %s24, 0
      %p229 = por %p227, %p228
      %s230 = ssub.s32 %s18, %s25
      %p231 = scmp.eq.s32.totalorder %s230, 0
      %s233 = sadd.s32 %s232, 1
      %s234 = scalar_select %p231, %s232, %s233
      %p237 = pneg %p231
      %p238 = scmp.eq.s32.totalorder %s18, 1
      %p239 = por %p237, %p238
      %p240 = scmp.ne.s32.totalorder %s232, %s235
      %p241 = scmp.eq.s32.totalorder %s18, 0
      %p242 = por %p240, %p241
      %p243 = scmp.ne.s32.totalorder %s232, %s235
      %p244 = scmp.eq.s32.totalorder %s23, 1
      %p245 = por %p243, %p244
      %p246 = scmp.ne.s32.totalorder %s235, %s236
      %p247 = scmp.eq.s32.totalorder %s23, 0
      %p248 = por %p246, %p247
      %p249 = scmp.ne.s32.totalorder %s235, %s236
      %p250 = scmp.eq.s32.totalorder %s24, 1
      %p251 = por %p249, %p250
      %p253 = scmp.ne.s32.totalorder %s236, %s252
      %p254 = scmp.eq.s32.totalorder %s24, 0
      %p255 = por %p253, %p254
      %p256 = scmp.le.s32.totalorder 1, %s18
      %p257 = scmp.lt.s32.totalorder %s18, 3
      %p258 = pnand %p256, %p257
      %p259 = pneg %p258
      // Predicated region
      $region9: #{end2end_rv_two_models.2} parent=5 // pred_check
        _
      $region10: #{end2end_rv_two_models.2} parent=5 // pred_check_branch
        %261 = sbr.rel (%p258) target = $region12
      $region11: #{end2end_rv_two_models.2} parent=5 // pred_region
        %s262 = ssub.s32 %s18, 1
        // Predicated region
        $region13: #{end2end_rv_two_models.2} parent=11 // pred_check
          %p263 = pneg %p65
        $region14: #{end2end_rv_two_models.2} parent=11 // pred_check_branch
          %265 = sbr.rel (%p263) target = $region16
        $region15: #{end2end_rv_two_models.2} parent=11 // pred_region
          _
        $region16: #{end2end_rv_two_models.2} parent=11 // pred_fallthru
          _
        // Predicated region
        $region17: #{end2end_rv_two_models.2} parent=11 // pred_check
          %p266 = pneg %p86
        $region18: #{end2end_rv_two_models.2} parent=11 // pred_check_branch
          %268 = sbr.rel (%p266) target = $region20
        $region19: #{end2end_rv_two_models.2} parent=11 // pred_region
          _
        $region20: #{end2end_rv_two_models.2} parent=11 // pred_fallthru
          _
        // Predicated region
        $region21: #{end2end_rv_two_models.2} parent=11 // pred_check
          %p269 = pneg %p107
        $region22: #{end2end_rv_two_models.2} parent=11 // pred_check_branch
          %271 = sbr.rel (%p269) target = $region24
        $region23: #{end2end_rv_two_models.2} parent=11 // pred_region
          _
        $region24: #{end2end_rv_two_models.2} parent=11 // pred_fallthru
          _
        // Predicated region
        $region25: #{end2end_rv_two_models.2} parent=11 // pred_check
          %p272 = pneg %p128
        $region26: #{end2end_rv_two_models.2} parent=11 // pred_check_branch
          %274 = sbr.rel (%p272) target = $region28
        $region27: #{end2end_rv_two_models.2} parent=11 // pred_region
          _
        $region28: #{end2end_rv_two_models.2} parent=11 // pred_fallthru
          _
        // Predicated region
        $region29: #{end2end_rv_two_models.2} parent=11 // pred_check
          %p275 = pneg %p149
        $region30: #{end2end_rv_two_models.2} parent=11 // pred_check_branch
          %277 = sbr.rel (%p275) target = $region32
        $region31: #{end2end_rv_two_models.2} parent=11 // pred_region
          %279 = vsyncadd [#allocation3], 0
          %s280 = sshll.u32 %s5, 4
          %s281 = int_to_ptr.hbm [resolvable:$true] %s280
          %s282 = sshll.u32 [#allocation2], 4
          %s283 = int_to_ptr.vmem [resolvable:$true] %s282
          %288 = dma.hbm_to_vmem [thread:$0]  %s281, 512, %s283, [#allocation3], 128, 128, 8
        $region32: #{end2end_rv_two_models.2} parent=11 // pred_fallthru
          _
        // Predicated region
        $region33: #{end2end_rv_two_models.2} parent=11 // pred_check
          %p289 = pneg %p170
        $region34: #{end2end_rv_two_models.2} parent=11 // pred_check_branch
          %291 = sbr.rel (%p289) target = $region36
        $region35: #{end2end_rv_two_models.2} parent=11 // pred_region
          %293 = vsyncadd [#allocation5], 0
          %s294 = sshll.u32 %s6, 4
          %s295 = int_to_ptr.hbm [resolvable:$true] %s294
          %s296 = sshll.u32 [#allocation4], 4
          %s297 = int_to_ptr.vmem [resolvable:$true] %s296
          %302 = dma.hbm_to_vmem [thread:$0]  %s295, 512, %s297, [#allocation5], 128, 128, 8
        $region36: #{end2end_rv_two_models.2} parent=11 // pred_fallthru
          _
      $region12: #{end2end_rv_two_models.2} parent=5 // pred_fallthru
        _
      %p303 = scmp.lt.s32.totalorder %s18, 2
      // Predicated region
      $region37: #{end2end_rv_two_models.2} parent=5 // pred_check
        %p304 = pneg %p303
      $region38: #{end2end_rv_two_models.2} parent=5 // pred_check_branch
        %306 = sbr.rel (%p304) target = $region40
      $region39: #{end2end_rv_two_models.2} parent=5 // pred_region
        // Predicated region
        $region41: #{end2end_rv_two_models.2} parent=39 // pred_check
          %p307 = pneg %p38
        $region42: #{end2end_rv_two_models.2} parent=39 // pred_check_branch
          %309 = sbr.rel (%p307) target = $region44
        $region43: #{end2end_rv_two_models.2} parent=39 // pred_region
          %p310 = scmp.lt.s32.totalorder %s18, 1
          %s311 = scalar_select %p310, %s18, 1
          %s312 = smul.addr %s311, 2
          %s313 = smul.addr %s312, 4
          %s314 = scalar_lea.vmem %s0, %s313
        $region44: #{end2end_rv_two_models.2} parent=39 // pred_fallthru
          _
      $region40: #{end2end_rv_two_models.2} parent=5 // pred_fallthru
        _
      %p315 = scmp.le.s32.totalorder 1, %s18
      %p316 = scmp.lt.s32.totalorder %s18, 3
      %p317 = pnand %p315, %p316
      %p318 = pneg %p317
      // Predicated region
      $region45: #{end2end_rv_two_models.2} parent=5 // pred_check
        _
      $region46: #{end2end_rv_two_models.2} parent=5 // pred_check_branch
        %320 = sbr.rel (%p317) target = $region48
      $region47: #{end2end_rv_two_models.2} parent=5 // pred_region
        %s321 = ssub.s32 %s18, 1
        // Predicated region
        $region49: #{end2end_rv_two_models.2} parent=47 // pred_check
          %p322 = pneg %p149
        $region50: #{end2end_rv_two_models.2} parent=47 // pred_check_branch
          %324 = sbr.rel (%p322) target = $region52
        $region51: #{end2end_rv_two_models.2} parent=47 // pred_region
          %326 = dma.done [#allocation3], 512
        $region52: #{end2end_rv_two_models.2} parent=47 // pred_fallthru
          _
        // Predicated region
        $region53: #{end2end_rv_two_models.2} parent=47 // pred_check
          %p327 = pneg %p170
        $region54: #{end2end_rv_two_models.2} parent=47 // pred_check_branch
          %329 = sbr.rel (%p327) target = $region56
        $region55: #{end2end_rv_two_models.2} parent=47 // pred_region
          %331 = dma.done [#allocation5], 512
        $region56: #{end2end_rv_two_models.2} parent=47 // pred_fallthru
          _
        %p332 = scmp.lt.s32.totalorder %s23, 1
        %s333 = scalar_select %p332, %s23, 1
        %s334 = smul.addr %s333, 2
        %s335 = smul.addr %s334, 4
        %s336 = scalar_lea.vmem %s0, %s335
        %p337 = pneg %p44
        %p338 = pneg %p41
        %p339 = pneg %p65
        %p340 = pneg %p62
        %p341 = pneg %p86
        %p342 = pneg %p83
        %p343 = pneg %p107
        %p344 = pneg %p104
        %p345 = pneg %p128
        %p346 = pneg %p125
        %p347 = pneg %p149
        %p348 = pneg %p146
        %p349 = pneg %p170
        %p350 = pneg %p167
        %p351 = pneg %p196
        %p352 = pneg %p193
        %p353 = scmp.lt.s32.totalorder %s23, 1
        %s354 = scalar_select %p353, %s23, 1
        %s355 = smul.addr %s354, 4
        %s356 = smul.addr %s355, 4
        %s357 = scalar_lea.vmem %s7, %s356
        %p358 = pneg %p222
        %p359 = pneg %p219
        %p360 = scmp.lt.s32.totalorder %s23, 1
        %s361 = scalar_select %p360, %s23, 1
        %s362 = smul.addr %s361, 4
        %s363 = scalar_lea.vmem %s8, %s362
        %p364 = pneg %p248
        %p365 = pneg %p245
        %p366 = scmp.lt.s32.totalorder %s23, 1
        %s367 = scalar_select %p366, %s23, 1
        %s368 = smul.addr %s367, 4
        %s369 = scalar_lea.vmem %s9, %s368
        %p370 = scmp.lt.s32.totalorder %s23, 1
        %s371 = scalar_select %p370, %s23, 1
        %s372 = smul.addr %s371, 2
        %s373 = smul.addr %s372, 4
        %s374 = scalar_lea.vmem %s0, %s373
        %p375 = scmp.lt.s32.totalorder %s23, 1
        %s376 = scalar_select %p375, %s23, 1
        %s377 = smul.addr %s376, 4
        %s378 = smul.addr %s377, 4
        %s379 = scalar_lea.vmem %s7, %s378
        %p380 = scmp.lt.s32.totalorder %s23, 1
        %s381 = scalar_select %p380, %s23, 1
        %s382 = smul.addr %s381, 4
        %s383 = scalar_lea.vmem %s8, %s382
        %p384 = scmp.lt.s32.totalorder %s23, 1
        %s385 = scalar_select %p384, %s23, 1
        %s386 = smul.addr %s385, 4
        %s387 = scalar_lea.vmem %s9, %s386
        %v389 = vld [vmem:[%s374] sm:$0xff]
        %391 = vst [vmem:[#allocation1] ss:$2 sm:$0xff] %v389
        %v392 = vld.sshfl [vmem:[#allocation1] sm:$0xff pattern:$0x75316420]
        %v393 = vld.sshfl [vmem:[#allocation1 + $0x8] sm:$0xff pattern:$0x75316420]
        %v396 = vpack.c.bf16 %v392, %v392
        %v397 = vpack.c.bf16 %v393, %v393
        %v398 = vld [vmem:[%s1] sm:$0xf]
        %v399 = vld [vmem:[%s1 + $0x4] sm:$0xf]
        %v400 = vld [vmem:[%s1 + $0x8] sm:$0xf]
        %v401 = vld [vmem:[%s1 + $0xc] sm:$0xf]
        %v402 = vld [vmem:[%s1 + $0x10] sm:$0xf]
        %v403 = vld [vmem:[%s1 + $0x14] sm:$0xf]
        %v404 = vld [vmem:[%s1 + $0x18] sm:$0xf]
        %v405 = vld [vmem:[%s1 + $0x1c] sm:$0xf]
        %v406 = vld [vmem:[%s2] sm:$0xff]
        %v407 = vld [vmem:[%s2 + $0x8] sm:$0xff]
        %v408 = vld [vmem:[%s2 + $0x10] sm:$0xff]
        %v409 = vld [vmem:[%s2 + $0x18] sm:$0xff]
        %v410 = vld [vmem:[%s2 + $0x20] sm:$0xff]
        %v411 = vld [vmem:[%s2 + $0x28] sm:$0xff]
        %v412 = vld [vmem:[%s2 + $0x30] sm:$0xff]
        %v413 = vld [vmem:[%s2 + $0x38] sm:$0xff]
        %415 = vset.pattern.permute.xlu0 0
        %416 = vperm.xlu0 %415, %v406
        %v417 = vpop.permute.xlu0 %416
        %420 = vset.pattern.permute.xlu0 0
        %421 = vperm.xlu0 %420, %v407
        %v422 = vpop.permute.xlu0 %421
        %425 = vset.pattern.permute.xlu0 0
        %426 = vperm.xlu0 %425, %v408
        %v427 = vpop.permute.xlu0 %426
        %430 = vset.pattern.permute.xlu0 0
        %431 = vperm.xlu0 %430, %v409
        %v432 = vpop.permute.xlu0 %431
        %435 = vset.pattern.permute.xlu0 0
        %436 = vperm.xlu0 %435, %v410
        %v437 = vpop.permute.xlu0 %436
        %440 = vset.pattern.permute.xlu0 0
        %441 = vperm.xlu0 %440, %v411
        %v442 = vpop.permute.xlu0 %441
        %445 = vset.pattern.permute.xlu0 0
        %446 = vperm.xlu0 %445, %v412
        %v447 = vpop.permute.xlu0 %446
        %450 = vset.pattern.permute.xlu0 0
        %451 = vperm.xlu0 %450, %v413
        %v452 = vpop.permute.xlu0 %451
        %v462 = vunpack.c.l.b16 %v398
        %v463 = vunpack.c.l.b16 %v399
        %v464 = vunpack.c.l.b16 %v400
        %v465 = vunpack.c.l.b16 %v401
        %v466 = vunpack.c.l.b16 %v402
        %v467 = vunpack.c.l.b16 %v403
        %v468 = vunpack.c.l.b16 %v404
        %v469 = vunpack.c.l.b16 %v405
        %v470 = vpack.c.b16 %v463, %v462
        %v471 = vpack.c.b16 %v465, %v464
        %v472 = vpack.c.b16 %v467, %v466
        %v473 = vpack.c.b16 %v469, %v468
        %vm474 = vcmask 31744
        %v476 = vsel %vm474, %v470, 0
        %v479 = vsel %vm474, %v471, 0
        %v482 = vsel %vm474, %v472, 0
        %v485 = vsel %vm474, %v473, 0
        %vm487 = vcmask 1041408
        %v489 = vsel %vm487, %v396, 0
        %v492 = vsel %vm487, %v397, 0
        %494 = vmatpush.bf16.msra.mxu0 0
        %495 = vmatpush.bf16.msra.mxu0 0
        %496 = vmatpush.bf16.msra.mxu0 0
        %497 = vmatpush.bf16.msra.mxu0 0
        %498 = vmatpush.bf16.msra.mxu0 0
        %499 = vmatpush.bf16.msra.mxu0 0
        %500 = vmatpush.bf16.msra.mxu0 0
        %501 = vmatpush.bf16.msra.mxu0 %v489
        %502 = vmatmul.bf16.gmra.mxu0 %v476
        %v503 = vpop.f32.mrf.mxu0
        %v504 = vadd.f32 %v417, %v503
        %v505 = vpop.f32.mrf.mxu0
        %v506 = vadd.f32 %v422, %v505
        %507 = vmatmul.bf16.gmra.mxu0 %v479
        %v508 = vpop.f32.mrf.mxu0
        %v509 = vadd.f32 %v427, %v508
        %v510 = vpop.f32.mrf.mxu0
        %v511 = vadd.f32 %v432, %v510
        %512 = vmatmul.bf16.gmra.mxu0 %v482
        %v513 = vpop.f32.mrf.mxu0
        %v514 = vadd.f32 %v437, %v513
        %v515 = vpop.f32.mrf.mxu0
        %v516 = vadd.f32 %v442, %v515
        %517 = vmatmul.bf16.gmra.mxu0 %v485
        %v518 = vpop.f32.mrf.mxu0
        %v519 = vadd.f32 %v447, %v518
        %v520 = vpop.f32.mrf.mxu0
        %v521 = vadd.f32 %v452, %v520
        %522 = vdwg.mxu0
        %523 = vmatpush.bf16.msra.mxu0 0
        %524 = vmatpush.bf16.msra.mxu0 0
        %525 = vmatpush.bf16.msra.mxu0 0
        %526 = vmatpush.bf16.msra.mxu0 0
        %527 = vmatpush.bf16.msra.mxu0 0
        %528 = vmatpush.bf16.msra.mxu0 0
        %529 = vmatpush.bf16.msra.mxu0 0
        %530 = vmatpush.bf16.msra.mxu0 %v492
        %531 = vmatmul.bf16.gmra.mxu0 %v476
        %v532 = vpop.f32.mrf.mxu0
        %v533 = vadd.f32 %v417, %v532
        %v534 = vpop.f32.mrf.mxu0
        %v535 = vadd.f32 %v422, %v534
        %536 = vmatmul.bf16.gmra.mxu0 %v479
        %v537 = vpop.f32.mrf.mxu0
        %v538 = vadd.f32 %v427, %v537
        %v539 = vpop.f32.mrf.mxu0
        %v540 = vadd.f32 %v432, %v539
        %541 = vmatmul.bf16.gmra.mxu0 %v482
        %v542 = vpop.f32.mrf.mxu0
        %v543 = vadd.f32 %v437, %v542
        %v544 = vpop.f32.mrf.mxu0
        %v545 = vadd.f32 %v442, %v544
        %546 = vmatmul.bf16.gmra.mxu0 %v485
        %v547 = vpop.f32.mrf.mxu0
        %v548 = vadd.f32 %v447, %v547
        %v549 = vpop.f32.mrf.mxu0
        %v550 = vadd.f32 %v452, %v549
        %551 = vdwg.mxu0
        %v552 = vmax.f32 %v504, 0.0
        %v553 = vmax.f32 %v533, 0.0
        %v554 = vmax.f32 %v506, 0.0
        %v555 = vmax.f32 %v535, 0.0
        %v556 = vmax.f32 %v509, 0.0
        %v557 = vmax.f32 %v538, 0.0
        %v558 = vmax.f32 %v511, 0.0
        %v559 = vmax.f32 %v540, 0.0
        %v560 = vmax.f32 %v514, 0.0
        %v561 = vmax.f32 %v543, 0.0
        %v562 = vmax.f32 %v516, 0.0
        %v563 = vmax.f32 %v545, 0.0
        %v564 = vmax.f32 %v519, 0.0
        %v565 = vmax.f32 %v548, 0.0
        %v566 = vmax.f32 %v521, 0.0
        %v567 = vmax.f32 %v550, 0.0
        %v568 = vpack.c.bf16 %v554, %v552
        %v569 = vpack.c.bf16 %v555, %v553
        %v570 = vpack.c.bf16 %v558, %v556
        %v571 = vpack.c.bf16 %v559, %v557
        %v572 = vpack.c.bf16 %v562, %v560
        %v573 = vpack.c.bf16 %v563, %v561
        %v574 = vpack.c.bf16 %v566, %v564
        %v575 = vpack.c.bf16 %v567, %v565
        %v576 = vld [vmem:[%s3] sm:$0xf]
        %v577 = vld [vmem:[%s3 + $0x4] sm:$0xf]
        %v578 = vld [vmem:[%s3 + $0x8] sm:$0xf]
        %v579 = vld [vmem:[%s3 + $0xc] sm:$0xf]
        %v580 = vld [vmem:[%s4] sm:$0xff]
        %v581 = vld [vmem:[%s4 + $0x8] sm:$0xff]
        %v582 = vld [vmem:[%s4 + $0x10] sm:$0xff]
        %v583 = vld [vmem:[%s4 + $0x18] sm:$0xff]
        %585 = vset.pattern.permute.xlu0 0
        %586 = vperm.xlu0 %585, %v580
        %v587 = vpop.permute.xlu0 %586
        %590 = vset.pattern.permute.xlu0 0
        %591 = vperm.xlu0 %590, %v581
        %v592 = vpop.permute.xlu0 %591
        %595 = vset.pattern.permute.xlu0 0
        %596 = vperm.xlu0 %595, %v582
        %v597 = vpop.permute.xlu0 %596
        %600 = vset.pattern.permute.xlu0 0
        %601 = vperm.xlu0 %600, %v583
        %v602 = vpop.permute.xlu0 %601
        %v608 = vunpack.c.l.b16 %v576
        %v609 = vunpack.c.l.b16 %v577
        %v610 = vunpack.c.l.b16 %v578
        %v611 = vunpack.c.l.b16 %v579
        %v612 = vpack.c.b16 %v609, %v608
        %v613 = vpack.c.b16 %v611, %v610
        %vm614 = vcmask 523264
        %v616 = vsel %vm614, %v612, 0
        %v619 = vsel %vm614, %v613, 0
        %621 = vmatpush.bf16.msra.mxu0 0
        %622 = vmatpush.bf16.msra.mxu0 0
        %623 = vmatpush.bf16.msra.mxu0 0
        %624 = vmatpush.bf16.msra.mxu0 0
        %625 = vmatpush.bf16.msra.mxu0 %v574
        %626 = vmatpush.bf16.msra.mxu0 %v572
        %627 = vmatpush.bf16.msra.mxu0 %v570
        %628 = vmatpush.bf16.msra.mxu0 %v568
        %629 = vmatmul.bf16.gmra.mxu0 %v616
        %v630 = vpop.f32.mrf.mxu0
        %v631 = vadd.f32 %v587, %v630
        %v632 = vpop.f32.mrf.mxu0
        %v633 = vadd.f32 %v592, %v632
        %634 = vmatmul.bf16.gmra.mxu0 %v619
        %v635 = vpop.f32.mrf.mxu0
        %v636 = vadd.f32 %v597, %v635
        %v637 = vpop.f32.mrf.mxu0
        %v638 = vadd.f32 %v602, %v637
        %639 = vdwg.mxu0
        %640 = vmatpush.bf16.msra.mxu0 0
        %641 = vmatpush.bf16.msra.mxu0 0
        %642 = vmatpush.bf16.msra.mxu0 0
        %643 = vmatpush.bf16.msra.mxu0 0
        %644 = vmatpush.bf16.msra.mxu0 %v575
        %645 = vmatpush.bf16.msra.mxu0 %v573
        %646 = vmatpush.bf16.msra.mxu0 %v571
        %647 = vmatpush.bf16.msra.mxu0 %v569
        %648 = vmatmul.bf16.gmra.mxu0 %v616
        %v649 = vpop.f32.mrf.mxu0
        %v650 = vadd.f32 %v587, %v649
        %v651 = vpop.f32.mrf.mxu0
        %v652 = vadd.f32 %v592, %v651
        %653 = vmatmul.bf16.gmra.mxu0 %v619
        %v654 = vpop.f32.mrf.mxu0
        %v655 = vadd.f32 %v597, %v654
        %v656 = vpop.f32.mrf.mxu0
        %v657 = vadd.f32 %v602, %v656
        %658 = vdwg.mxu0
        %v659 = vxor.u32 %v631, 2147483648
        %v660 = vxor.u32 %v650, 2147483648
        %v661 = vxor.u32 %v633, 2147483648
        %v662 = vxor.u32 %v652, 2147483648
        %v663 = vxor.u32 %v636, 2147483648
        %v664 = vxor.u32 %v655, 2147483648
        %v665 = vxor.u32 %v638, 2147483648
        %v666 = vxor.u32 %v657, 2147483648
        %v667 = vmul.f32 %v659, 1.442695
        %v668 = vpow.pop %v667
        %v669 = vmul.f32 %v660, 1.442695
        %v670 = vpow.pop %v669
        %v671 = vmul.f32 %v661, 1.442695
        %v672 = vpow.pop %v671
        %v673 = vmul.f32 %v662, 1.442695
        %v674 = vpow.pop %v673
        %v675 = vmul.f32 %v663, 1.442695
        %v676 = vpow.pop %v675
        %v677 = vmul.f32 %v664, 1.442695
        %v678 = vpow.pop %v677
        %v679 = vmul.f32 %v665, 1.442695
        %v680 = vpow.pop %v679
        %v681 = vmul.f32 %v666, 1.442695
        %v682 = vpow.pop %v681
        %v683 = vadd.f32 %v668, 1.0
        %v684 = vadd.f32 %v670, 1.0
        %v685 = vadd.f32 %v672, 1.0
        %v686 = vadd.f32 %v674, 1.0
        %v687 = vadd.f32 %v676, 1.0
        %v688 = vadd.f32 %v678, 1.0
        %v689 = vadd.f32 %v680, 1.0
        %v690 = vadd.f32 %v682, 1.0
        %v691 = vrcp.pop %v683
        %v692 = vmul.f32 %v683, %v691
        %v693 = vsub.f32 1.0, %v692
        %v694 = vmul.f32 %v691, %v693
        %v695 = vadd.f32 %v691, %v694
        %vm696 = vweird.f32 %v683
        %vm697 = vweird.f32 %v691
        %vm698 = vmor %vm696, %vm697
        %v699 = vsel %vm698, %v691, %v695
        %v700 = vand.u32 2147483647, %v683
        %vm701 = vcmp.eq.f32.partialorder %v700, 8.507059e+37
        %v702 = vand.u32 %v683, 2147483648
        %v703 = vor.u32 1.1754944e-38, %v702
        %v704 = vsel %vm701, %v703, %v699
        %v705 = vmul.f32 1.0, %v704
        %v706 = vrcp.pop %v684
        %v707 = vmul.f32 %v684, %v706
        %v708 = vsub.f32 1.0, %v707
        %v709 = vmul.f32 %v706, %v708
        %v710 = vadd.f32 %v706, %v709
        %vm711 = vweird.f32 %v684
        %vm712 = vweird.f32 %v706
        %vm713 = vmor %vm711, %vm712
        %v714 = vsel %vm713, %v706, %v710
        %v715 = vand.u32 2147483647, %v684
        %vm716 = vcmp.eq.f32.partialorder %v715, 8.507059e+37
        %v717 = vand.u32 %v684, 2147483648
        %v718 = vor.u32 1.1754944e-38, %v717
        %v719 = vsel %vm716, %v718, %v714
        %v720 = vmul.f32 1.0, %v719
        %v721 = vrcp.pop %v685
        %v722 = vmul.f32 %v685, %v721
        %v723 = vsub.f32 1.0, %v722
        %v724 = vmul.f32 %v721, %v723
        %v725 = vadd.f32 %v721, %v724
        %vm726 = vweird.f32 %v685
        %vm727 = vweird.f32 %v721
        %vm728 = vmor %vm726, %vm727
        %v729 = vsel %vm728, %v721, %v725
        %v730 = vand.u32 2147483647, %v685
        %vm731 = vcmp.eq.f32.partialorder %v730, 8.507059e+37
        %v732 = vand.u32 %v685, 2147483648
        %v733 = vor.u32 1.1754944e-38, %v732
        %v734 = vsel %vm731, %v733, %v729
        %v735 = vmul.f32 1.0, %v734
        %v736 = vrcp.pop %v686
        %v737 = vmul.f32 %v686, %v736
        %v738 = vsub.f32 1.0, %v737
        %v739 = vmul.f32 %v736, %v738
        %v740 = vadd.f32 %v736, %v739
        %vm741 = vweird.f32 %v686
        %vm742 = vweird.f32 %v736
        %vm743 = vmor %vm741, %vm742
        %v744 = vsel %vm743, %v736, %v740
        %v745 = vand.u32 2147483647, %v686
        %vm746 = vcmp.eq.f32.partialorder %v745, 8.507059e+37
        %v747 = vand.u32 %v686, 2147483648
        %v748 = vor.u32 1.1754944e-38, %v747
        %v749 = vsel %vm746, %v748, %v744
        %v750 = vmul.f32 1.0, %v749
        %v751 = vrcp.pop %v687
        %v752 = vmul.f32 %v687, %v751
        %v753 = vsub.f32 1.0, %v752
        %v754 = vmul.f32 %v751, %v753
        %v755 = vadd.f32 %v751, %v754
        %vm756 = vweird.f32 %v687
        %vm757 = vweird.f32 %v751
        %vm758 = vmor %vm756, %vm757
        %v759 = vsel %vm758, %v751, %v755
        %v760 = vand.u32 2147483647, %v687
        %vm761 = vcmp.eq.f32.partialorder %v760, 8.507059e+37
        %v762 = vand.u32 %v687, 2147483648
        %v763 = vor.u32 1.1754944e-38, %v762
        %v764 = vsel %vm761, %v763, %v759
        %v765 = vmul.f32 1.0, %v764
        %v766 = vrcp.pop %v688
        %v767 = vmul.f32 %v688, %v766
        %v768 = vsub.f32 1.0, %v767
        %v769 = vmul.f32 %v766, %v768
        %v770 = vadd.f32 %v766, %v769
        %vm771 = vweird.f32 %v688
        %vm772 = vweird.f32 %v766
        %vm773 = vmor %vm771, %vm772
        %v774 = vsel %vm773, %v766, %v770
        %v775 = vand.u32 2147483647, %v688
        %vm776 = vcmp.eq.f32.partialorder %v775, 8.507059e+37
        %v777 = vand.u32 %v688, 2147483648
        %v778 = vor.u32 1.1754944e-38, %v777
        %v779 = vsel %vm776, %v778, %v774
        %v780 = vmul.f32 1.0, %v779
        %v781 = vrcp.pop %v689
        %v782 = vmul.f32 %v689, %v781
        %v783 = vsub.f32 1.0, %v782
        %v784 = vmul.f32 %v781, %v783
        %v785 = vadd.f32 %v781, %v784
        %vm786 = vweird.f32 %v689
        %vm787 = vweird.f32 %v781
        %vm788 = vmor %vm786, %vm787
        %v789 = vsel %vm788, %v781, %v785
        %v790 = vand.u32 2147483647, %v689
        %vm791 = vcmp.eq.f32.partialorder %v790, 8.507059e+37
        %v792 = vand.u32 %v689, 2147483648
        %v793 = vor.u32 1.1754944e-38, %v792
        %v794 = vsel %vm791, %v793, %v789
        %v795 = vmul.f32 1.0, %v794
        %v796 = vrcp.pop %v690
        %v797 = vmul.f32 %v690, %v796
        %v798 = vsub.f32 1.0, %v797
        %v799 = vmul.f32 %v796, %v798
        %v800 = vadd.f32 %v796, %v799
        %vm801 = vweird.f32 %v690
        %vm802 = vweird.f32 %v796
        %vm803 = vmor %vm801, %vm802
        %v804 = vsel %vm803, %v796, %v800
        %v805 = vand.u32 2147483647, %v690
        %vm806 = vcmp.eq.f32.partialorder %v805, 8.507059e+37
        %v807 = vand.u32 %v690, 2147483648
        %v808 = vor.u32 1.1754944e-38, %v807
        %v809 = vsel %vm806, %v808, %v804
        %v810 = vmul.f32 1.0, %v809
        %v811 = vld [vmem:[#allocation2] sm:$0xff]
        %v812 = vld [vmem:[#allocation2 + $0x8] sm:$0xff]
        %v813 = vld [vmem:[#allocation2 + $0x10] sm:$0xff]
        %v814 = vld [vmem:[#allocation2 + $0x18] sm:$0xff]
        %816 = vset.pattern.permute.xlu0 0
        %817 = vperm.xlu0 %816, %v811
        %v818 = vpop.permute.xlu0 %817
        %821 = vset.pattern.permute.xlu0 0
        %822 = vperm.xlu0 %821, %v812
        %v823 = vpop.permute.xlu0 %822
        %826 = vset.pattern.permute.xlu0 0
        %827 = vperm.xlu0 %826, %v813
        %v828 = vpop.permute.xlu0 %827
        %831 = vset.pattern.permute.xlu0 0
        %832 = vperm.xlu0 %831, %v814
        %v833 = vpop.permute.xlu0 %832
        %v835 = vmul.f32 %v705, %v818
        %v836 = vmul.f32 %v720, %v818
        %v837 = vmul.f32 %v735, %v823
        %v838 = vmul.f32 %v750, %v823
        %v839 = vmul.f32 %v765, %v828
        %v840 = vmul.f32 %v780, %v828
        %v841 = vmul.f32 %v795, %v833
        %v842 = vmul.f32 %v810, %v833
        %v843 = vld [vmem:[#allocation4] sm:$0xff]
        %v844 = vld [vmem:[#allocation4 + $0x8] sm:$0xff]
        %v845 = vld [vmem:[#allocation4 + $0x10] sm:$0xff]
        %v846 = vld [vmem:[#allocation4 + $0x18] sm:$0xff]
        %848 = vset.pattern.permute.xlu0 0
        %849 = vperm.xlu0 %848, %v843
        %v850 = vpop.permute.xlu0 %849
        %853 = vset.pattern.permute.xlu0 0
        %854 = vperm.xlu0 %853, %v844
        %v855 = vpop.permute.xlu0 %854
        %858 = vset.pattern.permute.xlu0 0
        %859 = vperm.xlu0 %858, %v845
        %v860 = vpop.permute.xlu0 %859
        %863 = vset.pattern.permute.xlu0 0
        %864 = vperm.xlu0 %863, %v846
        %v865 = vpop.permute.xlu0 %864
        %v867 = vadd.f32 %v835, %v850
        %v868 = vadd.f32 %v836, %v850
        %v869 = vadd.f32 %v837, %v855
        %v870 = vadd.f32 %v838, %v855
        %v871 = vadd.f32 %v839, %v860
        %v872 = vadd.f32 %v840, %v860
        %v873 = vadd.f32 %v841, %v865
        %v874 = vadd.f32 %v842, %v865
        %v875 = vmul.f32 %v867, 0.5
        %v876 = vmul.f32 %v868, 0.5
        %v879 = vrot.slane %v875, 2
        %v880 = vrot.slane %v876, 2
        %v883 = vsub.f32 %v867, %v879
        %v884 = vsub.f32 %v868, %v880
        %v885 = vadd.f32 %v867, %v879
        %v886 = vadd.f32 %v868, %v880
        %v889 = vrot.slane %v885, 6
        %v890 = vrot.slane %v886, 6
        %v893 = vsel %vm487, %v883, %v889
        %v894 = vsel %vm487, %v884, %v890
        %v895 = vperm.slane %v867, 4
        %v896 = vperm.slane %v868, 4
        %v897 = vmul.f32 %v869, %v895
        %v898 = vmul.f32 %v870, %v896
        %v899 = vrot.slane %v897, 4
        %v900 = vmax.f32 %v897, %v899
        %v901 = vrot.slane %v900, 2
        %v902 = vmax.f32 %v900, %v901
        %v903 = vrot.slane %v902, 1
        %v904 = vmax.f32 %v902, %v903
        %v905 = vrot.slane %v898, 4
        %v906 = vmax.f32 %v898, %v905
        %v907 = vrot.slane %v906, 2
        %v908 = vmax.f32 %v906, %v907
        %v909 = vrot.slane %v908, 1
        %v910 = vmax.f32 %v908, %v909
        %v911 = vlaneseq
        %v912 = vshrl.u32 %v911, 7
        %vm913 = vcmp.eq.f32.partialorder %v897, %v904
        %vm914 = vcmp.eq.f32.partialorder %v898, %v910
        %v915 = vsel %vm913, %v912, 8
        %v916 = vsel %vm914, %v912, 8
        %v917 = vrot.slane %v915, 4
        %vm918 = vcmp.lt.s32.totalorder %v915, %v917
        %v919 = vsel %vm918, %v915, %v917
        %v920 = vrot.slane %v919, 2
        %vm921 = vcmp.lt.s32.totalorder %v919, %v920
        %v922 = vsel %vm921, %v919, %v920
        %v923 = vrot.slane %v922, 1
        %vm924 = vcmp.lt.s32.totalorder %v922, %v923
        %v925 = vsel %vm924, %v922, %v923
        %v926 = vrot.slane %v916, 4
        %vm927 = vcmp.lt.s32.totalorder %v916, %v926
        %v928 = vsel %vm927, %v916, %v926
        %v929 = vrot.slane %v928, 2
        %vm930 = vcmp.lt.s32.totalorder %v928, %v929
        %v931 = vsel %vm930, %v928, %v929
        %v932 = vrot.slane %v931, 1
        %vm933 = vcmp.lt.s32.totalorder %v931, %v932
        %v934 = vsel %vm933, %v931, %v932
        %v935 = vmul.f32 %v871, 0.5
        %v936 = vmul.f32 %v872, 0.5
        %v939 = vrot.slane %v935, 2
        %v940 = vrot.slane %v936, 2
        %v943 = vsub.f32 %v871, %v939
        %v944 = vsub.f32 %v872, %v940
        %v945 = vadd.f32 %v871, %v939
        %v946 = vadd.f32 %v872, %v940
        %v949 = vrot.slane %v945, 6
        %v950 = vrot.slane %v946, 6
        %v953 = vsel %vm487, %v943, %v949
        %v954 = vsel %vm487, %v944, %v950
        %v955 = vperm.slane %v871, 4
        %v956 = vperm.slane %v872, 4
        %v957 = vmul.f32 %v873, %v955
        %v958 = vmul.f32 %v874, %v956
        %v959 = vrot.slane %v957, 4
        %v960 = vmax.f32 %v957, %v959
        %v961 = vrot.slane %v960, 2
        %v962 = vmax.f32 %v960, %v961
        %v963 = vrot.slane %v962, 1
        %v964 = vmax.f32 %v962, %v963
        %v965 = vrot.slane %v958, 4
        %v966 = vmax.f32 %v958, %v965
        %v967 = vrot.slane %v966, 2
        %v968 = vmax.f32 %v966, %v967
        %v969 = vrot.slane %v968, 1
        %v970 = vmax.f32 %v968, %v969
        %vm971 = vcmp.eq.f32.partialorder %v957, %v964
        %vm972 = vcmp.eq.f32.partialorder %v958, %v970
        %v973 = vsel %vm971, %v912, 8
        %v974 = vsel %vm972, %v912, 8
        %v975 = vrot.slane %v973, 4
        %vm976 = vcmp.lt.s32.totalorder %v973, %v975
        %v977 = vsel %vm976, %v973, %v975
        %v978 = vrot.slane %v977, 2
        %vm979 = vcmp.lt.s32.totalorder %v977, %v978
        %v980 = vsel %vm979, %v977, %v978
        %v981 = vrot.slane %v980, 1
        %vm982 = vcmp.lt.s32.totalorder %v980, %v981
        %v983 = vsel %vm982, %v980, %v981
        %v984 = vrot.slane %v974, 4
        %vm985 = vcmp.lt.s32.totalorder %v974, %v984
        %v986 = vsel %vm985, %v974, %v984
        %v987 = vrot.slane %v986, 2
        %vm988 = vcmp.lt.s32.totalorder %v986, %v987
        %v989 = vsel %vm988, %v986, %v987
        %v990 = vrot.slane %v989, 1
        %vm991 = vcmp.lt.s32.totalorder %v989, %v990
        %v992 = vsel %vm991, %v989, %v990
        %v997 = vrot.slane %v894, 4
        %v998 = vrot.slane %v954, 4
        %vm999 = vcmask 1043456
        %v1000 = vsel %vm999, %v893, %v997
        %v1001 = vsel %vm999, %v953, %v998
        %1004 = vst [vmem:[%s379] sm:$0xff] %v1000
        %1005 = vst [vmem:[%s379 + $0x8] sm:$0xff] %v1001
        %v1010 = vrot.slane %v910, 7
        %v1011 = vrot.slane %v964, 6
        %v1012 = vrot.slane %v970, 5
        %vm1013 = vcmask 1040384
        %v1014 = vsel %vm1013, %v904, %v1010
        %vm1015 = vcmask 1042434
        %v1016 = vsel %vm1015, %v1011, %v1012
        %v1017 = vsel %vm487, %v1014, %v1016
        %v1019 = vlaneseq
        %vm1020 = vcmp.ge.s32.totalorder %v1019, 0
        %vm1021 = vcmp.lt.s32.totalorder %v1019, 512
        %vm1022 = vmand %vm1020, %vm1021
        %1023 = vst.msk [vmem:[%s383] sm:$0xf] %vm1022, %v1017
        %v1024 = vrot.slane %v934, 7
        %v1025 = vrot.slane %v983, 6
        %v1026 = vrot.slane %v992, 5
        %v1027 = vsel %vm1013, %v925, %v1024
        %v1028 = vsel %vm1015, %v1025, %v1026
        %v1029 = vsel %vm487, %v1027, %v1028
        %1030 = vst.msk [vmem:[%s387] sm:$0xf] %vm1022, %v1029
        %p1031 = scmp.lt.s32.totalorder %s23, 1
        %s1032 = scalar_select %p1031, %s23, 1
        %s1033 = smul.addr %s1032, 4
        %s1034 = smul.addr %s1033, 4
        %s1035 = scalar_lea.vmem %s7, %s1034
        %p1036 = scmp.lt.s32.totalorder %s23, 1
        %s1037 = scalar_select %p1036, %s23, 1
        %s1038 = smul.addr %s1037, 4
        %s1039 = scalar_lea.vmem %s8, %s1038
        %p1040 = scmp.lt.s32.totalorder %s23, 1
        %s1041 = scalar_select %p1040, %s23, 1
        %s1042 = smul.addr %s1041, 4
        %s1043 = scalar_lea.vmem %s9, %s1042
        // Predicated region
        $region57: #{end2end_rv_two_models.2} parent=47 // pred_check
          %p1044 = pneg %p193
        $region58: #{end2end_rv_two_models.2} parent=47 // pred_check_branch
          %1046 = sbr.rel (%p1044) target = $region60
        $region59: #{end2end_rv_two_models.2} parent=47 // pred_region
          _
        $region60: #{end2end_rv_two_models.2} parent=47 // pred_fallthru
          _
        // Predicated region
        $region61: #{end2end_rv_two_models.2} parent=47 // pred_check
          %p1047 = pneg %p219
        $region62: #{end2end_rv_two_models.2} parent=47 // pred_check_branch
          %1049 = sbr.rel (%p1047) target = $region64
        $region63: #{end2end_rv_two_models.2} parent=47 // pred_region
          _
        $region64: #{end2end_rv_two_models.2} parent=47 // pred_fallthru
          _
        // Predicated region
        $region65: #{end2end_rv_two_models.2} parent=47 // pred_check
          %p1050 = pneg %p245
        $region66: #{end2end_rv_two_models.2} parent=47 // pred_check_branch
          %1052 = sbr.rel (%p1050) target = $region68
        $region67: #{end2end_rv_two_models.2} parent=47 // pred_region
          _
        $region68: #{end2end_rv_two_models.2} parent=47 // pred_fallthru
          _
      $region48: #{end2end_rv_two_models.2} parent=5 // pred_fallthru
        _
      %p1053 = scmp.le.s32.totalorder 2, %s18
      // Predicated region
      $region69: #{end2end_rv_two_models.2} parent=5 // pred_check
        %p1054 = pneg %p1053
      $region70: #{end2end_rv_two_models.2} parent=5 // pred_check_branch
        %1056 = sbr.rel (%p1054) target = $region72
      $region71: #{end2end_rv_two_models.2} parent=5 // pred_region
        %s1057 = ssub.s32 %s18, 2
        // Predicated region
        $region73: #{end2end_rv_two_models.2} parent=71 // pred_check
          %p1058 = pneg %p199
        $region74: #{end2end_rv_two_models.2} parent=71 // pred_check_branch
          %1060 = sbr.rel (%p1058) target = $region76
        $region75: #{end2end_rv_two_models.2} parent=71 // pred_region
          %p1061 = scmp.lt.s32.totalorder %s24, 1
          %s1062 = scalar_select %p1061, %s24, 1
          %s1063 = smul.addr %s1062, 4
          %s1064 = smul.addr %s1063, 4
          %s1065 = scalar_lea.vmem %s7, %s1064
        $region76: #{end2end_rv_two_models.2} parent=71 // pred_fallthru
          _
        // Predicated region
        $region77: #{end2end_rv_two_models.2} parent=71 // pred_check
          %p1066 = pneg %p225
        $region78: #{end2end_rv_two_models.2} parent=71 // pred_check_branch
          %1068 = sbr.rel (%p1066) target = $region80
        $region79: #{end2end_rv_two_models.2} parent=71 // pred_region
          %p1069 = scmp.lt.s32.totalorder %s24, 1
          %s1070 = scalar_select %p1069, %s24, 1
          %s1071 = smul.addr %s1070, 4
          %s1072 = scalar_lea.vmem %s8, %s1071
        $region80: #{end2end_rv_two_models.2} parent=71 // pred_fallthru
          _
        // Predicated region
        $region81: #{end2end_rv_two_models.2} parent=71 // pred_check
          %p1073 = pneg %p251
        $region82: #{end2end_rv_two_models.2} parent=71 // pred_check_branch
          %1075 = sbr.rel (%p1073) target = $region84
        $region83: #{end2end_rv_two_models.2} parent=71 // pred_region
          %p1076 = scmp.lt.s32.totalorder %s24, 1
          %s1077 = scalar_select %p1076, %s24, 1
          %s1078 = smul.addr %s1077, 4
          %s1079 = scalar_lea.vmem %s9, %s1078
        $region84: #{end2end_rv_two_models.2} parent=71 // pred_fallthru
          _
      $region72: #{end2end_rv_two_models.2} parent=5 // pred_fallthru
        _
    $region6: #{end2end_rv_two_models.2} parent=1 // loop_footer
      %s22 = sadd.s32 1, %s18
    $region7: #{end2end_rv_two_models.2} parent=1 // loop_footer_branch
      %17 = sbr.rel target = $region3
    $region8: #{end2end_rv_two_models.2} parent=1 // loop_exit
      _
    %1080 = vsyncpa [#allocation3], 1
    %s1081 = scalar_lea.sflag [#allocation3], 1
    %1082 = vsyncpa %s1081, 1
    %1083 = vsyncpa [#allocation5], 1

// kernel: end2end_rv_two_models.3
$region0: #{end2end_rv_two_models.3}
  #allocation0 [shape = 'u32[]', space=smem, size = 0x4, offset = 0x4, fixed_abs, tag = 'smem constant byte address 0x4 - core index']
  #allocation1 [shape = 'u32[72,128]{1,0:T(1,128)}', space=vmem, size = 0x9000, scoped, tag = 'internal scratch']
  #allocation2 [shape = 'f32[512,512]{1,0:T(8,128)}', space=vmem, size = 0x100000, scoped, tag = 'scratch operand']
  %s0 = inlined_call_operand.vmem [shape: f32[2,512,4], index: 0, kind: input, shape index: {}]
  %s1 = inlined_call_operand.vmem [shape: f32[2,4,512], index: 1, kind: input, shape index: {}]
  %s2 = inlined_call_operand.vmem [shape: f32[2,1,512], index: 2, kind: input, shape index: {}]
  %s3 = inlined_call_operand.vmem [shape: f32[2,1,512], index: 3, kind: output, shape index: {}]
  %s4 = sld [smem:[#allocation0]]
  $region52: #{end2end_rv_two_models.3} parent=0
    _
  %s6 = ssub.s32 1, %s4
  %s7 = scalar_select 0, %s6, %s4
  loop: start=0, step=1, limit=4
  $region2: #{end2end_rv_two_models.3} parent=0 // loop_pre_header
    _
  $region3: #{end2end_rv_two_models.3} parent=0 // loop_header
    %s9 = sphi 0, %s13
    %p10 = scmp.ge.s32.totalorder %s9, 4
    %s19 = sphi 0, %s21
    %s22 = sphi 0, %s19
    %s23 = sphi 0, %s22
    %s39 = sphi 0, %s23
    %s45 = sphi 0, %s47
    %s48 = sphi 0, %s45
    %s49 = sphi 0, %s48
    %s65 = sphi 0, %s49
    %s71 = sphi 0, %s73
    %s74 = sphi 0, %s71
    %s75 = sphi 0, %s74
    %s91 = sphi 0, %s75
    %s97 = sphi 0, %s99
    %s100 = sphi 0, %s97
    %s101 = sphi 0, %s100
    %s117 = sphi 0, %s101
  $region4: #{end2end_rv_two_models.3} parent=0 // loop_header_branch
    %12 = sbr.rel (%p10) target = $region8
  $region5: #{end2end_rv_two_models.3} parent=0 // loop_body
    %s14 = ssub.s32 %s9, 1
    %s15 = ssub.s32 %s9, 2
    %s16 = sadd.s32 %s9, 1
    %s17 = ssub.s32 %s9, %s16
    %p18 = scmp.eq.s32.totalorder %s17, 0
    %s20 = sadd.s32 %s19, 1
    %s21 = scalar_select %p18, %s19, %s20
    %p24 = pneg %p18
    %p25 = scmp.eq.s32.totalorder %s9, 1
    %p26 = por %p24, %p25
    %p27 = scmp.ne.s32.totalorder %s19, %s22
    %p28 = scmp.eq.s32.totalorder %s9, 0
    %p29 = por %p27, %p28
    %p30 = scmp.ne.s32.totalorder %s19, %s22
    %p31 = scmp.eq.s32.totalorder %s14, 1
    %p32 = por %p30, %p31
    %p33 = scmp.ne.s32.totalorder %s22, %s23
    %p34 = scmp.eq.s32.totalorder %s14, 0
    %p35 = por %p33, %p34
    %p36 = scmp.ne.s32.totalorder %s22, %s23
    %p37 = scmp.eq.s32.totalorder %s15, 1
    %p38 = por %p36, %p37
    %p40 = scmp.ne.s32.totalorder %s23, %s39
    %p41 = scmp.eq.s32.totalorder %s15, 0
    %p42 = por %p40, %p41
    %s43 = ssub.s32 %s9, %s16
    %p44 = scmp.eq.s32.totalorder %s43, 0
    %s46 = sadd.s32 %s45, 1
    %s47 = scalar_select %p44, %s45, %s46
    %p50 = pneg %p44
    %p51 = scmp.eq.s32.totalorder %s9, 1
    %p52 = por %p50, %p51
    %p53 = scmp.ne.s32.totalorder %s45, %s48
    %p54 = scmp.eq.s32.totalorder %s9, 0
    %p55 = por %p53, %p54
    %p56 = scmp.ne.s32.totalorder %s45, %s48
    %p57 = scmp.eq.s32.totalorder %s14, 1
    %p58 = por %p56, %p57
    %p59 = scmp.ne.s32.totalorder %s48, %s49
    %p60 = scmp.eq.s32.totalorder %s14, 0
    %p61 = por %p59, %p60
    %p62 = scmp.ne.s32.totalorder %s48, %s49
    %p63 = scmp.eq.s32.totalorder %s15, 1
    %p64 = por %p62, %p63
    %p66 = scmp.ne.s32.totalorder %s49, %s65
    %p67 = scmp.eq.s32.totalorder %s15, 0
    %p68 = por %p66, %p67
    %s69 = ssub.s32 %s9, %s16
    %p70 = scmp.eq.s32.totalorder %s69, 0
    %s72 = sadd.s32 %s71, 1
    %s73 = scalar_select %p70, %s71, %s72
    %p76 = pneg %p70
    %p77 = scmp.eq.s32.totalorder %s9, 1
    %p78 = por %p76, %p77
    %p79 = scmp.ne.s32.totalorder %s71, %s74
    %p80 = scmp.eq.s32.totalorder %s9, 0
    %p81 = por %p79, %p80
    %p82 = scmp.ne.s32.totalorder %s71, %s74
    %p83 = scmp.eq.s32.totalorder %s14, 1
    %p84 = por %p82, %p83
    %p85 = scmp.ne.s32.totalorder %s74, %s75
    %p86 = scmp.eq.s32.totalorder %s14, 0
    %p87 = por %p85, %p86
    %p88 = scmp.ne.s32.totalorder %s74, %s75
    %p89 = scmp.eq.s32.totalorder %s15, 1
    %p90 = por %p88, %p89
    %p92 = scmp.ne.s32.totalorder %s75, %s91
    %p93 = scmp.eq.s32.totalorder %s15, 0
    %p94 = por %p92, %p93
    %s95 = ssub.s32 %s9, %s16
    %p96 = scmp.eq.s32.totalorder %s95, 0
    %s98 = sadd.s32 %s97, 1
    %s99 = scalar_select %p96, %s97, %s98
    %p102 = pneg %p96
    %p103 = scmp.eq.s32.totalorder %s9, 1
    %p104 = por %p102, %p103
    %p105 = scmp.ne.s32.totalorder %s97, %s100
    %p106 = scmp.eq.s32.totalorder %s9, 0
    %p107 = por %p105, %p106
    %p108 = scmp.ne.s32.totalorder %s97, %s100
    %p109 = scmp.eq.s32.totalorder %s14, 1
    %p110 = por %p108, %p109
    %p111 = scmp.ne.s32.totalorder %s100, %s101
    %p112 = scmp.eq.s32.totalorder %s14, 0
    %p113 = por %p111, %p112
    %p114 = scmp.ne.s32.totalorder %s100, %s101
    %p115 = scmp.eq.s32.totalorder %s15, 1
    %p116 = por %p114, %p115
    %p118 = scmp.ne.s32.totalorder %s101, %s117
    %p119 = scmp.eq.s32.totalorder %s15, 0
    %p120 = por %p118, %p119
    %p121 = scmp.le.s32.totalorder 1, %s9
    %p122 = scmp.lt.s32.totalorder %s9, 3
    %p123 = pnand %p121, %p122
    %p124 = pneg %p123
    // Predicated region
    $region9: #{end2end_rv_two_models.3} parent=5 // pred_check
      _
    $region10: #{end2end_rv_two_models.3} parent=5 // pred_check_branch
      %126 = sbr.rel (%p123) target = $region12
    $region11: #{end2end_rv_two_models.3} parent=5 // pred_region
      %s127 = ssub.s32 %s9, 1
    $region12: #{end2end_rv_two_models.3} parent=5 // pred_fallthru
      _
    %p128 = scmp.lt.s32.totalorder %s9, 2
    // Predicated region
    $region13: #{end2end_rv_two_models.3} parent=5 // pred_check
      %p129 = pneg %p128
    $region14: #{end2end_rv_two_models.3} parent=5 // pred_check_branch
      %131 = sbr.rel (%p129) target = $region16
    $region15: #{end2end_rv_two_models.3} parent=5 // pred_region
      // Predicated region
      $region17: #{end2end_rv_two_models.3} parent=15 // pred_check
        %p132 = pneg %p29
      $region18: #{end2end_rv_two_models.3} parent=15 // pred_check_branch
        %134 = sbr.rel (%p132) target = $region20
      $region19: #{end2end_rv_two_models.3} parent=15 // pred_region
        %p135 = scmp.lt.s32.totalorder %s9, 1
        %s136 = scalar_select %p135, %s9, 1
        %s137 = smul.addr %s136, 64
        %s138 = smul.addr %s137, 8
        %s139 = scalar_lea.vmem %s0, %s138
      $region20: #{end2end_rv_two_models.3} parent=15 // pred_fallthru
        _
      // Predicated region
      $region21: #{end2end_rv_two_models.3} parent=15 // pred_check
        %p140 = pneg %p55
      $region22: #{end2end_rv_two_models.3} parent=15 // pred_check_branch
        %142 = sbr.rel (%p140) target = $region24
      $region23: #{end2end_rv_two_models.3} parent=15 // pred_region
        %p143 = scmp.lt.s32.totalorder %s9, 1
        %s144 = scalar_select %p143, %s9, 1
        %s145 = smul.addr %s144, 4
        %s146 = smul.addr %s145, 4
        %s147 = scalar_lea.vmem %s1, %s146
      $region24: #{end2end_rv_two_models.3} parent=15 // pred_fallthru
        _
      // Predicated region
      $region25: #{end2end_rv_two_models.3} parent=15 // pred_check
        %p148 = pneg %p81
      $region26: #{end2end_rv_two_models.3} parent=15 // pred_check_branch
        %150 = sbr.rel (%p148) target = $region28
      $region27: #{end2end_rv_two_models.3} parent=15 // pred_region
        %p151 = scmp.lt.s32.totalorder %s9, 1
        %s152 = scalar_select %p151, %s9, 1
        %s153 = smul.addr %s152, 4
        %s154 = scalar_lea.vmem %s2, %s153
      $region28: #{end2end_rv_two_models.3} parent=15 // pred_fallthru
        _
    $region16: #{end2end_rv_two_models.3} parent=5 // pred_fallthru
      _
    %p155 = scmp.le.s32.totalorder 1, %s9
    %p156 = scmp.lt.s32.totalorder %s9, 3
    %p157 = pnand %p155, %p156
    %p158 = pneg %p157
    // Predicated region
    $region29: #{end2end_rv_two_models.3} parent=5 // pred_check
      _
    $region30: #{end2end_rv_two_models.3} parent=5 // pred_check_branch
      %160 = sbr.rel (%p157) target = $region32
    $region31: #{end2end_rv_two_models.3} parent=5 // pred_region
      %s161 = ssub.s32 %s9, 1
      %p162 = scmp.lt.s32.totalorder %s14, 1
      %s163 = scalar_select %p162, %s14, 1
      %s164 = smul.addr %s163, 64
      %s165 = smul.addr %s164, 8
      %s166 = scalar_lea.vmem %s0, %s165
      %p167 = pneg %p35
      %p168 = pneg %p32
      %p169 = scmp.lt.s32.totalorder %s14, 1
      %s170 = scalar_select %p169, %s14, 1
      %s171 = smul.addr %s170, 4
      %s172 = smul.addr %s171, 4
      %s173 = scalar_lea.vmem %s1, %s172
      %p174 = pneg %p61
      %p175 = pneg %p58
      %p176 = scmp.lt.s32.totalorder %s14, 1
      %s177 = scalar_select %p176, %s14, 1
      %s178 = smul.addr %s177, 4
      %s179 = scalar_lea.vmem %s2, %s178
      %p180 = pneg %p87
      %p181 = pneg %p84
      %p182 = pneg %p113
      %p183 = pneg %p110
      %p184 = scmp.lt.s32.totalorder %s14, 1
      %s185 = scalar_select %p184, %s14, 1
      %s186 = smul.addr %s185, 4
      %s187 = scalar_lea.vmem %s3, %s186
      %p188 = scmp.lt.s32.totalorder %s14, 1
      %s189 = scalar_select %p188, %s14, 1
      %s190 = smul.addr %s189, 64
      %s191 = smul.addr %s190, 8
      %s192 = scalar_lea.vmem %s0, %s191
      %p193 = scmp.lt.s32.totalorder %s14, 1
      %s194 = scalar_select %p193, %s14, 1
      %s195 = smul.addr %s194, 4
      %s196 = smul.addr %s195, 4
      %s197 = scalar_lea.vmem %s1, %s196
      %p198 = scmp.lt.s32.totalorder %s14, 1
      %s199 = scalar_select %p198, %s14, 1
      %s200 = smul.addr %s199, 4
      %s201 = scalar_lea.vmem %s2, %s200
      %p202 = scmp.lt.s32.totalorder %s14, 1
      %s203 = scalar_select %p202, %s14, 1
      %s204 = smul.addr %s203, 4
      %s205 = scalar_lea.vmem %s3, %s204
      %v206 = vld [vmem:[%s192] sm:$0xff]
      %v207 = vld [vmem:[%s192 + $0x8] sm:$0xff]
      %v208 = vld [vmem:[%s192 + $0x10] sm:$0xff]
      %v209 = vld [vmem:[%s192 + $0x18] sm:$0xff]
      %v210 = vld [vmem:[%s192 + $0x20] sm:$0xff]
      %v211 = vld [vmem:[%s192 + $0x28] sm:$0xff]
      %v212 = vld [vmem:[%s192 + $0x30] sm:$0xff]
      %v213 = vld [vmem:[%s192 + $0x38] sm:$0xff]
      %v214 = vld [vmem:[%s192 + $0x40] sm:$0xff]
      %v215 = vld [vmem:[%s192 + $0x48] sm:$0xff]
      %v216 = vld [vmem:[%s192 + $0x50] sm:$0xff]
      %v217 = vld [vmem:[%s192 + $0x58] sm:$0xff]
      %v218 = vld [vmem:[%s192 + $0x60] sm:$0xff]
      %v219 = vld [vmem:[%s192 + $0x68] sm:$0xff]
      %v220 = vld [vmem:[%s192 + $0x70] sm:$0xff]
      %v221 = vld [vmem:[%s192 + $0x78] sm:$0xff]
      %v222 = vld [vmem:[%s192 + $0x80] sm:$0xff]
      %v223 = vld [vmem:[%s192 + $0x88] sm:$0xff]
      %v224 = vld [vmem:[%s192 + $0x90] sm:$0xff]
      %v225 = vld [vmem:[%s192 + $0x98] sm:$0xff]
      %v226 = vld [vmem:[%s192 + $0xa0] sm:$0xff]
      %v227 = vld [vmem:[%s192 + $0xa8] sm:$0xff]
      %v228 = vld [vmem:[%s192 + $0xb0] sm:$0xff]
      %v229 = vld [vmem:[%s192 + $0xb8] sm:$0xff]
      %v230 = vld [vmem:[%s192 + $0xc0] sm:$0xff]
      %v231 = vld [vmem:[%s192 + $0xc8] sm:$0xff]
      %v232 = vld [vmem:[%s192 + $0xd0] sm:$0xff]
      %v233 = vld [vmem:[%s192 + $0xd8] sm:$0xff]
      %v234 = vld [vmem:[%s192 + $0xe0] sm:$0xff]
      %v235 = vld [vmem:[%s192 + $0xe8] sm:$0xff]
      %v236 = vld [vmem:[%s192 + $0xf0] sm:$0xff]
      %v237 = vld [vmem:[%s192 + $0xf8] sm:$0xff]
      %v238 = vld [vmem:[%s192 + $0x100] sm:$0xff]
      %v239 = vld [vmem:[%s192 + $0x108] sm:$0xff]
      %v240 = vld [vmem:[%s192 + $0x110] sm:$0xff]
      %v241 = vld [vmem:[%s192 + $0x118] sm:$0xff]
      %v242 = vld [vmem:[%s192 + $0x120] sm:$0xff]
      %v243 = vld [vmem:[%s192 + $0x128] sm:$0xff]
      %v244 = vld [vmem:[%s192 + $0x130] sm:$0xff]
      %v245 = vld [vmem:[%s192 + $0x138] sm:$0xff]
      %v246 = vld [vmem:[%s192 + $0x140] sm:$0xff]
      %v247 = vld [vmem:[%s192 + $0x148] sm:$0xff]
      %v248 = vld [vmem:[%s192 + $0x150] sm:$0xff]
      %v249 = vld [vmem:[%s192 + $0x158] sm:$0xff]
      %v250 = vld [vmem:[%s192 + $0x160] sm:$0xff]
      %v251 = vld [vmem:[%s192 + $0x168] sm:$0xff]
      %v252 = vld [vmem:[%s192 + $0x170] sm:$0xff]
      %v253 = vld [vmem:[%s192 + $0x178] sm:$0xff]
      %v254 = vld [vmem:[%s192 + $0x180] sm:$0xff]
      %v255 = vld [vmem:[%s192 + $0x188] sm:$0xff]
      %v256 = vld [vmem:[%s192 + $0x190] sm:$0xff]
      %v257 = vld [vmem:[%s192 + $0x198] sm:$0xff]
      %v258 = vld [vmem:[%s192 + $0x1a0] sm:$0xff]
      %v259 = vld [vmem:[%s192 + $0x1a8] sm:$0xff]
      %v260 = vld [vmem:[%s192 + $0x1b0] sm:$0xff]
      %v261 = vld [vmem:[%s192 + $0x1b8] sm:$0xff]
      %v262 = vld [vmem:[%s192 + $0x1c0] sm:$0xff]
      %v263 = vld [vmem:[%s192 + $0x1c8] sm:$0xff]
      %v264 = vld [vmem:[%s192 + $0x1d0] sm:$0xff]
      %v265 = vld [vmem:[%s192 + $0x1d8] sm:$0xff]
      %v266 = vld [vmem:[%s192 + $0x1e0] sm:$0xff]
      %v267 = vld [vmem:[%s192 + $0x1e8] sm:$0xff]
      %v268 = vld [vmem:[%s192 + $0x1f0] sm:$0xff]
      %v269 = vld [vmem:[%s192 + $0x1f8] sm:$0xff]
      %v270 = vld [vmem:[%s197] sm:$0xff]
      %v271 = vld [vmem:[%s197 + $0x8] sm:$0xff]
      %v274 = vrot.slane %v270, 6
      %v275 = vrot.slane %v271, 6
      %v278 = vsub.f32 %v270, %v274
      %v279 = vsub.f32 %v271, %v275
      %v282 = vrot.slane %v278, 5
      %v283 = vrot.slane %v282, 4
      %v284 = vrot.slane %v279, 5
      %v285 = vrot.slane %v284, 4
      %v288 = vmul.f32 %v278, %v283
      %v289 = vmul.f32 %v279, %v285
      %291 = vset.pattern.permute.xlu0 0
      %292 = vperm.xlu0 %291, %v206
      %v293 = vpop.permute.xlu0 %292
      %296 = vset.pattern.permute.xlu0 0
      %297 = vperm.xlu0 %296, %v207
      %v298 = vpop.permute.xlu0 %297
      %301 = vset.pattern.permute.xlu0 0
      %302 = vperm.xlu0 %301, %v208
      %v303 = vpop.permute.xlu0 %302
      %306 = vset.pattern.permute.xlu0 0
      %307 = vperm.xlu0 %306, %v209
      %v308 = vpop.permute.xlu0 %307
      %311 = vset.pattern.permute.xlu0 0
      %312 = vperm.xlu0 %311, %v210
      %v313 = vpop.permute.xlu0 %312
      %316 = vset.pattern.permute.xlu0 0
      %317 = vperm.xlu0 %316, %v211
      %v318 = vpop.permute.xlu0 %317
      %321 = vset.pattern.permute.xlu0 0
      %322 = vperm.xlu0 %321, %v212
      %v323 = vpop.permute.xlu0 %322
      %326 = vset.pattern.permute.xlu0 0
      %327 = vperm.xlu0 %326, %v213
      %v328 = vpop.permute.xlu0 %327
      %331 = vset.pattern.permute.xlu0 0
      %332 = vperm.xlu0 %331, %v214
      %v333 = vpop.permute.xlu0 %332
      %336 = vset.pattern.permute.xlu0 0
      %337 = vperm.xlu0 %336, %v215
      %v338 = vpop.permute.xlu0 %337
      %341 = vset.pattern.permute.xlu0 0
      %342 = vperm.xlu0 %341, %v216
      %v343 = vpop.permute.xlu0 %342
      %346 = vset.pattern.permute.xlu0 0
      %347 = vperm.xlu0 %346, %v217
      %v348 = vpop.permute.xlu0 %347
      %351 = vset.pattern.permute.xlu0 0
      %352 = vperm.xlu0 %351, %v218
      %v353 = vpop.permute.xlu0 %352
      %356 = vset.pattern.permute.xlu0 0
      %357 = vperm.xlu0 %356, %v219
      %v358 = vpop.permute.xlu0 %357
      %361 = vset.pattern.permute.xlu0 0
      %362 = vperm.xlu0 %361, %v220
      %v363 = vpop.permute.xlu0 %362
      %366 = vset.pattern.permute.xlu0 0
      %367 = vperm.xlu0 %366, %v221
      %v368 = vpop.permute.xlu0 %367
      %v370 = vperm.slane %v270, 0
      %v371 = vperm.slane %v270, 4
      %v372 = vperm.slane %v271, 0
      %v373 = vperm.slane %v271, 4
      %v378 = vperm.slane %v370, 0
      %v379 = vperm.slane %v371, 0
      %v380 = vperm.slane %v372, 0
      %v381 = vperm.slane %v373, 0
      %v382 = vmax.f32 %v293, %v378
      %v383 = vmax.f32 %v293, %v379
      %v384 = vmax.f32 %v293, %v380
      %v385 = vmax.f32 %v293, %v381
      %v386 = vmax.f32 %v298, %v378
      %v387 = vmax.f32 %v298, %v379
      %v388 = vmax.f32 %v298, %v380
      %v389 = vmax.f32 %v298, %v381
      %v390 = vmax.f32 %v303, %v378
      %v391 = vmax.f32 %v303, %v379
      %v392 = vmax.f32 %v303, %v380
      %v393 = vmax.f32 %v303, %v381
      %v394 = vmax.f32 %v308, %v378
      %v395 = vmax.f32 %v308, %v379
      %v396 = vmax.f32 %v308, %v380
      %v397 = vmax.f32 %v308, %v381
      %v398 = vmax.f32 %v313, %v378
      %v399 = vmax.f32 %v313, %v379
      %v400 = vmax.f32 %v313, %v380
      %v401 = vmax.f32 %v313, %v381
      %v402 = vmax.f32 %v318, %v378
      %v403 = vmax.f32 %v318, %v379
      %v404 = vmax.f32 %v318, %v380
      %v405 = vmax.f32 %v318, %v381
      %v406 = vmax.f32 %v323, %v378
      %v407 = vmax.f32 %v323, %v379
      %v408 = vmax.f32 %v323, %v380
      %v409 = vmax.f32 %v323, %v381
      %v410 = vmax.f32 %v328, %v378
      %v411 = vmax.f32 %v328, %v379
      %v412 = vmax.f32 %v328, %v380
      %v413 = vmax.f32 %v328, %v381
      %v414 = vmax.f32 %v333, %v378
      %v415 = vmax.f32 %v333, %v379
      %v416 = vmax.f32 %v333, %v380
      %v417 = vmax.f32 %v333, %v381
      %v418 = vmax.f32 %v338, %v378
      %v419 = vmax.f32 %v338, %v379
      %v420 = vmax.f32 %v338, %v380
      %v421 = vmax.f32 %v338, %v381
      %v422 = vmax.f32 %v343, %v378
      %v423 = vmax.f32 %v343, %v379
      %v424 = vmax.f32 %v343, %v380
      %v425 = vmax.f32 %v343, %v381
      %v426 = vmax.f32 %v348, %v378
      %v427 = vmax.f32 %v348, %v379
      %v428 = vmax.f32 %v348, %v380
      %v429 = vmax.f32 %v348, %v381
      %v430 = vmax.f32 %v353, %v378
      %v431 = vmax.f32 %v353, %v379
      %v432 = vmax.f32 %v353, %v380
      %v433 = vmax.f32 %v353, %v381
      %v434 = vmax.f32 %v358, %v378
      %v435 = vmax.f32 %v358, %v379
      %v436 = vmax.f32 %v358, %v380
      %v437 = vmax.f32 %v358, %v381
      %v438 = vmax.f32 %v363, %v378
      %v439 = vmax.f32 %v363, %v379
      %v440 = vmax.f32 %v363, %v380
      %v441 = vmax.f32 %v363, %v381
      %v442 = vmax.f32 %v368, %v378
      %v443 = vmax.f32 %v368, %v379
      %v444 = vmax.f32 %v368, %v380
      %v445 = vmax.f32 %v368, %v381
      %446 = vset.pattern.permute.xlu0 1
      %447 = vperm.xlu0 %446, %v206
      %v448 = vpop.permute.xlu0 %447
      %450 = vset.pattern.permute.xlu0 1
      %451 = vperm.xlu0 %450, %v207
      %v452 = vpop.permute.xlu0 %451
      %454 = vset.pattern.permute.xlu0 1
      %455 = vperm.xlu0 %454, %v208
      %v456 = vpop.permute.xlu0 %455
      %458 = vset.pattern.permute.xlu0 1
      %459 = vperm.xlu0 %458, %v209
      %v460 = vpop.permute.xlu0 %459
      %462 = vset.pattern.permute.xlu0 1
      %463 = vperm.xlu0 %462, %v210
      %v464 = vpop.permute.xlu0 %463
      %466 = vset.pattern.permute.xlu0 1
      %467 = vperm.xlu0 %466, %v211
      %v468 = vpop.permute.xlu0 %467
      %470 = vset.pattern.permute.xlu0 1
      %471 = vperm.xlu0 %470, %v212
      %v472 = vpop.permute.xlu0 %471
      %474 = vset.pattern.permute.xlu0 1
      %475 = vperm.xlu0 %474, %v213
      %v476 = vpop.permute.xlu0 %475
      %478 = vset.pattern.permute.xlu0 1
      %479 = vperm.xlu0 %478, %v214
      %v480 = vpop.permute.xlu0 %479
      %482 = vset.pattern.permute.xlu0 1
      %483 = vperm.xlu0 %482, %v215
      %v484 = vpop.permute.xlu0 %483
      %486 = vset.pattern.permute.xlu0 1
      %487 = vperm.xlu0 %486, %v216
      %v488 = vpop.permute.xlu0 %487
      %490 = vset.pattern.permute.xlu0 1
      %491 = vperm.xlu0 %490, %v217
      %v492 = vpop.permute.xlu0 %491
      %494 = vset.pattern.permute.xlu0 1
      %495 = vperm.xlu0 %494, %v218
      %v496 = vpop.permute.xlu0 %495
      %498 = vset.pattern.permute.xlu0 1
      %499 = vperm.xlu0 %498, %v219
      %v500 = vpop.permute.xlu0 %499
      %502 = vset.pattern.permute.xlu0 1
      %503 = vperm.xlu0 %502, %v220
      %v504 = vpop.permute.xlu0 %503
      %506 = vset.pattern.permute.xlu0 1
      %507 = vperm.xlu0 %506, %v221
      %v508 = vpop.permute.xlu0 %507
      %v510 = vperm.slane %v270, 1
      %v511 = vperm.slane %v270, 5
      %v512 = vperm.slane %v271, 1
      %v513 = vperm.slane %v271, 5
      %v518 = vperm.slane %v510, 1
      %v519 = vperm.slane %v511, 1
      %v520 = vperm.slane %v512, 1
      %v521 = vperm.slane %v513, 1
      %v522 = vmax.f32 %v448, %v518
      %v523 = vmax.f32 %v448, %v519
      %v524 = vmax.f32 %v448, %v520
      %v525 = vmax.f32 %v448, %v521
      %v526 = vmax.f32 %v452, %v518
      %v527 = vmax.f32 %v452, %v519
      %v528 = vmax.f32 %v452, %v520
      %v529 = vmax.f32 %v452, %v521
      %v530 = vmax.f32 %v456, %v518
      %v531 = vmax.f32 %v456, %v519
      %v532 = vmax.f32 %v456, %v520
      %v533 = vmax.f32 %v456, %v521
      %v534 = vmax.f32 %v460, %v518
      %v535 = vmax.f32 %v460, %v519
      %v536 = vmax.f32 %v460, %v520
      %v537 = vmax.f32 %v460, %v521
      %v538 = vmax.f32 %v464, %v518
      %v539 = vmax.f32 %v464, %v519
      %v540 = vmax.f32 %v464, %v520
      %v541 = vmax.f32 %v464, %v521
      %v542 = vmax.f32 %v468, %v518
      %v543 = vmax.f32 %v468, %v519
      %v544 = vmax.f32 %v468, %v520
      %v545 = vmax.f32 %v468, %v521
      %v546 = vmax.f32 %v472, %v518
      %v547 = vmax.f32 %v472, %v519
      %v548 = vmax.f32 %v472, %v520
      %v549 = vmax.f32 %v472, %v521
      %v550 = vmax.f32 %v476, %v518
      %v551 = vmax.f32 %v476, %v519
      %v552 = vmax.f32 %v476, %v520
      %v553 = vmax.f32 %v476, %v521
      %v554 = vmax.f32 %v480, %v518
      %v555 = vmax.f32 %v480, %v519
      %v556 = vmax.f32 %v480, %v520
      %v557 = vmax.f32 %v480, %v521
      %v558 = vmax.f32 %v484, %v518
      %v559 = vmax.f32 %v484, %v519
      %v560 = vmax.f32 %v484, %v520
      %v561 = vmax.f32 %v484, %v521
      %v562 = vmax.f32 %v488, %v518
      %v563 = vmax.f32 %v488, %v519
      %v564 = vmax.f32 %v488, %v520
      %v565 = vmax.f32 %v488, %v521
      %v566 = vmax.f32 %v492, %v518
      %v567 = vmax.f32 %v492, %v519
      %v568 = vmax.f32 %v492, %v520
      %v569 = vmax.f32 %v492, %v521
      %v570 = vmax.f32 %v496, %v518
      %v571 = vmax.f32 %v496, %v519
      %v572 = vmax.f32 %v496, %v520
      %v573 = vmax.f32 %v496, %v521
      %v574 = vmax.f32 %v500, %v518
      %v575 = vmax.f32 %v500, %v519
      %v576 = vmax.f32 %v500, %v520
      %v577 = vmax.f32 %v500, %v521
      %v578 = vmax.f32 %v504, %v518
      %v579 = vmax.f32 %v504, %v519
      %v580 = vmax.f32 %v504, %v520
      %v581 = vmax.f32 %v504, %v521
      %v582 = vmax.f32 %v508, %v518
      %v583 = vmax.f32 %v508, %v519
      %v584 = vmax.f32 %v508, %v520
      %v585 = vmax.f32 %v508, %v521
      %586 = vset.pattern.permute.xlu0 2
      %587 = vperm.xlu0 %586, %v206
      %v588 = vpop.permute.xlu0 %587
      %590 = vset.pattern.permute.xlu0 2
      %591 = vperm.xlu0 %590, %v207
      %v592 = vpop.permute.xlu0 %591
      %594 = vset.pattern.permute.xlu0 2
      %595 = vperm.xlu0 %594, %v208
      %v596 = vpop.permute.xlu0 %595
      %598 = vset.pattern.permute.xlu0 2
      %599 = vperm.xlu0 %598, %v209
      %v600 = vpop.permute.xlu0 %599
      %602 = vset.pattern.permute.xlu0 2
      %603 = vperm.xlu0 %602, %v210
      %v604 = vpop.permute.xlu0 %603
      %606 = vset.pattern.permute.xlu0 2
      %607 = vperm.xlu0 %606, %v211
      %v608 = vpop.permute.xlu0 %607
      %610 = vset.pattern.permute.xlu0 2
      %611 = vperm.xlu0 %610, %v212
      %v612 = vpop.permute.xlu0 %611
      %614 = vset.pattern.permute.xlu0 2
      %615 = vperm.xlu0 %614, %v213
      %v616 = vpop.permute.xlu0 %615
      %618 = vset.pattern.permute.xlu0 2
      %619 = vperm.xlu0 %618, %v214
      %v620 = vpop.permute.xlu0 %619
      %622 = vset.pattern.permute.xlu0 2
      %623 = vperm.xlu0 %622, %v215
      %v624 = vpop.permute.xlu0 %623
      %626 = vset.pattern.permute.xlu0 2
      %627 = vperm.xlu0 %626, %v216
      %v628 = vpop.permute.xlu0 %627
      %630 = vset.pattern.permute.xlu0 2
      %631 = vperm.xlu0 %630, %v217
      %v632 = vpop.permute.xlu0 %631
      %634 = vset.pattern.permute.xlu0 2
      %635 = vperm.xlu0 %634, %v218
      %v636 = vpop.permute.xlu0 %635
      %638 = vset.pattern.permute.xlu0 2
      %639 = vperm.xlu0 %638, %v219
      %v640 = vpop.permute.xlu0 %639
      %642 = vset.pattern.permute.xlu0 2
      %643 = vperm.xlu0 %642, %v220
      %v644 = vpop.permute.xlu0 %643
      %646 = vset.pattern.permute.xlu0 2
      %647 = vperm.xlu0 %646, %v221
      %v648 = vpop.permute.xlu0 %647
      %v650 = vperm.slane %v270, 2
      %v651 = vperm.slane %v270, 6
      %v652 = vperm.slane %v271, 2
      %v653 = vperm.slane %v271, 6
      %v658 = vperm.slane %v650, 2
      %v659 = vperm.slane %v651, 2
      %v660 = vperm.slane %v652, 2
      %v661 = vperm.slane %v653, 2
      %v662 = vmin.f32 %v588, %v658
      %v663 = vmin.f32 %v588, %v659
      %v664 = vmin.f32 %v588, %v660
      %v665 = vmin.f32 %v588, %v661
      %v666 = vmin.f32 %v592, %v658
      %v667 = vmin.f32 %v592, %v659
      %v668 = vmin.f32 %v592, %v660
      %v669 = vmin.f32 %v592, %v661
      %v670 = vmin.f32 %v596, %v658
      %v671 = vmin.f32 %v596, %v659
      %v672 = vmin.f32 %v596, %v660
      %v673 = vmin.f32 %v596, %v661
      %v674 = vmin.f32 %v600, %v658
      %v675 = vmin.f32 %v600, %v659
      %v676 = vmin.f32 %v600, %v660
      %v677 = vmin.f32 %v600, %v661
      %v678 = vmin.f32 %v604, %v658
      %v679 = vmin.f32 %v604, %v659
      %v680 = vmin.f32 %v604, %v660
      %v681 = vmin.f32 %v604, %v661
      %v682 = vmin.f32 %v608, %v658
      %v683 = vmin.f32 %v608, %v659
      %v684 = vmin.f32 %v608, %v660
      %v685 = vmin.f32 %v608, %v661
      %v686 = vmin.f32 %v612, %v658
      %v687 = vmin.f32 %v612, %v659
      %v688 = vmin.f32 %v612, %v660
      %v689 = vmin.f32 %v612, %v661
      %v690 = vmin.f32 %v616, %v658
      %v691 = vmin.f32 %v616, %v659
      %v692 = vmin.f32 %v616, %v660
      %v693 = vmin.f32 %v616, %v661
      %v694 = vmin.f32 %v620, %v658
      %v695 = vmin.f32 %v620, %v659
      %v696 = vmin.f32 %v620, %v660
      %v697 = vmin.f32 %v620, %v661
      %v698 = vmin.f32 %v624, %v658
      %v699 = vmin.f32 %v624, %v659
      %v700 = vmin.f32 %v624, %v660
      %v701 = vmin.f32 %v624, %v661
      %v702 = vmin.f32 %v628, %v658
      %v703 = vmin.f32 %v628, %v659
      %v704 = vmin.f32 %v628, %v660
      %v705 = vmin.f32 %v628, %v661
      %v706 = vmin.f32 %v632, %v658
      %v707 = vmin.f32 %v632, %v659
      %v708 = vmin.f32 %v632, %v660
      %v709 = vmin.f32 %v632, %v661
      %v710 = vmin.f32 %v636, %v658
      %v711 = vmin.f32 %v636, %v659
      %v712 = vmin.f32 %v636, %v660
      %v713 = vmin.f32 %v636, %v661
      %v714 = vmin.f32 %v640, %v658
      %v715 = vmin.f32 %v640, %v659
      %v716 = vmin.f32 %v640, %v660
      %v717 = vmin.f32 %v640, %v661
      %v718 = vmin.f32 %v644, %v658
      %v719 = vmin.f32 %v644, %v659
      %v720 = vmin.f32 %v644, %v660
      %v721 = vmin.f32 %v644, %v661
      %v722 = vmin.f32 %v648, %v658
      %v723 = vmin.f32 %v648, %v659
      %v724 = vmin.f32 %v648, %v660
      %v725 = vmin.f32 %v648, %v661
      %726 = vset.pattern.permute.xlu0 3
      %727 = vperm.xlu0 %726, %v206
      %v728 = vpop.permute.xlu0 %727
      %730 = vset.pattern.permute.xlu0 3
      %731 = vperm.xlu0 %730, %v207
      %v732 = vpop.permute.xlu0 %731
      %734 = vset.pattern.permute.xlu0 3
      %735 = vperm.xlu0 %734, %v208
      %v736 = vpop.permute.xlu0 %735
      %738 = vset.pattern.permute.xlu0 3
      %739 = vperm.xlu0 %738, %v209
      %v740 = vpop.permute.xlu0 %739
      %742 = vset.pattern.permute.xlu0 3
      %743 = vperm.xlu0 %742, %v210
      %v744 = vpop.permute.xlu0 %743
      %746 = vset.pattern.permute.xlu0 3
      %747 = vperm.xlu0 %746, %v211
      %v748 = vpop.permute.xlu0 %747
      %750 = vset.pattern.permute.xlu0 3
      %751 = vperm.xlu0 %750, %v212
      %v752 = vpop.permute.xlu0 %751
      %754 = vset.pattern.permute.xlu0 3
      %755 = vperm.xlu0 %754, %v213
      %v756 = vpop.permute.xlu0 %755
      %758 = vset.pattern.permute.xlu0 3
      %759 = vperm.xlu0 %758, %v214
      %v760 = vpop.permute.xlu0 %759
      %762 = vset.pattern.permute.xlu0 3
      %763 = vperm.xlu0 %762, %v215
      %v764 = vpop.permute.xlu0 %763
      %766 = vset.pattern.permute.xlu0 3
      %767 = vperm.xlu0 %766, %v216
      %v768 = vpop.permute.xlu0 %767
      %770 = vset.pattern.permute.xlu0 3
      %771 = vperm.xlu0 %770, %v217
      %v772 = vpop.permute.xlu0 %771
      %774 = vset.pattern.permute.xlu0 3
      %775 = vperm.xlu0 %774, %v218
      %v776 = vpop.permute.xlu0 %775
      %778 = vset.pattern.permute.xlu0 3
      %779 = vperm.xlu0 %778, %v219
      %v780 = vpop.permute.xlu0 %779
      %782 = vset.pattern.permute.xlu0 3
      %783 = vperm.xlu0 %782, %v220
      %v784 = vpop.permute.xlu0 %783
      %786 = vset.pattern.permute.xlu0 3
      %787 = vperm.xlu0 %786, %v221
      %v788 = vpop.permute.xlu0 %787
      %v790 = vperm.slane %v270, 3
      %v791 = vperm.slane %v270, 7
      %v792 = vperm.slane %v271, 3
      %v793 = vperm.slane %v271, 7
      %v798 = vperm.slane %v790, 3
      %v799 = vperm.slane %v791, 3
      %v800 = vperm.slane %v792, 3
      %v801 = vperm.slane %v793, 3
      %v802 = vmin.f32 %v728, %v798
      %v803 = vmin.f32 %v728, %v799
      %v804 = vmin.f32 %v728, %v800
      %v805 = vmin.f32 %v728, %v801
      %v806 = vmin.f32 %v732, %v798
      %v807 = vmin.f32 %v732, %v799
      %v808 = vmin.f32 %v732, %v800
      %v809 = vmin.f32 %v732, %v801
      %v810 = vmin.f32 %v736, %v798
      %v811 = vmin.f32 %v736, %v799
      %v812 = vmin.f32 %v736, %v800
      %v813 = vmin.f32 %v736, %v801
      %v814 = vmin.f32 %v740, %v798
      %v815 = vmin.f32 %v740, %v799
      %v816 = vmin.f32 %v740, %v800
      %v817 = vmin.f32 %v740, %v801
      %v818 = vmin.f32 %v744, %v798
      %v819 = vmin.f32 %v744, %v799
      %v820 = vmin.f32 %v744, %v800
      %v821 = vmin.f32 %v744, %v801
      %v822 = vmin.f32 %v748, %v798
      %v823 = vmin.f32 %v748, %v799
      %v824 = vmin.f32 %v748, %v800
      %v825 = vmin.f32 %v748, %v801
      %v826 = vmin.f32 %v752, %v798
      %v827 = vmin.f32 %v752, %v799
      %v828 = vmin.f32 %v752, %v800
      %v829 = vmin.f32 %v752, %v801
      %v830 = vmin.f32 %v756, %v798
      %v831 = vmin.f32 %v756, %v799
      %v832 = vmin.f32 %v756, %v800
      %v833 = vmin.f32 %v756, %v801
      %v834 = vmin.f32 %v760, %v798
      %v835 = vmin.f32 %v760, %v799
      %v836 = vmin.f32 %v760, %v800
      %v837 = vmin.f32 %v760, %v801
      %v838 = vmin.f32 %v764, %v798
      %v839 = vmin.f32 %v764, %v799
      %v840 = vmin.f32 %v764, %v800
      %v841 = vmin.f32 %v764, %v801
      %v842 = vmin.f32 %v768, %v798
      %v843 = vmin.f32 %v768, %v799
      %v844 = vmin.f32 %v768, %v800
      %v845 = vmin.f32 %v768, %v801
      %v846 = vmin.f32 %v772, %v798
      %v847 = vmin.f32 %v772, %v799
      %v848 = vmin.f32 %v772, %v800
      %v849 = vmin.f32 %v772, %v801
      %v850 = vmin.f32 %v776, %v798
      %v851 = vmin.f32 %v776, %v799
      %v852 = vmin.f32 %v776, %v800
      %v853 = vmin.f32 %v776, %v801
      %v854 = vmin.f32 %v780, %v798
      %v855 = vmin.f32 %v780, %v799
      %v856 = vmin.f32 %v780, %v800
      %v857 = vmin.f32 %v780, %v801
      %v858 = vmin.f32 %v784, %v798
      %v859 = vmin.f32 %v784, %v799
      %v860 = vmin.f32 %v784, %v800
      %v861 = vmin.f32 %v784, %v801
      %v862 = vmin.f32 %v788, %v798
      %v863 = vmin.f32 %v788, %v799
      %v864 = vmin.f32 %v788, %v800
      %v865 = vmin.f32 %v788, %v801
      %v866 = vsub.f32 %v662, %v382
      %v867 = vsub.f32 %v663, %v383
      %v868 = vsub.f32 %v664, %v384
      %v869 = vsub.f32 %v665, %v385
      %v870 = vsub.f32 %v666, %v386
      %v871 = vsub.f32 %v667, %v387
      %v872 = vsub.f32 %v668, %v388
      %v873 = vsub.f32 %v669, %v389
      %v874 = vsub.f32 %v670, %v390
      %v875 = vsub.f32 %v671, %v391
      %v876 = vsub.f32 %v672, %v392
      %v877 = vsub.f32 %v673, %v393
      %v878 = vsub.f32 %v674, %v394
      %v879 = vsub.f32 %v675, %v395
      %v880 = vsub.f32 %v676, %v396
      %v881 = vsub.f32 %v677, %v397
      %v882 = vsub.f32 %v678, %v398
      %v883 = vsub.f32 %v679, %v399
      %v884 = vsub.f32 %v680, %v400
      %v885 = vsub.f32 %v681, %v401
      %v886 = vsub.f32 %v682, %v402
      %v887 = vsub.f32 %v683, %v403
      %v888 = vsub.f32 %v684, %v404
      %v889 = vsub.f32 %v685, %v405
      %v890 = vsub.f32 %v686, %v406
      %v891 = vsub.f32 %v687, %v407
      %v892 = vsub.f32 %v688, %v408
      %v893 = vsub.f32 %v689, %v409
      %v894 = vsub.f32 %v690, %v410
      %v895 = vsub.f32 %v691, %v411
      %v896 = vsub.f32 %v692, %v412
      %v897 = vsub.f32 %v693, %v413
      %v898 = vsub.f32 %v694, %v414
      %v899 = vsub.f32 %v695, %v415
      %v900 = vsub.f32 %v696, %v416
      %v901 = vsub.f32 %v697, %v417
      %v902 = vsub.f32 %v698, %v418
      %v903 = vsub.f32 %v699, %v419
      %v904 = vsub.f32 %v700, %v420
      %v905 = vsub.f32 %v701, %v421
      %v906 = vsub.f32 %v702, %v422
      %v907 = vsub.f32 %v703, %v423
      %v908 = vsub.f32 %v704, %v424
      %v909 = vsub.f32 %v705, %v425
      %v910 = vsub.f32 %v706, %v426
      %v911 = vsub.f32 %v707, %v427
      %v912 = vsub.f32 %v708, %v428
      %v913 = vsub.f32 %v709, %v429
      %v914 = vsub.f32 %v710, %v430
      %v915 = vsub.f32 %v711, %v431
      %v916 = vsub.f32 %v712, %v432
      %v917 = vsub.f32 %v713, %v433
      %v918 = vsub.f32 %v714, %v434
      %v919 = vsub.f32 %v715, %v435
      %v920 = vsub.f32 %v716, %v436
      %v921 = vsub.f32 %v717, %v437
      %v922 = vsub.f32 %v718, %v438
      %v923 = vsub.f32 %v719, %v439
      %v924 = vsub.f32 %v720, %v440
      %v925 = vsub.f32 %v721, %v441
      %v926 = vsub.f32 %v722, %v442
      %v927 = vsub.f32 %v723, %v443
      %v928 = vsub.f32 %v724, %v444
      %v929 = vsub.f32 %v725, %v445
      %v930 = vmax.f32 %v866, 0.0
      %v931 = vmax.f32 %v867, 0.0
      %v932 = vmax.f32 %v868, 0.0
      %v933 = vmax.f32 %v869, 0.0
      %v934 = vmax.f32 %v870, 0.0
      %v935 = vmax.f32 %v871, 0.0
      %v936 = vmax.f32 %v872, 0.0
      %v937 = vmax.f32 %v873, 0.0
      %v938 = vmax.f32 %v874, 0.0
      %v939 = vmax.f32 %v875, 0.0
      %v940 = vmax.f32 %v876, 0.0
      %v941 = vmax.f32 %v877, 0.0
      %v942 = vmax.f32 %v878, 0.0
      %v943 = vmax.f32 %v879, 0.0
      %v944 = vmax.f32 %v880, 0.0
      %v945 = vmax.f32 %v881, 0.0
      %v946 = vmax.f32 %v882, 0.0
      %v947 = vmax.f32 %v883, 0.0
      %v948 = vmax.f32 %v884, 0.0
      %v949 = vmax.f32 %v885, 0.0
      %v950 = vmax.f32 %v886, 0.0
      %v951 = vmax.f32 %v887, 0.0
      %v952 = vmax.f32 %v888, 0.0
      %v953 = vmax.f32 %v889, 0.0
      %v954 = vmax.f32 %v890, 0.0
      %v955 = vmax.f32 %v891, 0.0
      %v956 = vmax.f32 %v892, 0.0
      %v957 = vmax.f32 %v893, 0.0
      %v958 = vmax.f32 %v894, 0.0
      %v959 = vmax.f32 %v895, 0.0
      %v960 = vmax.f32 %v896, 0.0
      %v961 = vmax.f32 %v897, 0.0
      %v962 = vmax.f32 %v898, 0.0
      %v963 = vmax.f32 %v899, 0.0
      %v964 = vmax.f32 %v900, 0.0
      %v965 = vmax.f32 %v901, 0.0
      %v966 = vmax.f32 %v902, 0.0
      %v967 = vmax.f32 %v903, 0.0
      %v968 = vmax.f32 %v904, 0.0
      %v969 = vmax.f32 %v905, 0.0
      %v970 = vmax.f32 %v906, 0.0
      %v971 = vmax.f32 %v907, 0.0
      %v972 = vmax.f32 %v908, 0.0
      %v973 = vmax.f32 %v909, 0.0
      %v974 = vmax.f32 %v910, 0.0
      %v975 = vmax.f32 %v911, 0.0
      %v976 = vmax.f32 %v912, 0.0
      %v977 = vmax.f32 %v913, 0.0
      %v978 = vmax.f32 %v914, 0.0
      %v979 = vmax.f32 %v915, 0.0
      %v980 = vmax.f32 %v916, 0.0
      %v981 = vmax.f32 %v917, 0.0
      %v982 = vmax.f32 %v918, 0.0
      %v983 = vmax.f32 %v919, 0.0
      %v984 = vmax.f32 %v920, 0.0
      %v985 = vmax.f32 %v921, 0.0
      %v986 = vmax.f32 %v922, 0.0
      %v987 = vmax.f32 %v923, 0.0
      %v988 = vmax.f32 %v924, 0.0
      %v989 = vmax.f32 %v925, 0.0
      %v990 = vmax.f32 %v926, 0.0
      %v991 = vmax.f32 %v927, 0.0
      %v992 = vmax.f32 %v928, 0.0
      %v993 = vmax.f32 %v929, 0.0
      %v994 = vsub.f32 %v802, %v522
      %v995 = vsub.f32 %v803, %v523
      %v996 = vsub.f32 %v804, %v524
      %v997 = vsub.f32 %v805, %v525
      %v998 = vsub.f32 %v806, %v526
      %v999 = vsub.f32 %v807, %v527
      %v1000 = vsub.f32 %v808, %v528
      %v1001 = vsub.f32 %v809, %v529
      %v1002 = vsub.f32 %v810, %v530
      %v1003 = vsub.f32 %v811, %v531
      %v1004 = vsub.f32 %v812, %v532
      %v1005 = vsub.f32 %v813, %v533
      %v1006 = vsub.f32 %v814, %v534
      %v1007 = vsub.f32 %v815, %v535
      %v1008 = vsub.f32 %v816, %v536
      %v1009 = vsub.f32 %v817, %v537
      %v1010 = vsub.f32 %v818, %v538
      %v1011 = vsub.f32 %v819, %v539
      %v1012 = vsub.f32 %v820, %v540
      %v1013 = vsub.f32 %v821, %v541
      %v1014 = vsub.f32 %v822, %v542
      %v1015 = vsub.f32 %v823, %v543
      %v1016 = vsub.f32 %v824, %v544
      %v1017 = vsub.f32 %v825, %v545
      %v1018 = vsub.f32 %v826, %v546
      %v1019 = vsub.f32 %v827, %v547
      %v1020 = vsub.f32 %v828, %v548
      %v1021 = vsub.f32 %v829, %v549
      %v1022 = vsub.f32 %v830, %v550
      %v1023 = vsub.f32 %v831, %v551
      %v1024 = vsub.f32 %v832, %v552
      %v1025 = vsub.f32 %v833, %v553
      %v1026 = vsub.f32 %v834, %v554
      %v1027 = vsub.f32 %v835, %v555
      %v1028 = vsub.f32 %v836, %v556
      %v1029 = vsub.f32 %v837, %v557
      %v1030 = vsub.f32 %v838, %v558
      %v1031 = vsub.f32 %v839, %v559
      %v1032 = vsub.f32 %v840, %v560
      %v1033 = vsub.f32 %v841, %v561
      %v1034 = vsub.f32 %v842, %v562
      %v1035 = vsub.f32 %v843, %v563
      %v1036 = vsub.f32 %v844, %v564
      %v1037 = vsub.f32 %v845, %v565
      %v1038 = vsub.f32 %v846, %v566
      %v1039 = vsub.f32 %v847, %v567
      %v1040 = vsub.f32 %v848, %v568
      %v1041 = vsub.f32 %v849, %v569
      %v1042 = vsub.f32 %v850, %v570
      %v1043 = vsub.f32 %v851, %v571
      %v1044 = vsub.f32 %v852, %v572
      %v1045 = vsub.f32 %v853, %v573
      %v1046 = vsub.f32 %v854, %v574
      %v1047 = vsub.f32 %v855, %v575
      %v1048 = vsub.f32 %v856, %v576
      %v1049 = vsub.f32 %v857, %v577
      %v1050 = vsub.f32 %v858, %v578
      %v1051 = vsub.f32 %v859, %v579
      %v1052 = vsub.f32 %v860, %v580
      %v1053 = vsub.f32 %v861, %v581
      %v1054 = vsub.f32 %v862, %v582
      %v1055 = vsub.f32 %v863, %v583
      %v1056 = vsub.f32 %v864, %v584
      %v1057 = vsub.f32 %v865, %v585
      %v1058 = vmax.f32 %v994, 0.0
      %v1059 = vmax.f32 %v995, 0.0
      %v1060 = vmax.f32 %v996, 0.0
      %v1061 = vmax.f32 %v997, 0.0
      %v1062 = vmax.f32 %v998, 0.0
      %v1063 = vmax.f32 %v999, 0.0
      %v1064 = vmax.f32 %v1000, 0.0
      %v1065 = vmax.f32 %v1001, 0.0
      %v1066 = vmax.f32 %v1002, 0.0
      %v1067 = vmax.f32 %v1003, 0.0
      %v1068 = vmax.f32 %v1004, 0.0
      %v1069 = vmax.f32 %v1005, 0.0
      %v1070 = vmax.f32 %v1006, 0.0
      %v1071 = vmax.f32 %v1007, 0.0
      %v1072 = vmax.f32 %v1008, 0.0
      %v1073 = vmax.f32 %v1009, 0.0
      %v1074 = vmax.f32 %v1010, 0.0
      %v1075 = vmax.f32 %v1011, 0.0
      %v1076 = vmax.f32 %v1012, 0.0
      %v1077 = vmax.f32 %v1013, 0.0
      %v1078 = vmax.f32 %v1014, 0.0
      %v1079 = vmax.f32 %v1015, 0.0
      %v1080 = vmax.f32 %v1016, 0.0
      %v1081 = vmax.f32 %v1017, 0.0
      %v1082 = vmax.f32 %v1018, 0.0
      %v1083 = vmax.f32 %v1019, 0.0
      %v1084 = vmax.f32 %v1020, 0.0
      %v1085 = vmax.f32 %v1021, 0.0
      %v1086 = vmax.f32 %v1022, 0.0
      %v1087 = vmax.f32 %v1023, 0.0
      %v1088 = vmax.f32 %v1024, 0.0
      %v1089 = vmax.f32 %v1025, 0.0
      %v1090 = vmax.f32 %v1026, 0.0
      %v1091 = vmax.f32 %v1027, 0.0
      %v1092 = vmax.f32 %v1028, 0.0
      %v1093 = vmax.f32 %v1029, 0.0
      %v1094 = vmax.f32 %v1030, 0.0
      %v1095 = vmax.f32 %v1031, 0.0
      %v1096 = vmax.f32 %v1032, 0.0
      %v1097 = vmax.f32 %v1033, 0.0
      %v1098 = vmax.f32 %v1034, 0.0
      %v1099 = vmax.f32 %v1035, 0.0
      %v1100 = vmax.f32 %v1036, 0.0
      %v1101 = vmax.f32 %v1037, 0.0
      %v1102 = vmax.f32 %v1038, 0.0
      %v1103 = vmax.f32 %v1039, 0.0
      %v1104 = vmax.f32 %v1040, 0.0
      %v1105 = vmax.f32 %v1041, 0.0
      %v1106 = vmax.f32 %v1042, 0.0
      %v1107 = vmax.f32 %v1043, 0.0
      %v1108 = vmax.f32 %v1044, 0.0
      %v1109 = vmax.f32 %v1045, 0.0
      %v1110 = vmax.f32 %v1046, 0.0
      %v1111 = vmax.f32 %v1047, 0.0
      %v1112 = vmax.f32 %v1048, 0.0
      %v1113 = vmax.f32 %v1049, 0.0
      %v1114 = vmax.f32 %v1050, 0.0
      %v1115 = vmax.f32 %v1051, 0.0
      %v1116 = vmax.f32 %v1052, 0.0
      %v1117 = vmax.f32 %v1053, 0.0
      %v1118 = vmax.f32 %v1054, 0.0
      %v1119 = vmax.f32 %v1055, 0.0
      %v1120 = vmax.f32 %v1056, 0.0
      %v1121 = vmax.f32 %v1057, 0.0
      %v1122 = vmul.f32 %v930, %v1058
      %v1123 = vmul.f32 %v931, %v1059
      %v1124 = vmul.f32 %v932, %v1060
      %v1125 = vmul.f32 %v933, %v1061
      %v1126 = vmul.f32 %v934, %v1062
      %v1127 = vmul.f32 %v935, %v1063
      %v1128 = vmul.f32 %v936, %v1064
      %v1129 = vmul.f32 %v937, %v1065
      %v1130 = vmul.f32 %v938, %v1066
      %v1131 = vmul.f32 %v939, %v1067
      %v1132 = vmul.f32 %v940, %v1068
      %v1133 = vmul.f32 %v941, %v1069
      %v1134 = vmul.f32 %v942, %v1070
      %v1135 = vmul.f32 %v943, %v1071
      %v1136 = vmul.f32 %v944, %v1072
      %v1137 = vmul.f32 %v945, %v1073
      %v1138 = vmul.f32 %v946, %v1074
      %v1139 = vmul.f32 %v947, %v1075
      %v1140 = vmul.f32 %v948, %v1076
      %v1141 = vmul.f32 %v949, %v1077
      %v1142 = vmul.f32 %v950, %v1078
      %v1143 = vmul.f32 %v951, %v1079
      %v1144 = vmul.f32 %v952, %v1080
      %v1145 = vmul.f32 %v953, %v1081
      %v1146 = vmul.f32 %v954, %v1082
      %v1147 = vmul.f32 %v955, %v1083
      %v1148 = vmul.f32 %v956, %v1084
      %v1149 = vmul.f32 %v957, %v1085
      %v1150 = vmul.f32 %v958, %v1086
      %v1151 = vmul.f32 %v959, %v1087
      %v1152 = vmul.f32 %v960, %v1088
      %v1153 = vmul.f32 %v961, %v1089
      %v1154 = vmul.f32 %v962, %v1090
      %v1155 = vmul.f32 %v963, %v1091
      %v1156 = vmul.f32 %v964, %v1092
      %v1157 = vmul.f32 %v965, %v1093
      %v1158 = vmul.f32 %v966, %v1094
      %v1159 = vmul.f32 %v967, %v1095
      %v1160 = vmul.f32 %v968, %v1096
      %v1161 = vmul.f32 %v969, %v1097
      %v1162 = vmul.f32 %v970, %v1098
      %v1163 = vmul.f32 %v971, %v1099
      %v1164 = vmul.f32 %v972, %v1100
      %v1165 = vmul.f32 %v973, %v1101
      %v1166 = vmul.f32 %v974, %v1102
      %v1167 = vmul.f32 %v975, %v1103
      %v1168 = vmul.f32 %v976, %v1104
      %v1169 = vmul.f32 %v977, %v1105
      %v1170 = vmul.f32 %v978, %v1106
      %v1171 = vmul.f32 %v979, %v1107
      %v1172 = vmul.f32 %v980, %v1108
      %v1173 = vmul.f32 %v981, %v1109
      %v1174 = vmul.f32 %v982, %v1110
      %v1175 = vmul.f32 %v983, %v1111
      %v1176 = vmul.f32 %v984, %v1112
      %v1177 = vmul.f32 %v985, %v1113
      %v1178 = vmul.f32 %v986, %v1114
      %v1179 = vmul.f32 %v987, %v1115
      %v1180 = vmul.f32 %v988, %v1116
      %v1181 = vmul.f32 %v989, %v1117
      %v1182 = vmul.f32 %v990, %v1118
      %v1183 = vmul.f32 %v991, %v1119
      %v1184 = vmul.f32 %v992, %v1120
      %v1185 = vmul.f32 %v993, %v1121
      %1186 = vrot.lane.b32.xlu0 %v206, 2
      %v1187 = vpop.permute.xlu0 %1186
      %1188 = vrot.lane.b32.xlu0 %v207, 2
      %v1189 = vpop.permute.xlu0 %1188
      %1190 = vrot.lane.b32.xlu0 %v208, 2
      %v1191 = vpop.permute.xlu0 %1190
      %1192 = vrot.lane.b32.xlu0 %v209, 2
      %v1193 = vpop.permute.xlu0 %1192
      %1194 = vrot.lane.b32.xlu0 %v210, 2
      %v1195 = vpop.permute.xlu0 %1194
      %1196 = vrot.lane.b32.xlu0 %v211, 2
      %v1197 = vpop.permute.xlu0 %1196
      %1198 = vrot.lane.b32.xlu0 %v212, 2
      %v1199 = vpop.permute.xlu0 %1198
      %1200 = vrot.lane.b32.xlu0 %v213, 2
      %v1201 = vpop.permute.xlu0 %1200
      %1202 = vrot.lane.b32.xlu0 %v214, 2
      %v1203 = vpop.permute.xlu0 %1202
      %1204 = vrot.lane.b32.xlu0 %v215, 2
      %v1205 = vpop.permute.xlu0 %1204
      %1206 = vrot.lane.b32.xlu0 %v216, 2
      %v1207 = vpop.permute.xlu0 %1206
      %1208 = vrot.lane.b32.xlu0 %v217, 2
      %v1209 = vpop.permute.xlu0 %1208
      %1210 = vrot.lane.b32.xlu0 %v218, 2
      %v1211 = vpop.permute.xlu0 %1210
      %1212 = vrot.lane.b32.xlu0 %v219, 2
      %v1213 = vpop.permute.xlu0 %1212
      %1214 = vrot.lane.b32.xlu0 %v220, 2
      %v1215 = vpop.permute.xlu0 %1214
      %1216 = vrot.lane.b32.xlu0 %v221, 2
      %v1217 = vpop.permute.xlu0 %1216
      %v1234 = vsub.f32 %v206, %v1187
      %v1235 = vsub.f32 %v207, %v1189
      %v1236 = vsub.f32 %v208, %v1191
      %v1237 = vsub.f32 %v209, %v1193
      %v1238 = vsub.f32 %v210, %v1195
      %v1239 = vsub.f32 %v211, %v1197
      %v1240 = vsub.f32 %v212, %v1199
      %v1241 = vsub.f32 %v213, %v1201
      %v1242 = vsub.f32 %v214, %v1203
      %v1243 = vsub.f32 %v215, %v1205
      %v1244 = vsub.f32 %v216, %v1207
      %v1245 = vsub.f32 %v217, %v1209
      %v1246 = vsub.f32 %v218, %v1211
      %v1247 = vsub.f32 %v219, %v1213
      %v1248 = vsub.f32 %v220, %v1215
      %v1249 = vsub.f32 %v221, %v1217
      %1266 = vrot.lane.b32.xlu0 %v1234, 127
      %v1267 = vpop.permute.xlu0 %1266
      %1268 = vrot.lane.b32.xlu0 %v1235, 127
      %v1269 = vpop.permute.xlu0 %1268
      %1270 = vrot.lane.b32.xlu0 %v1236, 127
      %v1271 = vpop.permute.xlu0 %1270
      %1272 = vrot.lane.b32.xlu0 %v1237, 127
      %v1273 = vpop.permute.xlu0 %1272
      %1274 = vrot.lane.b32.xlu0 %v1238, 127
      %v1275 = vpop.permute.xlu0 %1274
      %1276 = vrot.lane.b32.xlu0 %v1239, 127
      %v1277 = vpop.permute.xlu0 %1276
      %1278 = vrot.lane.b32.xlu0 %v1240, 127
      %v1279 = vpop.permute.xlu0 %1278
      %1280 = vrot.lane.b32.xlu0 %v1241, 127
      %v1281 = vpop.permute.xlu0 %1280
      %1282 = vrot.lane.b32.xlu0 %v1242, 127
      %v1283 = vpop.permute.xlu0 %1282
      %1284 = vrot.lane.b32.xlu0 %v1243, 127
      %v1285 = vpop.permute.xlu0 %1284
      %1286 = vrot.lane.b32.xlu0 %v1244, 127
      %v1287 = vpop.permute.xlu0 %1286
      %1288 = vrot.lane.b32.xlu0 %v1245, 127
      %v1289 = vpop.permute.xlu0 %1288
      %1290 = vrot.lane.b32.xlu0 %v1246, 127
      %v1291 = vpop.permute.xlu0 %1290
      %1292 = vrot.lane.b32.xlu0 %v1247, 127
      %v1293 = vpop.permute.xlu0 %1292
      %1294 = vrot.lane.b32.xlu0 %v1248, 127
      %v1295 = vpop.permute.xlu0 %1294
      %1296 = vrot.lane.b32.xlu0 %v1249, 127
      %v1297 = vpop.permute.xlu0 %1296
      %v1314 = vmul.f32 %v1234, %v1267
      %v1315 = vmul.f32 %v1235, %v1269
      %v1316 = vmul.f32 %v1236, %v1271
      %v1317 = vmul.f32 %v1237, %v1273
      %v1318 = vmul.f32 %v1238, %v1275
      %v1319 = vmul.f32 %v1239, %v1277
      %v1320 = vmul.f32 %v1240, %v1279
      %v1321 = vmul.f32 %v1241, %v1281
      %v1322 = vmul.f32 %v1242, %v1283
      %v1323 = vmul.f32 %v1243, %v1285
      %v1324 = vmul.f32 %v1244, %v1287
      %v1325 = vmul.f32 %v1245, %v1289
      %v1326 = vmul.f32 %v1246, %v1291
      %v1327 = vmul.f32 %v1247, %v1293
      %v1328 = vmul.f32 %v1248, %v1295
      %v1329 = vmul.f32 %v1249, %v1297
      %1331 = vset.pattern.permute.xlu0 2
      %1332 = vperm.xlu0 %1331, %v1314
      %v1333 = vpop.permute.xlu0 %1332
      %1336 = vset.pattern.permute.xlu0 2
      %1337 = vperm.xlu0 %1336, %v1315
      %v1338 = vpop.permute.xlu0 %1337
      %1341 = vset.pattern.permute.xlu0 2
      %1342 = vperm.xlu0 %1341, %v1316
      %v1343 = vpop.permute.xlu0 %1342
      %1346 = vset.pattern.permute.xlu0 2
      %1347 = vperm.xlu0 %1346, %v1317
      %v1348 = vpop.permute.xlu0 %1347
      %1351 = vset.pattern.permute.xlu0 2
      %1352 = vperm.xlu0 %1351, %v1318
      %v1353 = vpop.permute.xlu0 %1352
      %1356 = vset.pattern.permute.xlu0 2
      %1357 = vperm.xlu0 %1356, %v1319
      %v1358 = vpop.permute.xlu0 %1357
      %1361 = vset.pattern.permute.xlu0 2
      %1362 = vperm.xlu0 %1361, %v1320
      %v1363 = vpop.permute.xlu0 %1362
      %1366 = vset.pattern.permute.xlu0 2
      %1367 = vperm.xlu0 %1366, %v1321
      %v1368 = vpop.permute.xlu0 %1367
      %1371 = vset.pattern.permute.xlu0 2
      %1372 = vperm.xlu0 %1371, %v1322
      %v1373 = vpop.permute.xlu0 %1372
      %1376 = vset.pattern.permute.xlu0 2
      %1377 = vperm.xlu0 %1376, %v1323
      %v1378 = vpop.permute.xlu0 %1377
      %1381 = vset.pattern.permute.xlu0 2
      %1382 = vperm.xlu0 %1381, %v1324
      %v1383 = vpop.permute.xlu0 %1382
      %1386 = vset.pattern.permute.xlu0 2
      %1387 = vperm.xlu0 %1386, %v1325
      %v1388 = vpop.permute.xlu0 %1387
      %1391 = vset.pattern.permute.xlu0 2
      %1392 = vperm.xlu0 %1391, %v1326
      %v1393 = vpop.permute.xlu0 %1392
      %1396 = vset.pattern.permute.xlu0 2
      %1397 = vperm.xlu0 %1396, %v1327
      %v1398 = vpop.permute.xlu0 %1397
      %1401 = vset.pattern.permute.xlu0 2
      %1402 = vperm.xlu0 %1401, %v1328
      %v1403 = vpop.permute.xlu0 %1402
      %1406 = vset.pattern.permute.xlu0 2
      %1407 = vperm.xlu0 %1406, %v1329
      %v1408 = vpop.permute.xlu0 %1407
      %v1412 = vperm.slane %v288, 2
      %v1413 = vperm.slane %v288, 6
      %v1414 = vperm.slane %v289, 2
      %v1415 = vperm.slane %v289, 6
      %v1420 = vperm.slane %v1412, 2
      %v1421 = vperm.slane %v1413, 2
      %v1422 = vperm.slane %v1414, 2
      %v1423 = vperm.slane %v1415, 2
      %v1424 = vadd.f32 %v1333, %v1420
      %v1425 = vadd.f32 %v1333, %v1421
      %v1426 = vadd.f32 %v1333, %v1422
      %v1427 = vadd.f32 %v1333, %v1423
      %v1428 = vadd.f32 %v1338, %v1420
      %v1429 = vadd.f32 %v1338, %v1421
      %v1430 = vadd.f32 %v1338, %v1422
      %v1431 = vadd.f32 %v1338, %v1423
      %v1432 = vadd.f32 %v1343, %v1420
      %v1433 = vadd.f32 %v1343, %v1421
      %v1434 = vadd.f32 %v1343, %v1422
      %v1435 = vadd.f32 %v1343, %v1423
      %v1436 = vadd.f32 %v1348, %v1420
      %v1437 = vadd.f32 %v1348, %v1421
      %v1438 = vadd.f32 %v1348, %v1422
      %v1439 = vadd.f32 %v1348, %v1423
      %v1440 = vadd.f32 %v1353, %v1420
      %v1441 = vadd.f32 %v1353, %v1421
      %v1442 = vadd.f32 %v1353, %v1422
      %v1443 = vadd.f32 %v1353, %v1423
      %v1444 = vadd.f32 %v1358, %v1420
      %v1445 = vadd.f32 %v1358, %v1421
      %v1446 = vadd.f32 %v1358, %v1422
      %v1447 = vadd.f32 %v1358, %v1423
      %v1448 = vadd.f32 %v1363, %v1420
      %v1449 = vadd.f32 %v1363, %v1421
      %v1450 = vadd.f32 %v1363, %v1422
      %v1451 = vadd.f32 %v1363, %v1423
      %v1452 = vadd.f32 %v1368, %v1420
      %v1453 = vadd.f32 %v1368, %v1421
      %v1454 = vadd.f32 %v1368, %v1422
      %v1455 = vadd.f32 %v1368, %v1423
      %v1456 = vadd.f32 %v1373, %v1420
      %v1457 = vadd.f32 %v1373, %v1421
      %v1458 = vadd.f32 %v1373, %v1422
      %v1459 = vadd.f32 %v1373, %v1423
      %v1460 = vadd.f32 %v1378, %v1420
      %v1461 = vadd.f32 %v1378, %v1421
      %v1462 = vadd.f32 %v1378, %v1422
      %v1463 = vadd.f32 %v1378, %v1423
      %v1464 = vadd.f32 %v1383, %v1420
      %v1465 = vadd.f32 %v1383, %v1421
      %v1466 = vadd.f32 %v1383, %v1422
      %v1467 = vadd.f32 %v1383, %v1423
      %v1468 = vadd.f32 %v1388, %v1420
      %v1469 = vadd.f32 %v1388, %v1421
      %v1470 = vadd.f32 %v1388, %v1422
      %v1471 = vadd.f32 %v1388, %v1423
      %v1472 = vadd.f32 %v1393, %v1420
      %v1473 = vadd.f32 %v1393, %v1421
      %v1474 = vadd.f32 %v1393, %v1422
      %v1475 = vadd.f32 %v1393, %v1423
      %v1476 = vadd.f32 %v1398, %v1420
      %v1477 = vadd.f32 %v1398, %v1421
      %v1478 = vadd.f32 %v1398, %v1422
      %v1479 = vadd.f32 %v1398, %v1423
      %v1480 = vadd.f32 %v1403, %v1420
      %v1481 = vadd.f32 %v1403, %v1421
      %v1482 = vadd.f32 %v1403, %v1422
      %v1483 = vadd.f32 %v1403, %v1423
      %v1484 = vadd.f32 %v1408, %v1420
      %v1485 = vadd.f32 %v1408, %v1421
      %v1486 = vadd.f32 %v1408, %v1422
      %v1487 = vadd.f32 %v1408, %v1423
      %v1488 = vsub.f32 %v1424, %v1122
      %v1489 = vsub.f32 %v1425, %v1123
      %v1490 = vsub.f32 %v1426, %v1124
      %v1491 = vsub.f32 %v1427, %v1125
      %v1492 = vsub.f32 %v1428, %v1126
      %v1493 = vsub.f32 %v1429, %v1127
      %v1494 = vsub.f32 %v1430, %v1128
      %v1495 = vsub.f32 %v1431, %v1129
      %v1496 = vsub.f32 %v1432, %v1130
      %v1497 = vsub.f32 %v1433, %v1131
      %v1498 = vsub.f32 %v1434, %v1132
      %v1499 = vsub.f32 %v1435, %v1133
      %v1500 = vsub.f32 %v1436, %v1134
      %v1501 = vsub.f32 %v1437, %v1135
      %v1502 = vsub.f32 %v1438, %v1136
      %v1503 = vsub.f32 %v1439, %v1137
      %v1504 = vsub.f32 %v1440, %v1138
      %v1505 = vsub.f32 %v1441, %v1139
      %v1506 = vsub.f32 %v1442, %v1140
      %v1507 = vsub.f32 %v1443, %v1141
      %v1508 = vsub.f32 %v1444, %v1142
      %v1509 = vsub.f32 %v1445, %v1143
      %v1510 = vsub.f32 %v1446, %v1144
      %v1511 = vsub.f32 %v1447, %v1145
      %v1512 = vsub.f32 %v1448, %v1146
      %v1513 = vsub.f32 %v1449, %v1147
      %v1514 = vsub.f32 %v1450, %v1148
      %v1515 = vsub.f32 %v1451, %v1149
      %v1516 = vsub.f32 %v1452, %v1150
      %v1517 = vsub.f32 %v1453, %v1151
      %v1518 = vsub.f32 %v1454, %v1152
      %v1519 = vsub.f32 %v1455, %v1153
      %v1520 = vsub.f32 %v1456, %v1154
      %v1521 = vsub.f32 %v1457, %v1155
      %v1522 = vsub.f32 %v1458, %v1156
      %v1523 = vsub.f32 %v1459, %v1157
      %v1524 = vsub.f32 %v1460, %v1158
      %v1525 = vsub.f32 %v1461, %v1159
      %v1526 = vsub.f32 %v1462, %v1160
      %v1527 = vsub.f32 %v1463, %v1161
      %v1528 = vsub.f32 %v1464, %v1162
      %v1529 = vsub.f32 %v1465, %v1163
      %v1530 = vsub.f32 %v1466, %v1164
      %v1531 = vsub.f32 %v1467, %v1165
      %v1532 = vsub.f32 %v1468, %v1166
      %v1533 = vsub.f32 %v1469, %v1167
      %v1534 = vsub.f32 %v1470, %v1168
      %v1535 = vsub.f32 %v1471, %v1169
      %v1536 = vsub.f32 %v1472, %v1170
      %v1537 = vsub.f32 %v1473, %v1171
      %v1538 = vsub.f32 %v1474, %v1172
      %v1539 = vsub.f32 %v1475, %v1173
      %v1540 = vsub.f32 %v1476, %v1174
      %v1541 = vsub.f32 %v1477, %v1175
      %v1542 = vsub.f32 %v1478, %v1176
      %v1543 = vsub.f32 %v1479, %v1177
      %v1544 = vsub.f32 %v1480, %v1178
      %v1545 = vsub.f32 %v1481, %v1179
      %v1546 = vsub.f32 %v1482, %v1180
      %v1547 = vsub.f32 %v1483, %v1181
      %v1548 = vsub.f32 %v1484, %v1182
      %v1549 = vsub.f32 %v1485, %v1183
      %v1550 = vsub.f32 %v1486, %v1184
      %v1551 = vsub.f32 %v1487, %v1185
      %v1552 = vlaneseq
      %v1553 = vshrl.u32 %v1552, 7
      %v1554 = vadd.s32 %v1553, 8
      %v1555 = vadd.s32 %v1553, 16
      %v1556 = vadd.s32 %v1553, 24
      %v1557 = vadd.s32 %v1553, 32
      %v1558 = vadd.s32 %v1553, 40
      %v1559 = vadd.s32 %v1553, 48
      %v1560 = vadd.s32 %v1553, 56
      %v1561 = vadd.s32 %v1553, 64
      %v1562 = vadd.s32 %v1553, 72
      %v1563 = vadd.s32 %v1553, 80
      %v1564 = vadd.s32 %v1553, 88
      %v1565 = vadd.s32 %v1553, 96
      %v1566 = vadd.s32 %v1553, 104
      %v1567 = vadd.s32 %v1553, 112
      %v1568 = vadd.s32 %v1553, 120
      %v1569 = vlaneseq
      %v1570 = vand.u32 %v1569, 127
      %v1571 = vadd.s32 %v1570, 128
      %v1572 = vadd.s32 %v1570, 256
      %v1573 = vadd.s32 %v1570, 384
      %v1574 = vmul.f32 %v1488, 0.45
      %v1575 = vmul.f32 %v1489, 0.45
      %v1576 = vmul.f32 %v1490, 0.45
      %v1577 = vmul.f32 %v1491, 0.45
      %v1578 = vmul.f32 %v1492, 0.45
      %v1579 = vmul.f32 %v1493, 0.45
      %v1580 = vmul.f32 %v1494, 0.45
      %v1581 = vmul.f32 %v1495, 0.45
      %v1582 = vmul.f32 %v1496, 0.45
      %v1583 = vmul.f32 %v1497, 0.45
      %v1584 = vmul.f32 %v1498, 0.45
      %v1585 = vmul.f32 %v1499, 0.45
      %v1586 = vmul.f32 %v1500, 0.45
      %v1587 = vmul.f32 %v1501, 0.45
      %v1588 = vmul.f32 %v1502, 0.45
      %v1589 = vmul.f32 %v1503, 0.45
      %v1590 = vmul.f32 %v1504, 0.45
      %v1591 = vmul.f32 %v1505, 0.45
      %v1592 = vmul.f32 %v1506, 0.45
      %v1593 = vmul.f32 %v1507, 0.45
      %v1594 = vmul.f32 %v1508, 0.45
      %v1595 = vmul.f32 %v1509, 0.45
      %v1596 = vmul.f32 %v1510, 0.45
      %v1597 = vmul.f32 %v1511, 0.45
      %v1598 = vmul.f32 %v1512, 0.45
      %v1599 = vmul.f32 %v1513, 0.45
      %v1600 = vmul.f32 %v1514, 0.45
      %v1601 = vmul.f32 %v1515, 0.45
      %v1602 = vmul.f32 %v1516, 0.45
      %v1603 = vmul.f32 %v1517, 0.45
      %v1604 = vmul.f32 %v1518, 0.45
      %v1605 = vmul.f32 %v1519, 0.45
      %v1606 = vmul.f32 %v1520, 0.45
      %v1607 = vmul.f32 %v1521, 0.45
      %v1608 = vmul.f32 %v1522, 0.45
      %v1609 = vmul.f32 %v1523, 0.45
      %v1610 = vmul.f32 %v1524, 0.45
      %v1611 = vmul.f32 %v1525, 0.45
      %v1612 = vmul.f32 %v1526, 0.45
      %v1613 = vmul.f32 %v1527, 0.45
      %v1614 = vmul.f32 %v1528, 0.45
      %v1615 = vmul.f32 %v1529, 0.45
      %v1616 = vmul.f32 %v1530, 0.45
      %v1617 = vmul.f32 %v1531, 0.45
      %v1618 = vmul.f32 %v1532, 0.45
      %v1619 = vmul.f32 %v1533, 0.45
      %v1620 = vmul.f32 %v1534, 0.45
      %v1621 = vmul.f32 %v1535, 0.45
      %v1622 = vmul.f32 %v1536, 0.45
      %v1623 = vmul.f32 %v1537, 0.45
      %v1624 = vmul.f32 %v1538, 0.45
      %v1625 = vmul.f32 %v1539, 0.45
      %v1626 = vmul.f32 %v1540, 0.45
      %v1627 = vmul.f32 %v1541, 0.45
      %v1628 = vmul.f32 %v1542, 0.45
      %v1629 = vmul.f32 %v1543, 0.45
      %v1630 = vmul.f32 %v1544, 0.45
      %v1631 = vmul.f32 %v1545, 0.45
      %v1632 = vmul.f32 %v1546, 0.45
      %v1633 = vmul.f32 %v1547, 0.45
      %v1634 = vmul.f32 %v1548, 0.45
      %v1635 = vmul.f32 %v1549, 0.45
      %v1636 = vmul.f32 %v1550, 0.45
      %v1637 = vmul.f32 %v1551, 0.45
      %vm1638 = vcmp.gt.f32.partialorder %v1122, %v1574
      %vm1639 = vcmp.gt.f32.partialorder %v1123, %v1575
      %vm1640 = vcmp.gt.f32.partialorder %v1124, %v1576
      %vm1641 = vcmp.gt.f32.partialorder %v1125, %v1577
      %vm1642 = vcmp.gt.f32.partialorder %v1126, %v1578
      %vm1643 = vcmp.gt.f32.partialorder %v1127, %v1579
      %vm1644 = vcmp.gt.f32.partialorder %v1128, %v1580
      %vm1645 = vcmp.gt.f32.partialorder %v1129, %v1581
      %vm1646 = vcmp.gt.f32.partialorder %v1130, %v1582
      %vm1647 = vcmp.gt.f32.partialorder %v1131, %v1583
      %vm1648 = vcmp.gt.f32.partialorder %v1132, %v1584
      %vm1649 = vcmp.gt.f32.partialorder %v1133, %v1585
      %vm1650 = vcmp.gt.f32.partialorder %v1134, %v1586
      %vm1651 = vcmp.gt.f32.partialorder %v1135, %v1587
      %vm1652 = vcmp.gt.f32.partialorder %v1136, %v1588
      %vm1653 = vcmp.gt.f32.partialorder %v1137, %v1589
      %vm1654 = vcmp.gt.f32.partialorder %v1138, %v1590
      %vm1655 = vcmp.gt.f32.partialorder %v1139, %v1591
      %vm1656 = vcmp.gt.f32.partialorder %v1140, %v1592
      %vm1657 = vcmp.gt.f32.partialorder %v1141, %v1593
      %vm1658 = vcmp.gt.f32.partialorder %v1142, %v1594
      %vm1659 = vcmp.gt.f32.partialorder %v1143, %v1595
      %vm1660 = vcmp.gt.f32.partialorder %v1144, %v1596
      %vm1661 = vcmp.gt.f32.partialorder %v1145, %v1597
      %vm1662 = vcmp.gt.f32.partialorder %v1146, %v1598
      %vm1663 = vcmp.gt.f32.partialorder %v1147, %v1599
      %vm1664 = vcmp.gt.f32.partialorder %v1148, %v1600
      %vm1665 = vcmp.gt.f32.partialorder %v1149, %v1601
      %vm1666 = vcmp.gt.f32.partialorder %v1150, %v1602
      %vm1667 = vcmp.gt.f32.partialorder %v1151, %v1603
      %vm1668 = vcmp.gt.f32.partialorder %v1152, %v1604
      %vm1669 = vcmp.gt.f32.partialorder %v1153, %v1605
      %vm1670 = vcmp.gt.f32.partialorder %v1154, %v1606
      %vm1671 = vcmp.gt.f32.partialorder %v1155, %v1607
      %vm1672 = vcmp.gt.f32.partialorder %v1156, %v1608
      %vm1673 = vcmp.gt.f32.partialorder %v1157, %v1609
      %vm1674 = vcmp.gt.f32.partialorder %v1158, %v1610
      %vm1675 = vcmp.gt.f32.partialorder %v1159, %v1611
      %vm1676 = vcmp.gt.f32.partialorder %v1160, %v1612
      %vm1677 = vcmp.gt.f32.partialorder %v1161, %v1613
      %vm1678 = vcmp.gt.f32.partialorder %v1162, %v1614
      %vm1679 = vcmp.gt.f32.partialorder %v1163, %v1615
      %vm1680 = vcmp.gt.f32.partialorder %v1164, %v1616
      %vm1681 = vcmp.gt.f32.partialorder %v1165, %v1617
      %vm1682 = vcmp.gt.f32.partialorder %v1166, %v1618
      %vm1683 = vcmp.gt.f32.partialorder %v1167, %v1619
      %vm1684 = vcmp.gt.f32.partialorder %v1168, %v1620
      %vm1685 = vcmp.gt.f32.partialorder %v1169, %v1621
      %vm1686 = vcmp.gt.f32.partialorder %v1170, %v1622
      %vm1687 = vcmp.gt.f32.partialorder %v1171, %v1623
      %vm1688 = vcmp.gt.f32.partialorder %v1172, %v1624
      %vm1689 = vcmp.gt.f32.partialorder %v1173, %v1625
      %vm1690 = vcmp.gt.f32.partialorder %v1174, %v1626
      %vm1691 = vcmp.gt.f32.partialorder %v1175, %v1627
      %vm1692 = vcmp.gt.f32.partialorder %v1176, %v1628
      %vm1693 = vcmp.gt.f32.partialorder %v1177, %v1629
      %vm1694 = vcmp.gt.f32.partialorder %v1178, %v1630
      %vm1695 = vcmp.gt.f32.partialorder %v1179, %v1631
      %vm1696 = vcmp.gt.f32.partialorder %v1180, %v1632
      %vm1697 = vcmp.gt.f32.partialorder %v1181, %v1633
      %vm1698 = vcmp.gt.f32.partialorder %v1182, %v1634
      %vm1699 = vcmp.gt.f32.partialorder %v1183, %v1635
      %vm1700 = vcmp.gt.f32.partialorder %v1184, %v1636
      %vm1701 = vcmp.gt.f32.partialorder %v1185, %v1637
      %vm1702 = vcmp.gt.s32.totalorder %v1570, %v1553
      %vm1703 = vcmp.gt.s32.totalorder %v1571, %v1553
      %vm1704 = vcmp.gt.s32.totalorder %v1572, %v1553
      %vm1705 = vcmp.gt.s32.totalorder %v1573, %v1553
      %vm1706 = vcmp.gt.s32.totalorder %v1570, %v1554
      %vm1707 = vcmp.gt.s32.totalorder %v1571, %v1554
      %vm1708 = vcmp.gt.s32.totalorder %v1572, %v1554
      %vm1709 = vcmp.gt.s32.totalorder %v1573, %v1554
      %vm1710 = vcmp.gt.s32.totalorder %v1570, %v1555
      %vm1711 = vcmp.gt.s32.totalorder %v1571, %v1555
      %vm1712 = vcmp.gt.s32.totalorder %v1572, %v1555
      %vm1713 = vcmp.gt.s32.totalorder %v1573, %v1555
      %vm1714 = vcmp.gt.s32.totalorder %v1570, %v1556
      %vm1715 = vcmp.gt.s32.totalorder %v1571, %v1556
      %vm1716 = vcmp.gt.s32.totalorder %v1572, %v1556
      %vm1717 = vcmp.gt.s32.totalorder %v1573, %v1556
      %vm1718 = vcmp.gt.s32.totalorder %v1570, %v1557
      %vm1719 = vcmp.gt.s32.totalorder %v1571, %v1557
      %vm1720 = vcmp.gt.s32.totalorder %v1572, %v1557
      %vm1721 = vcmp.gt.s32.totalorder %v1573, %v1557
      %vm1722 = vcmp.gt.s32.totalorder %v1570, %v1558
      %vm1723 = vcmp.gt.s32.totalorder %v1571, %v1558
      %vm1724 = vcmp.gt.s32.totalorder %v1572, %v1558
      %vm1725 = vcmp.gt.s32.totalorder %v1573, %v1558
      %vm1726 = vcmp.gt.s32.totalorder %v1570, %v1559
      %vm1727 = vcmp.gt.s32.totalorder %v1571, %v1559
      %vm1728 = vcmp.gt.s32.totalorder %v1572, %v1559
      %vm1729 = vcmp.gt.s32.totalorder %v1573, %v1559
      %vm1730 = vcmp.gt.s32.totalorder %v1570, %v1560
      %vm1731 = vcmp.gt.s32.totalorder %v1571, %v1560
      %vm1732 = vcmp.gt.s32.totalorder %v1572, %v1560
      %vm1733 = vcmp.gt.s32.totalorder %v1573, %v1560
      %vm1734 = vcmp.gt.s32.totalorder %v1570, %v1561
      %vm1735 = vcmp.gt.s32.totalorder %v1571, %v1561
      %vm1736 = vcmp.gt.s32.totalorder %v1572, %v1561
      %vm1737 = vcmp.gt.s32.totalorder %v1573, %v1561
      %vm1738 = vcmp.gt.s32.totalorder %v1570, %v1562
      %vm1739 = vcmp.gt.s32.totalorder %v1571, %v1562
      %vm1740 = vcmp.gt.s32.totalorder %v1572, %v1562
      %vm1741 = vcmp.gt.s32.totalorder %v1573, %v1562
      %vm1742 = vcmp.gt.s32.totalorder %v1570, %v1563
      %vm1743 = vcmp.gt.s32.totalorder %v1571, %v1563
      %vm1744 = vcmp.gt.s32.totalorder %v1572, %v1563
      %vm1745 = vcmp.gt.s32.totalorder %v1573, %v1563
      %vm1746 = vcmp.gt.s32.totalorder %v1570, %v1564
      %vm1747 = vcmp.gt.s32.totalorder %v1571, %v1564
      %vm1748 = vcmp.gt.s32.totalorder %v1572, %v1564
      %vm1749 = vcmp.gt.s32.totalorder %v1573, %v1564
      %vm1750 = vcmp.gt.s32.totalorder %v1570, %v1565
      %vm1751 = vcmp.gt.s32.totalorder %v1571, %v1565
      %vm1752 = vcmp.gt.s32.totalorder %v1572, %v1565
      %vm1753 = vcmp.gt.s32.totalorder %v1573, %v1565
      %vm1754 = vcmp.gt.s32.totalorder %v1570, %v1566
      %vm1755 = vcmp.gt.s32.totalorder %v1571, %v1566
      %vm1756 = vcmp.gt.s32.totalorder %v1572, %v1566
      %vm1757 = vcmp.gt.s32.totalorder %v1573, %v1566
      %vm1758 = vcmp.gt.s32.totalorder %v1570, %v1567
      %vm1759 = vcmp.gt.s32.totalorder %v1571, %v1567
      %vm1760 = vcmp.gt.s32.totalorder %v1572, %v1567
      %vm1761 = vcmp.gt.s32.totalorder %v1573, %v1567
      %vm1762 = vcmp.gt.s32.totalorder %v1570, %v1568
      %vm1763 = vcmp.gt.s32.totalorder %v1571, %v1568
      %vm1764 = vcmp.gt.s32.totalorder %v1572, %v1568
      %vm1765 = vcmp.gt.s32.totalorder %v1573, %v1568
      %vm1766 = vmand %vm1638, %vm1702
      %vm1767 = vmand %vm1639, %vm1703
      %vm1768 = vmand %vm1640, %vm1704
      %vm1769 = vmand %vm1641, %vm1705
      %vm1770 = vmand %vm1642, %vm1706
      %vm1771 = vmand %vm1643, %vm1707
      %vm1772 = vmand %vm1644, %vm1708
      %vm1773 = vmand %vm1645, %vm1709
      %vm1774 = vmand %vm1646, %vm1710
      %vm1775 = vmand %vm1647, %vm1711
      %vm1776 = vmand %vm1648, %vm1712
      %vm1777 = vmand %vm1649, %vm1713
      %vm1778 = vmand %vm1650, %vm1714
      %vm1779 = vmand %vm1651, %vm1715
      %vm1780 = vmand %vm1652, %vm1716
      %vm1781 = vmand %vm1653, %vm1717
      %vm1782 = vmand %vm1654, %vm1718
      %vm1783 = vmand %vm1655, %vm1719
      %vm1784 = vmand %vm1656, %vm1720
      %vm1785 = vmand %vm1657, %vm1721
      %vm1786 = vmand %vm1658, %vm1722
      %vm1787 = vmand %vm1659, %vm1723
      %vm1788 = vmand %vm1660, %vm1724
      %vm1789 = vmand %vm1661, %vm1725
      %vm1790 = vmand %vm1662, %vm1726
      %vm1791 = vmand %vm1663, %vm1727
      %vm1792 = vmand %vm1664, %vm1728
      %vm1793 = vmand %vm1665, %vm1729
      %vm1794 = vmand %vm1666, %vm1730
      %vm1795 = vmand %vm1667, %vm1731
      %vm1796 = vmand %vm1668, %vm1732
      %vm1797 = vmand %vm1669, %vm1733
      %vm1798 = vmand %vm1670, %vm1734
      %vm1799 = vmand %vm1671, %vm1735
      %vm1800 = vmand %vm1672, %vm1736
      %vm1801 = vmand %vm1673, %vm1737
      %vm1802 = vmand %vm1674, %vm1738
      %vm1803 = vmand %vm1675, %vm1739
      %vm1804 = vmand %vm1676, %vm1740
      %vm1805 = vmand %vm1677, %vm1741
      %vm1806 = vmand %vm1678, %vm1742
      %vm1807 = vmand %vm1679, %vm1743
      %vm1808 = vmand %vm1680, %vm1744
      %vm1809 = vmand %vm1681, %vm1745
      %vm1810 = vmand %vm1682, %vm1746
      %vm1811 = vmand %vm1683, %vm1747
      %vm1812 = vmand %vm1684, %vm1748
      %vm1813 = vmand %vm1685, %vm1749
      %vm1814 = vmand %vm1686, %vm1750
      %vm1815 = vmand %vm1687, %vm1751
      %vm1816 = vmand %vm1688, %vm1752
      %vm1817 = vmand %vm1689, %vm1753
      %vm1818 = vmand %vm1690, %vm1754
      %vm1819 = vmand %vm1691, %vm1755
      %vm1820 = vmand %vm1692, %vm1756
      %vm1821 = vmand %vm1693, %vm1757
      %vm1822 = vmand %vm1694, %vm1758
      %vm1823 = vmand %vm1695, %vm1759
      %vm1824 = vmand %vm1696, %vm1760
      %vm1825 = vmand %vm1697, %vm1761
      %vm1826 = vmand %vm1698, %vm1762
      %vm1827 = vmand %vm1699, %vm1763
      %vm1828 = vmand %vm1700, %vm1764
      %vm1829 = vmand %vm1701, %vm1765
      %v1830 = vsel %vm1766, 1.0, 0.0
      %v1831 = vsel %vm1767, 1.0, 0.0
      %v1832 = vsel %vm1768, 1.0, 0.0
      %v1833 = vsel %vm1769, 1.0, 0.0
      %v1834 = vsel %vm1770, 1.0, 0.0
      %v1835 = vsel %vm1771, 1.0, 0.0
      %v1836 = vsel %vm1772, 1.0, 0.0
      %v1837 = vsel %vm1773, 1.0, 0.0
      %v1838 = vsel %vm1774, 1.0, 0.0
      %v1839 = vsel %vm1775, 1.0, 0.0
      %v1840 = vsel %vm1776, 1.0, 0.0
      %v1841 = vsel %vm1777, 1.0, 0.0
      %v1842 = vsel %vm1778, 1.0, 0.0
      %v1843 = vsel %vm1779, 1.0, 0.0
      %v1844 = vsel %vm1780, 1.0, 0.0
      %v1845 = vsel %vm1781, 1.0, 0.0
      %v1846 = vsel %vm1782, 1.0, 0.0
      %v1847 = vsel %vm1783, 1.0, 0.0
      %v1848 = vsel %vm1784, 1.0, 0.0
      %v1849 = vsel %vm1785, 1.0, 0.0
      %v1850 = vsel %vm1786, 1.0, 0.0
      %v1851 = vsel %vm1787, 1.0, 0.0
      %v1852 = vsel %vm1788, 1.0, 0.0
      %v1853 = vsel %vm1789, 1.0, 0.0
      %v1854 = vsel %vm1790, 1.0, 0.0
      %v1855 = vsel %vm1791, 1.0, 0.0
      %v1856 = vsel %vm1792, 1.0, 0.0
      %v1857 = vsel %vm1793, 1.0, 0.0
      %v1858 = vsel %vm1794, 1.0, 0.0
      %v1859 = vsel %vm1795, 1.0, 0.0
      %v1860 = vsel %vm1796, 1.0, 0.0
      %v1861 = vsel %vm1797, 1.0, 0.0
      %v1862 = vsel %vm1798, 1.0, 0.0
      %v1863 = vsel %vm1799, 1.0, 0.0
      %v1864 = vsel %vm1800, 1.0, 0.0
      %v1865 = vsel %vm1801, 1.0, 0.0
      %v1866 = vsel %vm1802, 1.0, 0.0
      %v1867 = vsel %vm1803, 1.0, 0.0
      %v1868 = vsel %vm1804, 1.0, 0.0
      %v1869 = vsel %vm1805, 1.0, 0.0
      %v1870 = vsel %vm1806, 1.0, 0.0
      %v1871 = vsel %vm1807, 1.0, 0.0
      %v1872 = vsel %vm1808, 1.0, 0.0
      %v1873 = vsel %vm1809, 1.0, 0.0
      %v1874 = vsel %vm1810, 1.0, 0.0
      %v1875 = vsel %vm1811, 1.0, 0.0
      %v1876 = vsel %vm1812, 1.0, 0.0
      %v1877 = vsel %vm1813, 1.0, 0.0
      %v1878 = vsel %vm1814, 1.0, 0.0
      %v1879 = vsel %vm1815, 1.0, 0.0
      %v1880 = vsel %vm1816, 1.0, 0.0
      %v1881 = vsel %vm1817, 1.0, 0.0
      %v1882 = vsel %vm1818, 1.0, 0.0
      %v1883 = vsel %vm1819, 1.0, 0.0
      %v1884 = vsel %vm1820, 1.0, 0.0
      %v1885 = vsel %vm1821, 1.0, 0.0
      %v1886 = vsel %vm1822, 1.0, 0.0
      %v1887 = vsel %vm1823, 1.0, 0.0
      %v1888 = vsel %vm1824, 1.0, 0.0
      %v1889 = vsel %vm1825, 1.0, 0.0
      %v1890 = vsel %vm1826, 1.0, 0.0
      %v1891 = vsel %vm1827, 1.0, 0.0
      %v1892 = vsel %vm1828, 1.0, 0.0
      %v1893 = vsel %vm1829, 1.0, 0.0
      %1894 = vst [vmem:[#allocation2] sm:$0xff] %v1830
      %1895 = vst [vmem:[#allocation2 + $0x8] sm:$0xff] %v1831
      %1896 = vst [vmem:[#allocation2 + $0x10] sm:$0xff] %v1832
      %1897 = vst [vmem:[#allocation2 + $0x18] sm:$0xff] %v1833
      %1898 = vst [vmem:[#allocation2 + $0x20] sm:$0xff] %v1834
      %1899 = vst [vmem:[#allocation2 + $0x28] sm:$0xff] %v1835
      %1900 = vst [vmem:[#allocation2 + $0x30] sm:$0xff] %v1836
      %1901 = vst [vmem:[#allocation2 + $0x38] sm:$0xff] %v1837
      %1902 = vst [vmem:[#allocation2 + $0x40] sm:$0xff] %v1838
      %1903 = vst [vmem:[#allocation2 + $0x48] sm:$0xff] %v1839
      %1904 = vst [vmem:[#allocation2 + $0x50] sm:$0xff] %v1840
      %1905 = vst [vmem:[#allocation2 + $0x58] sm:$0xff] %v1841
      %1906 = vst [vmem:[#allocation2 + $0x60] sm:$0xff] %v1842
      %1907 = vst [vmem:[#allocation2 + $0x68] sm:$0xff] %v1843
      %1908 = vst [vmem:[#allocation2 + $0x70] sm:$0xff] %v1844
      %1909 = vst [vmem:[#allocation2 + $0x78] sm:$0xff] %v1845
      %1910 = vst [vmem:[#allocation2 + $0x80] sm:$0xff] %v1846
      %1911 = vst [vmem:[#allocation2 + $0x88] sm:$0xff] %v1847
      %1912 = vst [vmem:[#allocation2 + $0x90] sm:$0xff] %v1848
      %1913 = vst [vmem:[#allocation2 + $0x98] sm:$0xff] %v1849
      %1914 = vst [vmem:[#allocation2 + $0xa0] sm:$0xff] %v1850
      %1915 = vst [vmem:[#allocation2 + $0xa8] sm:$0xff] %v1851
      %1916 = vst [vmem:[#allocation2 + $0xb0] sm:$0xff] %v1852
      %1917 = vst [vmem:[#allocation2 + $0xb8] sm:$0xff] %v1853
      %1918 = vst [vmem:[#allocation2 + $0xc0] sm:$0xff] %v1854
      %1919 = vst [vmem:[#allocation2 + $0xc8] sm:$0xff] %v1855
      %1920 = vst [vmem:[#allocation2 + $0xd0] sm:$0xff] %v1856
      %1921 = vst [vmem:[#allocation2 + $0xd8] sm:$0xff] %v1857
      %1922 = vst [vmem:[#allocation2 + $0xe0] sm:$0xff] %v1858
      %1923 = vst [vmem:[#allocation2 + $0xe8] sm:$0xff] %v1859
      %1924 = vst [vmem:[#allocation2 + $0xf0] sm:$0xff] %v1860
      %1925 = vst [vmem:[#allocation2 + $0xf8] sm:$0xff] %v1861
      %1926 = vst [vmem:[#allocation2 + $0x100] sm:$0xff] %v1862
      %1927 = vst [vmem:[#allocation2 + $0x108] sm:$0xff] %v1863
      %1928 = vst [vmem:[#allocation2 + $0x110] sm:$0xff] %v1864
      %1929 = vst [vmem:[#allocation2 + $0x118] sm:$0xff] %v1865
      %1930 = vst [vmem:[#allocation2 + $0x120] sm:$0xff] %v1866
      %1931 = vst [vmem:[#allocation2 + $0x128] sm:$0xff] %v1867
      %1932 = vst [vmem:[#allocation2 + $0x130] sm:$0xff] %v1868
      %1933 = vst [vmem:[#allocation2 + $0x138] sm:$0xff] %v1869
      %1934 = vst [vmem:[#allocation2 + $0x140] sm:$0xff] %v1870
      %1935 = vst [vmem:[#allocation2 + $0x148] sm:$0xff] %v1871
      %1936 = vst [vmem:[#allocation2 + $0x150] sm:$0xff] %v1872
      %1937 = vst [vmem:[#allocation2 + $0x158] sm:$0xff] %v1873
      %1938 = vst [vmem:[#allocation2 + $0x160] sm:$0xff] %v1874
      %1939 = vst [vmem:[#allocation2 + $0x168] sm:$0xff] %v1875
      %1940 = vst [vmem:[#allocation2 + $0x170] sm:$0xff] %v1876
      %1941 = vst [vmem:[#allocation2 + $0x178] sm:$0xff] %v1877
      %1942 = vst [vmem:[#allocation2 + $0x180] sm:$0xff] %v1878
      %1943 = vst [vmem:[#allocation2 + $0x188] sm:$0xff] %v1879
      %1944 = vst [vmem:[#allocation2 + $0x190] sm:$0xff] %v1880
      %1945 = vst [vmem:[#allocation2 + $0x198] sm:$0xff] %v1881
      %1946 = vst [vmem:[#allocation2 + $0x1a0] sm:$0xff] %v1882
      %1947 = vst [vmem:[#allocation2 + $0x1a8] sm:$0xff] %v1883
      %1948 = vst [vmem:[#allocation2 + $0x1b0] sm:$0xff] %v1884
      %1949 = vst [vmem:[#allocation2 + $0x1b8] sm:$0xff] %v1885
      %1950 = vst [vmem:[#allocation2 + $0x1c0] sm:$0xff] %v1886
      %1951 = vst [vmem:[#allocation2 + $0x1c8] sm:$0xff] %v1887
      %1952 = vst [vmem:[#allocation2 + $0x1d0] sm:$0xff] %v1888
      %1953 = vst [vmem:[#allocation2 + $0x1d8] sm:$0xff] %v1889
      %1954 = vst [vmem:[#allocation2 + $0x1e0] sm:$0xff] %v1890
      %1955 = vst [vmem:[#allocation2 + $0x1e8] sm:$0xff] %v1891
      %1956 = vst [vmem:[#allocation2 + $0x1f0] sm:$0xff] %v1892
      %1957 = vst [vmem:[#allocation2 + $0x1f8] sm:$0xff] %v1893
      %1959 = vset.pattern.permute.xlu0 0
      %1960 = vperm.xlu0 %1959, %v222
      %v1961 = vpop.permute.xlu0 %1960
      %1964 = vset.pattern.permute.xlu0 0
      %1965 = vperm.xlu0 %1964, %v223
      %v1966 = vpop.permute.xlu0 %1965
      %1969 = vset.pattern.permute.xlu0 0
      %1970 = vperm.xlu0 %1969, %v224
      %v1971 = vpop.permute.xlu0 %1970
      %1974 = vset.pattern.permute.xlu0 0
      %1975 = vperm.xlu0 %1974, %v225
      %v1976 = vpop.permute.xlu0 %1975
      %1979 = vset.pattern.permute.xlu0 0
      %1980 = vperm.xlu0 %1979, %v226
      %v1981 = vpop.permute.xlu0 %1980
      %1984 = vset.pattern.permute.xlu0 0
      %1985 = vperm.xlu0 %1984, %v227
      %v1986 = vpop.permute.xlu0 %1985
      %1989 = vset.pattern.permute.xlu0 0
      %1990 = vperm.xlu0 %1989, %v228
      %v1991 = vpop.permute.xlu0 %1990
      %1994 = vset.pattern.permute.xlu0 0
      %1995 = vperm.xlu0 %1994, %v229
      %v1996 = vpop.permute.xlu0 %1995
      %1999 = vset.pattern.permute.xlu0 0
      %2000 = vperm.xlu0 %1999, %v230
      %v2001 = vpop.permute.xlu0 %2000
      %2004 = vset.pattern.permute.xlu0 0
      %2005 = vperm.xlu0 %2004, %v231
      %v2006 = vpop.permute.xlu0 %2005
      %2009 = vset.pattern.permute.xlu0 0
      %2010 = vperm.xlu0 %2009, %v232
      %v2011 = vpop.permute.xlu0 %2010
      %2014 = vset.pattern.permute.xlu0 0
      %2015 = vperm.xlu0 %2014, %v233
      %v2016 = vpop.permute.xlu0 %2015
      %2019 = vset.pattern.permute.xlu0 0
      %2020 = vperm.xlu0 %2019, %v234
      %v2021 = vpop.permute.xlu0 %2020
      %2024 = vset.pattern.permute.xlu0 0
      %2025 = vperm.xlu0 %2024, %v235
      %v2026 = vpop.permute.xlu0 %2025
      %2029 = vset.pattern.permute.xlu0 0
      %2030 = vperm.xlu0 %2029, %v236
      %v2031 = vpop.permute.xlu0 %2030
      %2034 = vset.pattern.permute.xlu0 0
      %2035 = vperm.xlu0 %2034, %v237
      %v2036 = vpop.permute.xlu0 %2035
      %v2038 = vmax.f32 %v1961, %v378
      %v2039 = vmax.f32 %v1961, %v379
      %v2040 = vmax.f32 %v1961, %v380
      %v2041 = vmax.f32 %v1961, %v381
      %v2042 = vmax.f32 %v1966, %v378
      %v2043 = vmax.f32 %v1966, %v379
      %v2044 = vmax.f32 %v1966, %v380
      %v2045 = vmax.f32 %v1966, %v381
      %v2046 = vmax.f32 %v1971, %v378
      %v2047 = vmax.f32 %v1971, %v379
      %v2048 = vmax.f32 %v1971, %v380
      %v2049 = vmax.f32 %v1971, %v381
      %v2050 = vmax.f32 %v1976, %v378
      %v2051 = vmax.f32 %v1976, %v379
      %v2052 = vmax.f32 %v1976, %v380
      %v2053 = vmax.f32 %v1976, %v381
      %v2054 = vmax.f32 %v1981, %v378
      %v2055 = vmax.f32 %v1981, %v379
      %v2056 = vmax.f32 %v1981, %v380
      %v2057 = vmax.f32 %v1981, %v381
      %v2058 = vmax.f32 %v1986, %v378
      %v2059 = vmax.f32 %v1986, %v379
      %v2060 = vmax.f32 %v1986, %v380
      %v2061 = vmax.f32 %v1986, %v381
      %v2062 = vmax.f32 %v1991, %v378
      %v2063 = vmax.f32 %v1991, %v379
      %v2064 = vmax.f32 %v1991, %v380
      %v2065 = vmax.f32 %v1991, %v381
      %v2066 = vmax.f32 %v1996, %v378
      %v2067 = vmax.f32 %v1996, %v379
      %v2068 = vmax.f32 %v1996, %v380
      %v2069 = vmax.f32 %v1996, %v381
      %v2070 = vmax.f32 %v2001, %v378
      %v2071 = vmax.f32 %v2001, %v379
      %v2072 = vmax.f32 %v2001, %v380
      %v2073 = vmax.f32 %v2001, %v381
      %v2074 = vmax.f32 %v2006, %v378
      %v2075 = vmax.f32 %v2006, %v379
      %v2076 = vmax.f32 %v2006, %v380
      %v2077 = vmax.f32 %v2006, %v381
      %v2078 = vmax.f32 %v2011, %v378
      %v2079 = vmax.f32 %v2011, %v379
      %v2080 = vmax.f32 %v2011, %v380
      %v2081 = vmax.f32 %v2011, %v381
      %v2082 = vmax.f32 %v2016, %v378
      %v2083 = vmax.f32 %v2016, %v379
      %v2084 = vmax.f32 %v2016, %v380
      %v2085 = vmax.f32 %v2016, %v381
      %v2086 = vmax.f32 %v2021, %v378
      %v2087 = vmax.f32 %v2021, %v379
      %v2088 = vmax.f32 %v2021, %v380
      %v2089 = vmax.f32 %v2021, %v381
      %v2090 = vmax.f32 %v2026, %v378
      %v2091 = vmax.f32 %v2026, %v379
      %v2092 = vmax.f32 %v2026, %v380
      %v2093 = vmax.f32 %v2026, %v381
      %v2094 = vmax.f32 %v2031, %v378
      %v2095 = vmax.f32 %v2031, %v379
      %v2096 = vmax.f32 %v2031, %v380
      %v2097 = vmax.f32 %v2031, %v381
      %v2098 = vmax.f32 %v2036, %v378
      %v2099 = vmax.f32 %v2036, %v379
      %v2100 = vmax.f32 %v2036, %v380
      %v2101 = vmax.f32 %v2036, %v381
      %2102 = vset.pattern.permute.xlu0 1
      %2103 = vperm.xlu0 %2102, %v222
      %v2104 = vpop.permute.xlu0 %2103
      %2106 = vset.pattern.permute.xlu0 1
      %2107 = vperm.xlu0 %2106, %v223
      %v2108 = vpop.permute.xlu0 %2107
      %2110 = vset.pattern.permute.xlu0 1
      %2111 = vperm.xlu0 %2110, %v224
      %v2112 = vpop.permute.xlu0 %2111
      %2114 = vset.pattern.permute.xlu0 1
      %2115 = vperm.xlu0 %2114, %v225
      %v2116 = vpop.permute.xlu0 %2115
      %2118 = vset.pattern.permute.xlu0 1
      %2119 = vperm.xlu0 %2118, %v226
      %v2120 = vpop.permute.xlu0 %2119
      %2122 = vset.pattern.permute.xlu0 1
      %2123 = vperm.xlu0 %2122, %v227
      %v2124 = vpop.permute.xlu0 %2123
      %2126 = vset.pattern.permute.xlu0 1
      %2127 = vperm.xlu0 %2126, %v228
      %v2128 = vpop.permute.xlu0 %2127
      %2130 = vset.pattern.permute.xlu0 1
      %2131 = vperm.xlu0 %2130, %v229
      %v2132 = vpop.permute.xlu0 %2131
      %2134 = vset.pattern.permute.xlu0 1
      %2135 = vperm.xlu0 %2134, %v230
      %v2136 = vpop.permute.xlu0 %2135
      %2138 = vset.pattern.permute.xlu0 1
      %2139 = vperm.xlu0 %2138, %v231
      %v2140 = vpop.permute.xlu0 %2139
      %2142 = vset.pattern.permute.xlu0 1
      %2143 = vperm.xlu0 %2142, %v232
      %v2144 = vpop.permute.xlu0 %2143
      %2146 = vset.pattern.permute.xlu0 1
      %2147 = vperm.xlu0 %2146, %v233
      %v2148 = vpop.permute.xlu0 %2147
      %2150 = vset.pattern.permute.xlu0 1
      %2151 = vperm.xlu0 %2150, %v234
      %v2152 = vpop.permute.xlu0 %2151
      %2154 = vset.pattern.permute.xlu0 1
      %2155 = vperm.xlu0 %2154, %v235
      %v2156 = vpop.permute.xlu0 %2155
      %2158 = vset.pattern.permute.xlu0 1
      %2159 = vperm.xlu0 %2158, %v236
      %v2160 = vpop.permute.xlu0 %2159
      %2162 = vset.pattern.permute.xlu0 1
      %2163 = vperm.xlu0 %2162, %v237
      %v2164 = vpop.permute.xlu0 %2163
      %v2166 = vmax.f32 %v2104, %v518
      %v2167 = vmax.f32 %v2104, %v519
      %v2168 = vmax.f32 %v2104, %v520
      %v2169 = vmax.f32 %v2104, %v521
      %v2170 = vmax.f32 %v2108, %v518
      %v2171 = vmax.f32 %v2108, %v519
      %v2172 = vmax.f32 %v2108, %v520
      %v2173 = vmax.f32 %v2108, %v521
      %v2174 = vmax.f32 %v2112, %v518
      %v2175 = vmax.f32 %v2112, %v519
      %v2176 = vmax.f32 %v2112, %v520
      %v2177 = vmax.f32 %v2112, %v521
      %v2178 = vmax.f32 %v2116, %v518
      %v2179 = vmax.f32 %v2116, %v519
      %v2180 = vmax.f32 %v2116, %v520
      %v2181 = vmax.f32 %v2116, %v521
      %v2182 = vmax.f32 %v2120, %v518
      %v2183 = vmax.f32 %v2120, %v519
      %v2184 = vmax.f32 %v2120, %v520
      %v2185 = vmax.f32 %v2120, %v521
      %v2186 = vmax.f32 %v2124, %v518
      %v2187 = vmax.f32 %v2124, %v519
      %v2188 = vmax.f32 %v2124, %v520
      %v2189 = vmax.f32 %v2124, %v521
      %v2190 = vmax.f32 %v2128, %v518
      %v2191 = vmax.f32 %v2128, %v519
      %v2192 = vmax.f32 %v2128, %v520
      %v2193 = vmax.f32 %v2128, %v521
      %v2194 = vmax.f32 %v2132, %v518
      %v2195 = vmax.f32 %v2132, %v519
      %v2196 = vmax.f32 %v2132, %v520
      %v2197 = vmax.f32 %v2132, %v521
      %v2198 = vmax.f32 %v2136, %v518
      %v2199 = vmax.f32 %v2136, %v519
      %v2200 = vmax.f32 %v2136, %v520
      %v2201 = vmax.f32 %v2136, %v521
      %v2202 = vmax.f32 %v2140, %v518
      %v2203 = vmax.f32 %v2140, %v519
      %v2204 = vmax.f32 %v2140, %v520
      %v2205 = vmax.f32 %v2140, %v521
      %v2206 = vmax.f32 %v2144, %v518
      %v2207 = vmax.f32 %v2144, %v519
      %v2208 = vmax.f32 %v2144, %v520
      %v2209 = vmax.f32 %v2144, %v521
      %v2210 = vmax.f32 %v2148, %v518
      %v2211 = vmax.f32 %v2148, %v519
      %v2212 = vmax.f32 %v2148, %v520
      %v2213 = vmax.f32 %v2148, %v521
      %v2214 = vmax.f32 %v2152, %v518
      %v2215 = vmax.f32 %v2152, %v519
      %v2216 = vmax.f32 %v2152, %v520
      %v2217 = vmax.f32 %v2152, %v521
      %v2218 = vmax.f32 %v2156, %v518
      %v2219 = vmax.f32 %v2156, %v519
      %v2220 = vmax.f32 %v2156, %v520
      %v2221 = vmax.f32 %v2156, %v521
      %v2222 = vmax.f32 %v2160, %v518
      %v2223 = vmax.f32 %v2160, %v519
      %v2224 = vmax.f32 %v2160, %v520
      %v2225 = vmax.f32 %v2160, %v521
      %v2226 = vmax.f32 %v2164, %v518
      %v2227 = vmax.f32 %v2164, %v519
      %v2228 = vmax.f32 %v2164, %v520
      %v2229 = vmax.f32 %v2164, %v521
      %2230 = vset.pattern.permute.xlu0 2
      %2231 = vperm.xlu0 %2230, %v222
      %v2232 = vpop.permute.xlu0 %2231
      %2234 = vset.pattern.permute.xlu0 2
      %2235 = vperm.xlu0 %2234, %v223
      %v2236 = vpop.permute.xlu0 %2235
      %2238 = vset.pattern.permute.xlu0 2
      %2239 = vperm.xlu0 %2238, %v224
      %v2240 = vpop.permute.xlu0 %2239
      %2242 = vset.pattern.permute.xlu0 2
      %2243 = vperm.xlu0 %2242, %v225
      %v2244 = vpop.permute.xlu0 %2243
      %2246 = vset.pattern.permute.xlu0 2
      %2247 = vperm.xlu0 %2246, %v226
      %v2248 = vpop.permute.xlu0 %2247
      %2250 = vset.pattern.permute.xlu0 2
      %2251 = vperm.xlu0 %2250, %v227
      %v2252 = vpop.permute.xlu0 %2251
      %2254 = vset.pattern.permute.xlu0 2
      %2255 = vperm.xlu0 %2254, %v228
      %v2256 = vpop.permute.xlu0 %2255
      %2258 = vset.pattern.permute.xlu0 2
      %2259 = vperm.xlu0 %2258, %v229
      %v2260 = vpop.permute.xlu0 %2259
      %2262 = vset.pattern.permute.xlu0 2
      %2263 = vperm.xlu0 %2262, %v230
      %v2264 = vpop.permute.xlu0 %2263
      %2266 = vset.pattern.permute.xlu0 2
      %2267 = vperm.xlu0 %2266, %v231
      %v2268 = vpop.permute.xlu0 %2267
      %2270 = vset.pattern.permute.xlu0 2
      %2271 = vperm.xlu0 %2270, %v232
      %v2272 = vpop.permute.xlu0 %2271
      %2274 = vset.pattern.permute.xlu0 2
      %2275 = vperm.xlu0 %2274, %v233
      %v2276 = vpop.permute.xlu0 %2275
      %2278 = vset.pattern.permute.xlu0 2
      %2279 = vperm.xlu0 %2278, %v234
      %v2280 = vpop.permute.xlu0 %2279
      %2282 = vset.pattern.permute.xlu0 2
      %2283 = vperm.xlu0 %2282, %v235
      %v2284 = vpop.permute.xlu0 %2283
      %2286 = vset.pattern.permute.xlu0 2
      %2287 = vperm.xlu0 %2286, %v236
      %v2288 = vpop.permute.xlu0 %2287
      %2290 = vset.pattern.permute.xlu0 2
      %2291 = vperm.xlu0 %2290, %v237
      %v2292 = vpop.permute.xlu0 %2291
      %v2294 = vmin.f32 %v2232, %v658
      %v2295 = vmin.f32 %v2232, %v659
      %v2296 = vmin.f32 %v2232, %v660
      %v2297 = vmin.f32 %v2232, %v661
      %v2298 = vmin.f32 %v2236, %v658
      %v2299 = vmin.f32 %v2236, %v659
      %v2300 = vmin.f32 %v2236, %v660
      %v2301 = vmin.f32 %v2236, %v661
      %v2302 = vmin.f32 %v2240, %v658
      %v2303 = vmin.f32 %v2240, %v659
      %v2304 = vmin.f32 %v2240, %v660
      %v2305 = vmin.f32 %v2240, %v661
      %v2306 = vmin.f32 %v2244, %v658
      %v2307 = vmin.f32 %v2244, %v659
      %v2308 = vmin.f32 %v2244, %v660
      %v2309 = vmin.f32 %v2244, %v661
      %v2310 = vmin.f32 %v2248, %v658
      %v2311 = vmin.f32 %v2248, %v659
      %v2312 = vmin.f32 %v2248, %v660
      %v2313 = vmin.f32 %v2248, %v661
      %v2314 = vmin.f32 %v2252, %v658
      %v2315 = vmin.f32 %v2252, %v659
      %v2316 = vmin.f32 %v2252, %v660
      %v2317 = vmin.f32 %v2252, %v661
      %v2318 = vmin.f32 %v2256, %v658
      %v2319 = vmin.f32 %v2256, %v659
      %v2320 = vmin.f32 %v2256, %v660
      %v2321 = vmin.f32 %v2256, %v661
      %v2322 = vmin.f32 %v2260, %v658
      %v2323 = vmin.f32 %v2260, %v659
      %v2324 = vmin.f32 %v2260, %v660
      %v2325 = vmin.f32 %v2260, %v661
      %v2326 = vmin.f32 %v2264, %v658
      %v2327 = vmin.f32 %v2264, %v659
      %v2328 = vmin.f32 %v2264, %v660
      %v2329 = vmin.f32 %v2264, %v661
      %v2330 = vmin.f32 %v2268, %v658
      %v2331 = vmin.f32 %v2268, %v659
      %v2332 = vmin.f32 %v2268, %v660
      %v2333 = vmin.f32 %v2268, %v661
      %v2334 = vmin.f32 %v2272, %v658
      %v2335 = vmin.f32 %v2272, %v659
      %v2336 = vmin.f32 %v2272, %v660
      %v2337 = vmin.f32 %v2272, %v661
      %v2338 = vmin.f32 %v2276, %v658
      %v2339 = vmin.f32 %v2276, %v659
      %v2340 = vmin.f32 %v2276, %v660
      %v2341 = vmin.f32 %v2276, %v661
      %v2342 = vmin.f32 %v2280, %v658
      %v2343 = vmin.f32 %v2280, %v659
      %v2344 = vmin.f32 %v2280, %v660
      %v2345 = vmin.f32 %v2280, %v661
      %v2346 = vmin.f32 %v2284, %v658
      %v2347 = vmin.f32 %v2284, %v659
      %v2348 = vmin.f32 %v2284, %v660
      %v2349 = vmin.f32 %v2284, %v661
      %v2350 = vmin.f32 %v2288, %v658
      %v2351 = vmin.f32 %v2288, %v659
      %v2352 = vmin.f32 %v2288, %v660
      %v2353 = vmin.f32 %v2288, %v661
      %v2354 = vmin.f32 %v2292, %v658
      %v2355 = vmin.f32 %v2292, %v659
      %v2356 = vmin.f32 %v2292, %v660
      %v2357 = vmin.f32 %v2292, %v661
      %2358 = vset.pattern.permute.xlu0 3
      %2359 = vperm.xlu0 %2358, %v222
      %v2360 = vpop.permute.xlu0 %2359
      %2362 = vset.pattern.permute.xlu0 3
      %2363 = vperm.xlu0 %2362, %v223
      %v2364 = vpop.permute.xlu0 %2363
      %2366 = vset.pattern.permute.xlu0 3
      %2367 = vperm.xlu0 %2366, %v224
      %v2368 = vpop.permute.xlu0 %2367
      %2370 = vset.pattern.permute.xlu0 3
      %2371 = vperm.xlu0 %2370, %v225
      %v2372 = vpop.permute.xlu0 %2371
      %2374 = vset.pattern.permute.xlu0 3
      %2375 = vperm.xlu0 %2374, %v226
      %v2376 = vpop.permute.xlu0 %2375
      %2378 = vset.pattern.permute.xlu0 3
      %2379 = vperm.xlu0 %2378, %v227
      %v2380 = vpop.permute.xlu0 %2379
      %2382 = vset.pattern.permute.xlu0 3
      %2383 = vperm.xlu0 %2382, %v228
      %v2384 = vpop.permute.xlu0 %2383
      %2386 = vset.pattern.permute.xlu0 3
      %2387 = vperm.xlu0 %2386, %v229
      %v2388 = vpop.permute.xlu0 %2387
      %2390 = vset.pattern.permute.xlu0 3
      %2391 = vperm.xlu0 %2390, %v230
      %v2392 = vpop.permute.xlu0 %2391
      %2394 = vset.pattern.permute.xlu0 3
      %2395 = vperm.xlu0 %2394, %v231
      %v2396 = vpop.permute.xlu0 %2395
      %2398 = vset.pattern.permute.xlu0 3
      %2399 = vperm.xlu0 %2398, %v232
      %v2400 = vpop.permute.xlu0 %2399
      %2402 = vset.pattern.permute.xlu0 3
      %2403 = vperm.xlu0 %2402, %v233
      %v2404 = vpop.permute.xlu0 %2403
      %2406 = vset.pattern.permute.xlu0 3
      %2407 = vperm.xlu0 %2406, %v234
      %v2408 = vpop.permute.xlu0 %2407
      %2410 = vset.pattern.permute.xlu0 3
      %2411 = vperm.xlu0 %2410, %v235
      %v2412 = vpop.permute.xlu0 %2411
      %2414 = vset.pattern.permute.xlu0 3
      %2415 = vperm.xlu0 %2414, %v236
      %v2416 = vpop.permute.xlu0 %2415
      %2418 = vset.pattern.permute.xlu0 3
      %2419 = vperm.xlu0 %2418, %v237
      %v2420 = vpop.permute.xlu0 %2419
      %v2422 = vmin.f32 %v2360, %v798
      %v2423 = vmin.f32 %v2360, %v799
      %v2424 = vmin.f32 %v2360, %v800
      %v2425 = vmin.f32 %v2360, %v801
      %v2426 = vmin.f32 %v2364, %v798
      %v2427 = vmin.f32 %v2364, %v799
      %v2428 = vmin.f32 %v2364, %v800
      %v2429 = vmin.f32 %v2364, %v801
      %v2430 = vmin.f32 %v2368, %v798
      %v2431 = vmin.f32 %v2368, %v799
      %v2432 = vmin.f32 %v2368, %v800
      %v2433 = vmin.f32 %v2368, %v801
      %v2434 = vmin.f32 %v2372, %v798
      %v2435 = vmin.f32 %v2372, %v799
      %v2436 = vmin.f32 %v2372, %v800
      %v2437 = vmin.f32 %v2372, %v801
      %v2438 = vmin.f32 %v2376, %v798
      %v2439 = vmin.f32 %v2376, %v799
      %v2440 = vmin.f32 %v2376, %v800
      %v2441 = vmin.f32 %v2376, %v801
      %v2442 = vmin.f32 %v2380, %v798
      %v2443 = vmin.f32 %v2380, %v799
      %v2444 = vmin.f32 %v2380, %v800
      %v2445 = vmin.f32 %v2380, %v801
      %v2446 = vmin.f32 %v2384, %v798
      %v2447 = vmin.f32 %v2384, %v799
      %v2448 = vmin.f32 %v2384, %v800
      %v2449 = vmin.f32 %v2384, %v801
      %v2450 = vmin.f32 %v2388, %v798
      %v2451 = vmin.f32 %v2388, %v799
      %v2452 = vmin.f32 %v2388, %v800
      %v2453 = vmin.f32 %v2388, %v801
      %v2454 = vmin.f32 %v2392, %v798
      %v2455 = vmin.f32 %v2392, %v799
      %v2456 = vmin.f32 %v2392, %v800
      %v2457 = vmin.f32 %v2392, %v801
      %v2458 = vmin.f32 %v2396, %v798
      %v2459 = vmin.f32 %v2396, %v799
      %v2460 = vmin.f32 %v2396, %v800
      %v2461 = vmin.f32 %v2396, %v801
      %v2462 = vmin.f32 %v2400, %v798
      %v2463 = vmin.f32 %v2400, %v799
      %v2464 = vmin.f32 %v2400, %v800
      %v2465 = vmin.f32 %v2400, %v801
      %v2466 = vmin.f32 %v2404, %v798
      %v2467 = vmin.f32 %v2404, %v799
      %v2468 = vmin.f32 %v2404, %v800
      %v2469 = vmin.f32 %v2404, %v801
      %v2470 = vmin.f32 %v2408, %v798
      %v2471 = vmin.f32 %v2408, %v799
      %v2472 = vmin.f32 %v2408, %v800
      %v2473 = vmin.f32 %v2408, %v801
      %v2474 = vmin.f32 %v2412, %v798
      %v2475 = vmin.f32 %v2412, %v799
      %v2476 = vmin.f32 %v2412, %v800
      %v2477 = vmin.f32 %v2412, %v801
      %v2478 = vmin.f32 %v2416, %v798
      %v2479 = vmin.f32 %v2416, %v799
      %v2480 = vmin.f32 %v2416, %v800
      %v2481 = vmin.f32 %v2416, %v801
      %v2482 = vmin.f32 %v2420, %v798
      %v2483 = vmin.f32 %v2420, %v799
      %v2484 = vmin.f32 %v2420, %v800
      %v2485 = vmin.f32 %v2420, %v801
      %v2486 = vsub.f32 %v2294, %v2038
      %v2487 = vsub.f32 %v2295, %v2039
      %v2488 = vsub.f32 %v2296, %v2040
      %v2489 = vsub.f32 %v2297, %v2041
      %v2490 = vsub.f32 %v2298, %v2042
      %v2491 = vsub.f32 %v2299, %v2043
      %v2492 = vsub.f32 %v2300, %v2044
      %v2493 = vsub.f32 %v2301, %v2045
      %v2494 = vsub.f32 %v2302, %v2046
      %v2495 = vsub.f32 %v2303, %v2047
      %v2496 = vsub.f32 %v2304, %v2048
      %v2497 = vsub.f32 %v2305, %v2049
      %v2498 = vsub.f32 %v2306, %v2050
      %v2499 = vsub.f32 %v2307, %v2051
      %v2500 = vsub.f32 %v2308, %v2052
      %v2501 = vsub.f32 %v2309, %v2053
      %v2502 = vsub.f32 %v2310, %v2054
      %v2503 = vsub.f32 %v2311, %v2055
      %v2504 = vsub.f32 %v2312, %v2056
      %v2505 = vsub.f32 %v2313, %v2057
      %v2506 = vsub.f32 %v2314, %v2058
      %v2507 = vsub.f32 %v2315, %v2059
      %v2508 = vsub.f32 %v2316, %v2060
      %v2509 = vsub.f32 %v2317, %v2061
      %v2510 = vsub.f32 %v2318, %v2062
      %v2511 = vsub.f32 %v2319, %v2063
      %v2512 = vsub.f32 %v2320, %v2064
      %v2513 = vsub.f32 %v2321, %v2065
      %v2514 = vsub.f32 %v2322, %v2066
      %v2515 = vsub.f32 %v2323, %v2067
      %v2516 = vsub.f32 %v2324, %v2068
      %v2517 = vsub.f32 %v2325, %v2069
      %v2518 = vsub.f32 %v2326, %v2070
      %v2519 = vsub.f32 %v2327, %v2071
      %v2520 = vsub.f32 %v2328, %v2072
      %v2521 = vsub.f32 %v2329, %v2073
      %v2522 = vsub.f32 %v2330, %v2074
      %v2523 = vsub.f32 %v2331, %v2075
      %v2524 = vsub.f32 %v2332, %v2076
      %v2525 = vsub.f32 %v2333, %v2077
      %v2526 = vsub.f32 %v2334, %v2078
      %v2527 = vsub.f32 %v2335, %v2079
      %v2528 = vsub.f32 %v2336, %v2080
      %v2529 = vsub.f32 %v2337, %v2081
      %v2530 = vsub.f32 %v2338, %v2082
      %v2531 = vsub.f32 %v2339, %v2083
      %v2532 = vsub.f32 %v2340, %v2084
      %v2533 = vsub.f32 %v2341, %v2085
      %v2534 = vsub.f32 %v2342, %v2086
      %v2535 = vsub.f32 %v2343, %v2087
      %v2536 = vsub.f32 %v2344, %v2088
      %v2537 = vsub.f32 %v2345, %v2089
      %v2538 = vsub.f32 %v2346, %v2090
      %v2539 = vsub.f32 %v2347, %v2091
      %v2540 = vsub.f32 %v2348, %v2092
      %v2541 = vsub.f32 %v2349, %v2093
      %v2542 = vsub.f32 %v2350, %v2094
      %v2543 = vsub.f32 %v2351, %v2095
      %v2544 = vsub.f32 %v2352, %v2096
      %v2545 = vsub.f32 %v2353, %v2097
      %v2546 = vsub.f32 %v2354, %v2098
      %v2547 = vsub.f32 %v2355, %v2099
      %v2548 = vsub.f32 %v2356, %v2100
      %v2549 = vsub.f32 %v2357, %v2101
      %v2550 = vmax.f32 %v2486, 0.0
      %v2551 = vmax.f32 %v2487, 0.0
      %v2552 = vmax.f32 %v2488, 0.0
      %v2553 = vmax.f32 %v2489, 0.0
      %v2554 = vmax.f32 %v2490, 0.0
      %v2555 = vmax.f32 %v2491, 0.0
      %v2556 = vmax.f32 %v2492, 0.0
      %v2557 = vmax.f32 %v2493, 0.0
      %v2558 = vmax.f32 %v2494, 0.0
      %v2559 = vmax.f32 %v2495, 0.0
      %v2560 = vmax.f32 %v2496, 0.0
      %v2561 = vmax.f32 %v2497, 0.0
      %v2562 = vmax.f32 %v2498, 0.0
      %v2563 = vmax.f32 %v2499, 0.0
      %v2564 = vmax.f32 %v2500, 0.0
      %v2565 = vmax.f32 %v2501, 0.0
      %v2566 = vmax.f32 %v2502, 0.0
      %v2567 = vmax.f32 %v2503, 0.0
      %v2568 = vmax.f32 %v2504, 0.0
      %v2569 = vmax.f32 %v2505, 0.0
      %v2570 = vmax.f32 %v2506, 0.0
      %v2571 = vmax.f32 %v2507, 0.0
      %v2572 = vmax.f32 %v2508, 0.0
      %v2573 = vmax.f32 %v2509, 0.0
      %v2574 = vmax.f32 %v2510, 0.0
      %v2575 = vmax.f32 %v2511, 0.0
      %v2576 = vmax.f32 %v2512, 0.0
      %v2577 = vmax.f32 %v2513, 0.0
      %v2578 = vmax.f32 %v2514, 0.0
      %v2579 = vmax.f32 %v2515, 0.0
      %v2580 = vmax.f32 %v2516, 0.0
      %v2581 = vmax.f32 %v2517, 0.0
      %v2582 = vmax.f32 %v2518, 0.0
      %v2583 = vmax.f32 %v2519, 0.0
      %v2584 = vmax.f32 %v2520, 0.0
      %v2585 = vmax.f32 %v2521, 0.0
      %v2586 = vmax.f32 %v2522, 0.0
      %v2587 = vmax.f32 %v2523, 0.0
      %v2588 = vmax.f32 %v2524, 0.0
      %v2589 = vmax.f32 %v2525, 0.0
      %v2590 = vmax.f32 %v2526, 0.0
      %v2591 = vmax.f32 %v2527, 0.0
      %v2592 = vmax.f32 %v2528, 0.0
      %v2593 = vmax.f32 %v2529, 0.0
      %v2594 = vmax.f32 %v2530, 0.0
      %v2595 = vmax.f32 %v2531, 0.0
      %v2596 = vmax.f32 %v2532, 0.0
      %v2597 = vmax.f32 %v2533, 0.0
      %v2598 = vmax.f32 %v2534, 0.0
      %v2599 = vmax.f32 %v2535, 0.0
      %v2600 = vmax.f32 %v2536, 0.0
      %v2601 = vmax.f32 %v2537, 0.0
      %v2602 = vmax.f32 %v2538, 0.0
      %v2603 = vmax.f32 %v2539, 0.0
      %v2604 = vmax.f32 %v2540, 0.0
      %v2605 = vmax.f32 %v2541, 0.0
      %v2606 = vmax.f32 %v2542, 0.0
      %v2607 = vmax.f32 %v2543, 0.0
      %v2608 = vmax.f32 %v2544, 0.0
      %v2609 = vmax.f32 %v2545, 0.0
      %v2610 = vmax.f32 %v2546, 0.0
      %v2611 = vmax.f32 %v2547, 0.0
      %v2612 = vmax.f32 %v2548, 0.0
      %v2613 = vmax.f32 %v2549, 0.0
      %v2614 = vsub.f32 %v2422, %v2166
      %v2615 = vsub.f32 %v2423, %v2167
      %v2616 = vsub.f32 %v2424, %v2168
      %v2617 = vsub.f32 %v2425, %v2169
      %v2618 = vsub.f32 %v2426, %v2170
      %v2619 = vsub.f32 %v2427, %v2171
      %v2620 = vsub.f32 %v2428, %v2172
      %v2621 = vsub.f32 %v2429, %v2173
      %v2622 = vsub.f32 %v2430, %v2174
      %v2623 = vsub.f32 %v2431, %v2175
      %v2624 = vsub.f32 %v2432, %v2176
      %v2625 = vsub.f32 %v2433, %v2177
      %v2626 = vsub.f32 %v2434, %v2178
      %v2627 = vsub.f32 %v2435, %v2179
      %v2628 = vsub.f32 %v2436, %v2180
      %v2629 = vsub.f32 %v2437, %v2181
      %v2630 = vsub.f32 %v2438, %v2182
      %v2631 = vsub.f32 %v2439, %v2183
      %v2632 = vsub.f32 %v2440, %v2184
      %v2633 = vsub.f32 %v2441, %v2185
      %v2634 = vsub.f32 %v2442, %v2186
      %v2635 = vsub.f32 %v2443, %v2187
      %v2636 = vsub.f32 %v2444, %v2188
      %v2637 = vsub.f32 %v2445, %v2189
      %v2638 = vsub.f32 %v2446, %v2190
      %v2639 = vsub.f32 %v2447, %v2191
      %v2640 = vsub.f32 %v2448, %v2192
      %v2641 = vsub.f32 %v2449, %v2193
      %v2642 = vsub.f32 %v2450, %v2194
      %v2643 = vsub.f32 %v2451, %v2195
      %v2644 = vsub.f32 %v2452, %v2196
      %v2645 = vsub.f32 %v2453, %v2197
      %v2646 = vsub.f32 %v2454, %v2198
      %v2647 = vsub.f32 %v2455, %v2199
      %v2648 = vsub.f32 %v2456, %v2200
      %v2649 = vsub.f32 %v2457, %v2201
      %v2650 = vsub.f32 %v2458, %v2202
      %v2651 = vsub.f32 %v2459, %v2203
      %v2652 = vsub.f32 %v2460, %v2204
      %v2653 = vsub.f32 %v2461, %v2205
      %v2654 = vsub.f32 %v2462, %v2206
      %v2655 = vsub.f32 %v2463, %v2207
      %v2656 = vsub.f32 %v2464, %v2208
      %v2657 = vsub.f32 %v2465, %v2209
      %v2658 = vsub.f32 %v2466, %v2210
      %v2659 = vsub.f32 %v2467, %v2211
      %v2660 = vsub.f32 %v2468, %v2212
      %v2661 = vsub.f32 %v2469, %v2213
      %v2662 = vsub.f32 %v2470, %v2214
      %v2663 = vsub.f32 %v2471, %v2215
      %v2664 = vsub.f32 %v2472, %v2216
      %v2665 = vsub.f32 %v2473, %v2217
      %v2666 = vsub.f32 %v2474, %v2218
      %v2667 = vsub.f32 %v2475, %v2219
      %v2668 = vsub.f32 %v2476, %v2220
      %v2669 = vsub.f32 %v2477, %v2221
      %v2670 = vsub.f32 %v2478, %v2222
      %v2671 = vsub.f32 %v2479, %v2223
      %v2672 = vsub.f32 %v2480, %v2224
      %v2673 = vsub.f32 %v2481, %v2225
      %v2674 = vsub.f32 %v2482, %v2226
      %v2675 = vsub.f32 %v2483, %v2227
      %v2676 = vsub.f32 %v2484, %v2228
      %v2677 = vsub.f32 %v2485, %v2229
      %v2678 = vmax.f32 %v2614, 0.0
      %v2679 = vmax.f32 %v2615, 0.0
      %v2680 = vmax.f32 %v2616, 0.0
      %v2681 = vmax.f32 %v2617, 0.0
      %v2682 = vmax.f32 %v2618, 0.0
      %v2683 = vmax.f32 %v2619, 0.0
      %v2684 = vmax.f32 %v2620, 0.0
      %v2685 = vmax.f32 %v2621, 0.0
      %v2686 = vmax.f32 %v2622, 0.0
      %v2687 = vmax.f32 %v2623, 0.0
      %v2688 = vmax.f32 %v2624, 0.0
      %v2689 = vmax.f32 %v2625, 0.0
      %v2690 = vmax.f32 %v2626, 0.0
      %v2691 = vmax.f32 %v2627, 0.0
      %v2692 = vmax.f32 %v2628, 0.0
      %v2693 = vmax.f32 %v2629, 0.0
      %v2694 = vmax.f32 %v2630, 0.0
      %v2695 = vmax.f32 %v2631, 0.0
      %v2696 = vmax.f32 %v2632, 0.0
      %v2697 = vmax.f32 %v2633, 0.0
      %v2698 = vmax.f32 %v2634, 0.0
      %v2699 = vmax.f32 %v2635, 0.0
      %v2700 = vmax.f32 %v2636, 0.0
      %v2701 = vmax.f32 %v2637, 0.0
      %v2702 = vmax.f32 %v2638, 0.0
      %v2703 = vmax.f32 %v2639, 0.0
      %v2704 = vmax.f32 %v2640, 0.0
      %v2705 = vmax.f32 %v2641, 0.0
      %v2706 = vmax.f32 %v2642, 0.0
      %v2707 = vmax.f32 %v2643, 0.0
      %v2708 = vmax.f32 %v2644, 0.0
      %v2709 = vmax.f32 %v2645, 0.0
      %v2710 = vmax.f32 %v2646, 0.0
      %v2711 = vmax.f32 %v2647, 0.0
      %v2712 = vmax.f32 %v2648, 0.0
      %v2713 = vmax.f32 %v2649, 0.0
      %v2714 = vmax.f32 %v2650, 0.0
      %v2715 = vmax.f32 %v2651, 0.0
      %v2716 = vmax.f32 %v2652, 0.0
      %v2717 = vmax.f32 %v2653, 0.0
      %v2718 = vmax.f32 %v2654, 0.0
      %v2719 = vmax.f32 %v2655, 0.0
      %v2720 = vmax.f32 %v2656, 0.0
      %v2721 = vmax.f32 %v2657, 0.0
      %v2722 = vmax.f32 %v2658, 0.0
      %v2723 = vmax.f32 %v2659, 0.0
      %v2724 = vmax.f32 %v2660, 0.0
      %v2725 = vmax.f32 %v2661, 0.0
      %v2726 = vmax.f32 %v2662, 0.0
      %v2727 = vmax.f32 %v2663, 0.0
      %v2728 = vmax.f32 %v2664, 0.0
      %v2729 = vmax.f32 %v2665, 0.0
      %v2730 = vmax.f32 %v2666, 0.0
      %v2731 = vmax.f32 %v2667, 0.0
      %v2732 = vmax.f32 %v2668, 0.0
      %v2733 = vmax.f32 %v2669, 0.0
      %v2734 = vmax.f32 %v2670, 0.0
      %v2735 = vmax.f32 %v2671, 0.0
      %v2736 = vmax.f32 %v2672, 0.0
      %v2737 = vmax.f32 %v2673, 0.0
      %v2738 = vmax.f32 %v2674, 0.0
      %v2739 = vmax.f32 %v2675, 0.0
      %v2740 = vmax.f32 %v2676, 0.0
      %v2741 = vmax.f32 %v2677, 0.0
      %v2742 = vmul.f32 %v2550, %v2678
      %v2743 = vmul.f32 %v2551, %v2679
      %v2744 = vmul.f32 %v2552, %v2680
      %v2745 = vmul.f32 %v2553, %v2681
      %v2746 = vmul.f32 %v2554, %v2682
      %v2747 = vmul.f32 %v2555, %v2683
      %v2748 = vmul.f32 %v2556, %v2684
      %v2749 = vmul.f32 %v2557, %v2685
      %v2750 = vmul.f32 %v2558, %v2686
      %v2751 = vmul.f32 %v2559, %v2687
      %v2752 = vmul.f32 %v2560, %v2688
      %v2753 = vmul.f32 %v2561, %v2689
      %v2754 = vmul.f32 %v2562, %v2690
      %v2755 = vmul.f32 %v2563, %v2691
      %v2756 = vmul.f32 %v2564, %v2692
      %v2757 = vmul.f32 %v2565, %v2693
      %v2758 = vmul.f32 %v2566, %v2694
      %v2759 = vmul.f32 %v2567, %v2695
      %v2760 = vmul.f32 %v2568, %v2696
      %v2761 = vmul.f32 %v2569, %v2697
      %v2762 = vmul.f32 %v2570, %v2698
      %v2763 = vmul.f32 %v2571, %v2699
      %v2764 = vmul.f32 %v2572, %v2700
      %v2765 = vmul.f32 %v2573, %v2701
      %v2766 = vmul.f32 %v2574, %v2702
      %v2767 = vmul.f32 %v2575, %v2703
      %v2768 = vmul.f32 %v2576, %v2704
      %v2769 = vmul.f32 %v2577, %v2705
      %v2770 = vmul.f32 %v2578, %v2706
      %v2771 = vmul.f32 %v2579, %v2707
      %v2772 = vmul.f32 %v2580, %v2708
      %v2773 = vmul.f32 %v2581, %v2709
      %v2774 = vmul.f32 %v2582, %v2710
      %v2775 = vmul.f32 %v2583, %v2711
      %v2776 = vmul.f32 %v2584, %v2712
      %v2777 = vmul.f32 %v2585, %v2713
      %v2778 = vmul.f32 %v2586, %v2714
      %v2779 = vmul.f32 %v2587, %v2715
      %v2780 = vmul.f32 %v2588, %v2716
      %v2781 = vmul.f32 %v2589, %v2717
      %v2782 = vmul.f32 %v2590, %v2718
      %v2783 = vmul.f32 %v2591, %v2719
      %v2784 = vmul.f32 %v2592, %v2720
      %v2785 = vmul.f32 %v2593, %v2721
      %v2786 = vmul.f32 %v2594, %v2722
      %v2787 = vmul.f32 %v2595, %v2723
      %v2788 = vmul.f32 %v2596, %v2724
      %v2789 = vmul.f32 %v2597, %v2725
      %v2790 = vmul.f32 %v2598, %v2726
      %v2791 = vmul.f32 %v2599, %v2727
      %v2792 = vmul.f32 %v2600, %v2728
      %v2793 = vmul.f32 %v2601, %v2729
      %v2794 = vmul.f32 %v2602, %v2730
      %v2795 = vmul.f32 %v2603, %v2731
      %v2796 = vmul.f32 %v2604, %v2732
      %v2797 = vmul.f32 %v2605, %v2733
      %v2798 = vmul.f32 %v2606, %v2734
      %v2799 = vmul.f32 %v2607, %v2735
      %v2800 = vmul.f32 %v2608, %v2736
      %v2801 = vmul.f32 %v2609, %v2737
      %v2802 = vmul.f32 %v2610, %v2738
      %v2803 = vmul.f32 %v2611, %v2739
      %v2804 = vmul.f32 %v2612, %v2740
      %v2805 = vmul.f32 %v2613, %v2741
      %2806 = vrot.lane.b32.xlu0 %v222, 2
      %v2807 = vpop.permute.xlu0 %2806
      %2808 = vrot.lane.b32.xlu0 %v223, 2
      %v2809 = vpop.permute.xlu0 %2808
      %2810 = vrot.lane.b32.xlu0 %v224, 2
      %v2811 = vpop.permute.xlu0 %2810
      %2812 = vrot.lane.b32.xlu0 %v225, 2
      %v2813 = vpop.permute.xlu0 %2812
      %2814 = vrot.lane.b32.xlu0 %v226, 2
      %v2815 = vpop.permute.xlu0 %2814
      %2816 = vrot.lane.b32.xlu0 %v227, 2
      %v2817 = vpop.permute.xlu0 %2816
      %2818 = vrot.lane.b32.xlu0 %v228, 2
      %v2819 = vpop.permute.xlu0 %2818
      %2820 = vrot.lane.b32.xlu0 %v229, 2
      %v2821 = vpop.permute.xlu0 %2820
      %2822 = vrot.lane.b32.xlu0 %v230, 2
      %v2823 = vpop.permute.xlu0 %2822
      %2824 = vrot.lane.b32.xlu0 %v231, 2
      %v2825 = vpop.permute.xlu0 %2824
      %2826 = vrot.lane.b32.xlu0 %v232, 2
      %v2827 = vpop.permute.xlu0 %2826
      %2828 = vrot.lane.b32.xlu0 %v233, 2
      %v2829 = vpop.permute.xlu0 %2828
      %2830 = vrot.lane.b32.xlu0 %v234, 2
      %v2831 = vpop.permute.xlu0 %2830
      %2832 = vrot.lane.b32.xlu0 %v235, 2
      %v2833 = vpop.permute.xlu0 %2832
      %2834 = vrot.lane.b32.xlu0 %v236, 2
      %v2835 = vpop.permute.xlu0 %2834
      %2836 = vrot.lane.b32.xlu0 %v237, 2
      %v2837 = vpop.permute.xlu0 %2836
      %v2854 = vsub.f32 %v222, %v2807
      %v2855 = vsub.f32 %v223, %v2809
      %v2856 = vsub.f32 %v224, %v2811
      %v2857 = vsub.f32 %v225, %v2813
      %v2858 = vsub.f32 %v226, %v2815
      %v2859 = vsub.f32 %v227, %v2817
      %v2860 = vsub.f32 %v228, %v2819
      %v2861 = vsub.f32 %v229, %v2821
      %v2862 = vsub.f32 %v230, %v2823
      %v2863 = vsub.f32 %v231, %v2825
      %v2864 = vsub.f32 %v232, %v2827
      %v2865 = vsub.f32 %v233, %v2829
      %v2866 = vsub.f32 %v234, %v2831
      %v2867 = vsub.f32 %v235, %v2833
      %v2868 = vsub.f32 %v236, %v2835
      %v2869 = vsub.f32 %v237, %v2837
      %2886 = vrot.lane.b32.xlu0 %v2854, 127
      %v2887 = vpop.permute.xlu0 %2886
      %2888 = vrot.lane.b32.xlu0 %v2855, 127
      %v2889 = vpop.permute.xlu0 %2888
      %2890 = vrot.lane.b32.xlu0 %v2856, 127
      %v2891 = vpop.permute.xlu0 %2890
      %2892 = vrot.lane.b32.xlu0 %v2857, 127
      %v2893 = vpop.permute.xlu0 %2892
      %2894 = vrot.lane.b32.xlu0 %v2858, 127
      %v2895 = vpop.permute.xlu0 %2894
      %2896 = vrot.lane.b32.xlu0 %v2859, 127
      %v2897 = vpop.permute.xlu0 %2896
      %2898 = vrot.lane.b32.xlu0 %v2860, 127
      %v2899 = vpop.permute.xlu0 %2898
      %2900 = vrot.lane.b32.xlu0 %v2861, 127
      %v2901 = vpop.permute.xlu0 %2900
      %2902 = vrot.lane.b32.xlu0 %v2862, 127
      %v2903 = vpop.permute.xlu0 %2902
      %2904 = vrot.lane.b32.xlu0 %v2863, 127
      %v2905 = vpop.permute.xlu0 %2904
      %2906 = vrot.lane.b32.xlu0 %v2864, 127
      %v2907 = vpop.permute.xlu0 %2906
      %2908 = vrot.lane.b32.xlu0 %v2865, 127
      %v2909 = vpop.permute.xlu0 %2908
      %2910 = vrot.lane.b32.xlu0 %v2866, 127
      %v2911 = vpop.permute.xlu0 %2910
      %2912 = vrot.lane.b32.xlu0 %v2867, 127
      %v2913 = vpop.permute.xlu0 %2912
      %2914 = vrot.lane.b32.xlu0 %v2868, 127
      %v2915 = vpop.permute.xlu0 %2914
      %2916 = vrot.lane.b32.xlu0 %v2869, 127
      %v2917 = vpop.permute.xlu0 %2916
      %v2934 = vmul.f32 %v2854, %v2887
      %v2935 = vmul.f32 %v2855, %v2889
      %v2936 = vmul.f32 %v2856, %v2891
      %v2937 = vmul.f32 %v2857, %v2893
      %v2938 = vmul.f32 %v2858, %v2895
      %v2939 = vmul.f32 %v2859, %v2897
      %v2940 = vmul.f32 %v2860, %v2899
      %v2941 = vmul.f32 %v2861, %v2901
      %v2942 = vmul.f32 %v2862, %v2903
      %v2943 = vmul.f32 %v2863, %v2905
      %v2944 = vmul.f32 %v2864, %v2907
      %v2945 = vmul.f32 %v2865, %v2909
      %v2946 = vmul.f32 %v2866, %v2911
      %v2947 = vmul.f32 %v2867, %v2913
      %v2948 = vmul.f32 %v2868, %v2915
      %v2949 = vmul.f32 %v2869, %v2917
      %2951 = vset.pattern.permute.xlu0 2
      %2952 = vperm.xlu0 %2951, %v2934
      %v2953 = vpop.permute.xlu0 %2952
      %2956 = vset.pattern.permute.xlu0 2
      %2957 = vperm.xlu0 %2956, %v2935
      %v2958 = vpop.permute.xlu0 %2957
      %2961 = vset.pattern.permute.xlu0 2
      %2962 = vperm.xlu0 %2961, %v2936
      %v2963 = vpop.permute.xlu0 %2962
      %2966 = vset.pattern.permute.xlu0 2
      %2967 = vperm.xlu0 %2966, %v2937
      %v2968 = vpop.permute.xlu0 %2967
      %2971 = vset.pattern.permute.xlu0 2
      %2972 = vperm.xlu0 %2971, %v2938
      %v2973 = vpop.permute.xlu0 %2972
      %2976 = vset.pattern.permute.xlu0 2
      %2977 = vperm.xlu0 %2976, %v2939
      %v2978 = vpop.permute.xlu0 %2977
      %2981 = vset.pattern.permute.xlu0 2
      %2982 = vperm.xlu0 %2981, %v2940
      %v2983 = vpop.permute.xlu0 %2982
      %2986 = vset.pattern.permute.xlu0 2
      %2987 = vperm.xlu0 %2986, %v2941
      %v2988 = vpop.permute.xlu0 %2987
      %2991 = vset.pattern.permute.xlu0 2
      %2992 = vperm.xlu0 %2991, %v2942
      %v2993 = vpop.permute.xlu0 %2992
      %2996 = vset.pattern.permute.xlu0 2
      %2997 = vperm.xlu0 %2996, %v2943
      %v2998 = vpop.permute.xlu0 %2997
      %3001 = vset.pattern.permute.xlu0 2
      %3002 = vperm.xlu0 %3001, %v2944
      %v3003 = vpop.permute.xlu0 %3002
      %3006 = vset.pattern.permute.xlu0 2
      %3007 = vperm.xlu0 %3006, %v2945
      %v3008 = vpop.permute.xlu0 %3007
      %3011 = vset.pattern.permute.xlu0 2
      %3012 = vperm.xlu0 %3011, %v2946
      %v3013 = vpop.permute.xlu0 %3012
      %3016 = vset.pattern.permute.xlu0 2
      %3017 = vperm.xlu0 %3016, %v2947
      %v3018 = vpop.permute.xlu0 %3017
      %3021 = vset.pattern.permute.xlu0 2
      %3022 = vperm.xlu0 %3021, %v2948
      %v3023 = vpop.permute.xlu0 %3022
      %3026 = vset.pattern.permute.xlu0 2
      %3027 = vperm.xlu0 %3026, %v2949
      %v3028 = vpop.permute.xlu0 %3027
      %v3030 = vadd.f32 %v2953, %v1420
      %v3031 = vadd.f32 %v2953, %v1421
      %v3032 = vadd.f32 %v2953, %v1422
      %v3033 = vadd.f32 %v2953, %v1423
      %v3034 = vadd.f32 %v2958, %v1420
      %v3035 = vadd.f32 %v2958, %v1421
      %v3036 = vadd.f32 %v2958, %v1422
      %v3037 = vadd.f32 %v2958, %v1423
      %v3038 = vadd.f32 %v2963, %v1420
      %v3039 = vadd.f32 %v2963, %v1421
      %v3040 = vadd.f32 %v2963, %v1422
      %v3041 = vadd.f32 %v2963, %v1423
      %v3042 = vadd.f32 %v2968, %v1420
      %v3043 = vadd.f32 %v2968, %v1421
      %v3044 = vadd.f32 %v2968, %v1422
      %v3045 = vadd.f32 %v2968, %v1423
      %v3046 = vadd.f32 %v2973, %v1420
      %v3047 = vadd.f32 %v2973, %v1421
      %v3048 = vadd.f32 %v2973, %v1422
      %v3049 = vadd.f32 %v2973, %v1423
      %v3050 = vadd.f32 %v2978, %v1420
      %v3051 = vadd.f32 %v2978, %v1421
      %v3052 = vadd.f32 %v2978, %v1422
      %v3053 = vadd.f32 %v2978, %v1423
      %v3054 = vadd.f32 %v2983, %v1420
      %v3055 = vadd.f32 %v2983, %v1421
      %v3056 = vadd.f32 %v2983, %v1422
      %v3057 = vadd.f32 %v2983, %v1423
      %v3058 = vadd.f32 %v2988, %v1420
      %v3059 = vadd.f32 %v2988, %v1421
      %v3060 = vadd.f32 %v2988, %v1422
      %v3061 = vadd.f32 %v2988, %v1423
      %v3062 = vadd.f32 %v2993, %v1420
      %v3063 = vadd.f32 %v2993, %v1421
      %v3064 = vadd.f32 %v2993, %v1422
      %v3065 = vadd.f32 %v2993, %v1423
      %v3066 = vadd.f32 %v2998, %v1420
      %v3067 = vadd.f32 %v2998, %v1421
      %v3068 = vadd.f32 %v2998, %v1422
      %v3069 = vadd.f32 %v2998, %v1423
      %v3070 = vadd.f32 %v3003, %v1420
      %v3071 = vadd.f32 %v3003, %v1421
      %v3072 = vadd.f32 %v3003, %v1422
      %v3073 = vadd.f32 %v3003, %v1423
      %v3074 = vadd.f32 %v3008, %v1420
      %v3075 = vadd.f32 %v3008, %v1421
      %v3076 = vadd.f32 %v3008, %v1422
      %v3077 = vadd.f32 %v3008, %v1423
      %v3078 = vadd.f32 %v3013, %v1420
      %v3079 = vadd.f32 %v3013, %v1421
      %v3080 = vadd.f32 %v3013, %v1422
      %v3081 = vadd.f32 %v3013, %v1423
      %v3082 = vadd.f32 %v3018, %v1420
      %v3083 = vadd.f32 %v3018, %v1421
      %v3084 = vadd.f32 %v3018, %v1422
      %v3085 = vadd.f32 %v3018, %v1423
      %v3086 = vadd.f32 %v3023, %v1420
      %v3087 = vadd.f32 %v3023, %v1421
      %v3088 = vadd.f32 %v3023, %v1422
      %v3089 = vadd.f32 %v3023, %v1423
      %v3090 = vadd.f32 %v3028, %v1420
      %v3091 = vadd.f32 %v3028, %v1421
      %v3092 = vadd.f32 %v3028, %v1422
      %v3093 = vadd.f32 %v3028, %v1423
      %v3094 = vsub.f32 %v3030, %v2742
      %v3095 = vsub.f32 %v3031, %v2743
      %v3096 = vsub.f32 %v3032, %v2744
      %v3097 = vsub.f32 %v3033, %v2745
      %v3098 = vsub.f32 %v3034, %v2746
      %v3099 = vsub.f32 %v3035, %v2747
      %v3100 = vsub.f32 %v3036, %v2748
      %v3101 = vsub.f32 %v3037, %v2749
      %v3102 = vsub.f32 %v3038, %v2750
      %v3103 = vsub.f32 %v3039, %v2751
      %v3104 = vsub.f32 %v3040, %v2752
      %v3105 = vsub.f32 %v3041, %v2753
      %v3106 = vsub.f32 %v3042, %v2754
      %v3107 = vsub.f32 %v3043, %v2755
      %v3108 = vsub.f32 %v3044, %v2756
      %v3109 = vsub.f32 %v3045, %v2757
      %v3110 = vsub.f32 %v3046, %v2758
      %v3111 = vsub.f32 %v3047, %v2759
      %v3112 = vsub.f32 %v3048, %v2760
      %v3113 = vsub.f32 %v3049, %v2761
      %v3114 = vsub.f32 %v3050, %v2762
      %v3115 = vsub.f32 %v3051, %v2763
      %v3116 = vsub.f32 %v3052, %v2764
      %v3117 = vsub.f32 %v3053, %v2765
      %v3118 = vsub.f32 %v3054, %v2766
      %v3119 = vsub.f32 %v3055, %v2767
      %v3120 = vsub.f32 %v3056, %v2768
      %v3121 = vsub.f32 %v3057, %v2769
      %v3122 = vsub.f32 %v3058, %v2770
      %v3123 = vsub.f32 %v3059, %v2771
      %v3124 = vsub.f32 %v3060, %v2772
      %v3125 = vsub.f32 %v3061, %v2773
      %v3126 = vsub.f32 %v3062, %v2774
      %v3127 = vsub.f32 %v3063, %v2775
      %v3128 = vsub.f32 %v3064, %v2776
      %v3129 = vsub.f32 %v3065, %v2777
      %v3130 = vsub.f32 %v3066, %v2778
      %v3131 = vsub.f32 %v3067, %v2779
      %v3132 = vsub.f32 %v3068, %v2780
      %v3133 = vsub.f32 %v3069, %v2781
      %v3134 = vsub.f32 %v3070, %v2782
      %v3135 = vsub.f32 %v3071, %v2783
      %v3136 = vsub.f32 %v3072, %v2784
      %v3137 = vsub.f32 %v3073, %v2785
      %v3138 = vsub.f32 %v3074, %v2786
      %v3139 = vsub.f32 %v3075, %v2787
      %v3140 = vsub.f32 %v3076, %v2788
      %v3141 = vsub.f32 %v3077, %v2789
      %v3142 = vsub.f32 %v3078, %v2790
      %v3143 = vsub.f32 %v3079, %v2791
      %v3144 = vsub.f32 %v3080, %v2792
      %v3145 = vsub.f32 %v3081, %v2793
      %v3146 = vsub.f32 %v3082, %v2794
      %v3147 = vsub.f32 %v3083, %v2795
      %v3148 = vsub.f32 %v3084, %v2796
      %v3149 = vsub.f32 %v3085, %v2797
      %v3150 = vsub.f32 %v3086, %v2798
      %v3151 = vsub.f32 %v3087, %v2799
      %v3152 = vsub.f32 %v3088, %v2800
      %v3153 = vsub.f32 %v3089, %v2801
      %v3154 = vsub.f32 %v3090, %v2802
      %v3155 = vsub.f32 %v3091, %v2803
      %v3156 = vsub.f32 %v3092, %v2804
      %v3157 = vsub.f32 %v3093, %v2805
      %v3158 = vadd.s32 %v1553, 128
      %v3159 = vadd.s32 %v1554, 128
      %v3160 = vadd.s32 %v1555, 128
      %v3161 = vadd.s32 %v1556, 128
      %v3162 = vadd.s32 %v1557, 128
      %v3163 = vadd.s32 %v1558, 128
      %v3164 = vadd.s32 %v1559, 128
      %v3165 = vadd.s32 %v1560, 128
      %v3166 = vadd.s32 %v1561, 128
      %v3167 = vadd.s32 %v1562, 128
      %v3168 = vadd.s32 %v1563, 128
      %v3169 = vadd.s32 %v1564, 128
      %v3170 = vadd.s32 %v1565, 128
      %v3171 = vadd.s32 %v1566, 128
      %v3172 = vadd.s32 %v1567, 128
      %v3173 = vadd.s32 %v1568, 128
      %v3174 = vmul.f32 %v3094, 0.45
      %v3175 = vmul.f32 %v3095, 0.45
      %v3176 = vmul.f32 %v3096, 0.45
      %v3177 = vmul.f32 %v3097, 0.45
      %v3178 = vmul.f32 %v3098, 0.45
      %v3179 = vmul.f32 %v3099, 0.45
      %v3180 = vmul.f32 %v3100, 0.45
      %v3181 = vmul.f32 %v3101, 0.45
      %v3182 = vmul.f32 %v3102, 0.45
      %v3183 = vmul.f32 %v3103, 0.45
      %v3184 = vmul.f32 %v3104, 0.45
      %v3185 = vmul.f32 %v3105, 0.45
      %v3186 = vmul.f32 %v3106, 0.45
      %v3187 = vmul.f32 %v3107, 0.45
      %v3188 = vmul.f32 %v3108, 0.45
      %v3189 = vmul.f32 %v3109, 0.45
      %v3190 = vmul.f32 %v3110, 0.45
      %v3191 = vmul.f32 %v3111, 0.45
      %v3192 = vmul.f32 %v3112, 0.45
      %v3193 = vmul.f32 %v3113, 0.45
      %v3194 = vmul.f32 %v3114, 0.45
      %v3195 = vmul.f32 %v3115, 0.45
      %v3196 = vmul.f32 %v3116, 0.45
      %v3197 = vmul.f32 %v3117, 0.45
      %v3198 = vmul.f32 %v3118, 0.45
      %v3199 = vmul.f32 %v3119, 0.45
      %v3200 = vmul.f32 %v3120, 0.45
      %v3201 = vmul.f32 %v3121, 0.45
      %v3202 = vmul.f32 %v3122, 0.45
      %v3203 = vmul.f32 %v3123, 0.45
      %v3204 = vmul.f32 %v3124, 0.45
      %v3205 = vmul.f32 %v3125, 0.45
      %v3206 = vmul.f32 %v3126, 0.45
      %v3207 = vmul.f32 %v3127, 0.45
      %v3208 = vmul.f32 %v3128, 0.45
      %v3209 = vmul.f32 %v3129, 0.45
      %v3210 = vmul.f32 %v3130, 0.45
      %v3211 = vmul.f32 %v3131, 0.45
      %v3212 = vmul.f32 %v3132, 0.45
      %v3213 = vmul.f32 %v3133, 0.45
      %v3214 = vmul.f32 %v3134, 0.45
      %v3215 = vmul.f32 %v3135, 0.45
      %v3216 = vmul.f32 %v3136, 0.45
      %v3217 = vmul.f32 %v3137, 0.45
      %v3218 = vmul.f32 %v3138, 0.45
      %v3219 = vmul.f32 %v3139, 0.45
      %v3220 = vmul.f32 %v3140, 0.45
      %v3221 = vmul.f32 %v3141, 0.45
      %v3222 = vmul.f32 %v3142, 0.45
      %v3223 = vmul.f32 %v3143, 0.45
      %v3224 = vmul.f32 %v3144, 0.45
      %v3225 = vmul.f32 %v3145, 0.45
      %v3226 = vmul.f32 %v3146, 0.45
      %v3227 = vmul.f32 %v3147, 0.45
      %v3228 = vmul.f32 %v3148, 0.45
      %v3229 = vmul.f32 %v3149, 0.45
      %v3230 = vmul.f32 %v3150, 0.45
      %v3231 = vmul.f32 %v3151, 0.45
      %v3232 = vmul.f32 %v3152, 0.45
      %v3233 = vmul.f32 %v3153, 0.45
      %v3234 = vmul.f32 %v3154, 0.45
      %v3235 = vmul.f32 %v3155, 0.45
      %v3236 = vmul.f32 %v3156, 0.45
      %v3237 = vmul.f32 %v3157, 0.45
      %vm3238 = vcmp.gt.f32.partialorder %v2742, %v3174
      %vm3239 = vcmp.gt.f32.partialorder %v2743, %v3175
      %vm3240 = vcmp.gt.f32.partialorder %v2744, %v3176
      %vm3241 = vcmp.gt.f32.partialorder %v2745, %v3177
      %vm3242 = vcmp.gt.f32.partialorder %v2746, %v3178
      %vm3243 = vcmp.gt.f32.partialorder %v2747, %v3179
      %vm3244 = vcmp.gt.f32.partialorder %v2748, %v3180
      %vm3245 = vcmp.gt.f32.partialorder %v2749, %v3181
      %vm3246 = vcmp.gt.f32.partialorder %v2750, %v3182
      %vm3247 = vcmp.gt.f32.partialorder %v2751, %v3183
      %vm3248 = vcmp.gt.f32.partialorder %v2752, %v3184
      %vm3249 = vcmp.gt.f32.partialorder %v2753, %v3185
      %vm3250 = vcmp.gt.f32.partialorder %v2754, %v3186
      %vm3251 = vcmp.gt.f32.partialorder %v2755, %v3187
      %vm3252 = vcmp.gt.f32.partialorder %v2756, %v3188
      %vm3253 = vcmp.gt.f32.partialorder %v2757, %v3189
      %vm3254 = vcmp.gt.f32.partialorder %v2758, %v3190
      %vm3255 = vcmp.gt.f32.partialorder %v2759, %v3191
      %vm3256 = vcmp.gt.f32.partialorder %v2760, %v3192
      %vm3257 = vcmp.gt.f32.partialorder %v2761, %v3193
      %vm3258 = vcmp.gt.f32.partialorder %v2762, %v3194
      %vm3259 = vcmp.gt.f32.partialorder %v2763, %v3195
      %vm3260 = vcmp.gt.f32.partialorder %v2764, %v3196
      %vm3261 = vcmp.gt.f32.partialorder %v2765, %v3197
      %vm3262 = vcmp.gt.f32.partialorder %v2766, %v3198
      %vm3263 = vcmp.gt.f32.partialorder %v2767, %v3199
      %vm3264 = vcmp.gt.f32.partialorder %v2768, %v3200
      %vm3265 = vcmp.gt.f32.partialorder %v2769, %v3201
      %vm3266 = vcmp.gt.f32.partialorder %v2770, %v3202
      %vm3267 = vcmp.gt.f32.partialorder %v2771, %v3203
      %vm3268 = vcmp.gt.f32.partialorder %v2772, %v3204
      %vm3269 = vcmp.gt.f32.partialorder %v2773, %v3205
      %vm3270 = vcmp.gt.f32.partialorder %v2774, %v3206
      %vm3271 = vcmp.gt.f32.partialorder %v2775, %v3207
      %vm3272 = vcmp.gt.f32.partialorder %v2776, %v3208
      %vm3273 = vcmp.gt.f32.partialorder %v2777, %v3209
      %vm3274 = vcmp.gt.f32.partialorder %v2778, %v3210
      %vm3275 = vcmp.gt.f32.partialorder %v2779, %v3211
      %vm3276 = vcmp.gt.f32.partialorder %v2780, %v3212
      %vm3277 = vcmp.gt.f32.partialorder %v2781, %v3213
      %vm3278 = vcmp.gt.f32.partialorder %v2782, %v3214
      %vm3279 = vcmp.gt.f32.partialorder %v2783, %v3215
      %vm3280 = vcmp.gt.f32.partialorder %v2784, %v3216
      %vm3281 = vcmp.gt.f32.partialorder %v2785, %v3217
      %vm3282 = vcmp.gt.f32.partialorder %v2786, %v3218
      %vm3283 = vcmp.gt.f32.partialorder %v2787, %v3219
      %vm3284 = vcmp.gt.f32.partialorder %v2788, %v3220
      %vm3285 = vcmp.gt.f32.partialorder %v2789, %v3221
      %vm3286 = vcmp.gt.f32.partialorder %v2790, %v3222
      %vm3287 = vcmp.gt.f32.partialorder %v2791, %v3223
      %vm3288 = vcmp.gt.f32.partialorder %v2792, %v3224
      %vm3289 = vcmp.gt.f32.partialorder %v2793, %v3225
      %vm3290 = vcmp.gt.f32.partialorder %v2794, %v3226
      %vm3291 = vcmp.gt.f32.partialorder %v2795, %v3227
      %vm3292 = vcmp.gt.f32.partialorder %v2796, %v3228
      %vm3293 = vcmp.gt.f32.partialorder %v2797, %v3229
      %vm3294 = vcmp.gt.f32.partialorder %v2798, %v3230
      %vm3295 = vcmp.gt.f32.partialorder %v2799, %v3231
      %vm3296 = vcmp.gt.f32.partialorder %v2800, %v3232
      %vm3297 = vcmp.gt.f32.partialorder %v2801, %v3233
      %vm3298 = vcmp.gt.f32.partialorder %v2802, %v3234
      %vm3299 = vcmp.gt.f32.partialorder %v2803, %v3235
      %vm3300 = vcmp.gt.f32.partialorder %v2804, %v3236
      %vm3301 = vcmp.gt.f32.partialorder %v2805, %v3237
      %vm3302 = vcmp.gt.s32.totalorder %v1570, %v3158
      %vm3303 = vcmp.gt.s32.totalorder %v1571, %v3158
      %vm3304 = vcmp.gt.s32.totalorder %v1572, %v3158
      %vm3305 = vcmp.gt.s32.totalorder %v1573, %v3158
      %vm3306 = vcmp.gt.s32.totalorder %v1570, %v3159
      %vm3307 = vcmp.gt.s32.totalorder %v1571, %v3159
      %vm3308 = vcmp.gt.s32.totalorder %v1572, %v3159
      %vm3309 = vcmp.gt.s32.totalorder %v1573, %v3159
      %vm3310 = vcmp.gt.s32.totalorder %v1570, %v3160
      %vm3311 = vcmp.gt.s32.totalorder %v1571, %v3160
      %vm3312 = vcmp.gt.s32.totalorder %v1572, %v3160
      %vm3313 = vcmp.gt.s32.totalorder %v1573, %v3160
      %vm3314 = vcmp.gt.s32.totalorder %v1570, %v3161
      %vm3315 = vcmp.gt.s32.totalorder %v1571, %v3161
      %vm3316 = vcmp.gt.s32.totalorder %v1572, %v3161
      %vm3317 = vcmp.gt.s32.totalorder %v1573, %v3161
      %vm3318 = vcmp.gt.s32.totalorder %v1570, %v3162
      %vm3319 = vcmp.gt.s32.totalorder %v1571, %v3162
      %vm3320 = vcmp.gt.s32.totalorder %v1572, %v3162
      %vm3321 = vcmp.gt.s32.totalorder %v1573, %v3162
      %vm3322 = vcmp.gt.s32.totalorder %v1570, %v3163
      %vm3323 = vcmp.gt.s32.totalorder %v1571, %v3163
      %vm3324 = vcmp.gt.s32.totalorder %v1572, %v3163
      %vm3325 = vcmp.gt.s32.totalorder %v1573, %v3163
      %vm3326 = vcmp.gt.s32.totalorder %v1570, %v3164
      %vm3327 = vcmp.gt.s32.totalorder %v1571, %v3164
      %vm3328 = vcmp.gt.s32.totalorder %v1572, %v3164
      %vm3329 = vcmp.gt.s32.totalorder %v1573, %v3164
      %vm3330 = vcmp.gt.s32.totalorder %v1570, %v3165
      %vm3331 = vcmp.gt.s32.totalorder %v1571, %v3165
      %vm3332 = vcmp.gt.s32.totalorder %v1572, %v3165
      %vm3333 = vcmp.gt.s32.totalorder %v1573, %v3165
      %vm3334 = vcmp.gt.s32.totalorder %v1570, %v3166
      %vm3335 = vcmp.gt.s32.totalorder %v1571, %v3166
      %vm3336 = vcmp.gt.s32.totalorder %v1572, %v3166
      %vm3337 = vcmp.gt.s32.totalorder %v1573, %v3166
      %vm3338 = vcmp.gt.s32.totalorder %v1570, %v3167
      %vm3339 = vcmp.gt.s32.totalorder %v1571, %v3167
      %vm3340 = vcmp.gt.s32.totalorder %v1572, %v3167
      %vm3341 = vcmp.gt.s32.totalorder %v1573, %v3167
      %vm3342 = vcmp.gt.s32.totalorder %v1570, %v3168
      %vm3343 = vcmp.gt.s32.totalorder %v1571, %v3168
      %vm3344 = vcmp.gt.s32.totalorder %v1572, %v3168
      %vm3345 = vcmp.gt.s32.totalorder %v1573, %v3168
      %vm3346 = vcmp.gt.s32.totalorder %v1570, %v3169
      %vm3347 = vcmp.gt.s32.totalorder %v1571, %v3169
      %vm3348 = vcmp.gt.s32.totalorder %v1572, %v3169
      %vm3349 = vcmp.gt.s32.totalorder %v1573, %v3169
      %vm3350 = vcmp.gt.s32.totalorder %v1570, %v3170
      %vm3351 = vcmp.gt.s32.totalorder %v1571, %v3170
      %vm3352 = vcmp.gt.s32.totalorder %v1572, %v3170
      %vm3353 = vcmp.gt.s32.totalorder %v1573, %v3170
      %vm3354 = vcmp.gt.s32.totalorder %v1570, %v3171
      %vm3355 = vcmp.gt.s32.totalorder %v1571, %v3171
      %vm3356 = vcmp.gt.s32.totalorder %v1572, %v3171
      %vm3357 = vcmp.gt.s32.totalorder %v1573, %v3171
      %vm3358 = vcmp.gt.s32.totalorder %v1570, %v3172
      %vm3359 = vcmp.gt.s32.totalorder %v1571, %v3172
      %vm3360 = vcmp.gt.s32.totalorder %v1572, %v3172
      %vm3361 = vcmp.gt.s32.totalorder %v1573, %v3172
      %vm3362 = vcmp.gt.s32.totalorder %v1570, %v3173
      %vm3363 = vcmp.gt.s32.totalorder %v1571, %v3173
      %vm3364 = vcmp.gt.s32.totalorder %v1572, %v3173
      %vm3365 = vcmp.gt.s32.totalorder %v1573, %v3173
      %vm3366 = vmand %vm3238, %vm3302
      %vm3367 = vmand %vm3239, %vm3303
      %vm3368 = vmand %vm3240, %vm3304
      %vm3369 = vmand %vm3241, %vm3305
      %vm3370 = vmand %vm3242, %vm3306
      %vm3371 = vmand %vm3243, %vm3307
      %vm3372 = vmand %vm3244, %vm3308
      %vm3373 = vmand %vm3245, %vm3309
      %vm3374 = vmand %vm3246, %vm3310
      %vm3375 = vmand %vm3247, %vm3311
      %vm3376 = vmand %vm3248, %vm3312
      %vm3377 = vmand %vm3249, %vm3313
      %vm3378 = vmand %vm3250, %vm3314
      %vm3379 = vmand %vm3251, %vm3315
      %vm3380 = vmand %vm3252, %vm3316
      %vm3381 = vmand %vm3253, %vm3317
      %vm3382 = vmand %vm3254, %vm3318
      %vm3383 = vmand %vm3255, %vm3319
      %vm3384 = vmand %vm3256, %vm3320
      %vm3385 = vmand %vm3257, %vm3321
      %vm3386 = vmand %vm3258, %vm3322
      %vm3387 = vmand %vm3259, %vm3323
      %vm3388 = vmand %vm3260, %vm3324
      %vm3389 = vmand %vm3261, %vm3325
      %vm3390 = vmand %vm3262, %vm3326
      %vm3391 = vmand %vm3263, %vm3327
      %vm3392 = vmand %vm3264, %vm3328
      %vm3393 = vmand %vm3265, %vm3329
      %vm3394 = vmand %vm3266, %vm3330
      %vm3395 = vmand %vm3267, %vm3331
      %vm3396 = vmand %vm3268, %vm3332
      %vm3397 = vmand %vm3269, %vm3333
      %vm3398 = vmand %vm3270, %vm3334
      %vm3399 = vmand %vm3271, %vm3335
      %vm3400 = vmand %vm3272, %vm3336
      %vm3401 = vmand %vm3273, %vm3337
      %vm3402 = vmand %vm3274, %vm3338
      %vm3403 = vmand %vm3275, %vm3339
      %vm3404 = vmand %vm3276, %vm3340
      %vm3405 = vmand %vm3277, %vm3341
      %vm3406 = vmand %vm3278, %vm3342
      %vm3407 = vmand %vm3279, %vm3343
      %vm3408 = vmand %vm3280, %vm3344
      %vm3409 = vmand %vm3281, %vm3345
      %vm3410 = vmand %vm3282, %vm3346
      %vm3411 = vmand %vm3283, %vm3347
      %vm3412 = vmand %vm3284, %vm3348
      %vm3413 = vmand %vm3285, %vm3349
      %vm3414 = vmand %vm3286, %vm3350
      %vm3415 = vmand %vm3287, %vm3351
      %vm3416 = vmand %vm3288, %vm3352
      %vm3417 = vmand %vm3289, %vm3353
      %vm3418 = vmand %vm3290, %vm3354
      %vm3419 = vmand %vm3291, %vm3355
      %vm3420 = vmand %vm3292, %vm3356
      %vm3421 = vmand %vm3293, %vm3357
      %vm3422 = vmand %vm3294, %vm3358
      %vm3423 = vmand %vm3295, %vm3359
      %vm3424 = vmand %vm3296, %vm3360
      %vm3425 = vmand %vm3297, %vm3361
      %vm3426 = vmand %vm3298, %vm3362
      %vm3427 = vmand %vm3299, %vm3363
      %vm3428 = vmand %vm3300, %vm3364
      %vm3429 = vmand %vm3301, %vm3365
      %v3430 = vsel %vm3366, 1.0, 0.0
      %v3431 = vsel %vm3367, 1.0, 0.0
      %v3432 = vsel %vm3368, 1.0, 0.0
      %v3433 = vsel %vm3369, 1.0, 0.0
      %v3434 = vsel %vm3370, 1.0, 0.0
      %v3435 = vsel %vm3371, 1.0, 0.0
      %v3436 = vsel %vm3372, 1.0, 0.0
      %v3437 = vsel %vm3373, 1.0, 0.0
      %v3438 = vsel %vm3374, 1.0, 0.0
      %v3439 = vsel %vm3375, 1.0, 0.0
      %v3440 = vsel %vm3376, 1.0, 0.0
      %v3441 = vsel %vm3377, 1.0, 0.0
      %v3442 = vsel %vm3378, 1.0, 0.0
      %v3443 = vsel %vm3379, 1.0, 0.0
      %v3444 = vsel %vm3380, 1.0, 0.0
      %v3445 = vsel %vm3381, 1.0, 0.0
      %v3446 = vsel %vm3382, 1.0, 0.0
      %v3447 = vsel %vm3383, 1.0, 0.0
      %v3448 = vsel %vm3384, 1.0, 0.0
      %v3449 = vsel %vm3385, 1.0, 0.0
      %v3450 = vsel %vm3386, 1.0, 0.0
      %v3451 = vsel %vm3387, 1.0, 0.0
      %v3452 = vsel %vm3388, 1.0, 0.0
      %v3453 = vsel %vm3389, 1.0, 0.0
      %v3454 = vsel %vm3390, 1.0, 0.0
      %v3455 = vsel %vm3391, 1.0, 0.0
      %v3456 = vsel %vm3392, 1.0, 0.0
      %v3457 = vsel %vm3393, 1.0, 0.0
      %v3458 = vsel %vm3394, 1.0, 0.0
      %v3459 = vsel %vm3395, 1.0, 0.0
      %v3460 = vsel %vm3396, 1.0, 0.0
      %v3461 = vsel %vm3397, 1.0, 0.0
      %v3462 = vsel %vm3398, 1.0, 0.0
      %v3463 = vsel %vm3399, 1.0, 0.0
      %v3464 = vsel %vm3400, 1.0, 0.0
      %v3465 = vsel %vm3401, 1.0, 0.0
      %v3466 = vsel %vm3402, 1.0, 0.0
      %v3467 = vsel %vm3403, 1.0, 0.0
      %v3468 = vsel %vm3404, 1.0, 0.0
      %v3469 = vsel %vm3405, 1.0, 0.0
      %v3470 = vsel %vm3406, 1.0, 0.0
      %v3471 = vsel %vm3407, 1.0, 0.0
      %v3472 = vsel %vm3408, 1.0, 0.0
      %v3473 = vsel %vm3409, 1.0, 0.0
      %v3474 = vsel %vm3410, 1.0, 0.0
      %v3475 = vsel %vm3411, 1.0, 0.0
      %v3476 = vsel %vm3412, 1.0, 0.0
      %v3477 = vsel %vm3413, 1.0, 0.0
      %v3478 = vsel %vm3414, 1.0, 0.0
      %v3479 = vsel %vm3415, 1.0, 0.0
      %v3480 = vsel %vm3416, 1.0, 0.0
      %v3481 = vsel %vm3417, 1.0, 0.0
      %v3482 = vsel %vm3418, 1.0, 0.0
      %v3483 = vsel %vm3419, 1.0, 0.0
      %v3484 = vsel %vm3420, 1.0, 0.0
      %v3485 = vsel %vm3421, 1.0, 0.0
      %v3486 = vsel %vm3422, 1.0, 0.0
      %v3487 = vsel %vm3423, 1.0, 0.0
      %v3488 = vsel %vm3424, 1.0, 0.0
      %v3489 = vsel %vm3425, 1.0, 0.0
      %v3490 = vsel %vm3426, 1.0, 0.0
      %v3491 = vsel %vm3427, 1.0, 0.0
      %v3492 = vsel %vm3428, 1.0, 0.0
      %v3493 = vsel %vm3429, 1.0, 0.0
      %3494 = vst [vmem:[#allocation2 + $0x200] sm:$0xff] %v3430
      %3495 = vst [vmem:[#allocation2 + $0x208] sm:$0xff] %v3431
      %3496 = vst [vmem:[#allocation2 + $0x210] sm:$0xff] %v3432
      %3497 = vst [vmem:[#allocation2 + $0x218] sm:$0xff] %v3433
      %3498 = vst [vmem:[#allocation2 + $0x220] sm:$0xff] %v3434
      %3499 = vst [vmem:[#allocation2 + $0x228] sm:$0xff] %v3435
      %3500 = vst [vmem:[#allocation2 + $0x230] sm:$0xff] %v3436
      %3501 = vst [vmem:[#allocation2 + $0x238] sm:$0xff] %v3437
      %3502 = vst [vmem:[#allocation2 + $0x240] sm:$0xff] %v3438
      %3503 = vst [vmem:[#allocation2 + $0x248] sm:$0xff] %v3439
      %3504 = vst [vmem:[#allocation2 + $0x250] sm:$0xff] %v3440
      %3505 = vst [vmem:[#allocation2 + $0x258] sm:$0xff] %v3441
      %3506 = vst [vmem:[#allocation2 + $0x260] sm:$0xff] %v3442
      %3507 = vst [vmem:[#allocation2 + $0x268] sm:$0xff] %v3443
      %3508 = vst [vmem:[#allocation2 + $0x270] sm:$0xff] %v3444
      %3509 = vst [vmem:[#allocation2 + $0x278] sm:$0xff] %v3445
      %3510 = vst [vmem:[#allocation2 + $0x280] sm:$0xff] %v3446
      %3511 = vst [vmem:[#allocation2 + $0x288] sm:$0xff] %v3447
      %3512 = vst [vmem:[#allocation2 + $0x290] sm:$0xff] %v3448
      %3513 = vst [vmem:[#allocation2 + $0x298] sm:$0xff] %v3449
      %3514 = vst [vmem:[#allocation2 + $0x2a0] sm:$0xff] %v3450
      %3515 = vst [vmem:[#allocation2 + $0x2a8] sm:$0xff] %v3451
      %3516 = vst [vmem:[#allocation2 + $0x2b0] sm:$0xff] %v3452
      %3517 = vst [vmem:[#allocation2 + $0x2b8] sm:$0xff] %v3453
      %3518 = vst [vmem:[#allocation2 + $0x2c0] sm:$0xff] %v3454
      %3519 = vst [vmem:[#allocation2 + $0x2c8] sm:$0xff] %v3455
      %3520 = vst [vmem:[#allocation2 + $0x2d0] sm:$0xff] %v3456
      %3521 = vst [vmem:[#allocation2 + $0x2d8] sm:$0xff] %v3457
      %3522 = vst [vmem:[#allocation2 + $0x2e0] sm:$0xff] %v3458
      %3523 = vst [vmem:[#allocation2 + $0x2e8] sm:$0xff] %v3459
      %3524 = vst [vmem:[#allocation2 + $0x2f0] sm:$0xff] %v3460
      %3525 = vst [vmem:[#allocation2 + $0x2f8] sm:$0xff] %v3461
      %3526 = vst [vmem:[#allocation2 + $0x300] sm:$0xff] %v3462
      %3527 = vst [vmem:[#allocation2 + $0x308] sm:$0xff] %v3463
      %3528 = vst [vmem:[#allocation2 + $0x310] sm:$0xff] %v3464
      %3529 = vst [vmem:[#allocation2 + $0x318] sm:$0xff] %v3465
      %3530 = vst [vmem:[#allocation2 + $0x320] sm:$0xff] %v3466
      %3531 = vst [vmem:[#allocation2 + $0x328] sm:$0xff] %v3467
      %3532 = vst [vmem:[#allocation2 + $0x330] sm:$0xff] %v3468
      %3533 = vst [vmem:[#allocation2 + $0x338] sm:$0xff] %v3469
      %3534 = vst [vmem:[#allocation2 + $0x340] sm:$0xff] %v3470
      %3535 = vst [vmem:[#allocation2 + $0x348] sm:$0xff] %v3471
      %3536 = vst [vmem:[#allocation2 + $0x350] sm:$0xff] %v3472
      %3537 = vst [vmem:[#allocation2 + $0x358] sm:$0xff] %v3473
      %3538 = vst [vmem:[#allocation2 + $0x360] sm:$0xff] %v3474
      %3539 = vst [vmem:[#allocation2 + $0x368] sm:$0xff] %v3475
      %3540 = vst [vmem:[#allocation2 + $0x370] sm:$0xff] %v3476
      %3541 = vst [vmem:[#allocation2 + $0x378] sm:$0xff] %v3477
      %3542 = vst [vmem:[#allocation2 + $0x380] sm:$0xff] %v3478
      %3543 = vst [vmem:[#allocation2 + $0x388] sm:$0xff] %v3479
      %3544 = vst [vmem:[#allocation2 + $0x390] sm:$0xff] %v3480
      %3545 = vst [vmem:[#allocation2 + $0x398] sm:$0xff] %v3481
      %3546 = vst [vmem:[#allocation2 + $0x3a0] sm:$0xff] %v3482
      %3547 = vst [vmem:[#allocation2 + $0x3a8] sm:$0xff] %v3483
      %3548 = vst [vmem:[#allocation2 + $0x3b0] sm:$0xff] %v3484
      %3549 = vst [vmem:[#allocation2 + $0x3b8] sm:$0xff] %v3485
      %3550 = vst [vmem:[#allocation2 + $0x3c0] sm:$0xff] %v3486
      %3551 = vst [vmem:[#allocation2 + $0x3c8] sm:$0xff] %v3487
      %3552 = vst [vmem:[#allocation2 + $0x3d0] sm:$0xff] %v3488
      %3553 = vst [vmem:[#allocation2 + $0x3d8] sm:$0xff] %v3489
      %3554 = vst [vmem:[#allocation2 + $0x3e0] sm:$0xff] %v3490
      %3555 = vst [vmem:[#allocation2 + $0x3e8] sm:$0xff] %v3491
      %3556 = vst [vmem:[#allocation2 + $0x3f0] sm:$0xff] %v3492
      %3557 = vst [vmem:[#allocation2 + $0x3f8] sm:$0xff] %v3493
      %3559 = vset.pattern.permute.xlu0 0
      %3560 = vperm.xlu0 %3559, %v238
      %v3561 = vpop.permute.xlu0 %3560
      %3564 = vset.pattern.permute.xlu0 0
      %3565 = vperm.xlu0 %3564, %v239
      %v3566 = vpop.permute.xlu0 %3565
      %3569 = vset.pattern.permute.xlu0 0
      %3570 = vperm.xlu0 %3569, %v240
      %v3571 = vpop.permute.xlu0 %3570
      %3574 = vset.pattern.permute.xlu0 0
      %3575 = vperm.xlu0 %3574, %v241
      %v3576 = vpop.permute.xlu0 %3575
      %3579 = vset.pattern.permute.xlu0 0
      %3580 = vperm.xlu0 %3579, %v242
      %v3581 = vpop.permute.xlu0 %3580
      %3584 = vset.pattern.permute.xlu0 0
      %3585 = vperm.xlu0 %3584, %v243
      %v3586 = vpop.permute.xlu0 %3585
      %3589 = vset.pattern.permute.xlu0 0
      %3590 = vperm.xlu0 %3589, %v244
      %v3591 = vpop.permute.xlu0 %3590
      %3594 = vset.pattern.permute.xlu0 0
      %3595 = vperm.xlu0 %3594, %v245
      %v3596 = vpop.permute.xlu0 %3595
      %3599 = vset.pattern.permute.xlu0 0
      %3600 = vperm.xlu0 %3599, %v246
      %v3601 = vpop.permute.xlu0 %3600
      %3604 = vset.pattern.permute.xlu0 0
      %3605 = vperm.xlu0 %3604, %v247
      %v3606 = vpop.permute.xlu0 %3605
      %3609 = vset.pattern.permute.xlu0 0
      %3610 = vperm.xlu0 %3609, %v248
      %v3611 = vpop.permute.xlu0 %3610
      %3614 = vset.pattern.permute.xlu0 0
      %3615 = vperm.xlu0 %3614, %v249
      %v3616 = vpop.permute.xlu0 %3615
      %3619 = vset.pattern.permute.xlu0 0
      %3620 = vperm.xlu0 %3619, %v250
      %v3621 = vpop.permute.xlu0 %3620
      %3624 = vset.pattern.permute.xlu0 0
      %3625 = vperm.xlu0 %3624, %v251
      %v3626 = vpop.permute.xlu0 %3625
      %3629 = vset.pattern.permute.xlu0 0
      %3630 = vperm.xlu0 %3629, %v252
      %v3631 = vpop.permute.xlu0 %3630
      %3634 = vset.pattern.permute.xlu0 0
      %3635 = vperm.xlu0 %3634, %v253
      %v3636 = vpop.permute.xlu0 %3635
      %v3638 = vmax.f32 %v3561, %v378
      %v3639 = vmax.f32 %v3561, %v379
      %v3640 = vmax.f32 %v3561, %v380
      %v3641 = vmax.f32 %v3561, %v381
      %v3642 = vmax.f32 %v3566, %v378
      %v3643 = vmax.f32 %v3566, %v379
      %v3644 = vmax.f32 %v3566, %v380
      %v3645 = vmax.f32 %v3566, %v381
      %v3646 = vmax.f32 %v3571, %v378
      %v3647 = vmax.f32 %v3571, %v379
      %v3648 = vmax.f32 %v3571, %v380
      %v3649 = vmax.f32 %v3571, %v381
      %v3650 = vmax.f32 %v3576, %v378
      %v3651 = vmax.f32 %v3576, %v379
      %v3652 = vmax.f32 %v3576, %v380
      %v3653 = vmax.f32 %v3576, %v381
      %v3654 = vmax.f32 %v3581, %v378
      %v3655 = vmax.f32 %v3581, %v379
      %v3656 = vmax.f32 %v3581, %v380
      %v3657 = vmax.f32 %v3581, %v381
      %v3658 = vmax.f32 %v3586, %v378
      %v3659 = vmax.f32 %v3586, %v379
      %v3660 = vmax.f32 %v3586, %v380
      %v3661 = vmax.f32 %v3586, %v381
      %v3662 = vmax.f32 %v3591, %v378
      %v3663 = vmax.f32 %v3591, %v379
      %v3664 = vmax.f32 %v3591, %v380
      %v3665 = vmax.f32 %v3591, %v381
      %v3666 = vmax.f32 %v3596, %v378
      %v3667 = vmax.f32 %v3596, %v379
      %v3668 = vmax.f32 %v3596, %v380
      %v3669 = vmax.f32 %v3596, %v381
      %v3670 = vmax.f32 %v3601, %v378
      %v3671 = vmax.f32 %v3601, %v379
      %v3672 = vmax.f32 %v3601, %v380
      %v3673 = vmax.f32 %v3601, %v381
      %v3674 = vmax.f32 %v3606, %v378
      %v3675 = vmax.f32 %v3606, %v379
      %v3676 = vmax.f32 %v3606, %v380
      %v3677 = vmax.f32 %v3606, %v381
      %v3678 = vmax.f32 %v3611, %v378
      %v3679 = vmax.f32 %v3611, %v379
      %v3680 = vmax.f32 %v3611, %v380
      %v3681 = vmax.f32 %v3611, %v381
      %v3682 = vmax.f32 %v3616, %v378
      %v3683 = vmax.f32 %v3616, %v379
      %v3684 = vmax.f32 %v3616, %v380
      %v3685 = vmax.f32 %v3616, %v381
      %v3686 = vmax.f32 %v3621, %v378
      %v3687 = vmax.f32 %v3621, %v379
      %v3688 = vmax.f32 %v3621, %v380
      %v3689 = vmax.f32 %v3621, %v381
      %v3690 = vmax.f32 %v3626, %v378
      %v3691 = vmax.f32 %v3626, %v379
      %v3692 = vmax.f32 %v3626, %v380
      %v3693 = vmax.f32 %v3626, %v381
      %v3694 = vmax.f32 %v3631, %v378
      %v3695 = vmax.f32 %v3631, %v379
      %v3696 = vmax.f32 %v3631, %v380
      %v3697 = vmax.f32 %v3631, %v381
      %v3698 = vmax.f32 %v3636, %v378
      %v3699 = vmax.f32 %v3636, %v379
      %v3700 = vmax.f32 %v3636, %v380
      %v3701 = vmax.f32 %v3636, %v381
      %3702 = vset.pattern.permute.xlu0 1
      %3703 = vperm.xlu0 %3702, %v238
      %v3704 = vpop.permute.xlu0 %3703
      %3706 = vset.pattern.permute.xlu0 1
      %3707 = vperm.xlu0 %3706, %v239
      %v3708 = vpop.permute.xlu0 %3707
      %3710 = vset.pattern.permute.xlu0 1
      %3711 = vperm.xlu0 %3710, %v240
      %v3712 = vpop.permute.xlu0 %3711
      %3714 = vset.pattern.permute.xlu0 1
      %3715 = vperm.xlu0 %3714, %v241
      %v3716 = vpop.permute.xlu0 %3715
      %3718 = vset.pattern.permute.xlu0 1
      %3719 = vperm.xlu0 %3718, %v242
      %v3720 = vpop.permute.xlu0 %3719
      %3722 = vset.pattern.permute.xlu0 1
      %3723 = vperm.xlu0 %3722, %v243
      %v3724 = vpop.permute.xlu0 %3723
      %3726 = vset.pattern.permute.xlu0 1
      %3727 = vperm.xlu0 %3726, %v244
      %v3728 = vpop.permute.xlu0 %3727
      %3730 = vset.pattern.permute.xlu0 1
      %3731 = vperm.xlu0 %3730, %v245
      %v3732 = vpop.permute.xlu0 %3731
      %3734 = vset.pattern.permute.xlu0 1
      %3735 = vperm.xlu0 %3734, %v246
      %v3736 = vpop.permute.xlu0 %3735
      %3738 = vset.pattern.permute.xlu0 1
      %3739 = vperm.xlu0 %3738, %v247
      %v3740 = vpop.permute.xlu0 %3739
      %3742 = vset.pattern.permute.xlu0 1
      %3743 = vperm.xlu0 %3742, %v248
      %v3744 = vpop.permute.xlu0 %3743
      %3746 = vset.pattern.permute.xlu0 1
      %3747 = vperm.xlu0 %3746, %v249
      %v3748 = vpop.permute.xlu0 %3747
      %3750 = vset.pattern.permute.xlu0 1
      %3751 = vperm.xlu0 %3750, %v250
      %v3752 = vpop.permute.xlu0 %3751
      %3754 = vset.pattern.permute.xlu0 1
      %3755 = vperm.xlu0 %3754, %v251
      %v3756 = vpop.permute.xlu0 %3755
      %3758 = vset.pattern.permute.xlu0 1
      %3759 = vperm.xlu0 %3758, %v252
      %v3760 = vpop.permute.xlu0 %3759
      %3762 = vset.pattern.permute.xlu0 1
      %3763 = vperm.xlu0 %3762, %v253
      %v3764 = vpop.permute.xlu0 %3763
      %v3766 = vmax.f32 %v3704, %v518
      %v3767 = vmax.f32 %v3704, %v519
      %v3768 = vmax.f32 %v3704, %v520
      %v3769 = vmax.f32 %v3704, %v521
      %v3770 = vmax.f32 %v3708, %v518
      %v3771 = vmax.f32 %v3708, %v519
      %v3772 = vmax.f32 %v3708, %v520
      %v3773 = vmax.f32 %v3708, %v521
      %v3774 = vmax.f32 %v3712, %v518
      %v3775 = vmax.f32 %v3712, %v519
      %v3776 = vmax.f32 %v3712, %v520
      %v3777 = vmax.f32 %v3712, %v521
      %v3778 = vmax.f32 %v3716, %v518
      %v3779 = vmax.f32 %v3716, %v519
      %v3780 = vmax.f32 %v3716, %v520
      %v3781 = vmax.f32 %v3716, %v521
      %v3782 = vmax.f32 %v3720, %v518
      %v3783 = vmax.f32 %v3720, %v519
      %v3784 = vmax.f32 %v3720, %v520
      %v3785 = vmax.f32 %v3720, %v521
      %v3786 = vmax.f32 %v3724, %v518
      %v3787 = vmax.f32 %v3724, %v519
      %v3788 = vmax.f32 %v3724, %v520
      %v3789 = vmax.f32 %v3724, %v521
      %v3790 = vmax.f32 %v3728, %v518
      %v3791 = vmax.f32 %v3728, %v519
      %v3792 = vmax.f32 %v3728, %v520
      %v3793 = vmax.f32 %v3728, %v521
      %v3794 = vmax.f32 %v3732, %v518
      %v3795 = vmax.f32 %v3732, %v519
      %v3796 = vmax.f32 %v3732, %v520
      %v3797 = vmax.f32 %v3732, %v521
      %v3798 = vmax.f32 %v3736, %v518
      %v3799 = vmax.f32 %v3736, %v519
      %v3800 = vmax.f32 %v3736, %v520
      %v3801 = vmax.f32 %v3736, %v521
      %v3802 = vmax.f32 %v3740, %v518
      %v3803 = vmax.f32 %v3740, %v519
      %v3804 = vmax.f32 %v3740, %v520
      %v3805 = vmax.f32 %v3740, %v521
      %v3806 = vmax.f32 %v3744, %v518
      %v3807 = vmax.f32 %v3744, %v519
      %v3808 = vmax.f32 %v3744, %v520
      %v3809 = vmax.f32 %v3744, %v521
      %v3810 = vmax.f32 %v3748, %v518
      %v3811 = vmax.f32 %v3748, %v519
      %v3812 = vmax.f32 %v3748, %v520
      %v3813 = vmax.f32 %v3748, %v521
      %v3814 = vmax.f32 %v3752, %v518
      %v3815 = vmax.f32 %v3752, %v519
      %v3816 = vmax.f32 %v3752, %v520
      %v3817 = vmax.f32 %v3752, %v521
      %v3818 = vmax.f32 %v3756, %v518
      %v3819 = vmax.f32 %v3756, %v519
      %v3820 = vmax.f32 %v3756, %v520
      %v3821 = vmax.f32 %v3756, %v521
      %v3822 = vmax.f32 %v3760, %v518
      %v3823 = vmax.f32 %v3760, %v519
      %v3824 = vmax.f32 %v3760, %v520
      %v3825 = vmax.f32 %v3760, %v521
      %v3826 = vmax.f32 %v3764, %v518
      %v3827 = vmax.f32 %v3764, %v519
      %v3828 = vmax.f32 %v3764, %v520
      %v3829 = vmax.f32 %v3764, %v521
      %3830 = vset.pattern.permute.xlu0 2
      %3831 = vperm.xlu0 %3830, %v238
      %v3832 = vpop.permute.xlu0 %3831
      %3834 = vset.pattern.permute.xlu0 2
      %3835 = vperm.xlu0 %3834, %v239
      %v3836 = vpop.permute.xlu0 %3835
      %3838 = vset.pattern.permute.xlu0 2
      %3839 = vperm.xlu0 %3838, %v240
      %v3840 = vpop.permute.xlu0 %3839
      %3842 = vset.pattern.permute.xlu0 2
      %3843 = vperm.xlu0 %3842, %v241
      %v3844 = vpop.permute.xlu0 %3843
      %3846 = vset.pattern.permute.xlu0 2
      %3847 = vperm.xlu0 %3846, %v242
      %v3848 = vpop.permute.xlu0 %3847
      %3850 = vset.pattern.permute.xlu0 2
      %3851 = vperm.xlu0 %3850, %v243
      %v3852 = vpop.permute.xlu0 %3851
      %3854 = vset.pattern.permute.xlu0 2
      %3855 = vperm.xlu0 %3854, %v244
      %v3856 = vpop.permute.xlu0 %3855
      %3858 = vset.pattern.permute.xlu0 2
      %3859 = vperm.xlu0 %3858, %v245
      %v3860 = vpop.permute.xlu0 %3859
      %3862 = vset.pattern.permute.xlu0 2
      %3863 = vperm.xlu0 %3862, %v246
      %v3864 = vpop.permute.xlu0 %3863
      %3866 = vset.pattern.permute.xlu0 2
      %3867 = vperm.xlu0 %3866, %v247
      %v3868 = vpop.permute.xlu0 %3867
      %3870 = vset.pattern.permute.xlu0 2
      %3871 = vperm.xlu0 %3870, %v248
      %v3872 = vpop.permute.xlu0 %3871
      %3874 = vset.pattern.permute.xlu0 2
      %3875 = vperm.xlu0 %3874, %v249
      %v3876 = vpop.permute.xlu0 %3875
      %3878 = vset.pattern.permute.xlu0 2
      %3879 = vperm.xlu0 %3878, %v250
      %v3880 = vpop.permute.xlu0 %3879
      %3882 = vset.pattern.permute.xlu0 2
      %3883 = vperm.xlu0 %3882, %v251
      %v3884 = vpop.permute.xlu0 %3883
      %3886 = vset.pattern.permute.xlu0 2
      %3887 = vperm.xlu0 %3886, %v252
      %v3888 = vpop.permute.xlu0 %3887
      %3890 = vset.pattern.permute.xlu0 2
      %3891 = vperm.xlu0 %3890, %v253
      %v3892 = vpop.permute.xlu0 %3891
      %v3894 = vmin.f32 %v3832, %v658
      %v3895 = vmin.f32 %v3832, %v659
      %v3896 = vmin.f32 %v3832, %v660
      %v3897 = vmin.f32 %v3832, %v661
      %v3898 = vmin.f32 %v3836, %v658
      %v3899 = vmin.f32 %v3836, %v659
      %v3900 = vmin.f32 %v3836, %v660
      %v3901 = vmin.f32 %v3836, %v661
      %v3902 = vmin.f32 %v3840, %v658
      %v3903 = vmin.f32 %v3840, %v659
      %v3904 = vmin.f32 %v3840, %v660
      %v3905 = vmin.f32 %v3840, %v661
      %v3906 = vmin.f32 %v3844, %v658
      %v3907 = vmin.f32 %v3844, %v659
      %v3908 = vmin.f32 %v3844, %v660
      %v3909 = vmin.f32 %v3844, %v661
      %v3910 = vmin.f32 %v3848, %v658
      %v3911 = vmin.f32 %v3848, %v659
      %v3912 = vmin.f32 %v3848, %v660
      %v3913 = vmin.f32 %v3848, %v661
      %v3914 = vmin.f32 %v3852, %v658
      %v3915 = vmin.f32 %v3852, %v659
      %v3916 = vmin.f32 %v3852, %v660
      %v3917 = vmin.f32 %v3852, %v661
      %v3918 = vmin.f32 %v3856, %v658
      %v3919 = vmin.f32 %v3856, %v659
      %v3920 = vmin.f32 %v3856, %v660
      %v3921 = vmin.f32 %v3856, %v661
      %v3922 = vmin.f32 %v3860, %v658
      %v3923 = vmin.f32 %v3860, %v659
      %v3924 = vmin.f32 %v3860, %v660
      %v3925 = vmin.f32 %v3860, %v661
      %v3926 = vmin.f32 %v3864, %v658
      %v3927 = vmin.f32 %v3864, %v659
      %v3928 = vmin.f32 %v3864, %v660
      %v3929 = vmin.f32 %v3864, %v661
      %v3930 = vmin.f32 %v3868, %v658
      %v3931 = vmin.f32 %v3868, %v659
      %v3932 = vmin.f32 %v3868, %v660
      %v3933 = vmin.f32 %v3868, %v661
      %v3934 = vmin.f32 %v3872, %v658
      %v3935 = vmin.f32 %v3872, %v659
      %v3936 = vmin.f32 %v3872, %v660
      %v3937 = vmin.f32 %v3872, %v661
      %v3938 = vmin.f32 %v3876, %v658
      %v3939 = vmin.f32 %v3876, %v659
      %v3940 = vmin.f32 %v3876, %v660
      %v3941 = vmin.f32 %v3876, %v661
      %v3942 = vmin.f32 %v3880, %v658
      %v3943 = vmin.f32 %v3880, %v659
      %v3944 = vmin.f32 %v3880, %v660
      %v3945 = vmin.f32 %v3880, %v661
      %v3946 = vmin.f32 %v3884, %v658
      %v3947 = vmin.f32 %v3884, %v659
      %v3948 = vmin.f32 %v3884, %v660
      %v3949 = vmin.f32 %v3884, %v661
      %v3950 = vmin.f32 %v3888, %v658
      %v3951 = vmin.f32 %v3888, %v659
      %v3952 = vmin.f32 %v3888, %v660
      %v3953 = vmin.f32 %v3888, %v661
      %v3954 = vmin.f32 %v3892, %v658
      %v3955 = vmin.f32 %v3892, %v659
      %v3956 = vmin.f32 %v3892, %v660
      %v3957 = vmin.f32 %v3892, %v661
      %3958 = vset.pattern.permute.xlu0 3
      %3959 = vperm.xlu0 %3958, %v238
      %v3960 = vpop.permute.xlu0 %3959
      %3962 = vset.pattern.permute.xlu0 3
      %3963 = vperm.xlu0 %3962, %v239
      %v3964 = vpop.permute.xlu0 %3963
      %3966 = vset.pattern.permute.xlu0 3
      %3967 = vperm.xlu0 %3966, %v240
      %v3968 = vpop.permute.xlu0 %3967
      %3970 = vset.pattern.permute.xlu0 3
      %3971 = vperm.xlu0 %3970, %v241
      %v3972 = vpop.permute.xlu0 %3971
      %3974 = vset.pattern.permute.xlu0 3
      %3975 = vperm.xlu0 %3974, %v242
      %v3976 = vpop.permute.xlu0 %3975
      %3978 = vset.pattern.permute.xlu0 3
      %3979 = vperm.xlu0 %3978, %v243
      %v3980 = vpop.permute.xlu0 %3979
      %3982 = vset.pattern.permute.xlu0 3
      %3983 = vperm.xlu0 %3982, %v244
      %v3984 = vpop.permute.xlu0 %3983
      %3986 = vset.pattern.permute.xlu0 3
      %3987 = vperm.xlu0 %3986, %v245
      %v3988 = vpop.permute.xlu0 %3987
      %3990 = vset.pattern.permute.xlu0 3
      %3991 = vperm.xlu0 %3990, %v246
      %v3992 = vpop.permute.xlu0 %3991
      %3994 = vset.pattern.permute.xlu0 3
      %3995 = vperm.xlu0 %3994, %v247
      %v3996 = vpop.permute.xlu0 %3995
      %3998 = vset.pattern.permute.xlu0 3
      %3999 = vperm.xlu0 %3998, %v248
      %v4000 = vpop.permute.xlu0 %3999
      %4002 = vset.pattern.permute.xlu0 3
      %4003 = vperm.xlu0 %4002, %v249
      %v4004 = vpop.permute.xlu0 %4003
      %4006 = vset.pattern.permute.xlu0 3
      %4007 = vperm.xlu0 %4006, %v250
      %v4008 = vpop.permute.xlu0 %4007
      %4010 = vset.pattern.permute.xlu0 3
      %4011 = vperm.xlu0 %4010, %v251
      %v4012 = vpop.permute.xlu0 %4011
      %4014 = vset.pattern.permute.xlu0 3
      %4015 = vperm.xlu0 %4014, %v252
      %v4016 = vpop.permute.xlu0 %4015
      %4018 = vset.pattern.permute.xlu0 3
      %4019 = vperm.xlu0 %4018, %v253
      %v4020 = vpop.permute.xlu0 %4019
      %v4022 = vmin.f32 %v3960, %v798
      %v4023 = vmin.f32 %v3960, %v799
      %v4024 = vmin.f32 %v3960, %v800
      %v4025 = vmin.f32 %v3960, %v801
      %v4026 = vmin.f32 %v3964, %v798
      %v4027 = vmin.f32 %v3964, %v799
      %v4028 = vmin.f32 %v3964, %v800
      %v4029 = vmin.f32 %v3964, %v801
      %v4030 = vmin.f32 %v3968, %v798
      %v4031 = vmin.f32 %v3968, %v799
      %v4032 = vmin.f32 %v3968, %v800
      %v4033 = vmin.f32 %v3968, %v801
      %v4034 = vmin.f32 %v3972, %v798
      %v4035 = vmin.f32 %v3972, %v799
      %v4036 = vmin.f32 %v3972, %v800
      %v4037 = vmin.f32 %v3972, %v801
      %v4038 = vmin.f32 %v3976, %v798
      %v4039 = vmin.f32 %v3976, %v799
      %v4040 = vmin.f32 %v3976, %v800
      %v4041 = vmin.f32 %v3976, %v801
      %v4042 = vmin.f32 %v3980, %v798
      %v4043 = vmin.f32 %v3980, %v799
      %v4044 = vmin.f32 %v3980, %v800
      %v4045 = vmin.f32 %v3980, %v801
      %v4046 = vmin.f32 %v3984, %v798
      %v4047 = vmin.f32 %v3984, %v799
      %v4048 = vmin.f32 %v3984, %v800
      %v4049 = vmin.f32 %v3984, %v801
      %v4050 = vmin.f32 %v3988, %v798
      %v4051 = vmin.f32 %v3988, %v799
      %v4052 = vmin.f32 %v3988, %v800
      %v4053 = vmin.f32 %v3988, %v801
      %v4054 = vmin.f32 %v3992, %v798
      %v4055 = vmin.f32 %v3992, %v799
      %v4056 = vmin.f32 %v3992, %v800
      %v4057 = vmin.f32 %v3992, %v801
      %v4058 = vmin.f32 %v3996, %v798
      %v4059 = vmin.f32 %v3996, %v799
      %v4060 = vmin.f32 %v3996, %v800
      %v4061 = vmin.f32 %v3996, %v801
      %v4062 = vmin.f32 %v4000, %v798
      %v4063 = vmin.f32 %v4000, %v799
      %v4064 = vmin.f32 %v4000, %v800
      %v4065 = vmin.f32 %v4000, %v801
      %v4066 = vmin.f32 %v4004, %v798
      %v4067 = vmin.f32 %v4004, %v799
      %v4068 = vmin.f32 %v4004, %v800
      %v4069 = vmin.f32 %v4004, %v801
      %v4070 = vmin.f32 %v4008, %v798
      %v4071 = vmin.f32 %v4008, %v799
      %v4072 = vmin.f32 %v4008, %v800
      %v4073 = vmin.f32 %v4008, %v801
      %v4074 = vmin.f32 %v4012, %v798
      %v4075 = vmin.f32 %v4012, %v799
      %v4076 = vmin.f32 %v4012, %v800
      %v4077 = vmin.f32 %v4012, %v801
      %v4078 = vmin.f32 %v4016, %v798
      %v4079 = vmin.f32 %v4016, %v799
      %v4080 = vmin.f32 %v4016, %v800
      %v4081 = vmin.f32 %v4016, %v801
      %v4082 = vmin.f32 %v4020, %v798
      %v4083 = vmin.f32 %v4020, %v799
      %v4084 = vmin.f32 %v4020, %v800
      %v4085 = vmin.f32 %v4020, %v801
      %v4086 = vsub.f32 %v3894, %v3638
      %v4087 = vsub.f32 %v3895, %v3639
      %v4088 = vsub.f32 %v3896, %v3640
      %v4089 = vsub.f32 %v3897, %v3641
      %v4090 = vsub.f32 %v3898, %v3642
      %v4091 = vsub.f32 %v3899, %v3643
      %v4092 = vsub.f32 %v3900, %v3644
      %v4093 = vsub.f32 %v3901, %v3645
      %v4094 = vsub.f32 %v3902, %v3646
      %v4095 = vsub.f32 %v3903, %v3647
      %v4096 = vsub.f32 %v3904, %v3648
      %v4097 = vsub.f32 %v3905, %v3649
      %v4098 = vsub.f32 %v3906, %v3650
      %v4099 = vsub.f32 %v3907, %v3651
      %v4100 = vsub.f32 %v3908, %v3652
      %v4101 = vsub.f32 %v3909, %v3653
      %v4102 = vsub.f32 %v3910, %v3654
      %v4103 = vsub.f32 %v3911, %v3655
      %v4104 = vsub.f32 %v3912, %v3656
      %v4105 = vsub.f32 %v3913, %v3657
      %v4106 = vsub.f32 %v3914, %v3658
      %v4107 = vsub.f32 %v3915, %v3659
      %v4108 = vsub.f32 %v3916, %v3660
      %v4109 = vsub.f32 %v3917, %v3661
      %v4110 = vsub.f32 %v3918, %v3662
      %v4111 = vsub.f32 %v3919, %v3663
      %v4112 = vsub.f32 %v3920, %v3664
      %v4113 = vsub.f32 %v3921, %v3665
      %v4114 = vsub.f32 %v3922, %v3666
      %v4115 = vsub.f32 %v3923, %v3667
      %v4116 = vsub.f32 %v3924, %v3668
      %v4117 = vsub.f32 %v3925, %v3669
      %v4118 = vsub.f32 %v3926, %v3670
      %v4119 = vsub.f32 %v3927, %v3671
      %v4120 = vsub.f32 %v3928, %v3672
      %v4121 = vsub.f32 %v3929, %v3673
      %v4122 = vsub.f32 %v3930, %v3674
      %v4123 = vsub.f32 %v3931, %v3675
      %v4124 = vsub.f32 %v3932, %v3676
      %v4125 = vsub.f32 %v3933, %v3677
      %v4126 = vsub.f32 %v3934, %v3678
      %v4127 = vsub.f32 %v3935, %v3679
      %v4128 = vsub.f32 %v3936, %v3680
      %v4129 = vsub.f32 %v3937, %v3681
      %v4130 = vsub.f32 %v3938, %v3682
      %v4131 = vsub.f32 %v3939, %v3683
      %v4132 = vsub.f32 %v3940, %v3684
      %v4133 = vsub.f32 %v3941, %v3685
      %v4134 = vsub.f32 %v3942, %v3686
      %v4135 = vsub.f32 %v3943, %v3687
      %v4136 = vsub.f32 %v3944, %v3688
      %v4137 = vsub.f32 %v3945, %v3689
      %v4138 = vsub.f32 %v3946, %v3690
      %v4139 = vsub.f32 %v3947, %v3691
      %v4140 = vsub.f32 %v3948, %v3692
      %v4141 = vsub.f32 %v3949, %v3693
      %v4142 = vsub.f32 %v3950, %v3694
      %v4143 = vsub.f32 %v3951, %v3695
      %v4144 = vsub.f32 %v3952, %v3696
      %v4145 = vsub.f32 %v3953, %v3697
      %v4146 = vsub.f32 %v3954, %v3698
      %v4147 = vsub.f32 %v3955, %v3699
      %v4148 = vsub.f32 %v3956, %v3700
      %v4149 = vsub.f32 %v3957, %v3701
      %v4150 = vmax.f32 %v4086, 0.0
      %v4151 = vmax.f32 %v4087, 0.0
      %v4152 = vmax.f32 %v4088, 0.0
      %v4153 = vmax.f32 %v4089, 0.0
      %v4154 = vmax.f32 %v4090, 0.0
      %v4155 = vmax.f32 %v4091, 0.0
      %v4156 = vmax.f32 %v4092, 0.0
      %v4157 = vmax.f32 %v4093, 0.0
      %v4158 = vmax.f32 %v4094, 0.0
      %v4159 = vmax.f32 %v4095, 0.0
      %v4160 = vmax.f32 %v4096, 0.0
      %v4161 = vmax.f32 %v4097, 0.0
      %v4162 = vmax.f32 %v4098, 0.0
      %v4163 = vmax.f32 %v4099, 0.0
      %v4164 = vmax.f32 %v4100, 0.0
      %v4165 = vmax.f32 %v4101, 0.0
      %v4166 = vmax.f32 %v4102, 0.0
      %v4167 = vmax.f32 %v4103, 0.0
      %v4168 = vmax.f32 %v4104, 0.0
      %v4169 = vmax.f32 %v4105, 0.0
      %v4170 = vmax.f32 %v4106, 0.0
      %v4171 = vmax.f32 %v4107, 0.0
      %v4172 = vmax.f32 %v4108, 0.0
      %v4173 = vmax.f32 %v4109, 0.0
      %v4174 = vmax.f32 %v4110, 0.0
      %v4175 = vmax.f32 %v4111, 0.0
      %v4176 = vmax.f32 %v4112, 0.0
      %v4177 = vmax.f32 %v4113, 0.0
      %v4178 = vmax.f32 %v4114, 0.0
      %v4179 = vmax.f32 %v4115, 0.0
      %v4180 = vmax.f32 %v4116, 0.0
      %v4181 = vmax.f32 %v4117, 0.0
      %v4182 = vmax.f32 %v4118, 0.0
      %v4183 = vmax.f32 %v4119, 0.0
      %v4184 = vmax.f32 %v4120, 0.0
      %v4185 = vmax.f32 %v4121, 0.0
      %v4186 = vmax.f32 %v4122, 0.0
      %v4187 = vmax.f32 %v4123, 0.0
      %v4188 = vmax.f32 %v4124, 0.0
      %v4189 = vmax.f32 %v4125, 0.0
      %v4190 = vmax.f32 %v4126, 0.0
      %v4191 = vmax.f32 %v4127, 0.0
      %v4192 = vmax.f32 %v4128, 0.0
      %v4193 = vmax.f32 %v4129, 0.0
      %v4194 = vmax.f32 %v4130, 0.0
      %v4195 = vmax.f32 %v4131, 0.0
      %v4196 = vmax.f32 %v4132, 0.0
      %v4197 = vmax.f32 %v4133, 0.0
      %v4198 = vmax.f32 %v4134, 0.0
      %v4199 = vmax.f32 %v4135, 0.0
      %v4200 = vmax.f32 %v4136, 0.0
      %v4201 = vmax.f32 %v4137, 0.0
      %v4202 = vmax.f32 %v4138, 0.0
      %v4203 = vmax.f32 %v4139, 0.0
      %v4204 = vmax.f32 %v4140, 0.0
      %v4205 = vmax.f32 %v4141, 0.0
      %v4206 = vmax.f32 %v4142, 0.0
      %v4207 = vmax.f32 %v4143, 0.0
      %v4208 = vmax.f32 %v4144, 0.0
      %v4209 = vmax.f32 %v4145, 0.0
      %v4210 = vmax.f32 %v4146, 0.0
      %v4211 = vmax.f32 %v4147, 0.0
      %v4212 = vmax.f32 %v4148, 0.0
      %v4213 = vmax.f32 %v4149, 0.0
      %v4214 = vsub.f32 %v4022, %v3766
      %v4215 = vsub.f32 %v4023, %v3767
      %v4216 = vsub.f32 %v4024, %v3768
      %v4217 = vsub.f32 %v4025, %v3769
      %v4218 = vsub.f32 %v4026, %v3770
      %v4219 = vsub.f32 %v4027, %v3771
      %v4220 = vsub.f32 %v4028, %v3772
      %v4221 = vsub.f32 %v4029, %v3773
      %v4222 = vsub.f32 %v4030, %v3774
      %v4223 = vsub.f32 %v4031, %v3775
      %v4224 = vsub.f32 %v4032, %v3776
      %v4225 = vsub.f32 %v4033, %v3777
      %v4226 = vsub.f32 %v4034, %v3778
      %v4227 = vsub.f32 %v4035, %v3779
      %v4228 = vsub.f32 %v4036, %v3780
      %v4229 = vsub.f32 %v4037, %v3781
      %v4230 = vsub.f32 %v4038, %v3782
      %v4231 = vsub.f32 %v4039, %v3783
      %v4232 = vsub.f32 %v4040, %v3784
      %v4233 = vsub.f32 %v4041, %v3785
      %v4234 = vsub.f32 %v4042, %v3786
      %v4235 = vsub.f32 %v4043, %v3787
      %v4236 = vsub.f32 %v4044, %v3788
      %v4237 = vsub.f32 %v4045, %v3789
      %v4238 = vsub.f32 %v4046, %v3790
      %v4239 = vsub.f32 %v4047, %v3791
      %v4240 = vsub.f32 %v4048, %v3792
      %v4241 = vsub.f32 %v4049, %v3793
      %v4242 = vsub.f32 %v4050, %v3794
      %v4243 = vsub.f32 %v4051, %v3795
      %v4244 = vsub.f32 %v4052, %v3796
      %v4245 = vsub.f32 %v4053, %v3797
      %v4246 = vsub.f32 %v4054, %v3798
      %v4247 = vsub.f32 %v4055, %v3799
      %v4248 = vsub.f32 %v4056, %v3800
      %v4249 = vsub.f32 %v4057, %v3801
      %v4250 = vsub.f32 %v4058, %v3802
      %v4251 = vsub.f32 %v4059, %v3803
      %v4252 = vsub.f32 %v4060, %v3804
      %v4253 = vsub.f32 %v4061, %v3805
      %v4254 = vsub.f32 %v4062, %v3806
      %v4255 = vsub.f32 %v4063, %v3807
      %v4256 = vsub.f32 %v4064, %v3808
      %v4257 = vsub.f32 %v4065, %v3809
      %v4258 = vsub.f32 %v4066, %v3810
      %v4259 = vsub.f32 %v4067, %v3811
      %v4260 = vsub.f32 %v4068, %v3812
      %v4261 = vsub.f32 %v4069, %v3813
      %v4262 = vsub.f32 %v4070, %v3814
      %v4263 = vsub.f32 %v4071, %v3815
      %v4264 = vsub.f32 %v4072, %v3816
      %v4265 = vsub.f32 %v4073, %v3817
      %v4266 = vsub.f32 %v4074, %v3818
      %v4267 = vsub.f32 %v4075, %v3819
      %v4268 = vsub.f32 %v4076, %v3820
      %v4269 = vsub.f32 %v4077, %v3821
      %v4270 = vsub.f32 %v4078, %v3822
      %v4271 = vsub.f32 %v4079, %v3823
      %v4272 = vsub.f32 %v4080, %v3824
      %v4273 = vsub.f32 %v4081, %v3825
      %v4274 = vsub.f32 %v4082, %v3826
      %v4275 = vsub.f32 %v4083, %v3827
      %v4276 = vsub.f32 %v4084, %v3828
      %v4277 = vsub.f32 %v4085, %v3829
      %v4278 = vmax.f32 %v4214, 0.0
      %v4279 = vmax.f32 %v4215, 0.0
      %v4280 = vmax.f32 %v4216, 0.0
      %v4281 = vmax.f32 %v4217, 0.0
      %v4282 = vmax.f32 %v4218, 0.0
      %v4283 = vmax.f32 %v4219, 0.0
      %v4284 = vmax.f32 %v4220, 0.0
      %v4285 = vmax.f32 %v4221, 0.0
      %v4286 = vmax.f32 %v4222, 0.0
      %v4287 = vmax.f32 %v4223, 0.0
      %v4288 = vmax.f32 %v4224, 0.0
      %v4289 = vmax.f32 %v4225, 0.0
      %v4290 = vmax.f32 %v4226, 0.0
      %v4291 = vmax.f32 %v4227, 0.0
      %v4292 = vmax.f32 %v4228, 0.0
      %v4293 = vmax.f32 %v4229, 0.0
      %v4294 = vmax.f32 %v4230, 0.0
      %v4295 = vmax.f32 %v4231, 0.0
      %v4296 = vmax.f32 %v4232, 0.0
      %v4297 = vmax.f32 %v4233, 0.0
      %v4298 = vmax.f32 %v4234, 0.0
      %v4299 = vmax.f32 %v4235, 0.0
      %v4300 = vmax.f32 %v4236, 0.0
      %v4301 = vmax.f32 %v4237, 0.0
      %v4302 = vmax.f32 %v4238, 0.0
      %v4303 = vmax.f32 %v4239, 0.0
      %v4304 = vmax.f32 %v4240, 0.0
      %v4305 = vmax.f32 %v4241, 0.0
      %v4306 = vmax.f32 %v4242, 0.0
      %v4307 = vmax.f32 %v4243, 0.0
      %v4308 = vmax.f32 %v4244, 0.0
      %v4309 = vmax.f32 %v4245, 0.0
      %v4310 = vmax.f32 %v4246, 0.0
      %v4311 = vmax.f32 %v4247, 0.0
      %v4312 = vmax.f32 %v4248, 0.0
      %v4313 = vmax.f32 %v4249, 0.0
      %v4314 = vmax.f32 %v4250, 0.0
      %v4315 = vmax.f32 %v4251, 0.0
      %v4316 = vmax.f32 %v4252, 0.0
      %v4317 = vmax.f32 %v4253, 0.0
      %v4318 = vmax.f32 %v4254, 0.0
      %v4319 = vmax.f32 %v4255, 0.0
      %v4320 = vmax.f32 %v4256, 0.0
      %v4321 = vmax.f32 %v4257, 0.0
      %v4322 = vmax.f32 %v4258, 0.0
      %v4323 = vmax.f32 %v4259, 0.0
      %v4324 = vmax.f32 %v4260, 0.0
      %v4325 = vmax.f32 %v4261, 0.0
      %v4326 = vmax.f32 %v4262, 0.0
      %v4327 = vmax.f32 %v4263, 0.0
      %v4328 = vmax.f32 %v4264, 0.0
      %v4329 = vmax.f32 %v4265, 0.0
      %v4330 = vmax.f32 %v4266, 0.0
      %v4331 = vmax.f32 %v4267, 0.0
      %v4332 = vmax.f32 %v4268, 0.0
      %v4333 = vmax.f32 %v4269, 0.0
      %v4334 = vmax.f32 %v4270, 0.0
      %v4335 = vmax.f32 %v4271, 0.0
      %v4336 = vmax.f32 %v4272, 0.0
      %v4337 = vmax.f32 %v4273, 0.0
      %v4338 = vmax.f32 %v4274, 0.0
      %v4339 = vmax.f32 %v4275, 0.0
      %v4340 = vmax.f32 %v4276, 0.0
      %v4341 = vmax.f32 %v4277, 0.0
      %v4342 = vmul.f32 %v4150, %v4278
      %v4343 = vmul.f32 %v4151, %v4279
      %v4344 = vmul.f32 %v4152, %v4280
      %v4345 = vmul.f32 %v4153, %v4281
      %v4346 = vmul.f32 %v4154, %v4282
      %v4347 = vmul.f32 %v4155, %v4283
      %v4348 = vmul.f32 %v4156, %v4284
      %v4349 = vmul.f32 %v4157, %v4285
      %v4350 = vmul.f32 %v4158, %v4286
      %v4351 = vmul.f32 %v4159, %v4287
      %v4352 = vmul.f32 %v4160, %v4288
      %v4353 = vmul.f32 %v4161, %v4289
      %v4354 = vmul.f32 %v4162, %v4290
      %v4355 = vmul.f32 %v4163, %v4291
      %v4356 = vmul.f32 %v4164, %v4292
      %v4357 = vmul.f32 %v4165, %v4293
      %v4358 = vmul.f32 %v4166, %v4294
      %v4359 = vmul.f32 %v4167, %v4295
      %v4360 = vmul.f32 %v4168, %v4296
      %v4361 = vmul.f32 %v4169, %v4297
      %v4362 = vmul.f32 %v4170, %v4298
      %v4363 = vmul.f32 %v4171, %v4299
      %v4364 = vmul.f32 %v4172, %v4300
      %v4365 = vmul.f32 %v4173, %v4301
      %v4366 = vmul.f32 %v4174, %v4302
      %v4367 = vmul.f32 %v4175, %v4303
      %v4368 = vmul.f32 %v4176, %v4304
      %v4369 = vmul.f32 %v4177, %v4305
      %v4370 = vmul.f32 %v4178, %v4306
      %v4371 = vmul.f32 %v4179, %v4307
      %v4372 = vmul.f32 %v4180, %v4308
      %v4373 = vmul.f32 %v4181, %v4309
      %v4374 = vmul.f32 %v4182, %v4310
      %v4375 = vmul.f32 %v4183, %v4311
      %v4376 = vmul.f32 %v4184, %v4312
      %v4377 = vmul.f32 %v4185, %v4313
      %v4378 = vmul.f32 %v4186, %v4314
      %v4379 = vmul.f32 %v4187, %v4315
      %v4380 = vmul.f32 %v4188, %v4316
      %v4381 = vmul.f32 %v4189, %v4317
      %v4382 = vmul.f32 %v4190, %v4318
      %v4383 = vmul.f32 %v4191, %v4319
      %v4384 = vmul.f32 %v4192, %v4320
      %v4385 = vmul.f32 %v4193, %v4321
      %v4386 = vmul.f32 %v4194, %v4322
      %v4387 = vmul.f32 %v4195, %v4323
      %v4388 = vmul.f32 %v4196, %v4324
      %v4389 = vmul.f32 %v4197, %v4325
      %v4390 = vmul.f32 %v4198, %v4326
      %v4391 = vmul.f32 %v4199, %v4327
      %v4392 = vmul.f32 %v4200, %v4328
      %v4393 = vmul.f32 %v4201, %v4329
      %v4394 = vmul.f32 %v4202, %v4330
      %v4395 = vmul.f32 %v4203, %v4331
      %v4396 = vmul.f32 %v4204, %v4332
      %v4397 = vmul.f32 %v4205, %v4333
      %v4398 = vmul.f32 %v4206, %v4334
      %v4399 = vmul.f32 %v4207, %v4335
      %v4400 = vmul.f32 %v4208, %v4336
      %v4401 = vmul.f32 %v4209, %v4337
      %v4402 = vmul.f32 %v4210, %v4338
      %v4403 = vmul.f32 %v4211, %v4339
      %v4404 = vmul.f32 %v4212, %v4340
      %v4405 = vmul.f32 %v4213, %v4341
      %4406 = vrot.lane.b32.xlu0 %v238, 2
      %v4407 = vpop.permute.xlu0 %4406
      %4408 = vrot.lane.b32.xlu0 %v239, 2
      %v4409 = vpop.permute.xlu0 %4408
      %4410 = vrot.lane.b32.xlu0 %v240, 2
      %v4411 = vpop.permute.xlu0 %4410
      %4412 = vrot.lane.b32.xlu0 %v241, 2
      %v4413 = vpop.permute.xlu0 %4412
      %4414 = vrot.lane.b32.xlu0 %v242, 2
      %v4415 = vpop.permute.xlu0 %4414
      %4416 = vrot.lane.b32.xlu0 %v243, 2
      %v4417 = vpop.permute.xlu0 %4416
      %4418 = vrot.lane.b32.xlu0 %v244, 2
      %v4419 = vpop.permute.xlu0 %4418
      %4420 = vrot.lane.b32.xlu0 %v245, 2
      %v4421 = vpop.permute.xlu0 %4420
      %4422 = vrot.lane.b32.xlu0 %v246, 2
      %v4423 = vpop.permute.xlu0 %4422
      %4424 = vrot.lane.b32.xlu0 %v247, 2
      %v4425 = vpop.permute.xlu0 %4424
      %4426 = vrot.lane.b32.xlu0 %v248, 2
      %v4427 = vpop.permute.xlu0 %4426
      %4428 = vrot.lane.b32.xlu0 %v249, 2
      %v4429 = vpop.permute.xlu0 %4428
      %4430 = vrot.lane.b32.xlu0 %v250, 2
      %v4431 = vpop.permute.xlu0 %4430
      %4432 = vrot.lane.b32.xlu0 %v251, 2
      %v4433 = vpop.permute.xlu0 %4432
      %4434 = vrot.lane.b32.xlu0 %v252, 2
      %v4435 = vpop.permute.xlu0 %4434
      %4436 = vrot.lane.b32.xlu0 %v253, 2
      %v4437 = vpop.permute.xlu0 %4436
      %v4454 = vsub.f32 %v238, %v4407
      %v4455 = vsub.f32 %v239, %v4409
      %v4456 = vsub.f32 %v240, %v4411
      %v4457 = vsub.f32 %v241, %v4413
      %v4458 = vsub.f32 %v242, %v4415
      %v4459 = vsub.f32 %v243, %v4417
      %v4460 = vsub.f32 %v244, %v4419
      %v4461 = vsub.f32 %v245, %v4421
      %v4462 = vsub.f32 %v246, %v4423
      %v4463 = vsub.f32 %v247, %v4425
      %v4464 = vsub.f32 %v248, %v4427
      %v4465 = vsub.f32 %v249, %v4429
      %v4466 = vsub.f32 %v250, %v4431
      %v4467 = vsub.f32 %v251, %v4433
      %v4468 = vsub.f32 %v252, %v4435
      %v4469 = vsub.f32 %v253, %v4437
      %4486 = vrot.lane.b32.xlu0 %v4454, 127
      %v4487 = vpop.permute.xlu0 %4486
      %4488 = vrot.lane.b32.xlu0 %v4455, 127
      %v4489 = vpop.permute.xlu0 %4488
      %4490 = vrot.lane.b32.xlu0 %v4456, 127
      %v4491 = vpop.permute.xlu0 %4490
      %4492 = vrot.lane.b32.xlu0 %v4457, 127
      %v4493 = vpop.permute.xlu0 %4492
      %4494 = vrot.lane.b32.xlu0 %v4458, 127
      %v4495 = vpop.permute.xlu0 %4494
      %4496 = vrot.lane.b32.xlu0 %v4459, 127
      %v4497 = vpop.permute.xlu0 %4496
      %4498 = vrot.lane.b32.xlu0 %v4460, 127
      %v4499 = vpop.permute.xlu0 %4498
      %4500 = vrot.lane.b32.xlu0 %v4461, 127
      %v4501 = vpop.permute.xlu0 %4500
      %4502 = vrot.lane.b32.xlu0 %v4462, 127
      %v4503 = vpop.permute.xlu0 %4502
      %4504 = vrot.lane.b32.xlu0 %v4463, 127
      %v4505 = vpop.permute.xlu0 %4504
      %4506 = vrot.lane.b32.xlu0 %v4464, 127
      %v4507 = vpop.permute.xlu0 %4506
      %4508 = vrot.lane.b32.xlu0 %v4465, 127
      %v4509 = vpop.permute.xlu0 %4508
      %4510 = vrot.lane.b32.xlu0 %v4466, 127
      %v4511 = vpop.permute.xlu0 %4510
      %4512 = vrot.lane.b32.xlu0 %v4467, 127
      %v4513 = vpop.permute.xlu0 %4512
      %4514 = vrot.lane.b32.xlu0 %v4468, 127
      %v4515 = vpop.permute.xlu0 %4514
      %4516 = vrot.lane.b32.xlu0 %v4469, 127
      %v4517 = vpop.permute.xlu0 %4516
      %v4534 = vmul.f32 %v4454, %v4487
      %v4535 = vmul.f32 %v4455, %v4489
      %v4536 = vmul.f32 %v4456, %v4491
      %v4537 = vmul.f32 %v4457, %v4493
      %v4538 = vmul.f32 %v4458, %v4495
      %v4539 = vmul.f32 %v4459, %v4497
      %v4540 = vmul.f32 %v4460, %v4499
      %v4541 = vmul.f32 %v4461, %v4501
      %v4542 = vmul.f32 %v4462, %v4503
      %v4543 = vmul.f32 %v4463, %v4505
      %v4544 = vmul.f32 %v4464, %v4507
      %v4545 = vmul.f32 %v4465, %v4509
      %v4546 = vmul.f32 %v4466, %v4511
      %v4547 = vmul.f32 %v4467, %v4513
      %v4548 = vmul.f32 %v4468, %v4515
      %v4549 = vmul.f32 %v4469, %v4517
      %4551 = vset.pattern.permute.xlu0 2
      %4552 = vperm.xlu0 %4551, %v4534
      %v4553 = vpop.permute.xlu0 %4552
      %4556 = vset.pattern.permute.xlu0 2
      %4557 = vperm.xlu0 %4556, %v4535
      %v4558 = vpop.permute.xlu0 %4557
      %4561 = vset.pattern.permute.xlu0 2
      %4562 = vperm.xlu0 %4561, %v4536
      %v4563 = vpop.permute.xlu0 %4562
      %4566 = vset.pattern.permute.xlu0 2
      %4567 = vperm.xlu0 %4566, %v4537
      %v4568 = vpop.permute.xlu0 %4567
      %4571 = vset.pattern.permute.xlu0 2
      %4572 = vperm.xlu0 %4571, %v4538
      %v4573 = vpop.permute.xlu0 %4572
      %4576 = vset.pattern.permute.xlu0 2
      %4577 = vperm.xlu0 %4576, %v4539
      %v4578 = vpop.permute.xlu0 %4577
      %4581 = vset.pattern.permute.xlu0 2
      %4582 = vperm.xlu0 %4581, %v4540
      %v4583 = vpop.permute.xlu0 %4582
      %4586 = vset.pattern.permute.xlu0 2
      %4587 = vperm.xlu0 %4586, %v4541
      %v4588 = vpop.permute.xlu0 %4587
      %4591 = vset.pattern.permute.xlu0 2
      %4592 = vperm.xlu0 %4591, %v4542
      %v4593 = vpop.permute.xlu0 %4592
      %4596 = vset.pattern.permute.xlu0 2
      %4597 = vperm.xlu0 %4596, %v4543
      %v4598 = vpop.permute.xlu0 %4597
      %4601 = vset.pattern.permute.xlu0 2
      %4602 = vperm.xlu0 %4601, %v4544
      %v4603 = vpop.permute.xlu0 %4602
      %4606 = vset.pattern.permute.xlu0 2
      %4607 = vperm.xlu0 %4606, %v4545
      %v4608 = vpop.permute.xlu0 %4607
      %4611 = vset.pattern.permute.xlu0 2
      %4612 = vperm.xlu0 %4611, %v4546
      %v4613 = vpop.permute.xlu0 %4612
      %4616 = vset.pattern.permute.xlu0 2
      %4617 = vperm.xlu0 %4616, %v4547
      %v4618 = vpop.permute.xlu0 %4617
      %4621 = vset.pattern.permute.xlu0 2
      %4622 = vperm.xlu0 %4621, %v4548
      %v4623 = vpop.permute.xlu0 %4622
      %4626 = vset.pattern.permute.xlu0 2
      %4627 = vperm.xlu0 %4626, %v4549
      %v4628 = vpop.permute.xlu0 %4627
      %v4630 = vadd.f32 %v4553, %v1420
      %v4631 = vadd.f32 %v4553, %v1421
      %v4632 = vadd.f32 %v4553, %v1422
      %v4633 = vadd.f32 %v4553, %v1423
      %v4634 = vadd.f32 %v4558, %v1420
      %v4635 = vadd.f32 %v4558, %v1421
      %v4636 = vadd.f32 %v4558, %v1422
      %v4637 = vadd.f32 %v4558, %v1423
      %v4638 = vadd.f32 %v4563, %v1420
      %v4639 = vadd.f32 %v4563, %v1421
      %v4640 = vadd.f32 %v4563, %v1422
      %v4641 = vadd.f32 %v4563, %v1423
      %v4642 = vadd.f32 %v4568, %v1420
      %v4643 = vadd.f32 %v4568, %v1421
      %v4644 = vadd.f32 %v4568, %v1422
      %v4645 = vadd.f32 %v4568, %v1423
      %v4646 = vadd.f32 %v4573, %v1420
      %v4647 = vadd.f32 %v4573, %v1421
      %v4648 = vadd.f32 %v4573, %v1422
      %v4649 = vadd.f32 %v4573, %v1423
      %v4650 = vadd.f32 %v4578, %v1420
      %v4651 = vadd.f32 %v4578, %v1421
      %v4652 = vadd.f32 %v4578, %v1422
      %v4653 = vadd.f32 %v4578, %v1423
      %v4654 = vadd.f32 %v4583, %v1420
      %v4655 = vadd.f32 %v4583, %v1421
      %v4656 = vadd.f32 %v4583, %v1422
      %v4657 = vadd.f32 %v4583, %v1423
      %v4658 = vadd.f32 %v4588, %v1420
      %v4659 = vadd.f32 %v4588, %v1421
      %v4660 = vadd.f32 %v4588, %v1422
      %v4661 = vadd.f32 %v4588, %v1423
      %v4662 = vadd.f32 %v4593, %v1420
      %v4663 = vadd.f32 %v4593, %v1421
      %v4664 = vadd.f32 %v4593, %v1422
      %v4665 = vadd.f32 %v4593, %v1423
      %v4666 = vadd.f32 %v4598, %v1420
      %v4667 = vadd.f32 %v4598, %v1421
      %v4668 = vadd.f32 %v4598, %v1422
      %v4669 = vadd.f32 %v4598, %v1423
      %v4670 = vadd.f32 %v4603, %v1420
      %v4671 = vadd.f32 %v4603, %v1421
      %v4672 = vadd.f32 %v4603, %v1422
      %v4673 = vadd.f32 %v4603, %v1423
      %v4674 = vadd.f32 %v4608, %v1420
      %v4675 = vadd.f32 %v4608, %v1421
      %v4676 = vadd.f32 %v4608, %v1422
      %v4677 = vadd.f32 %v4608, %v1423
      %v4678 = vadd.f32 %v4613, %v1420
      %v4679 = vadd.f32 %v4613, %v1421
      %v4680 = vadd.f32 %v4613, %v1422
      %v4681 = vadd.f32 %v4613, %v1423
      %v4682 = vadd.f32 %v4618, %v1420
      %v4683 = vadd.f32 %v4618, %v1421
      %v4684 = vadd.f32 %v4618, %v1422
      %v4685 = vadd.f32 %v4618, %v1423
      %v4686 = vadd.f32 %v4623, %v1420
      %v4687 = vadd.f32 %v4623, %v1421
      %v4688 = vadd.f32 %v4623, %v1422
      %v4689 = vadd.f32 %v4623, %v1423
      %v4690 = vadd.f32 %v4628, %v1420
      %v4691 = vadd.f32 %v4628, %v1421
      %v4692 = vadd.f32 %v4628, %v1422
      %v4693 = vadd.f32 %v4628, %v1423
      %v4694 = vsub.f32 %v4630, %v4342
      %v4695 = vsub.f32 %v4631, %v4343
      %v4696 = vsub.f32 %v4632, %v4344
      %v4697 = vsub.f32 %v4633, %v4345
      %v4698 = vsub.f32 %v4634, %v4346
      %v4699 = vsub.f32 %v4635, %v4347
      %v4700 = vsub.f32 %v4636, %v4348
      %v4701 = vsub.f32 %v4637, %v4349
      %v4702 = vsub.f32 %v4638, %v4350
      %v4703 = vsub.f32 %v4639, %v4351
      %v4704 = vsub.f32 %v4640, %v4352
      %v4705 = vsub.f32 %v4641, %v4353
      %v4706 = vsub.f32 %v4642, %v4354
      %v4707 = vsub.f32 %v4643, %v4355
      %v4708 = vsub.f32 %v4644, %v4356
      %v4709 = vsub.f32 %v4645, %v4357
      %v4710 = vsub.f32 %v4646, %v4358
      %v4711 = vsub.f32 %v4647, %v4359
      %v4712 = vsub.f32 %v4648, %v4360
      %v4713 = vsub.f32 %v4649, %v4361
      %v4714 = vsub.f32 %v4650, %v4362
      %v4715 = vsub.f32 %v4651, %v4363
      %v4716 = vsub.f32 %v4652, %v4364
      %v4717 = vsub.f32 %v4653, %v4365
      %v4718 = vsub.f32 %v4654, %v4366
      %v4719 = vsub.f32 %v4655, %v4367
      %v4720 = vsub.f32 %v4656, %v4368
      %v4721 = vsub.f32 %v4657, %v4369
      %v4722 = vsub.f32 %v4658, %v4370
      %v4723 = vsub.f32 %v4659, %v4371
      %v4724 = vsub.f32 %v4660, %v4372
      %v4725 = vsub.f32 %v4661, %v4373
      %v4726 = vsub.f32 %v4662, %v4374
      %v4727 = vsub.f32 %v4663, %v4375
      %v4728 = vsub.f32 %v4664, %v4376
      %v4729 = vsub.f32 %v4665, %v4377
      %v4730 = vsub.f32 %v4666, %v4378
      %v4731 = vsub.f32 %v4667, %v4379
      %v4732 = vsub.f32 %v4668, %v4380
      %v4733 = vsub.f32 %v4669, %v4381
      %v4734 = vsub.f32 %v4670, %v4382
      %v4735 = vsub.f32 %v4671, %v4383
      %v4736 = vsub.f32 %v4672, %v4384
      %v4737 = vsub.f32 %v4673, %v4385
      %v4738 = vsub.f32 %v4674, %v4386
      %v4739 = vsub.f32 %v4675, %v4387
      %v4740 = vsub.f32 %v4676, %v4388
      %v4741 = vsub.f32 %v4677, %v4389
      %v4742 = vsub.f32 %v4678, %v4390
      %v4743 = vsub.f32 %v4679, %v4391
      %v4744 = vsub.f32 %v4680, %v4392
      %v4745 = vsub.f32 %v4681, %v4393
      %v4746 = vsub.f32 %v4682, %v4394
      %v4747 = vsub.f32 %v4683, %v4395
      %v4748 = vsub.f32 %v4684, %v4396
      %v4749 = vsub.f32 %v4685, %v4397
      %v4750 = vsub.f32 %v4686, %v4398
      %v4751 = vsub.f32 %v4687, %v4399
      %v4752 = vsub.f32 %v4688, %v4400
      %v4753 = vsub.f32 %v4689, %v4401
      %v4754 = vsub.f32 %v4690, %v4402
      %v4755 = vsub.f32 %v4691, %v4403
      %v4756 = vsub.f32 %v4692, %v4404
      %v4757 = vsub.f32 %v4693, %v4405
      %v4758 = vadd.s32 %v1553, 256
      %v4759 = vadd.s32 %v1554, 256
      %v4760 = vadd.s32 %v1555, 256
      %v4761 = vadd.s32 %v1556, 256
      %v4762 = vadd.s32 %v1557, 256
      %v4763 = vadd.s32 %v1558, 256
      %v4764 = vadd.s32 %v1559, 256
      %v4765 = vadd.s32 %v1560, 256
      %v4766 = vadd.s32 %v1561, 256
      %v4767 = vadd.s32 %v1562, 256
      %v4768 = vadd.s32 %v1563, 256
      %v4769 = vadd.s32 %v1564, 256
      %v4770 = vadd.s32 %v1565, 256
      %v4771 = vadd.s32 %v1566, 256
      %v4772 = vadd.s32 %v1567, 256
      %v4773 = vadd.s32 %v1568, 256
      %v4774 = vmul.f32 %v4694, 0.45
      %v4775 = vmul.f32 %v4695, 0.45
      %v4776 = vmul.f32 %v4696, 0.45
      %v4777 = vmul.f32 %v4697, 0.45
      %v4778 = vmul.f32 %v4698, 0.45
      %v4779 = vmul.f32 %v4699, 0.45
      %v4780 = vmul.f32 %v4700, 0.45
      %v4781 = vmul.f32 %v4701, 0.45
      %v4782 = vmul.f32 %v4702, 0.45
      %v4783 = vmul.f32 %v4703, 0.45
      %v4784 = vmul.f32 %v4704, 0.45
      %v4785 = vmul.f32 %v4705, 0.45
      %v4786 = vmul.f32 %v4706, 0.45
      %v4787 = vmul.f32 %v4707, 0.45
      %v4788 = vmul.f32 %v4708, 0.45
      %v4789 = vmul.f32 %v4709, 0.45
      %v4790 = vmul.f32 %v4710, 0.45
      %v4791 = vmul.f32 %v4711, 0.45
      %v4792 = vmul.f32 %v4712, 0.45
      %v4793 = vmul.f32 %v4713, 0.45
      %v4794 = vmul.f32 %v4714, 0.45
      %v4795 = vmul.f32 %v4715, 0.45
      %v4796 = vmul.f32 %v4716, 0.45
      %v4797 = vmul.f32 %v4717, 0.45
      %v4798 = vmul.f32 %v4718, 0.45
      %v4799 = vmul.f32 %v4719, 0.45
      %v4800 = vmul.f32 %v4720, 0.45
      %v4801 = vmul.f32 %v4721, 0.45
      %v4802 = vmul.f32 %v4722, 0.45
      %v4803 = vmul.f32 %v4723, 0.45
      %v4804 = vmul.f32 %v4724, 0.45
      %v4805 = vmul.f32 %v4725, 0.45
      %v4806 = vmul.f32 %v4726, 0.45
      %v4807 = vmul.f32 %v4727, 0.45
      %v4808 = vmul.f32 %v4728, 0.45
      %v4809 = vmul.f32 %v4729, 0.45
      %v4810 = vmul.f32 %v4730, 0.45
      %v4811 = vmul.f32 %v4731, 0.45
      %v4812 = vmul.f32 %v4732, 0.45
      %v4813 = vmul.f32 %v4733, 0.45
      %v4814 = vmul.f32 %v4734, 0.45
      %v4815 = vmul.f32 %v4735, 0.45
      %v4816 = vmul.f32 %v4736, 0.45
      %v4817 = vmul.f32 %v4737, 0.45
      %v4818 = vmul.f32 %v4738, 0.45
      %v4819 = vmul.f32 %v4739, 0.45
      %v4820 = vmul.f32 %v4740, 0.45
      %v4821 = vmul.f32 %v4741, 0.45
      %v4822 = vmul.f32 %v4742, 0.45
      %v4823 = vmul.f32 %v4743, 0.45
      %v4824 = vmul.f32 %v4744, 0.45
      %v4825 = vmul.f32 %v4745, 0.45
      %v4826 = vmul.f32 %v4746, 0.45
      %v4827 = vmul.f32 %v4747, 0.45
      %v4828 = vmul.f32 %v4748, 0.45
      %v4829 = vmul.f32 %v4749, 0.45
      %v4830 = vmul.f32 %v4750, 0.45
      %v4831 = vmul.f32 %v4751, 0.45
      %v4832 = vmul.f32 %v4752, 0.45
      %v4833 = vmul.f32 %v4753, 0.45
      %v4834 = vmul.f32 %v4754, 0.45
      %v4835 = vmul.f32 %v4755, 0.45
      %v4836 = vmul.f32 %v4756, 0.45
      %v4837 = vmul.f32 %v4757, 0.45
      %vm4838 = vcmp.gt.f32.partialorder %v4342, %v4774
      %vm4839 = vcmp.gt.f32.partialorder %v4343, %v4775
      %vm4840 = vcmp.gt.f32.partialorder %v4344, %v4776
      %vm4841 = vcmp.gt.f32.partialorder %v4345, %v4777
      %vm4842 = vcmp.gt.f32.partialorder %v4346, %v4778
      %vm4843 = vcmp.gt.f32.partialorder %v4347, %v4779
      %vm4844 = vcmp.gt.f32.partialorder %v4348, %v4780
      %vm4845 = vcmp.gt.f32.partialorder %v4349, %v4781
      %vm4846 = vcmp.gt.f32.partialorder %v4350, %v4782
      %vm4847 = vcmp.gt.f32.partialorder %v4351, %v4783
      %vm4848 = vcmp.gt.f32.partialorder %v4352, %v4784
      %vm4849 = vcmp.gt.f32.partialorder %v4353, %v4785
      %vm4850 = vcmp.gt.f32.partialorder %v4354, %v4786
      %vm4851 = vcmp.gt.f32.partialorder %v4355, %v4787
      %vm4852 = vcmp.gt.f32.partialorder %v4356, %v4788
      %vm4853 = vcmp.gt.f32.partialorder %v4357, %v4789
      %vm4854 = vcmp.gt.f32.partialorder %v4358, %v4790
      %vm4855 = vcmp.gt.f32.partialorder %v4359, %v4791
      %vm4856 = vcmp.gt.f32.partialorder %v4360, %v4792
      %vm4857 = vcmp.gt.f32.partialorder %v4361, %v4793
      %vm4858 = vcmp.gt.f32.partialorder %v4362, %v4794
      %vm4859 = vcmp.gt.f32.partialorder %v4363, %v4795
      %vm4860 = vcmp.gt.f32.partialorder %v4364, %v4796
      %vm4861 = vcmp.gt.f32.partialorder %v4365, %v4797
      %vm4862 = vcmp.gt.f32.partialorder %v4366, %v4798
      %vm4863 = vcmp.gt.f32.partialorder %v4367, %v4799
      %vm4864 = vcmp.gt.f32.partialorder %v4368, %v4800
      %vm4865 = vcmp.gt.f32.partialorder %v4369, %v4801
      %vm4866 = vcmp.gt.f32.partialorder %v4370, %v4802
      %vm4867 = vcmp.gt.f32.partialorder %v4371, %v4803
      %vm4868 = vcmp.gt.f32.partialorder %v4372, %v4804
      %vm4869 = vcmp.gt.f32.partialorder %v4373, %v4805
      %vm4870 = vcmp.gt.f32.partialorder %v4374, %v4806
      %vm4871 = vcmp.gt.f32.partialorder %v4375, %v4807
      %vm4872 = vcmp.gt.f32.partialorder %v4376, %v4808
      %vm4873 = vcmp.gt.f32.partialorder %v4377, %v4809
      %vm4874 = vcmp.gt.f32.partialorder %v4378, %v4810
      %vm4875 = vcmp.gt.f32.partialorder %v4379, %v4811
      %vm4876 = vcmp.gt.f32.partialorder %v4380, %v4812
      %vm4877 = vcmp.gt.f32.partialorder %v4381, %v4813
      %vm4878 = vcmp.gt.f32.partialorder %v4382, %v4814
      %vm4879 = vcmp.gt.f32.partialorder %v4383, %v4815
      %vm4880 = vcmp.gt.f32.partialorder %v4384, %v4816
      %vm4881 = vcmp.gt.f32.partialorder %v4385, %v4817
      %vm4882 = vcmp.gt.f32.partialorder %v4386, %v4818
      %vm4883 = vcmp.gt.f32.partialorder %v4387, %v4819
      %vm4884 = vcmp.gt.f32.partialorder %v4388, %v4820
      %vm4885 = vcmp.gt.f32.partialorder %v4389, %v4821
      %vm4886 = vcmp.gt.f32.partialorder %v4390, %v4822
      %vm4887 = vcmp.gt.f32.partialorder %v4391, %v4823
      %vm4888 = vcmp.gt.f32.partialorder %v4392, %v4824
      %vm4889 = vcmp.gt.f32.partialorder %v4393, %v4825
      %vm4890 = vcmp.gt.f32.partialorder %v4394, %v4826
      %vm4891 = vcmp.gt.f32.partialorder %v4395, %v4827
      %vm4892 = vcmp.gt.f32.partialorder %v4396, %v4828
      %vm4893 = vcmp.gt.f32.partialorder %v4397, %v4829
      %vm4894 = vcmp.gt.f32.partialorder %v4398, %v4830
      %vm4895 = vcmp.gt.f32.partialorder %v4399, %v4831
      %vm4896 = vcmp.gt.f32.partialorder %v4400, %v4832
      %vm4897 = vcmp.gt.f32.partialorder %v4401, %v4833
      %vm4898 = vcmp.gt.f32.partialorder %v4402, %v4834
      %vm4899 = vcmp.gt.f32.partialorder %v4403, %v4835
      %vm4900 = vcmp.gt.f32.partialorder %v4404, %v4836
      %vm4901 = vcmp.gt.f32.partialorder %v4405, %v4837
      %vm4902 = vcmp.gt.s32.totalorder %v1570, %v4758
      %vm4903 = vcmp.gt.s32.totalorder %v1571, %v4758
      %vm4904 = vcmp.gt.s32.totalorder %v1572, %v4758
      %vm4905 = vcmp.gt.s32.totalorder %v1573, %v4758
      %vm4906 = vcmp.gt.s32.totalorder %v1570, %v4759
      %vm4907 = vcmp.gt.s32.totalorder %v1571, %v4759
      %vm4908 = vcmp.gt.s32.totalorder %v1572, %v4759
      %vm4909 = vcmp.gt.s32.totalorder %v1573, %v4759
      %vm4910 = vcmp.gt.s32.totalorder %v1570, %v4760
      %vm4911 = vcmp.gt.s32.totalorder %v1571, %v4760
      %vm4912 = vcmp.gt.s32.totalorder %v1572, %v4760
      %vm4913 = vcmp.gt.s32.totalorder %v1573, %v4760
      %vm4914 = vcmp.gt.s32.totalorder %v1570, %v4761
      %vm4915 = vcmp.gt.s32.totalorder %v1571, %v4761
      %vm4916 = vcmp.gt.s32.totalorder %v1572, %v4761
      %vm4917 = vcmp.gt.s32.totalorder %v1573, %v4761
      %vm4918 = vcmp.gt.s32.totalorder %v1570, %v4762
      %vm4919 = vcmp.gt.s32.totalorder %v1571, %v4762
      %vm4920 = vcmp.gt.s32.totalorder %v1572, %v4762
      %vm4921 = vcmp.gt.s32.totalorder %v1573, %v4762
      %vm4922 = vcmp.gt.s32.totalorder %v1570, %v4763
      %vm4923 = vcmp.gt.s32.totalorder %v1571, %v4763
      %vm4924 = vcmp.gt.s32.totalorder %v1572, %v4763
      %vm4925 = vcmp.gt.s32.totalorder %v1573, %v4763
      %vm4926 = vcmp.gt.s32.totalorder %v1570, %v4764
      %vm4927 = vcmp.gt.s32.totalorder %v1571, %v4764
      %vm4928 = vcmp.gt.s32.totalorder %v1572, %v4764
      %vm4929 = vcmp.gt.s32.totalorder %v1573, %v4764
      %vm4930 = vcmp.gt.s32.totalorder %v1570, %v4765
      %vm4931 = vcmp.gt.s32.totalorder %v1571, %v4765
      %vm4932 = vcmp.gt.s32.totalorder %v1572, %v4765
      %vm4933 = vcmp.gt.s32.totalorder %v1573, %v4765
      %vm4934 = vcmp.gt.s32.totalorder %v1570, %v4766
      %vm4935 = vcmp.gt.s32.totalorder %v1571, %v4766
      %vm4936 = vcmp.gt.s32.totalorder %v1572, %v4766
      %vm4937 = vcmp.gt.s32.totalorder %v1573, %v4766
      %vm4938 = vcmp.gt.s32.totalorder %v1570, %v4767
      %vm4939 = vcmp.gt.s32.totalorder %v1571, %v4767
      %vm4940 = vcmp.gt.s32.totalorder %v1572, %v4767
      %vm4941 = vcmp.gt.s32.totalorder %v1573, %v4767
      %vm4942 = vcmp.gt.s32.totalorder %v1570, %v4768
      %vm4943 = vcmp.gt.s32.totalorder %v1571, %v4768
      %vm4944 = vcmp.gt.s32.totalorder %v1572, %v4768
      %vm4945 = vcmp.gt.s32.totalorder %v1573, %v4768
      %vm4946 = vcmp.gt.s32.totalorder %v1570, %v4769
      %vm4947 = vcmp.gt.s32.totalorder %v1571, %v4769
      %vm4948 = vcmp.gt.s32.totalorder %v1572, %v4769
      %vm4949 = vcmp.gt.s32.totalorder %v1573, %v4769
      %vm4950 = vcmp.gt.s32.totalorder %v1570, %v4770
      %vm4951 = vcmp.gt.s32.totalorder %v1571, %v4770
      %vm4952 = vcmp.gt.s32.totalorder %v1572, %v4770
      %vm4953 = vcmp.gt.s32.totalorder %v1573, %v4770
      %vm4954 = vcmp.gt.s32.totalorder %v1570, %v4771
      %vm4955 = vcmp.gt.s32.totalorder %v1571, %v4771
      %vm4956 = vcmp.gt.s32.totalorder %v1572, %v4771
      %vm4957 = vcmp.gt.s32.totalorder %v1573, %v4771
      %vm4958 = vcmp.gt.s32.totalorder %v1570, %v4772
      %vm4959 = vcmp.gt.s32.totalorder %v1571, %v4772
      %vm4960 = vcmp.gt.s32.totalorder %v1572, %v4772
      %vm4961 = vcmp.gt.s32.totalorder %v1573, %v4772
      %vm4962 = vcmp.gt.s32.totalorder %v1570, %v4773
      %vm4963 = vcmp.gt.s32.totalorder %v1571, %v4773
      %vm4964 = vcmp.gt.s32.totalorder %v1572, %v4773
      %vm4965 = vcmp.gt.s32.totalorder %v1573, %v4773
      %vm4966 = vmand %vm4838, %vm4902
      %vm4967 = vmand %vm4839, %vm4903
      %vm4968 = vmand %vm4840, %vm4904
      %vm4969 = vmand %vm4841, %vm4905
      %vm4970 = vmand %vm4842, %vm4906
      %vm4971 = vmand %vm4843, %vm4907
      %vm4972 = vmand %vm4844, %vm4908
      %vm4973 = vmand %vm4845, %vm4909
      %vm4974 = vmand %vm4846, %vm4910
      %vm4975 = vmand %vm4847, %vm4911
      %vm4976 = vmand %vm4848, %vm4912
      %vm4977 = vmand %vm4849, %vm4913
      %vm4978 = vmand %vm4850, %vm4914
      %vm4979 = vmand %vm4851, %vm4915
      %vm4980 = vmand %vm4852, %vm4916
      %vm4981 = vmand %vm4853, %vm4917
      %vm4982 = vmand %vm4854, %vm4918
      %vm4983 = vmand %vm4855, %vm4919
      %vm4984 = vmand %vm4856, %vm4920
      %vm4985 = vmand %vm4857, %vm4921
      %vm4986 = vmand %vm4858, %vm4922
      %vm4987 = vmand %vm4859, %vm4923
      %vm4988 = vmand %vm4860, %vm4924
      %vm4989 = vmand %vm4861, %vm4925
      %vm4990 = vmand %vm4862, %vm4926
      %vm4991 = vmand %vm4863, %vm4927
      %vm4992 = vmand %vm4864, %vm4928
      %vm4993 = vmand %vm4865, %vm4929
      %vm4994 = vmand %vm4866, %vm4930
      %vm4995 = vmand %vm4867, %vm4931
      %vm4996 = vmand %vm4868, %vm4932
      %vm4997 = vmand %vm4869, %vm4933
      %vm4998 = vmand %vm4870, %vm4934
      %vm4999 = vmand %vm4871, %vm4935
      %vm5000 = vmand %vm4872, %vm4936
      %vm5001 = vmand %vm4873, %vm4937
      %vm5002 = vmand %vm4874, %vm4938
      %vm5003 = vmand %vm4875, %vm4939
      %vm5004 = vmand %vm4876, %vm4940
      %vm5005 = vmand %vm4877, %vm4941
      %vm5006 = vmand %vm4878, %vm4942
      %vm5007 = vmand %vm4879, %vm4943
      %vm5008 = vmand %vm4880, %vm4944
      %vm5009 = vmand %vm4881, %vm4945
      %vm5010 = vmand %vm4882, %vm4946
      %vm5011 = vmand %vm4883, %vm4947
      %vm5012 = vmand %vm4884, %vm4948
      %vm5013 = vmand %vm4885, %vm4949
      %vm5014 = vmand %vm4886, %vm4950
      %vm5015 = vmand %vm4887, %vm4951
      %vm5016 = vmand %vm4888, %vm4952
      %vm5017 = vmand %vm4889, %vm4953
      %vm5018 = vmand %vm4890, %vm4954
      %vm5019 = vmand %vm4891, %vm4955
      %vm5020 = vmand %vm4892, %vm4956
      %vm5021 = vmand %vm4893, %vm4957
      %vm5022 = vmand %vm4894, %vm4958
      %vm5023 = vmand %vm4895, %vm4959
      %vm5024 = vmand %vm4896, %vm4960
      %vm5025 = vmand %vm4897, %vm4961
      %vm5026 = vmand %vm4898, %vm4962
      %vm5027 = vmand %vm4899, %vm4963
      %vm5028 = vmand %vm4900, %vm4964
      %vm5029 = vmand %vm4901, %vm4965
      %v5030 = vsel %vm4966, 1.0, 0.0
      %v5031 = vsel %vm4967, 1.0, 0.0
      %v5032 = vsel %vm4968, 1.0, 0.0
      %v5033 = vsel %vm4969, 1.0, 0.0
      %v5034 = vsel %vm4970, 1.0, 0.0
      %v5035 = vsel %vm4971, 1.0, 0.0
      %v5036 = vsel %vm4972, 1.0, 0.0
      %v5037 = vsel %vm4973, 1.0, 0.0
      %v5038 = vsel %vm4974, 1.0, 0.0
      %v5039 = vsel %vm4975, 1.0, 0.0
      %v5040 = vsel %vm4976, 1.0, 0.0
      %v5041 = vsel %vm4977, 1.0, 0.0
      %v5042 = vsel %vm4978, 1.0, 0.0
      %v5043 = vsel %vm4979, 1.0, 0.0
      %v5044 = vsel %vm4980, 1.0, 0.0
      %v5045 = vsel %vm4981, 1.0, 0.0
      %v5046 = vsel %vm4982, 1.0, 0.0
      %v5047 = vsel %vm4983, 1.0, 0.0
      %v5048 = vsel %vm4984, 1.0, 0.0
      %v5049 = vsel %vm4985, 1.0, 0.0
      %v5050 = vsel %vm4986, 1.0, 0.0
      %v5051 = vsel %vm4987, 1.0, 0.0
      %v5052 = vsel %vm4988, 1.0, 0.0
      %v5053 = vsel %vm4989, 1.0, 0.0
      %v5054 = vsel %vm4990, 1.0, 0.0
      %v5055 = vsel %vm4991, 1.0, 0.0
      %v5056 = vsel %vm4992, 1.0, 0.0
      %v5057 = vsel %vm4993, 1.0, 0.0
      %v5058 = vsel %vm4994, 1.0, 0.0
      %v5059 = vsel %vm4995, 1.0, 0.0
      %v5060 = vsel %vm4996, 1.0, 0.0
      %v5061 = vsel %vm4997, 1.0, 0.0
      %v5062 = vsel %vm4998, 1.0, 0.0
      %v5063 = vsel %vm4999, 1.0, 0.0
      %v5064 = vsel %vm5000, 1.0, 0.0
      %v5065 = vsel %vm5001, 1.0, 0.0
      %v5066 = vsel %vm5002, 1.0, 0.0
      %v5067 = vsel %vm5003, 1.0, 0.0
      %v5068 = vsel %vm5004, 1.0, 0.0
      %v5069 = vsel %vm5005, 1.0, 0.0
      %v5070 = vsel %vm5006, 1.0, 0.0
      %v5071 = vsel %vm5007, 1.0, 0.0
      %v5072 = vsel %vm5008, 1.0, 0.0
      %v5073 = vsel %vm5009, 1.0, 0.0
      %v5074 = vsel %vm5010, 1.0, 0.0
      %v5075 = vsel %vm5011, 1.0, 0.0
      %v5076 = vsel %vm5012, 1.0, 0.0
      %v5077 = vsel %vm5013, 1.0, 0.0
      %v5078 = vsel %vm5014, 1.0, 0.0
      %v5079 = vsel %vm5015, 1.0, 0.0
      %v5080 = vsel %vm5016, 1.0, 0.0
      %v5081 = vsel %vm5017, 1.0, 0.0
      %v5082 = vsel %vm5018, 1.0, 0.0
      %v5083 = vsel %vm5019, 1.0, 0.0
      %v5084 = vsel %vm5020, 1.0, 0.0
      %v5085 = vsel %vm5021, 1.0, 0.0
      %v5086 = vsel %vm5022, 1.0, 0.0
      %v5087 = vsel %vm5023, 1.0, 0.0
      %v5088 = vsel %vm5024, 1.0, 0.0
      %v5089 = vsel %vm5025, 1.0, 0.0
      %v5090 = vsel %vm5026, 1.0, 0.0
      %v5091 = vsel %vm5027, 1.0, 0.0
      %v5092 = vsel %vm5028, 1.0, 0.0
      %v5093 = vsel %vm5029, 1.0, 0.0
      %5094 = vst [vmem:[#allocation2 + $0x400] sm:$0xff] %v5030
      %5095 = vst [vmem:[#allocation2 + $0x408] sm:$0xff] %v5031
      %5096 = vst [vmem:[#allocation2 + $0x410] sm:$0xff] %v5032
      %5097 = vst [vmem:[#allocation2 + $0x418] sm:$0xff] %v5033
      %5098 = vst [vmem:[#allocation2 + $0x420] sm:$0xff] %v5034
      %5099 = vst [vmem:[#allocation2 + $0x428] sm:$0xff] %v5035
      %5100 = vst [vmem:[#allocation2 + $0x430] sm:$0xff] %v5036
      %5101 = vst [vmem:[#allocation2 + $0x438] sm:$0xff] %v5037
      %5102 = vst [vmem:[#allocation2 + $0x440] sm:$0xff] %v5038
      %5103 = vst [vmem:[#allocation2 + $0x448] sm:$0xff] %v5039
      %5104 = vst [vmem:[#allocation2 + $0x450] sm:$0xff] %v5040
      %5105 = vst [vmem:[#allocation2 + $0x458] sm:$0xff] %v5041
      %5106 = vst [vmem:[#allocation2 + $0x460] sm:$0xff] %v5042
      %5107 = vst [vmem:[#allocation2 + $0x468] sm:$0xff] %v5043
      %5108 = vst [vmem:[#allocation2 + $0x470] sm:$0xff] %v5044
      %5109 = vst [vmem:[#allocation2 + $0x478] sm:$0xff] %v5045
      %5110 = vst [vmem:[#allocation2 + $0x480] sm:$0xff] %v5046
      %5111 = vst [vmem:[#allocation2 + $0x488] sm:$0xff] %v5047
      %5112 = vst [vmem:[#allocation2 + $0x490] sm:$0xff] %v5048
      %5113 = vst [vmem:[#allocation2 + $0x498] sm:$0xff] %v5049
      %5114 = vst [vmem:[#allocation2 + $0x4a0] sm:$0xff] %v5050
      %5115 = vst [vmem:[#allocation2 + $0x4a8] sm:$0xff] %v5051
      %5116 = vst [vmem:[#allocation2 + $0x4b0] sm:$0xff] %v5052
      %5117 = vst [vmem:[#allocation2 + $0x4b8] sm:$0xff] %v5053
      %5118 = vst [vmem:[#allocation2 + $0x4c0] sm:$0xff] %v5054
      %5119 = vst [vmem:[#allocation2 + $0x4c8] sm:$0xff] %v5055
      %5120 = vst [vmem:[#allocation2 + $0x4d0] sm:$0xff] %v5056
      %5121 = vst [vmem:[#allocation2 + $0x4d8] sm:$0xff] %v5057
      %5122 = vst [vmem:[#allocation2 + $0x4e0] sm:$0xff] %v5058
      %5123 = vst [vmem:[#allocation2 + $0x4e8] sm:$0xff] %v5059
      %5124 = vst [vmem:[#allocation2 + $0x4f0] sm:$0xff] %v5060
      %5125 = vst [vmem:[#allocation2 + $0x4f8] sm:$0xff] %v5061
      %5126 = vst [vmem:[#allocation2 + $0x500] sm:$0xff] %v5062
      %5127 = vst [vmem:[#allocation2 + $0x508] sm:$0xff] %v5063
      %5128 = vst [vmem:[#allocation2 + $0x510] sm:$0xff] %v5064
      %5129 = vst [vmem:[#allocation2 + $0x518] sm:$0xff] %v5065
      %5130 = vst [vmem:[#allocation2 + $0x520] sm:$0xff] %v5066
      %5131 = vst [vmem:[#allocation2 + $0x528] sm:$0xff] %v5067
      %5132 = vst [vmem:[#allocation2 + $0x530] sm:$0xff] %v5068
      %5133 = vst [vmem:[#allocation2 + $0x538] sm:$0xff] %v5069
      %5134 = vst [vmem:[#allocation2 + $0x540] sm:$0xff] %v5070
      %5135 = vst [vmem:[#allocation2 + $0x548] sm:$0xff] %v5071
      %5136 = vst [vmem:[#allocation2 + $0x550] sm:$0xff] %v5072
      %5137 = vst [vmem:[#allocation2 + $0x558] sm:$0xff] %v5073
      %5138 = vst [vmem:[#allocation2 + $0x560] sm:$0xff] %v5074
      %5139 = vst [vmem:[#allocation2 + $0x568] sm:$0xff] %v5075
      %5140 = vst [vmem:[#allocation2 + $0x570] sm:$0xff] %v5076
      %5141 = vst [vmem:[#allocation2 + $0x578] sm:$0xff] %v5077
      %5142 = vst [vmem:[#allocation2 + $0x580] sm:$0xff] %v5078
      %5143 = vst [vmem:[#allocation2 + $0x588] sm:$0xff] %v5079
      %5144 = vst [vmem:[#allocation2 + $0x590] sm:$0xff] %v5080
      %5145 = vst [vmem:[#allocation2 + $0x598] sm:$0xff] %v5081
      %5146 = vst [vmem:[#allocation2 + $0x5a0] sm:$0xff] %v5082
      %5147 = vst [vmem:[#allocation2 + $0x5a8] sm:$0xff] %v5083
      %5148 = vst [vmem:[#allocation2 + $0x5b0] sm:$0xff] %v5084
      %5149 = vst [vmem:[#allocation2 + $0x5b8] sm:$0xff] %v5085
      %5150 = vst [vmem:[#allocation2 + $0x5c0] sm:$0xff] %v5086
      %5151 = vst [vmem:[#allocation2 + $0x5c8] sm:$0xff] %v5087
      %5152 = vst [vmem:[#allocation2 + $0x5d0] sm:$0xff] %v5088
      %5153 = vst [vmem:[#allocation2 + $0x5d8] sm:$0xff] %v5089
      %5154 = vst [vmem:[#allocation2 + $0x5e0] sm:$0xff] %v5090
      %5155 = vst [vmem:[#allocation2 + $0x5e8] sm:$0xff] %v5091
      %5156 = vst [vmem:[#allocation2 + $0x5f0] sm:$0xff] %v5092
      %5157 = vst [vmem:[#allocation2 + $0x5f8] sm:$0xff] %v5093
      %5159 = vset.pattern.permute.xlu0 0
      %5160 = vperm.xlu0 %5159, %v254
      %v5161 = vpop.permute.xlu0 %5160
      %5164 = vset.pattern.permute.xlu0 0
      %5165 = vperm.xlu0 %5164, %v255
      %v5166 = vpop.permute.xlu0 %5165
      %5169 = vset.pattern.permute.xlu0 0
      %5170 = vperm.xlu0 %5169, %v256
      %v5171 = vpop.permute.xlu0 %5170
      %5174 = vset.pattern.permute.xlu0 0
      %5175 = vperm.xlu0 %5174, %v257
      %v5176 = vpop.permute.xlu0 %5175
      %5179 = vset.pattern.permute.xlu0 0
      %5180 = vperm.xlu0 %5179, %v258
      %v5181 = vpop.permute.xlu0 %5180
      %5184 = vset.pattern.permute.xlu0 0
      %5185 = vperm.xlu0 %5184, %v259
      %v5186 = vpop.permute.xlu0 %5185
      %5189 = vset.pattern.permute.xlu0 0
      %5190 = vperm.xlu0 %5189, %v260
      %v5191 = vpop.permute.xlu0 %5190
      %5194 = vset.pattern.permute.xlu0 0
      %5195 = vperm.xlu0 %5194, %v261
      %v5196 = vpop.permute.xlu0 %5195
      %5199 = vset.pattern.permute.xlu0 0
      %5200 = vperm.xlu0 %5199, %v262
      %v5201 = vpop.permute.xlu0 %5200
      %5204 = vset.pattern.permute.xlu0 0
      %5205 = vperm.xlu0 %5204, %v263
      %v5206 = vpop.permute.xlu0 %5205
      %5209 = vset.pattern.permute.xlu0 0
      %5210 = vperm.xlu0 %5209, %v264
      %v5211 = vpop.permute.xlu0 %5210
      %5214 = vset.pattern.permute.xlu0 0
      %5215 = vperm.xlu0 %5214, %v265
      %v5216 = vpop.permute.xlu0 %5215
      %5219 = vset.pattern.permute.xlu0 0
      %5220 = vperm.xlu0 %5219, %v266
      %v5221 = vpop.permute.xlu0 %5220
      %5224 = vset.pattern.permute.xlu0 0
      %5225 = vperm.xlu0 %5224, %v267
      %v5226 = vpop.permute.xlu0 %5225
      %5229 = vset.pattern.permute.xlu0 0
      %5230 = vperm.xlu0 %5229, %v268
      %v5231 = vpop.permute.xlu0 %5230
      %5234 = vset.pattern.permute.xlu0 0
      %5235 = vperm.xlu0 %5234, %v269
      %v5236 = vpop.permute.xlu0 %5235
      %v5238 = vmax.f32 %v5161, %v378
      %v5239 = vmax.f32 %v5161, %v379
      %v5240 = vmax.f32 %v5161, %v380
      %v5241 = vmax.f32 %v5161, %v381
      %v5242 = vmax.f32 %v5166, %v378
      %v5243 = vmax.f32 %v5166, %v379
      %v5244 = vmax.f32 %v5166, %v380
      %v5245 = vmax.f32 %v5166, %v381
      %v5246 = vmax.f32 %v5171, %v378
      %v5247 = vmax.f32 %v5171, %v379
      %v5248 = vmax.f32 %v5171, %v380
      %v5249 = vmax.f32 %v5171, %v381
      %v5250 = vmax.f32 %v5176, %v378
      %v5251 = vmax.f32 %v5176, %v379
      %v5252 = vmax.f32 %v5176, %v380
      %v5253 = vmax.f32 %v5176, %v381
      %v5254 = vmax.f32 %v5181, %v378
      %v5255 = vmax.f32 %v5181, %v379
      %v5256 = vmax.f32 %v5181, %v380
      %v5257 = vmax.f32 %v5181, %v381
      %v5258 = vmax.f32 %v5186, %v378
      %v5259 = vmax.f32 %v5186, %v379
      %v5260 = vmax.f32 %v5186, %v380
      %v5261 = vmax.f32 %v5186, %v381
      %v5262 = vmax.f32 %v5191, %v378
      %v5263 = vmax.f32 %v5191, %v379
      %v5264 = vmax.f32 %v5191, %v380
      %v5265 = vmax.f32 %v5191, %v381
      %v5266 = vmax.f32 %v5196, %v378
      %v5267 = vmax.f32 %v5196, %v379
      %v5268 = vmax.f32 %v5196, %v380
      %v5269 = vmax.f32 %v5196, %v381
      %v5270 = vmax.f32 %v5201, %v378
      %v5271 = vmax.f32 %v5201, %v379
      %v5272 = vmax.f32 %v5201, %v380
      %v5273 = vmax.f32 %v5201, %v381
      %v5274 = vmax.f32 %v5206, %v378
      %v5275 = vmax.f32 %v5206, %v379
      %v5276 = vmax.f32 %v5206, %v380
      %v5277 = vmax.f32 %v5206, %v381
      %v5278 = vmax.f32 %v5211, %v378
      %v5279 = vmax.f32 %v5211, %v379
      %v5280 = vmax.f32 %v5211, %v380
      %v5281 = vmax.f32 %v5211, %v381
      %v5282 = vmax.f32 %v5216, %v378
      %v5283 = vmax.f32 %v5216, %v379
      %v5284 = vmax.f32 %v5216, %v380
      %v5285 = vmax.f32 %v5216, %v381
      %v5286 = vmax.f32 %v5221, %v378
      %v5287 = vmax.f32 %v5221, %v379
      %v5288 = vmax.f32 %v5221, %v380
      %v5289 = vmax.f32 %v5221, %v381
      %v5290 = vmax.f32 %v5226, %v378
      %v5291 = vmax.f32 %v5226, %v379
      %v5292 = vmax.f32 %v5226, %v380
      %v5293 = vmax.f32 %v5226, %v381
      %v5294 = vmax.f32 %v5231, %v378
      %v5295 = vmax.f32 %v5231, %v379
      %v5296 = vmax.f32 %v5231, %v380
      %v5297 = vmax.f32 %v5231, %v381
      %v5298 = vmax.f32 %v5236, %v378
      %v5299 = vmax.f32 %v5236, %v379
      %v5300 = vmax.f32 %v5236, %v380
      %v5301 = vmax.f32 %v5236, %v381
      %5302 = vset.pattern.permute.xlu0 1
      %5303 = vperm.xlu0 %5302, %v254
      %v5304 = vpop.permute.xlu0 %5303
      %5306 = vset.pattern.permute.xlu0 1
      %5307 = vperm.xlu0 %5306, %v255
      %v5308 = vpop.permute.xlu0 %5307
      %5310 = vset.pattern.permute.xlu0 1
      %5311 = vperm.xlu0 %5310, %v256
      %v5312 = vpop.permute.xlu0 %5311
      %5314 = vset.pattern.permute.xlu0 1
      %5315 = vperm.xlu0 %5314, %v257
      %v5316 = vpop.permute.xlu0 %5315
      %5318 = vset.pattern.permute.xlu0 1
      %5319 = vperm.xlu0 %5318, %v258
      %v5320 = vpop.permute.xlu0 %5319
      %5322 = vset.pattern.permute.xlu0 1
      %5323 = vperm.xlu0 %5322, %v259
      %v5324 = vpop.permute.xlu0 %5323
      %5326 = vset.pattern.permute.xlu0 1
      %5327 = vperm.xlu0 %5326, %v260
      %v5328 = vpop.permute.xlu0 %5327
      %5330 = vset.pattern.permute.xlu0 1
      %5331 = vperm.xlu0 %5330, %v261
      %v5332 = vpop.permute.xlu0 %5331
      %5334 = vset.pattern.permute.xlu0 1
      %5335 = vperm.xlu0 %5334, %v262
      %v5336 = vpop.permute.xlu0 %5335
      %5338 = vset.pattern.permute.xlu0 1
      %5339 = vperm.xlu0 %5338, %v263
      %v5340 = vpop.permute.xlu0 %5339
      %5342 = vset.pattern.permute.xlu0 1
      %5343 = vperm.xlu0 %5342, %v264
      %v5344 = vpop.permute.xlu0 %5343
      %5346 = vset.pattern.permute.xlu0 1
      %5347 = vperm.xlu0 %5346, %v265
      %v5348 = vpop.permute.xlu0 %5347
      %5350 = vset.pattern.permute.xlu0 1
      %5351 = vperm.xlu0 %5350, %v266
      %v5352 = vpop.permute.xlu0 %5351
      %5354 = vset.pattern.permute.xlu0 1
      %5355 = vperm.xlu0 %5354, %v267
      %v5356 = vpop.permute.xlu0 %5355
      %5358 = vset.pattern.permute.xlu0 1
      %5359 = vperm.xlu0 %5358, %v268
      %v5360 = vpop.permute.xlu0 %5359
      %5362 = vset.pattern.permute.xlu0 1
      %5363 = vperm.xlu0 %5362, %v269
      %v5364 = vpop.permute.xlu0 %5363
      %v5366 = vmax.f32 %v5304, %v518
      %v5367 = vmax.f32 %v5304, %v519
      %v5368 = vmax.f32 %v5304, %v520
      %v5369 = vmax.f32 %v5304, %v521
      %v5370 = vmax.f32 %v5308, %v518
      %v5371 = vmax.f32 %v5308, %v519
      %v5372 = vmax.f32 %v5308, %v520
      %v5373 = vmax.f32 %v5308, %v521
      %v5374 = vmax.f32 %v5312, %v518
      %v5375 = vmax.f32 %v5312, %v519
      %v5376 = vmax.f32 %v5312, %v520
      %v5377 = vmax.f32 %v5312, %v521
      %v5378 = vmax.f32 %v5316, %v518
      %v5379 = vmax.f32 %v5316, %v519
      %v5380 = vmax.f32 %v5316, %v520
      %v5381 = vmax.f32 %v5316, %v521
      %v5382 = vmax.f32 %v5320, %v518
      %v5383 = vmax.f32 %v5320, %v519
      %v5384 = vmax.f32 %v5320, %v520
      %v5385 = vmax.f32 %v5320, %v521
      %v5386 = vmax.f32 %v5324, %v518
      %v5387 = vmax.f32 %v5324, %v519
      %v5388 = vmax.f32 %v5324, %v520
      %v5389 = vmax.f32 %v5324, %v521
      %v5390 = vmax.f32 %v5328, %v518
      %v5391 = vmax.f32 %v5328, %v519
      %v5392 = vmax.f32 %v5328, %v520
      %v5393 = vmax.f32 %v5328, %v521
      %v5394 = vmax.f32 %v5332, %v518
      %v5395 = vmax.f32 %v5332, %v519
      %v5396 = vmax.f32 %v5332, %v520
      %v5397 = vmax.f32 %v5332, %v521
      %v5398 = vmax.f32 %v5336, %v518
      %v5399 = vmax.f32 %v5336, %v519
      %v5400 = vmax.f32 %v5336, %v520
      %v5401 = vmax.f32 %v5336, %v521
      %v5402 = vmax.f32 %v5340, %v518
      %v5403 = vmax.f32 %v5340, %v519
      %v5404 = vmax.f32 %v5340, %v520
      %v5405 = vmax.f32 %v5340, %v521
      %v5406 = vmax.f32 %v5344, %v518
      %v5407 = vmax.f32 %v5344, %v519
      %v5408 = vmax.f32 %v5344, %v520
      %v5409 = vmax.f32 %v5344, %v521
      %v5410 = vmax.f32 %v5348, %v518
      %v5411 = vmax.f32 %v5348, %v519
      %v5412 = vmax.f32 %v5348, %v520
      %v5413 = vmax.f32 %v5348, %v521
      %v5414 = vmax.f32 %v5352, %v518
      %v5415 = vmax.f32 %v5352, %v519
      %v5416 = vmax.f32 %v5352, %v520
      %v5417 = vmax.f32 %v5352, %v521
      %v5418 = vmax.f32 %v5356, %v518
      %v5419 = vmax.f32 %v5356, %v519
      %v5420 = vmax.f32 %v5356, %v520
      %v5421 = vmax.f32 %v5356, %v521
      %v5422 = vmax.f32 %v5360, %v518
      %v5423 = vmax.f32 %v5360, %v519
      %v5424 = vmax.f32 %v5360, %v520
      %v5425 = vmax.f32 %v5360, %v521
      %v5426 = vmax.f32 %v5364, %v518
      %v5427 = vmax.f32 %v5364, %v519
      %v5428 = vmax.f32 %v5364, %v520
      %v5429 = vmax.f32 %v5364, %v521
      %5430 = vset.pattern.permute.xlu0 2
      %5431 = vperm.xlu0 %5430, %v254
      %v5432 = vpop.permute.xlu0 %5431
      %5434 = vset.pattern.permute.xlu0 2
      %5435 = vperm.xlu0 %5434, %v255
      %v5436 = vpop.permute.xlu0 %5435
      %5438 = vset.pattern.permute.xlu0 2
      %5439 = vperm.xlu0 %5438, %v256
      %v5440 = vpop.permute.xlu0 %5439
      %5442 = vset.pattern.permute.xlu0 2
      %5443 = vperm.xlu0 %5442, %v257
      %v5444 = vpop.permute.xlu0 %5443
      %5446 = vset.pattern.permute.xlu0 2
      %5447 = vperm.xlu0 %5446, %v258
      %v5448 = vpop.permute.xlu0 %5447
      %5450 = vset.pattern.permute.xlu0 2
      %5451 = vperm.xlu0 %5450, %v259
      %v5452 = vpop.permute.xlu0 %5451
      %5454 = vset.pattern.permute.xlu0 2
      %5455 = vperm.xlu0 %5454, %v260
      %v5456 = vpop.permute.xlu0 %5455
      %5458 = vset.pattern.permute.xlu0 2
      %5459 = vperm.xlu0 %5458, %v261
      %v5460 = vpop.permute.xlu0 %5459
      %5462 = vset.pattern.permute.xlu0 2
      %5463 = vperm.xlu0 %5462, %v262
      %v5464 = vpop.permute.xlu0 %5463
      %5466 = vset.pattern.permute.xlu0 2
      %5467 = vperm.xlu0 %5466, %v263
      %v5468 = vpop.permute.xlu0 %5467
      %5470 = vset.pattern.permute.xlu0 2
      %5471 = vperm.xlu0 %5470, %v264
      %v5472 = vpop.permute.xlu0 %5471
      %5474 = vset.pattern.permute.xlu0 2
      %5475 = vperm.xlu0 %5474, %v265
      %v5476 = vpop.permute.xlu0 %5475
      %5478 = vset.pattern.permute.xlu0 2
      %5479 = vperm.xlu0 %5478, %v266
      %v5480 = vpop.permute.xlu0 %5479
      %5482 = vset.pattern.permute.xlu0 2
      %5483 = vperm.xlu0 %5482, %v267
      %v5484 = vpop.permute.xlu0 %5483
      %5486 = vset.pattern.permute.xlu0 2
      %5487 = vperm.xlu0 %5486, %v268
      %v5488 = vpop.permute.xlu0 %5487
      %5490 = vset.pattern.permute.xlu0 2
      %5491 = vperm.xlu0 %5490, %v269
      %v5492 = vpop.permute.xlu0 %5491
      %v5494 = vmin.f32 %v5432, %v658
      %v5495 = vmin.f32 %v5432, %v659
      %v5496 = vmin.f32 %v5432, %v660
      %v5497 = vmin.f32 %v5432, %v661
      %v5498 = vmin.f32 %v5436, %v658
      %v5499 = vmin.f32 %v5436, %v659
      %v5500 = vmin.f32 %v5436, %v660
      %v5501 = vmin.f32 %v5436, %v661
      %v5502 = vmin.f32 %v5440, %v658
      %v5503 = vmin.f32 %v5440, %v659
      %v5504 = vmin.f32 %v5440, %v660
      %v5505 = vmin.f32 %v5440, %v661
      %v5506 = vmin.f32 %v5444, %v658
      %v5507 = vmin.f32 %v5444, %v659
      %v5508 = vmin.f32 %v5444, %v660
      %v5509 = vmin.f32 %v5444, %v661
      %v5510 = vmin.f32 %v5448, %v658
      %v5511 = vmin.f32 %v5448, %v659
      %v5512 = vmin.f32 %v5448, %v660
      %v5513 = vmin.f32 %v5448, %v661
      %v5514 = vmin.f32 %v5452, %v658
      %v5515 = vmin.f32 %v5452, %v659
      %v5516 = vmin.f32 %v5452, %v660
      %v5517 = vmin.f32 %v5452, %v661
      %v5518 = vmin.f32 %v5456, %v658
      %v5519 = vmin.f32 %v5456, %v659
      %v5520 = vmin.f32 %v5456, %v660
      %v5521 = vmin.f32 %v5456, %v661
      %v5522 = vmin.f32 %v5460, %v658
      %v5523 = vmin.f32 %v5460, %v659
      %v5524 = vmin.f32 %v5460, %v660
      %v5525 = vmin.f32 %v5460, %v661
      %v5526 = vmin.f32 %v5464, %v658
      %v5527 = vmin.f32 %v5464, %v659
      %v5528 = vmin.f32 %v5464, %v660
      %v5529 = vmin.f32 %v5464, %v661
      %v5530 = vmin.f32 %v5468, %v658
      %v5531 = vmin.f32 %v5468, %v659
      %v5532 = vmin.f32 %v5468, %v660
      %v5533 = vmin.f32 %v5468, %v661
      %v5534 = vmin.f32 %v5472, %v658
      %v5535 = vmin.f32 %v5472, %v659
      %v5536 = vmin.f32 %v5472, %v660
      %v5537 = vmin.f32 %v5472, %v661
      %v5538 = vmin.f32 %v5476, %v658
      %v5539 = vmin.f32 %v5476, %v659
      %v5540 = vmin.f32 %v5476, %v660
      %v5541 = vmin.f32 %v5476, %v661
      %v5542 = vmin.f32 %v5480, %v658
      %v5543 = vmin.f32 %v5480, %v659
      %v5544 = vmin.f32 %v5480, %v660
      %v5545 = vmin.f32 %v5480, %v661
      %v5546 = vmin.f32 %v5484, %v658
      %v5547 = vmin.f32 %v5484, %v659
      %v5548 = vmin.f32 %v5484, %v660
      %v5549 = vmin.f32 %v5484, %v661
      %v5550 = vmin.f32 %v5488, %v658
      %v5551 = vmin.f32 %v5488, %v659
      %v5552 = vmin.f32 %v5488, %v660
      %v5553 = vmin.f32 %v5488, %v661
      %v5554 = vmin.f32 %v5492, %v658
      %v5555 = vmin.f32 %v5492, %v659
      %v5556 = vmin.f32 %v5492, %v660
      %v5557 = vmin.f32 %v5492, %v661
      %5558 = vset.pattern.permute.xlu0 3
      %5559 = vperm.xlu0 %5558, %v254
      %v5560 = vpop.permute.xlu0 %5559
      %5562 = vset.pattern.permute.xlu0 3
      %5563 = vperm.xlu0 %5562, %v255
      %v5564 = vpop.permute.xlu0 %5563
      %5566 = vset.pattern.permute.xlu0 3
      %5567 = vperm.xlu0 %5566, %v256
      %v5568 = vpop.permute.xlu0 %5567
      %5570 = vset.pattern.permute.xlu0 3
      %5571 = vperm.xlu0 %5570, %v257
      %v5572 = vpop.permute.xlu0 %5571
      %5574 = vset.pattern.permute.xlu0 3
      %5575 = vperm.xlu0 %5574, %v258
      %v5576 = vpop.permute.xlu0 %5575
      %5578 = vset.pattern.permute.xlu0 3
      %5579 = vperm.xlu0 %5578, %v259
      %v5580 = vpop.permute.xlu0 %5579
      %5582 = vset.pattern.permute.xlu0 3
      %5583 = vperm.xlu0 %5582, %v260
      %v5584 = vpop.permute.xlu0 %5583
      %5586 = vset.pattern.permute.xlu0 3
      %5587 = vperm.xlu0 %5586, %v261
      %v5588 = vpop.permute.xlu0 %5587
      %5590 = vset.pattern.permute.xlu0 3
      %5591 = vperm.xlu0 %5590, %v262
      %v5592 = vpop.permute.xlu0 %5591
      %5594 = vset.pattern.permute.xlu0 3
      %5595 = vperm.xlu0 %5594, %v263
      %v5596 = vpop.permute.xlu0 %5595
      %5598 = vset.pattern.permute.xlu0 3
      %5599 = vperm.xlu0 %5598, %v264
      %v5600 = vpop.permute.xlu0 %5599
      %5602 = vset.pattern.permute.xlu0 3
      %5603 = vperm.xlu0 %5602, %v265
      %v5604 = vpop.permute.xlu0 %5603
      %5606 = vset.pattern.permute.xlu0 3
      %5607 = vperm.xlu0 %5606, %v266
      %v5608 = vpop.permute.xlu0 %5607
      %5610 = vset.pattern.permute.xlu0 3
      %5611 = vperm.xlu0 %5610, %v267
      %v5612 = vpop.permute.xlu0 %5611
      %5614 = vset.pattern.permute.xlu0 3
      %5615 = vperm.xlu0 %5614, %v268
      %v5616 = vpop.permute.xlu0 %5615
      %5618 = vset.pattern.permute.xlu0 3
      %5619 = vperm.xlu0 %5618, %v269
      %v5620 = vpop.permute.xlu0 %5619
      %v5622 = vmin.f32 %v5560, %v798
      %v5623 = vmin.f32 %v5560, %v799
      %v5624 = vmin.f32 %v5560, %v800
      %v5625 = vmin.f32 %v5560, %v801
      %v5626 = vmin.f32 %v5564, %v798
      %v5627 = vmin.f32 %v5564, %v799
      %v5628 = vmin.f32 %v5564, %v800
      %v5629 = vmin.f32 %v5564, %v801
      %v5630 = vmin.f32 %v5568, %v798
      %v5631 = vmin.f32 %v5568, %v799
      %v5632 = vmin.f32 %v5568, %v800
      %v5633 = vmin.f32 %v5568, %v801
      %v5634 = vmin.f32 %v5572, %v798
      %v5635 = vmin.f32 %v5572, %v799
      %v5636 = vmin.f32 %v5572, %v800
      %v5637 = vmin.f32 %v5572, %v801
      %v5638 = vmin.f32 %v5576, %v798
      %v5639 = vmin.f32 %v5576, %v799
      %v5640 = vmin.f32 %v5576, %v800
      %v5641 = vmin.f32 %v5576, %v801
      %v5642 = vmin.f32 %v5580, %v798
      %v5643 = vmin.f32 %v5580, %v799
      %v5644 = vmin.f32 %v5580, %v800
      %v5645 = vmin.f32 %v5580, %v801
      %v5646 = vmin.f32 %v5584, %v798
      %v5647 = vmin.f32 %v5584, %v799
      %v5648 = vmin.f32 %v5584, %v800
      %v5649 = vmin.f32 %v5584, %v801
      %v5650 = vmin.f32 %v5588, %v798
      %v5651 = vmin.f32 %v5588, %v799
      %v5652 = vmin.f32 %v5588, %v800
      %v5653 = vmin.f32 %v5588, %v801
      %v5654 = vmin.f32 %v5592, %v798
      %v5655 = vmin.f32 %v5592, %v799
      %v5656 = vmin.f32 %v5592, %v800
      %v5657 = vmin.f32 %v5592, %v801
      %v5658 = vmin.f32 %v5596, %v798
      %v5659 = vmin.f32 %v5596, %v799
      %v5660 = vmin.f32 %v5596, %v800
      %v5661 = vmin.f32 %v5596, %v801
      %v5662 = vmin.f32 %v5600, %v798
      %v5663 = vmin.f32 %v5600, %v799
      %v5664 = vmin.f32 %v5600, %v800
      %v5665 = vmin.f32 %v5600, %v801
      %v5666 = vmin.f32 %v5604, %v798
      %v5667 = vmin.f32 %v5604, %v799
      %v5668 = vmin.f32 %v5604, %v800
      %v5669 = vmin.f32 %v5604, %v801
      %v5670 = vmin.f32 %v5608, %v798
      %v5671 = vmin.f32 %v5608, %v799
      %v5672 = vmin.f32 %v5608, %v800
      %v5673 = vmin.f32 %v5608, %v801
      %v5674 = vmin.f32 %v5612, %v798
      %v5675 = vmin.f32 %v5612, %v799
      %v5676 = vmin.f32 %v5612, %v800
      %v5677 = vmin.f32 %v5612, %v801
      %v5678 = vmin.f32 %v5616, %v798
      %v5679 = vmin.f32 %v5616, %v799
      %v5680 = vmin.f32 %v5616, %v800
      %v5681 = vmin.f32 %v5616, %v801
      %v5682 = vmin.f32 %v5620, %v798
      %v5683 = vmin.f32 %v5620, %v799
      %v5684 = vmin.f32 %v5620, %v800
      %v5685 = vmin.f32 %v5620, %v801
      %v5686 = vsub.f32 %v5494, %v5238
      %v5687 = vsub.f32 %v5495, %v5239
      %v5688 = vsub.f32 %v5496, %v5240
      %v5689 = vsub.f32 %v5497, %v5241
      %v5690 = vsub.f32 %v5498, %v5242
      %v5691 = vsub.f32 %v5499, %v5243
      %v5692 = vsub.f32 %v5500, %v5244
      %v5693 = vsub.f32 %v5501, %v5245
      %v5694 = vsub.f32 %v5502, %v5246
      %v5695 = vsub.f32 %v5503, %v5247
      %v5696 = vsub.f32 %v5504, %v5248
      %v5697 = vsub.f32 %v5505, %v5249
      %v5698 = vsub.f32 %v5506, %v5250
      %v5699 = vsub.f32 %v5507, %v5251
      %v5700 = vsub.f32 %v5508, %v5252
      %v5701 = vsub.f32 %v5509, %v5253
      %v5702 = vsub.f32 %v5510, %v5254
      %v5703 = vsub.f32 %v5511, %v5255
      %v5704 = vsub.f32 %v5512, %v5256
      %v5705 = vsub.f32 %v5513, %v5257
      %v5706 = vsub.f32 %v5514, %v5258
      %v5707 = vsub.f32 %v5515, %v5259
      %v5708 = vsub.f32 %v5516, %v5260
      %v5709 = vsub.f32 %v5517, %v5261
      %v5710 = vsub.f32 %v5518, %v5262
      %v5711 = vsub.f32 %v5519, %v5263
      %v5712 = vsub.f32 %v5520, %v5264
      %v5713 = vsub.f32 %v5521, %v5265
      %v5714 = vsub.f32 %v5522, %v5266
      %v5715 = vsub.f32 %v5523, %v5267
      %v5716 = vsub.f32 %v5524, %v5268
      %v5717 = vsub.f32 %v5525, %v5269
      %v5718 = vsub.f32 %v5526, %v5270
      %v5719 = vsub.f32 %v5527, %v5271
      %v5720 = vsub.f32 %v5528, %v5272
      %v5721 = vsub.f32 %v5529, %v5273
      %v5722 = vsub.f32 %v5530, %v5274
      %v5723 = vsub.f32 %v5531, %v5275
      %v5724 = vsub.f32 %v5532, %v5276
      %v5725 = vsub.f32 %v5533, %v5277
      %v5726 = vsub.f32 %v5534, %v5278
      %v5727 = vsub.f32 %v5535, %v5279
      %v5728 = vsub.f32 %v5536, %v5280
      %v5729 = vsub.f32 %v5537, %v5281
      %v5730 = vsub.f32 %v5538, %v5282
      %v5731 = vsub.f32 %v5539, %v5283
      %v5732 = vsub.f32 %v5540, %v5284
      %v5733 = vsub.f32 %v5541, %v5285
      %v5734 = vsub.f32 %v5542, %v5286
      %v5735 = vsub.f32 %v5543, %v5287
      %v5736 = vsub.f32 %v5544, %v5288
      %v5737 = vsub.f32 %v5545, %v5289
      %v5738 = vsub.f32 %v5546, %v5290
      %v5739 = vsub.f32 %v5547, %v5291
      %v5740 = vsub.f32 %v5548, %v5292
      %v5741 = vsub.f32 %v5549, %v5293
      %v5742 = vsub.f32 %v5550, %v5294
      %v5743 = vsub.f32 %v5551, %v5295
      %v5744 = vsub.f32 %v5552, %v5296
      %v5745 = vsub.f32 %v5553, %v5297
      %v5746 = vsub.f32 %v5554, %v5298
      %v5747 = vsub.f32 %v5555, %v5299
      %v5748 = vsub.f32 %v5556, %v5300
      %v5749 = vsub.f32 %v5557, %v5301
      %v5750 = vmax.f32 %v5686, 0.0
      %v5751 = vmax.f32 %v5687, 0.0
      %v5752 = vmax.f32 %v5688, 0.0
      %v5753 = vmax.f32 %v5689, 0.0
      %v5754 = vmax.f32 %v5690, 0.0
      %v5755 = vmax.f32 %v5691, 0.0
      %v5756 = vmax.f32 %v5692, 0.0
      %v5757 = vmax.f32 %v5693, 0.0
      %v5758 = vmax.f32 %v5694, 0.0
      %v5759 = vmax.f32 %v5695, 0.0
      %v5760 = vmax.f32 %v5696, 0.0
      %v5761 = vmax.f32 %v5697, 0.0
      %v5762 = vmax.f32 %v5698, 0.0
      %v5763 = vmax.f32 %v5699, 0.0
      %v5764 = vmax.f32 %v5700, 0.0
      %v5765 = vmax.f32 %v5701, 0.0
      %v5766 = vmax.f32 %v5702, 0.0
      %v5767 = vmax.f32 %v5703, 0.0
      %v5768 = vmax.f32 %v5704, 0.0
      %v5769 = vmax.f32 %v5705, 0.0
      %v5770 = vmax.f32 %v5706, 0.0
      %v5771 = vmax.f32 %v5707, 0.0
      %v5772 = vmax.f32 %v5708, 0.0
      %v5773 = vmax.f32 %v5709, 0.0
      %v5774 = vmax.f32 %v5710, 0.0
      %v5775 = vmax.f32 %v5711, 0.0
      %v5776 = vmax.f32 %v5712, 0.0
      %v5777 = vmax.f32 %v5713, 0.0
      %v5778 = vmax.f32 %v5714, 0.0
      %v5779 = vmax.f32 %v5715, 0.0
      %v5780 = vmax.f32 %v5716, 0.0
      %v5781 = vmax.f32 %v5717, 0.0
      %v5782 = vmax.f32 %v5718, 0.0
      %v5783 = vmax.f32 %v5719, 0.0
      %v5784 = vmax.f32 %v5720, 0.0
      %v5785 = vmax.f32 %v5721, 0.0
      %v5786 = vmax.f32 %v5722, 0.0
      %v5787 = vmax.f32 %v5723, 0.0
      %v5788 = vmax.f32 %v5724, 0.0
      %v5789 = vmax.f32 %v5725, 0.0
      %v5790 = vmax.f32 %v5726, 0.0
      %v5791 = vmax.f32 %v5727, 0.0
      %v5792 = vmax.f32 %v5728, 0.0
      %v5793 = vmax.f32 %v5729, 0.0
      %v5794 = vmax.f32 %v5730, 0.0
      %v5795 = vmax.f32 %v5731, 0.0
      %v5796 = vmax.f32 %v5732, 0.0
      %v5797 = vmax.f32 %v5733, 0.0
      %v5798 = vmax.f32 %v5734, 0.0
      %v5799 = vmax.f32 %v5735, 0.0
      %v5800 = vmax.f32 %v5736, 0.0
      %v5801 = vmax.f32 %v5737, 0.0
      %v5802 = vmax.f32 %v5738, 0.0
      %v5803 = vmax.f32 %v5739, 0.0
      %v5804 = vmax.f32 %v5740, 0.0
      %v5805 = vmax.f32 %v5741, 0.0
      %v5806 = vmax.f32 %v5742, 0.0
      %v5807 = vmax.f32 %v5743, 0.0
      %v5808 = vmax.f32 %v5744, 0.0
      %v5809 = vmax.f32 %v5745, 0.0
      %v5810 = vmax.f32 %v5746, 0.0
      %v5811 = vmax.f32 %v5747, 0.0
      %v5812 = vmax.f32 %v5748, 0.0
      %v5813 = vmax.f32 %v5749, 0.0
      %v5814 = vsub.f32 %v5622, %v5366
      %v5815 = vsub.f32 %v5623, %v5367
      %v5816 = vsub.f32 %v5624, %v5368
      %v5817 = vsub.f32 %v5625, %v5369
      %v5818 = vsub.f32 %v5626, %v5370
      %v5819 = vsub.f32 %v5627, %v5371
      %v5820 = vsub.f32 %v5628, %v5372
      %v5821 = vsub.f32 %v5629, %v5373
      %v5822 = vsub.f32 %v5630, %v5374
      %v5823 = vsub.f32 %v5631, %v5375
      %v5824 = vsub.f32 %v5632, %v5376
      %v5825 = vsub.f32 %v5633, %v5377
      %v5826 = vsub.f32 %v5634, %v5378
      %v5827 = vsub.f32 %v5635, %v5379
      %v5828 = vsub.f32 %v5636, %v5380
      %v5829 = vsub.f32 %v5637, %v5381
      %v5830 = vsub.f32 %v5638, %v5382
      %v5831 = vsub.f32 %v5639, %v5383
      %v5832 = vsub.f32 %v5640, %v5384
      %v5833 = vsub.f32 %v5641, %v5385
      %v5834 = vsub.f32 %v5642, %v5386
      %v5835 = vsub.f32 %v5643, %v5387
      %v5836 = vsub.f32 %v5644, %v5388
      %v5837 = vsub.f32 %v5645, %v5389
      %v5838 = vsub.f32 %v5646, %v5390
      %v5839 = vsub.f32 %v5647, %v5391
      %v5840 = vsub.f32 %v5648, %v5392
      %v5841 = vsub.f32 %v5649, %v5393
      %v5842 = vsub.f32 %v5650, %v5394
      %v5843 = vsub.f32 %v5651, %v5395
      %v5844 = vsub.f32 %v5652, %v5396
      %v5845 = vsub.f32 %v5653, %v5397
      %v5846 = vsub.f32 %v5654, %v5398
      %v5847 = vsub.f32 %v5655, %v5399
      %v5848 = vsub.f32 %v5656, %v5400
      %v5849 = vsub.f32 %v5657, %v5401
      %v5850 = vsub.f32 %v5658, %v5402
      %v5851 = vsub.f32 %v5659, %v5403
      %v5852 = vsub.f32 %v5660, %v5404
      %v5853 = vsub.f32 %v5661, %v5405
      %v5854 = vsub.f32 %v5662, %v5406
      %v5855 = vsub.f32 %v5663, %v5407
      %v5856 = vsub.f32 %v5664, %v5408
      %v5857 = vsub.f32 %v5665, %v5409
      %v5858 = vsub.f32 %v5666, %v5410
      %v5859 = vsub.f32 %v5667, %v5411
      %v5860 = vsub.f32 %v5668, %v5412
      %v5861 = vsub.f32 %v5669, %v5413
      %v5862 = vsub.f32 %v5670, %v5414
      %v5863 = vsub.f32 %v5671, %v5415
      %v5864 = vsub.f32 %v5672, %v5416
      %v5865 = vsub.f32 %v5673, %v5417
      %v5866 = vsub.f32 %v5674, %v5418
      %v5867 = vsub.f32 %v5675, %v5419
      %v5868 = vsub.f32 %v5676, %v5420
      %v5869 = vsub.f32 %v5677, %v5421
      %v5870 = vsub.f32 %v5678, %v5422
      %v5871 = vsub.f32 %v5679, %v5423
      %v5872 = vsub.f32 %v5680, %v5424
      %v5873 = vsub.f32 %v5681, %v5425
      %v5874 = vsub.f32 %v5682, %v5426
      %v5875 = vsub.f32 %v5683, %v5427
      %v5876 = vsub.f32 %v5684, %v5428
      %v5877 = vsub.f32 %v5685, %v5429
      %v5878 = vmax.f32 %v5814, 0.0
      %v5879 = vmax.f32 %v5815, 0.0
      %v5880 = vmax.f32 %v5816, 0.0
      %v5881 = vmax.f32 %v5817, 0.0
      %v5882 = vmax.f32 %v5818, 0.0
      %v5883 = vmax.f32 %v5819, 0.0
      %v5884 = vmax.f32 %v5820, 0.0
      %v5885 = vmax.f32 %v5821, 0.0
      %v5886 = vmax.f32 %v5822, 0.0
      %v5887 = vmax.f32 %v5823, 0.0
      %v5888 = vmax.f32 %v5824, 0.0
      %v5889 = vmax.f32 %v5825, 0.0
      %v5890 = vmax.f32 %v5826, 0.0
      %v5891 = vmax.f32 %v5827, 0.0
      %v5892 = vmax.f32 %v5828, 0.0
      %v5893 = vmax.f32 %v5829, 0.0
      %v5894 = vmax.f32 %v5830, 0.0
      %v5895 = vmax.f32 %v5831, 0.0
      %v5896 = vmax.f32 %v5832, 0.0
      %v5897 = vmax.f32 %v5833, 0.0
      %v5898 = vmax.f32 %v5834, 0.0
      %v5899 = vmax.f32 %v5835, 0.0
      %v5900 = vmax.f32 %v5836, 0.0
      %v5901 = vmax.f32 %v5837, 0.0
      %v5902 = vmax.f32 %v5838, 0.0
      %v5903 = vmax.f32 %v5839, 0.0
      %v5904 = vmax.f32 %v5840, 0.0
      %v5905 = vmax.f32 %v5841, 0.0
      %v5906 = vmax.f32 %v5842, 0.0
      %v5907 = vmax.f32 %v5843, 0.0
      %v5908 = vmax.f32 %v5844, 0.0
      %v5909 = vmax.f32 %v5845, 0.0
      %v5910 = vmax.f32 %v5846, 0.0
      %v5911 = vmax.f32 %v5847, 0.0
      %v5912 = vmax.f32 %v5848, 0.0
      %v5913 = vmax.f32 %v5849, 0.0
      %v5914 = vmax.f32 %v5850, 0.0
      %v5915 = vmax.f32 %v5851, 0.0
      %v5916 = vmax.f32 %v5852, 0.0
      %v5917 = vmax.f32 %v5853, 0.0
      %v5918 = vmax.f32 %v5854, 0.0
      %v5919 = vmax.f32 %v5855, 0.0
      %v5920 = vmax.f32 %v5856, 0.0
      %v5921 = vmax.f32 %v5857, 0.0
      %v5922 = vmax.f32 %v5858, 0.0
      %v5923 = vmax.f32 %v5859, 0.0
      %v5924 = vmax.f32 %v5860, 0.0
      %v5925 = vmax.f32 %v5861, 0.0
      %v5926 = vmax.f32 %v5862, 0.0
      %v5927 = vmax.f32 %v5863, 0.0
      %v5928 = vmax.f32 %v5864, 0.0
      %v5929 = vmax.f32 %v5865, 0.0
      %v5930 = vmax.f32 %v5866, 0.0
      %v5931 = vmax.f32 %v5867, 0.0
      %v5932 = vmax.f32 %v5868, 0.0
      %v5933 = vmax.f32 %v5869, 0.0
      %v5934 = vmax.f32 %v5870, 0.0
      %v5935 = vmax.f32 %v5871, 0.0
      %v5936 = vmax.f32 %v5872, 0.0
      %v5937 = vmax.f32 %v5873, 0.0
      %v5938 = vmax.f32 %v5874, 0.0
      %v5939 = vmax.f32 %v5875, 0.0
      %v5940 = vmax.f32 %v5876, 0.0
      %v5941 = vmax.f32 %v5877, 0.0
      %v5942 = vmul.f32 %v5750, %v5878
      %v5943 = vmul.f32 %v5751, %v5879
      %v5944 = vmul.f32 %v5752, %v5880
      %v5945 = vmul.f32 %v5753, %v5881
      %v5946 = vmul.f32 %v5754, %v5882
      %v5947 = vmul.f32 %v5755, %v5883
      %v5948 = vmul.f32 %v5756, %v5884
      %v5949 = vmul.f32 %v5757, %v5885
      %v5950 = vmul.f32 %v5758, %v5886
      %v5951 = vmul.f32 %v5759, %v5887
      %v5952 = vmul.f32 %v5760, %v5888
      %v5953 = vmul.f32 %v5761, %v5889
      %v5954 = vmul.f32 %v5762, %v5890
      %v5955 = vmul.f32 %v5763, %v5891
      %v5956 = vmul.f32 %v5764, %v5892
      %v5957 = vmul.f32 %v5765, %v5893
      %v5958 = vmul.f32 %v5766, %v5894
      %v5959 = vmul.f32 %v5767, %v5895
      %v5960 = vmul.f32 %v5768, %v5896
      %v5961 = vmul.f32 %v5769, %v5897
      %v5962 = vmul.f32 %v5770, %v5898
      %v5963 = vmul.f32 %v5771, %v5899
      %v5964 = vmul.f32 %v5772, %v5900
      %v5965 = vmul.f32 %v5773, %v5901
      %v5966 = vmul.f32 %v5774, %v5902
      %v5967 = vmul.f32 %v5775, %v5903
      %v5968 = vmul.f32 %v5776, %v5904
      %v5969 = vmul.f32 %v5777, %v5905
      %v5970 = vmul.f32 %v5778, %v5906
      %v5971 = vmul.f32 %v5779, %v5907
      %v5972 = vmul.f32 %v5780, %v5908
      %v5973 = vmul.f32 %v5781, %v5909
      %v5974 = vmul.f32 %v5782, %v5910
      %v5975 = vmul.f32 %v5783, %v5911
      %v5976 = vmul.f32 %v5784, %v5912
      %v5977 = vmul.f32 %v5785, %v5913
      %v5978 = vmul.f32 %v5786, %v5914
      %v5979 = vmul.f32 %v5787, %v5915
      %v5980 = vmul.f32 %v5788, %v5916
      %v5981 = vmul.f32 %v5789, %v5917
      %v5982 = vmul.f32 %v5790, %v5918
      %v5983 = vmul.f32 %v5791, %v5919
      %v5984 = vmul.f32 %v5792, %v5920
      %v5985 = vmul.f32 %v5793, %v5921
      %v5986 = vmul.f32 %v5794, %v5922
      %v5987 = vmul.f32 %v5795, %v5923
      %v5988 = vmul.f32 %v5796, %v5924
      %v5989 = vmul.f32 %v5797, %v5925
      %v5990 = vmul.f32 %v5798, %v5926
      %v5991 = vmul.f32 %v5799, %v5927
      %v5992 = vmul.f32 %v5800, %v5928
      %v5993 = vmul.f32 %v5801, %v5929
      %v5994 = vmul.f32 %v5802, %v5930
      %v5995 = vmul.f32 %v5803, %v5931
      %v5996 = vmul.f32 %v5804, %v5932
      %v5997 = vmul.f32 %v5805, %v5933
      %v5998 = vmul.f32 %v5806, %v5934
      %v5999 = vmul.f32 %v5807, %v5935
      %v6000 = vmul.f32 %v5808, %v5936
      %v6001 = vmul.f32 %v5809, %v5937
      %v6002 = vmul.f32 %v5810, %v5938
      %v6003 = vmul.f32 %v5811, %v5939
      %v6004 = vmul.f32 %v5812, %v5940
      %v6005 = vmul.f32 %v5813, %v5941
      %6006 = vrot.lane.b32.xlu0 %v254, 2
      %v6007 = vpop.permute.xlu0 %6006
      %6008 = vrot.lane.b32.xlu0 %v255, 2
      %v6009 = vpop.permute.xlu0 %6008
      %6010 = vrot.lane.b32.xlu0 %v256, 2
      %v6011 = vpop.permute.xlu0 %6010
      %6012 = vrot.lane.b32.xlu0 %v257, 2
      %v6013 = vpop.permute.xlu0 %6012
      %6014 = vrot.lane.b32.xlu0 %v258, 2
      %v6015 = vpop.permute.xlu0 %6014
      %6016 = vrot.lane.b32.xlu0 %v259, 2
      %v6017 = vpop.permute.xlu0 %6016
      %6018 = vrot.lane.b32.xlu0 %v260, 2
      %v6019 = vpop.permute.xlu0 %6018
      %6020 = vrot.lane.b32.xlu0 %v261, 2
      %v6021 = vpop.permute.xlu0 %6020
      %6022 = vrot.lane.b32.xlu0 %v262, 2
      %v6023 = vpop.permute.xlu0 %6022
      %6024 = vrot.lane.b32.xlu0 %v263, 2
      %v6025 = vpop.permute.xlu0 %6024
      %6026 = vrot.lane.b32.xlu0 %v264, 2
      %v6027 = vpop.permute.xlu0 %6026
      %6028 = vrot.lane.b32.xlu0 %v265, 2
      %v6029 = vpop.permute.xlu0 %6028
      %6030 = vrot.lane.b32.xlu0 %v266, 2
      %v6031 = vpop.permute.xlu0 %6030
      %6032 = vrot.lane.b32.xlu0 %v267, 2
      %v6033 = vpop.permute.xlu0 %6032
      %6034 = vrot.lane.b32.xlu0 %v268, 2
      %v6035 = vpop.permute.xlu0 %6034
      %6036 = vrot.lane.b32.xlu0 %v269, 2
      %v6037 = vpop.permute.xlu0 %6036
      %v6054 = vsub.f32 %v254, %v6007
      %v6055 = vsub.f32 %v255, %v6009
      %v6056 = vsub.f32 %v256, %v6011
      %v6057 = vsub.f32 %v257, %v6013
      %v6058 = vsub.f32 %v258, %v6015
      %v6059 = vsub.f32 %v259, %v6017
      %v6060 = vsub.f32 %v260, %v6019
      %v6061 = vsub.f32 %v261, %v6021
      %v6062 = vsub.f32 %v262, %v6023
      %v6063 = vsub.f32 %v263, %v6025
      %v6064 = vsub.f32 %v264, %v6027
      %v6065 = vsub.f32 %v265, %v6029
      %v6066 = vsub.f32 %v266, %v6031
      %v6067 = vsub.f32 %v267, %v6033
      %v6068 = vsub.f32 %v268, %v6035
      %v6069 = vsub.f32 %v269, %v6037
      %6086 = vrot.lane.b32.xlu0 %v6054, 127
      %v6087 = vpop.permute.xlu0 %6086
      %6088 = vrot.lane.b32.xlu0 %v6055, 127
      %v6089 = vpop.permute.xlu0 %6088
      %6090 = vrot.lane.b32.xlu0 %v6056, 127
      %v6091 = vpop.permute.xlu0 %6090
      %6092 = vrot.lane.b32.xlu0 %v6057, 127
      %v6093 = vpop.permute.xlu0 %6092
      %6094 = vrot.lane.b32.xlu0 %v6058, 127
      %v6095 = vpop.permute.xlu0 %6094
      %6096 = vrot.lane.b32.xlu0 %v6059, 127
      %v6097 = vpop.permute.xlu0 %6096
      %6098 = vrot.lane.b32.xlu0 %v6060, 127
      %v6099 = vpop.permute.xlu0 %6098
      %6100 = vrot.lane.b32.xlu0 %v6061, 127
      %v6101 = vpop.permute.xlu0 %6100
      %6102 = vrot.lane.b32.xlu0 %v6062, 127
      %v6103 = vpop.permute.xlu0 %6102
      %6104 = vrot.lane.b32.xlu0 %v6063, 127
      %v6105 = vpop.permute.xlu0 %6104
      %6106 = vrot.lane.b32.xlu0 %v6064, 127
      %v6107 = vpop.permute.xlu0 %6106
      %6108 = vrot.lane.b32.xlu0 %v6065, 127
      %v6109 = vpop.permute.xlu0 %6108
      %6110 = vrot.lane.b32.xlu0 %v6066, 127
      %v6111 = vpop.permute.xlu0 %6110
      %6112 = vrot.lane.b32.xlu0 %v6067, 127
      %v6113 = vpop.permute.xlu0 %6112
      %6114 = vrot.lane.b32.xlu0 %v6068, 127
      %v6115 = vpop.permute.xlu0 %6114
      %6116 = vrot.lane.b32.xlu0 %v6069, 127
      %v6117 = vpop.permute.xlu0 %6116
      %v6134 = vmul.f32 %v6054, %v6087
      %v6135 = vmul.f32 %v6055, %v6089
      %v6136 = vmul.f32 %v6056, %v6091
      %v6137 = vmul.f32 %v6057, %v6093
      %v6138 = vmul.f32 %v6058, %v6095
      %v6139 = vmul.f32 %v6059, %v6097
      %v6140 = vmul.f32 %v6060, %v6099
      %v6141 = vmul.f32 %v6061, %v6101
      %v6142 = vmul.f32 %v6062, %v6103
      %v6143 = vmul.f32 %v6063, %v6105
      %v6144 = vmul.f32 %v6064, %v6107
      %v6145 = vmul.f32 %v6065, %v6109
      %v6146 = vmul.f32 %v6066, %v6111
      %v6147 = vmul.f32 %v6067, %v6113
      %v6148 = vmul.f32 %v6068, %v6115
      %v6149 = vmul.f32 %v6069, %v6117
      %6151 = vset.pattern.permute.xlu0 2
      %6152 = vperm.xlu0 %6151, %v6134
      %v6153 = vpop.permute.xlu0 %6152
      %6156 = vset.pattern.permute.xlu0 2
      %6157 = vperm.xlu0 %6156, %v6135
      %v6158 = vpop.permute.xlu0 %6157
      %6161 = vset.pattern.permute.xlu0 2
      %6162 = vperm.xlu0 %6161, %v6136
      %v6163 = vpop.permute.xlu0 %6162
      %6166 = vset.pattern.permute.xlu0 2
      %6167 = vperm.xlu0 %6166, %v6137
      %v6168 = vpop.permute.xlu0 %6167
      %6171 = vset.pattern.permute.xlu0 2
      %6172 = vperm.xlu0 %6171, %v6138
      %v6173 = vpop.permute.xlu0 %6172
      %6176 = vset.pattern.permute.xlu0 2
      %6177 = vperm.xlu0 %6176, %v6139
      %v6178 = vpop.permute.xlu0 %6177
      %6181 = vset.pattern.permute.xlu0 2
      %6182 = vperm.xlu0 %6181, %v6140
      %v6183 = vpop.permute.xlu0 %6182
      %6186 = vset.pattern.permute.xlu0 2
      %6187 = vperm.xlu0 %6186, %v6141
      %v6188 = vpop.permute.xlu0 %6187
      %6191 = vset.pattern.permute.xlu0 2
      %6192 = vperm.xlu0 %6191, %v6142
      %v6193 = vpop.permute.xlu0 %6192
      %6196 = vset.pattern.permute.xlu0 2
      %6197 = vperm.xlu0 %6196, %v6143
      %v6198 = vpop.permute.xlu0 %6197
      %6201 = vset.pattern.permute.xlu0 2
      %6202 = vperm.xlu0 %6201, %v6144
      %v6203 = vpop.permute.xlu0 %6202
      %6206 = vset.pattern.permute.xlu0 2
      %6207 = vperm.xlu0 %6206, %v6145
      %v6208 = vpop.permute.xlu0 %6207
      %6211 = vset.pattern.permute.xlu0 2
      %6212 = vperm.xlu0 %6211, %v6146
      %v6213 = vpop.permute.xlu0 %6212
      %6216 = vset.pattern.permute.xlu0 2
      %6217 = vperm.xlu0 %6216, %v6147
      %v6218 = vpop.permute.xlu0 %6217
      %6221 = vset.pattern.permute.xlu0 2
      %6222 = vperm.xlu0 %6221, %v6148
      %v6223 = vpop.permute.xlu0 %6222
      %6226 = vset.pattern.permute.xlu0 2
      %6227 = vperm.xlu0 %6226, %v6149
      %v6228 = vpop.permute.xlu0 %6227
      %v6230 = vadd.f32 %v6153, %v1420
      %v6231 = vadd.f32 %v6153, %v1421
      %v6232 = vadd.f32 %v6153, %v1422
      %v6233 = vadd.f32 %v6153, %v1423
      %v6234 = vadd.f32 %v6158, %v1420
      %v6235 = vadd.f32 %v6158, %v1421
      %v6236 = vadd.f32 %v6158, %v1422
      %v6237 = vadd.f32 %v6158, %v1423
      %v6238 = vadd.f32 %v6163, %v1420
      %v6239 = vadd.f32 %v6163, %v1421
      %v6240 = vadd.f32 %v6163, %v1422
      %v6241 = vadd.f32 %v6163, %v1423
      %v6242 = vadd.f32 %v6168, %v1420
      %v6243 = vadd.f32 %v6168, %v1421
      %v6244 = vadd.f32 %v6168, %v1422
      %v6245 = vadd.f32 %v6168, %v1423
      %v6246 = vadd.f32 %v6173, %v1420
      %v6247 = vadd.f32 %v6173, %v1421
      %v6248 = vadd.f32 %v6173, %v1422
      %v6249 = vadd.f32 %v6173, %v1423
      %v6250 = vadd.f32 %v6178, %v1420
      %v6251 = vadd.f32 %v6178, %v1421
      %v6252 = vadd.f32 %v6178, %v1422
      %v6253 = vadd.f32 %v6178, %v1423
      %v6254 = vadd.f32 %v6183, %v1420
      %v6255 = vadd.f32 %v6183, %v1421
      %v6256 = vadd.f32 %v6183, %v1422
      %v6257 = vadd.f32 %v6183, %v1423
      %v6258 = vadd.f32 %v6188, %v1420
      %v6259 = vadd.f32 %v6188, %v1421
      %v6260 = vadd.f32 %v6188, %v1422
      %v6261 = vadd.f32 %v6188, %v1423
      %v6262 = vadd.f32 %v6193, %v1420
      %v6263 = vadd.f32 %v6193, %v1421
      %v6264 = vadd.f32 %v6193, %v1422
      %v6265 = vadd.f32 %v6193, %v1423
      %v6266 = vadd.f32 %v6198, %v1420
      %v6267 = vadd.f32 %v6198, %v1421
      %v6268 = vadd.f32 %v6198, %v1422
      %v6269 = vadd.f32 %v6198, %v1423
      %v6270 = vadd.f32 %v6203, %v1420
      %v6271 = vadd.f32 %v6203, %v1421
      %v6272 = vadd.f32 %v6203, %v1422
      %v6273 = vadd.f32 %v6203, %v1423
      %v6274 = vadd.f32 %v6208, %v1420
      %v6275 = vadd.f32 %v6208, %v1421
      %v6276 = vadd.f32 %v6208, %v1422
      %v6277 = vadd.f32 %v6208, %v1423
      %v6278 = vadd.f32 %v6213, %v1420
      %v6279 = vadd.f32 %v6213, %v1421
      %v6280 = vadd.f32 %v6213, %v1422
      %v6281 = vadd.f32 %v6213, %v1423
      %v6282 = vadd.f32 %v6218, %v1420
      %v6283 = vadd.f32 %v6218, %v1421
      %v6284 = vadd.f32 %v6218, %v1422
      %v6285 = vadd.f32 %v6218, %v1423
      %v6286 = vadd.f32 %v6223, %v1420
      %v6287 = vadd.f32 %v6223, %v1421
      %v6288 = vadd.f32 %v6223, %v1422
      %v6289 = vadd.f32 %v6223, %v1423
      %v6290 = vadd.f32 %v6228, %v1420
      %v6291 = vadd.f32 %v6228, %v1421
      %v6292 = vadd.f32 %v6228, %v1422
      %v6293 = vadd.f32 %v6228, %v1423
      %v6294 = vsub.f32 %v6230, %v5942
      %v6295 = vsub.f32 %v6231, %v5943
      %v6296 = vsub.f32 %v6232, %v5944
      %v6297 = vsub.f32 %v6233, %v5945
      %v6298 = vsub.f32 %v6234, %v5946
      %v6299 = vsub.f32 %v6235, %v5947
      %v6300 = vsub.f32 %v6236, %v5948
      %v6301 = vsub.f32 %v6237, %v5949
      %v6302 = vsub.f32 %v6238, %v5950
      %v6303 = vsub.f32 %v6239, %v5951
      %v6304 = vsub.f32 %v6240, %v5952
      %v6305 = vsub.f32 %v6241, %v5953
      %v6306 = vsub.f32 %v6242, %v5954
      %v6307 = vsub.f32 %v6243, %v5955
      %v6308 = vsub.f32 %v6244, %v5956
      %v6309 = vsub.f32 %v6245, %v5957
      %v6310 = vsub.f32 %v6246, %v5958
      %v6311 = vsub.f32 %v6247, %v5959
      %v6312 = vsub.f32 %v6248, %v5960
      %v6313 = vsub.f32 %v6249, %v5961
      %v6314 = vsub.f32 %v6250, %v5962
      %v6315 = vsub.f32 %v6251, %v5963
      %v6316 = vsub.f32 %v6252, %v5964
      %v6317 = vsub.f32 %v6253, %v5965
      %v6318 = vsub.f32 %v6254, %v5966
      %v6319 = vsub.f32 %v6255, %v5967
      %v6320 = vsub.f32 %v6256, %v5968
      %v6321 = vsub.f32 %v6257, %v5969
      %v6322 = vsub.f32 %v6258, %v5970
      %v6323 = vsub.f32 %v6259, %v5971
      %v6324 = vsub.f32 %v6260, %v5972
      %v6325 = vsub.f32 %v6261, %v5973
      %v6326 = vsub.f32 %v6262, %v5974
      %v6327 = vsub.f32 %v6263, %v5975
      %v6328 = vsub.f32 %v6264, %v5976
      %v6329 = vsub.f32 %v6265, %v5977
      %v6330 = vsub.f32 %v6266, %v5978
      %v6331 = vsub.f32 %v6267, %v5979
      %v6332 = vsub.f32 %v6268, %v5980
      %v6333 = vsub.f32 %v6269, %v5981
      %v6334 = vsub.f32 %v6270, %v5982
      %v6335 = vsub.f32 %v6271, %v5983
      %v6336 = vsub.f32 %v6272, %v5984
      %v6337 = vsub.f32 %v6273, %v5985
      %v6338 = vsub.f32 %v6274, %v5986
      %v6339 = vsub.f32 %v6275, %v5987
      %v6340 = vsub.f32 %v6276, %v5988
      %v6341 = vsub.f32 %v6277, %v5989
      %v6342 = vsub.f32 %v6278, %v5990
      %v6343 = vsub.f32 %v6279, %v5991
      %v6344 = vsub.f32 %v6280, %v5992
      %v6345 = vsub.f32 %v6281, %v5993
      %v6346 = vsub.f32 %v6282, %v5994
      %v6347 = vsub.f32 %v6283, %v5995
      %v6348 = vsub.f32 %v6284, %v5996
      %v6349 = vsub.f32 %v6285, %v5997
      %v6350 = vsub.f32 %v6286, %v5998
      %v6351 = vsub.f32 %v6287, %v5999
      %v6352 = vsub.f32 %v6288, %v6000
      %v6353 = vsub.f32 %v6289, %v6001
      %v6354 = vsub.f32 %v6290, %v6002
      %v6355 = vsub.f32 %v6291, %v6003
      %v6356 = vsub.f32 %v6292, %v6004
      %v6357 = vsub.f32 %v6293, %v6005
      %v6358 = vadd.s32 %v1553, 384
      %v6359 = vadd.s32 %v1554, 384
      %v6360 = vadd.s32 %v1555, 384
      %v6361 = vadd.s32 %v1556, 384
      %v6362 = vadd.s32 %v1557, 384
      %v6363 = vadd.s32 %v1558, 384
      %v6364 = vadd.s32 %v1559, 384
      %v6365 = vadd.s32 %v1560, 384
      %v6366 = vadd.s32 %v1561, 384
      %v6367 = vadd.s32 %v1562, 384
      %v6368 = vadd.s32 %v1563, 384
      %v6369 = vadd.s32 %v1564, 384
      %v6370 = vadd.s32 %v1565, 384
      %v6371 = vadd.s32 %v1566, 384
      %v6372 = vadd.s32 %v1567, 384
      %v6373 = vadd.s32 %v1568, 384
      %v6374 = vmul.f32 %v6294, 0.45
      %v6375 = vmul.f32 %v6295, 0.45
      %v6376 = vmul.f32 %v6296, 0.45
      %v6377 = vmul.f32 %v6297, 0.45
      %v6378 = vmul.f32 %v6298, 0.45
      %v6379 = vmul.f32 %v6299, 0.45
      %v6380 = vmul.f32 %v6300, 0.45
      %v6381 = vmul.f32 %v6301, 0.45
      %v6382 = vmul.f32 %v6302, 0.45
      %v6383 = vmul.f32 %v6303, 0.45
      %v6384 = vmul.f32 %v6304, 0.45
      %v6385 = vmul.f32 %v6305, 0.45
      %v6386 = vmul.f32 %v6306, 0.45
      %v6387 = vmul.f32 %v6307, 0.45
      %v6388 = vmul.f32 %v6308, 0.45
      %v6389 = vmul.f32 %v6309, 0.45
      %v6390 = vmul.f32 %v6310, 0.45
      %v6391 = vmul.f32 %v6311, 0.45
      %v6392 = vmul.f32 %v6312, 0.45
      %v6393 = vmul.f32 %v6313, 0.45
      %v6394 = vmul.f32 %v6314, 0.45
      %v6395 = vmul.f32 %v6315, 0.45
      %v6396 = vmul.f32 %v6316, 0.45
      %v6397 = vmul.f32 %v6317, 0.45
      %v6398 = vmul.f32 %v6318, 0.45
      %v6399 = vmul.f32 %v6319, 0.45
      %v6400 = vmul.f32 %v6320, 0.45
      %v6401 = vmul.f32 %v6321, 0.45
      %v6402 = vmul.f32 %v6322, 0.45
      %v6403 = vmul.f32 %v6323, 0.45
      %v6404 = vmul.f32 %v6324, 0.45
      %v6405 = vmul.f32 %v6325, 0.45
      %v6406 = vmul.f32 %v6326, 0.45
      %v6407 = vmul.f32 %v6327, 0.45
      %v6408 = vmul.f32 %v6328, 0.45
      %v6409 = vmul.f32 %v6329, 0.45
      %v6410 = vmul.f32 %v6330, 0.45
      %v6411 = vmul.f32 %v6331, 0.45
      %v6412 = vmul.f32 %v6332, 0.45
      %v6413 = vmul.f32 %v6333, 0.45
      %v6414 = vmul.f32 %v6334, 0.45
      %v6415 = vmul.f32 %v6335, 0.45
      %v6416 = vmul.f32 %v6336, 0.45
      %v6417 = vmul.f32 %v6337, 0.45
      %v6418 = vmul.f32 %v6338, 0.45
      %v6419 = vmul.f32 %v6339, 0.45
      %v6420 = vmul.f32 %v6340, 0.45
      %v6421 = vmul.f32 %v6341, 0.45
      %v6422 = vmul.f32 %v6342, 0.45
      %v6423 = vmul.f32 %v6343, 0.45
      %v6424 = vmul.f32 %v6344, 0.45
      %v6425 = vmul.f32 %v6345, 0.45
      %v6426 = vmul.f32 %v6346, 0.45
      %v6427 = vmul.f32 %v6347, 0.45
      %v6428 = vmul.f32 %v6348, 0.45
      %v6429 = vmul.f32 %v6349, 0.45
      %v6430 = vmul.f32 %v6350, 0.45
      %v6431 = vmul.f32 %v6351, 0.45
      %v6432 = vmul.f32 %v6352, 0.45
      %v6433 = vmul.f32 %v6353, 0.45
      %v6434 = vmul.f32 %v6354, 0.45
      %v6435 = vmul.f32 %v6355, 0.45
      %v6436 = vmul.f32 %v6356, 0.45
      %v6437 = vmul.f32 %v6357, 0.45
      %vm6438 = vcmp.gt.f32.partialorder %v5942, %v6374
      %vm6439 = vcmp.gt.f32.partialorder %v5943, %v6375
      %vm6440 = vcmp.gt.f32.partialorder %v5944, %v6376
      %vm6441 = vcmp.gt.f32.partialorder %v5945, %v6377
      %vm6442 = vcmp.gt.f32.partialorder %v5946, %v6378
      %vm6443 = vcmp.gt.f32.partialorder %v5947, %v6379
      %vm6444 = vcmp.gt.f32.partialorder %v5948, %v6380
      %vm6445 = vcmp.gt.f32.partialorder %v5949, %v6381
      %vm6446 = vcmp.gt.f32.partialorder %v5950, %v6382
      %vm6447 = vcmp.gt.f32.partialorder %v5951, %v6383
      %vm6448 = vcmp.gt.f32.partialorder %v5952, %v6384
      %vm6449 = vcmp.gt.f32.partialorder %v5953, %v6385
      %vm6450 = vcmp.gt.f32.partialorder %v5954, %v6386
      %vm6451 = vcmp.gt.f32.partialorder %v5955, %v6387
      %vm6452 = vcmp.gt.f32.partialorder %v5956, %v6388
      %vm6453 = vcmp.gt.f32.partialorder %v5957, %v6389
      %vm6454 = vcmp.gt.f32.partialorder %v5958, %v6390
      %vm6455 = vcmp.gt.f32.partialorder %v5959, %v6391
      %vm6456 = vcmp.gt.f32.partialorder %v5960, %v6392
      %vm6457 = vcmp.gt.f32.partialorder %v5961, %v6393
      %vm6458 = vcmp.gt.f32.partialorder %v5962, %v6394
      %vm6459 = vcmp.gt.f32.partialorder %v5963, %v6395
      %vm6460 = vcmp.gt.f32.partialorder %v5964, %v6396
      %vm6461 = vcmp.gt.f32.partialorder %v5965, %v6397
      %vm6462 = vcmp.gt.f32.partialorder %v5966, %v6398
      %vm6463 = vcmp.gt.f32.partialorder %v5967, %v6399
      %vm6464 = vcmp.gt.f32.partialorder %v5968, %v6400
      %vm6465 = vcmp.gt.f32.partialorder %v5969, %v6401
      %vm6466 = vcmp.gt.f32.partialorder %v5970, %v6402
      %vm6467 = vcmp.gt.f32.partialorder %v5971, %v6403
      %vm6468 = vcmp.gt.f32.partialorder %v5972, %v6404
      %vm6469 = vcmp.gt.f32.partialorder %v5973, %v6405
      %vm6470 = vcmp.gt.f32.partialorder %v5974, %v6406
      %vm6471 = vcmp.gt.f32.partialorder %v5975, %v6407
      %vm6472 = vcmp.gt.f32.partialorder %v5976, %v6408
      %vm6473 = vcmp.gt.f32.partialorder %v5977, %v6409
      %vm6474 = vcmp.gt.f32.partialorder %v5978, %v6410
      %vm6475 = vcmp.gt.f32.partialorder %v5979, %v6411
      %vm6476 = vcmp.gt.f32.partialorder %v5980, %v6412
      %vm6477 = vcmp.gt.f32.partialorder %v5981, %v6413
      %vm6478 = vcmp.gt.f32.partialorder %v5982, %v6414
      %vm6479 = vcmp.gt.f32.partialorder %v5983, %v6415
      %vm6480 = vcmp.gt.f32.partialorder %v5984, %v6416
      %vm6481 = vcmp.gt.f32.partialorder %v5985, %v6417
      %vm6482 = vcmp.gt.f32.partialorder %v5986, %v6418
      %vm6483 = vcmp.gt.f32.partialorder %v5987, %v6419
      %vm6484 = vcmp.gt.f32.partialorder %v5988, %v6420
      %vm6485 = vcmp.gt.f32.partialorder %v5989, %v6421
      %vm6486 = vcmp.gt.f32.partialorder %v5990, %v6422
      %vm6487 = vcmp.gt.f32.partialorder %v5991, %v6423
      %vm6488 = vcmp.gt.f32.partialorder %v5992, %v6424
      %vm6489 = vcmp.gt.f32.partialorder %v5993, %v6425
      %vm6490 = vcmp.gt.f32.partialorder %v5994, %v6426
      %vm6491 = vcmp.gt.f32.partialorder %v5995, %v6427
      %vm6492 = vcmp.gt.f32.partialorder %v5996, %v6428
      %vm6493 = vcmp.gt.f32.partialorder %v5997, %v6429
      %vm6494 = vcmp.gt.f32.partialorder %v5998, %v6430
      %vm6495 = vcmp.gt.f32.partialorder %v5999, %v6431
      %vm6496 = vcmp.gt.f32.partialorder %v6000, %v6432
      %vm6497 = vcmp.gt.f32.partialorder %v6001, %v6433
      %vm6498 = vcmp.gt.f32.partialorder %v6002, %v6434
      %vm6499 = vcmp.gt.f32.partialorder %v6003, %v6435
      %vm6500 = vcmp.gt.f32.partialorder %v6004, %v6436
      %vm6501 = vcmp.gt.f32.partialorder %v6005, %v6437
      %vm6502 = vcmp.gt.s32.totalorder %v1570, %v6358
      %vm6503 = vcmp.gt.s32.totalorder %v1571, %v6358
      %vm6504 = vcmp.gt.s32.totalorder %v1572, %v6358
      %vm6505 = vcmp.gt.s32.totalorder %v1573, %v6358
      %vm6506 = vcmp.gt.s32.totalorder %v1570, %v6359
      %vm6507 = vcmp.gt.s32.totalorder %v1571, %v6359
      %vm6508 = vcmp.gt.s32.totalorder %v1572, %v6359
      %vm6509 = vcmp.gt.s32.totalorder %v1573, %v6359
      %vm6510 = vcmp.gt.s32.totalorder %v1570, %v6360
      %vm6511 = vcmp.gt.s32.totalorder %v1571, %v6360
      %vm6512 = vcmp.gt.s32.totalorder %v1572, %v6360
      %vm6513 = vcmp.gt.s32.totalorder %v1573, %v6360
      %vm6514 = vcmp.gt.s32.totalorder %v1570, %v6361
      %vm6515 = vcmp.gt.s32.totalorder %v1571, %v6361
      %vm6516 = vcmp.gt.s32.totalorder %v1572, %v6361
      %vm6517 = vcmp.gt.s32.totalorder %v1573, %v6361
      %vm6518 = vcmp.gt.s32.totalorder %v1570, %v6362
      %vm6519 = vcmp.gt.s32.totalorder %v1571, %v6362
      %vm6520 = vcmp.gt.s32.totalorder %v1572, %v6362
      %vm6521 = vcmp.gt.s32.totalorder %v1573, %v6362
      %vm6522 = vcmp.gt.s32.totalorder %v1570, %v6363
      %vm6523 = vcmp.gt.s32.totalorder %v1571, %v6363
      %vm6524 = vcmp.gt.s32.totalorder %v1572, %v6363
      %vm6525 = vcmp.gt.s32.totalorder %v1573, %v6363
      %vm6526 = vcmp.gt.s32.totalorder %v1570, %v6364
      %vm6527 = vcmp.gt.s32.totalorder %v1571, %v6364
      %vm6528 = vcmp.gt.s32.totalorder %v1572, %v6364
      %vm6529 = vcmp.gt.s32.totalorder %v1573, %v6364
      %vm6530 = vcmp.gt.s32.totalorder %v1570, %v6365
      %vm6531 = vcmp.gt.s32.totalorder %v1571, %v6365
      %vm6532 = vcmp.gt.s32.totalorder %v1572, %v6365
      %vm6533 = vcmp.gt.s32.totalorder %v1573, %v6365
      %vm6534 = vcmp.gt.s32.totalorder %v1570, %v6366
      %vm6535 = vcmp.gt.s32.totalorder %v1571, %v6366
      %vm6536 = vcmp.gt.s32.totalorder %v1572, %v6366
      %vm6537 = vcmp.gt.s32.totalorder %v1573, %v6366
      %vm6538 = vcmp.gt.s32.totalorder %v1570, %v6367
      %vm6539 = vcmp.gt.s32.totalorder %v1571, %v6367
      %vm6540 = vcmp.gt.s32.totalorder %v1572, %v6367
      %vm6541 = vcmp.gt.s32.totalorder %v1573, %v6367
      %vm6542 = vcmp.gt.s32.totalorder %v1570, %v6368
      %vm6543 = vcmp.gt.s32.totalorder %v1571, %v6368
      %vm6544 = vcmp.gt.s32.totalorder %v1572, %v6368
      %vm6545 = vcmp.gt.s32.totalorder %v1573, %v6368
      %vm6546 = vcmp.gt.s32.totalorder %v1570, %v6369
      %vm6547 = vcmp.gt.s32.totalorder %v1571, %v6369
      %vm6548 = vcmp.gt.s32.totalorder %v1572, %v6369
      %vm6549 = vcmp.gt.s32.totalorder %v1573, %v6369
      %vm6550 = vcmp.gt.s32.totalorder %v1570, %v6370
      %vm6551 = vcmp.gt.s32.totalorder %v1571, %v6370
      %vm6552 = vcmp.gt.s32.totalorder %v1572, %v6370
      %vm6553 = vcmp.gt.s32.totalorder %v1573, %v6370
      %vm6554 = vcmp.gt.s32.totalorder %v1570, %v6371
      %vm6555 = vcmp.gt.s32.totalorder %v1571, %v6371
      %vm6556 = vcmp.gt.s32.totalorder %v1572, %v6371
      %vm6557 = vcmp.gt.s32.totalorder %v1573, %v6371
      %vm6558 = vcmp.gt.s32.totalorder %v1570, %v6372
      %vm6559 = vcmp.gt.s32.totalorder %v1571, %v6372
      %vm6560 = vcmp.gt.s32.totalorder %v1572, %v6372
      %vm6561 = vcmp.gt.s32.totalorder %v1573, %v6372
      %vm6562 = vcmp.gt.s32.totalorder %v1570, %v6373
      %vm6563 = vcmp.gt.s32.totalorder %v1571, %v6373
      %vm6564 = vcmp.gt.s32.totalorder %v1572, %v6373
      %vm6565 = vcmp.gt.s32.totalorder %v1573, %v6373
      %vm6566 = vmand %vm6438, %vm6502
      %vm6567 = vmand %vm6439, %vm6503
      %vm6568 = vmand %vm6440, %vm6504
      %vm6569 = vmand %vm6441, %vm6505
      %vm6570 = vmand %vm6442, %vm6506
      %vm6571 = vmand %vm6443, %vm6507
      %vm6572 = vmand %vm6444, %vm6508
      %vm6573 = vmand %vm6445, %vm6509
      %vm6574 = vmand %vm6446, %vm6510
      %vm6575 = vmand %vm6447, %vm6511
      %vm6576 = vmand %vm6448, %vm6512
      %vm6577 = vmand %vm6449, %vm6513
      %vm6578 = vmand %vm6450, %vm6514
      %vm6579 = vmand %vm6451, %vm6515
      %vm6580 = vmand %vm6452, %vm6516
      %vm6581 = vmand %vm6453, %vm6517
      %vm6582 = vmand %vm6454, %vm6518
      %vm6583 = vmand %vm6455, %vm6519
      %vm6584 = vmand %vm6456, %vm6520
      %vm6585 = vmand %vm6457, %vm6521
      %vm6586 = vmand %vm6458, %vm6522
      %vm6587 = vmand %vm6459, %vm6523
      %vm6588 = vmand %vm6460, %vm6524
      %vm6589 = vmand %vm6461, %vm6525
      %vm6590 = vmand %vm6462, %vm6526
      %vm6591 = vmand %vm6463, %vm6527
      %vm6592 = vmand %vm6464, %vm6528
      %vm6593 = vmand %vm6465, %vm6529
      %vm6594 = vmand %vm6466, %vm6530
      %vm6595 = vmand %vm6467, %vm6531
      %vm6596 = vmand %vm6468, %vm6532
      %vm6597 = vmand %vm6469, %vm6533
      %vm6598 = vmand %vm6470, %vm6534
      %vm6599 = vmand %vm6471, %vm6535
      %vm6600 = vmand %vm6472, %vm6536
      %vm6601 = vmand %vm6473, %vm6537
      %vm6602 = vmand %vm6474, %vm6538
      %vm6603 = vmand %vm6475, %vm6539
      %vm6604 = vmand %vm6476, %vm6540
      %vm6605 = vmand %vm6477, %vm6541
      %vm6606 = vmand %vm6478, %vm6542
      %vm6607 = vmand %vm6479, %vm6543
      %vm6608 = vmand %vm6480, %vm6544
      %vm6609 = vmand %vm6481, %vm6545
      %vm6610 = vmand %vm6482, %vm6546
      %vm6611 = vmand %vm6483, %vm6547
      %vm6612 = vmand %vm6484, %vm6548
      %vm6613 = vmand %vm6485, %vm6549
      %vm6614 = vmand %vm6486, %vm6550
      %vm6615 = vmand %vm6487, %vm6551
      %vm6616 = vmand %vm6488, %vm6552
      %vm6617 = vmand %vm6489, %vm6553
      %vm6618 = vmand %vm6490, %vm6554
      %vm6619 = vmand %vm6491, %vm6555
      %vm6620 = vmand %vm6492, %vm6556
      %vm6621 = vmand %vm6493, %vm6557
      %vm6622 = vmand %vm6494, %vm6558
      %vm6623 = vmand %vm6495, %vm6559
      %vm6624 = vmand %vm6496, %vm6560
      %vm6625 = vmand %vm6497, %vm6561
      %vm6626 = vmand %vm6498, %vm6562
      %vm6627 = vmand %vm6499, %vm6563
      %vm6628 = vmand %vm6500, %vm6564
      %vm6629 = vmand %vm6501, %vm6565
      %v6630 = vsel %vm6566, 1.0, 0.0
      %v6631 = vsel %vm6567, 1.0, 0.0
      %v6632 = vsel %vm6568, 1.0, 0.0
      %v6633 = vsel %vm6569, 1.0, 0.0
      %v6634 = vsel %vm6570, 1.0, 0.0
      %v6635 = vsel %vm6571, 1.0, 0.0
      %v6636 = vsel %vm6572, 1.0, 0.0
      %v6637 = vsel %vm6573, 1.0, 0.0
      %v6638 = vsel %vm6574, 1.0, 0.0
      %v6639 = vsel %vm6575, 1.0, 0.0
      %v6640 = vsel %vm6576, 1.0, 0.0
      %v6641 = vsel %vm6577, 1.0, 0.0
      %v6642 = vsel %vm6578, 1.0, 0.0
      %v6643 = vsel %vm6579, 1.0, 0.0
      %v6644 = vsel %vm6580, 1.0, 0.0
      %v6645 = vsel %vm6581, 1.0, 0.0
      %v6646 = vsel %vm6582, 1.0, 0.0
      %v6647 = vsel %vm6583, 1.0, 0.0
      %v6648 = vsel %vm6584, 1.0, 0.0
      %v6649 = vsel %vm6585, 1.0, 0.0
      %v6650 = vsel %vm6586, 1.0, 0.0
      %v6651 = vsel %vm6587, 1.0, 0.0
      %v6652 = vsel %vm6588, 1.0, 0.0
      %v6653 = vsel %vm6589, 1.0, 0.0
      %v6654 = vsel %vm6590, 1.0, 0.0
      %v6655 = vsel %vm6591, 1.0, 0.0
      %v6656 = vsel %vm6592, 1.0, 0.0
      %v6657 = vsel %vm6593, 1.0, 0.0
      %v6658 = vsel %vm6594, 1.0, 0.0
      %v6659 = vsel %vm6595, 1.0, 0.0
      %v6660 = vsel %vm6596, 1.0, 0.0
      %v6661 = vsel %vm6597, 1.0, 0.0
      %v6662 = vsel %vm6598, 1.0, 0.0
      %v6663 = vsel %vm6599, 1.0, 0.0
      %v6664 = vsel %vm6600, 1.0, 0.0
      %v6665 = vsel %vm6601, 1.0, 0.0
      %v6666 = vsel %vm6602, 1.0, 0.0
      %v6667 = vsel %vm6603, 1.0, 0.0
      %v6668 = vsel %vm6604, 1.0, 0.0
      %v6669 = vsel %vm6605, 1.0, 0.0
      %v6670 = vsel %vm6606, 1.0, 0.0
      %v6671 = vsel %vm6607, 1.0, 0.0
      %v6672 = vsel %vm6608, 1.0, 0.0
      %v6673 = vsel %vm6609, 1.0, 0.0
      %v6674 = vsel %vm6610, 1.0, 0.0
      %v6675 = vsel %vm6611, 1.0, 0.0
      %v6676 = vsel %vm6612, 1.0, 0.0
      %v6677 = vsel %vm6613, 1.0, 0.0
      %v6678 = vsel %vm6614, 1.0, 0.0
      %v6679 = vsel %vm6615, 1.0, 0.0
      %v6680 = vsel %vm6616, 1.0, 0.0
      %v6681 = vsel %vm6617, 1.0, 0.0
      %v6682 = vsel %vm6618, 1.0, 0.0
      %v6683 = vsel %vm6619, 1.0, 0.0
      %v6684 = vsel %vm6620, 1.0, 0.0
      %v6685 = vsel %vm6621, 1.0, 0.0
      %v6686 = vsel %vm6622, 1.0, 0.0
      %v6687 = vsel %vm6623, 1.0, 0.0
      %v6688 = vsel %vm6624, 1.0, 0.0
      %v6689 = vsel %vm6625, 1.0, 0.0
      %v6690 = vsel %vm6626, 1.0, 0.0
      %v6691 = vsel %vm6627, 1.0, 0.0
      %v6692 = vsel %vm6628, 1.0, 0.0
      %v6693 = vsel %vm6629, 1.0, 0.0
      %6694 = vst [vmem:[#allocation2 + $0x600] sm:$0xff] %v6630
      %6695 = vst [vmem:[#allocation2 + $0x608] sm:$0xff] %v6631
      %6696 = vst [vmem:[#allocation2 + $0x610] sm:$0xff] %v6632
      %6697 = vst [vmem:[#allocation2 + $0x618] sm:$0xff] %v6633
      %6698 = vst [vmem:[#allocation2 + $0x620] sm:$0xff] %v6634
      %6699 = vst [vmem:[#allocation2 + $0x628] sm:$0xff] %v6635
      %6700 = vst [vmem:[#allocation2 + $0x630] sm:$0xff] %v6636
      %6701 = vst [vmem:[#allocation2 + $0x638] sm:$0xff] %v6637
      %6702 = vst [vmem:[#allocation2 + $0x640] sm:$0xff] %v6638
      %6703 = vst [vmem:[#allocation2 + $0x648] sm:$0xff] %v6639
      %6704 = vst [vmem:[#allocation2 + $0x650] sm:$0xff] %v6640
      %6705 = vst [vmem:[#allocation2 + $0x658] sm:$0xff] %v6641
      %6706 = vst [vmem:[#allocation2 + $0x660] sm:$0xff] %v6642
      %6707 = vst [vmem:[#allocation2 + $0x668] sm:$0xff] %v6643
      %6708 = vst [vmem:[#allocation2 + $0x670] sm:$0xff] %v6644
      %6709 = vst [vmem:[#allocation2 + $0x678] sm:$0xff] %v6645
      %6710 = vst [vmem:[#allocation2 + $0x680] sm:$0xff] %v6646
      %6711 = vst [vmem:[#allocation2 + $0x688] sm:$0xff] %v6647
      %6712 = vst [vmem:[#allocation2 + $0x690] sm:$0xff] %v6648
      %6713 = vst [vmem:[#allocation2 + $0x698] sm:$0xff] %v6649
      %6714 = vst [vmem:[#allocation2 + $0x6a0] sm:$0xff] %v6650
      %6715 = vst [vmem:[#allocation2 + $0x6a8] sm:$0xff] %v6651
      %6716 = vst [vmem:[#allocation2 + $0x6b0] sm:$0xff] %v6652
      %6717 = vst [vmem:[#allocation2 + $0x6b8] sm:$0xff] %v6653
      %6718 = vst [vmem:[#allocation2 + $0x6c0] sm:$0xff] %v6654
      %6719 = vst [vmem:[#allocation2 + $0x6c8] sm:$0xff] %v6655
      %6720 = vst [vmem:[#allocation2 + $0x6d0] sm:$0xff] %v6656
      %6721 = vst [vmem:[#allocation2 + $0x6d8] sm:$0xff] %v6657
      %6722 = vst [vmem:[#allocation2 + $0x6e0] sm:$0xff] %v6658
      %6723 = vst [vmem:[#allocation2 + $0x6e8] sm:$0xff] %v6659
      %6724 = vst [vmem:[#allocation2 + $0x6f0] sm:$0xff] %v6660
      %6725 = vst [vmem:[#allocation2 + $0x6f8] sm:$0xff] %v6661
      %6726 = vst [vmem:[#allocation2 + $0x700] sm:$0xff] %v6662
      %6727 = vst [vmem:[#allocation2 + $0x708] sm:$0xff] %v6663
      %6728 = vst [vmem:[#allocation2 + $0x710] sm:$0xff] %v6664
      %6729 = vst [vmem:[#allocation2 + $0x718] sm:$0xff] %v6665
      %6730 = vst [vmem:[#allocation2 + $0x720] sm:$0xff] %v6666
      %6731 = vst [vmem:[#allocation2 + $0x728] sm:$0xff] %v6667
      %6732 = vst [vmem:[#allocation2 + $0x730] sm:$0xff] %v6668
      %6733 = vst [vmem:[#allocation2 + $0x738] sm:$0xff] %v6669
      %6734 = vst [vmem:[#allocation2 + $0x740] sm:$0xff] %v6670
      %6735 = vst [vmem:[#allocation2 + $0x748] sm:$0xff] %v6671
      %6736 = vst [vmem:[#allocation2 + $0x750] sm:$0xff] %v6672
      %6737 = vst [vmem:[#allocation2 + $0x758] sm:$0xff] %v6673
      %6738 = vst [vmem:[#allocation2 + $0x760] sm:$0xff] %v6674
      %6739 = vst [vmem:[#allocation2 + $0x768] sm:$0xff] %v6675
      %6740 = vst [vmem:[#allocation2 + $0x770] sm:$0xff] %v6676
      %6741 = vst [vmem:[#allocation2 + $0x778] sm:$0xff] %v6677
      %6742 = vst [vmem:[#allocation2 + $0x780] sm:$0xff] %v6678
      %6743 = vst [vmem:[#allocation2 + $0x788] sm:$0xff] %v6679
      %6744 = vst [vmem:[#allocation2 + $0x790] sm:$0xff] %v6680
      %6745 = vst [vmem:[#allocation2 + $0x798] sm:$0xff] %v6681
      %6746 = vst [vmem:[#allocation2 + $0x7a0] sm:$0xff] %v6682
      %6747 = vst [vmem:[#allocation2 + $0x7a8] sm:$0xff] %v6683
      %6748 = vst [vmem:[#allocation2 + $0x7b0] sm:$0xff] %v6684
      %6749 = vst [vmem:[#allocation2 + $0x7b8] sm:$0xff] %v6685
      %6750 = vst [vmem:[#allocation2 + $0x7c0] sm:$0xff] %v6686
      %6751 = vst [vmem:[#allocation2 + $0x7c8] sm:$0xff] %v6687
      %6752 = vst [vmem:[#allocation2 + $0x7d0] sm:$0xff] %v6688
      %6753 = vst [vmem:[#allocation2 + $0x7d8] sm:$0xff] %v6689
      %6754 = vst [vmem:[#allocation2 + $0x7e0] sm:$0xff] %v6690
      %6755 = vst [vmem:[#allocation2 + $0x7e8] sm:$0xff] %v6691
      %6756 = vst [vmem:[#allocation2 + $0x7f0] sm:$0xff] %v6692
      %6757 = vst [vmem:[#allocation2 + $0x7f8] sm:$0xff] %v6693
      %v6758 = vld [vmem:[%s201] sm:$0xf]
      %vm6759 = vcmp.gt.f32.partialorder %v6758, 0.25
      %v6760 = vsel %vm6759, 1, 0
      %v6761 = vcvt.s32.f32 %v6760
      %v6763 = vperm.slane %v6761, 0
      %v6764 = vperm.slane %v6761, 1
      %v6765 = vperm.slane %v6761, 2
      %v6766 = vperm.slane %v6761, 3
      loop: start=0, step=1, limit=64
      $region33: #{end2end_rv_two_models.3} parent=31 // loop_pre_header
        _
      $region34: #{end2end_rv_two_models.3} parent=31 // loop_header
        %s6772 = sphi 0, %s6776
        %p6773 = scmp.ge.s32.totalorder %s6772, 64
        %v6777 = vphi %v6763, %v7150
        %v6778 = vphi %v6764, %v7151
        %v6779 = vphi %v6765, %v7152
        %v6780 = vphi %v6766, %v7153
      $region35: #{end2end_rv_two_models.3} parent=31 // loop_header_branch
        %6775 = sbr.rel (%p6773) target = $region39
      $region36: #{end2end_rv_two_models.3} parent=31 // loop_body
        %s6781 = smul.u32 %s6772, 8
        %s6782 = sshra.s32 %s6781, 3
        %s6783 = sand.u32 %s6781, 7
        %s6784 = smul.u32 %s6782, 4
        %s6785 = smul.addr %s6784, 8
        %s6786 = scalar_lea.vmem [#allocation2], %s6785
        %v6787 = vld [vmem:[%s6786] sm:$0xff]
        %v6788 = vld [vmem:[%s6786 + $0x8] sm:$0xff]
        %v6789 = vld [vmem:[%s6786 + $0x10] sm:$0xff]
        %v6790 = vld [vmem:[%s6786 + $0x18] sm:$0xff]
        %v6791 = vstv %s6781
        %vm6792 = vcmp.eq.s32.totalorder %v1570, %v6791
        %vm6793 = vcmp.eq.s32.totalorder %v1571, %v6791
        %vm6794 = vcmp.eq.s32.totalorder %v1572, %v6791
        %vm6795 = vcmp.eq.s32.totalorder %v1573, %v6791
        %v6796 = vsel %vm6792, %v6777, 0.0
        %v6797 = vsel %vm6793, %v6778, 0.0
        %v6798 = vsel %vm6794, %v6779, 0.0
        %v6799 = vsel %vm6795, %v6780, 0.0
        %vm6800 = vcmask 1040384
        %v6801 = vsel %vm6800, %v6796, -inf
        %v6802 = vsel %vm6800, %v6797, -inf
        %v6803 = vsel %vm6800, %v6798, -inf
        %v6804 = vsel %vm6800, %v6799, -inf
        %v6805 = vmax.f32 %v6801, %v6802
        %v6806 = vmax.f32 %v6803, %v6804
        %v6807 = vmax.f32 %v6805, %v6806
        %6808 = vmax.xlane.f32.xlu0 %v6807
        %v6809 = vpop.xlane.xlu0 %6808
        %vm6810 = vcmp.gt.f32.partialorder %v6787, 0.5
        %vm6811 = vcmp.gt.f32.partialorder %v6788, 0.5
        %vm6812 = vcmp.gt.f32.partialorder %v6789, 0.5
        %vm6813 = vcmp.gt.f32.partialorder %v6790, 0.5
        %vm6814 = vcmp.gt.f32.partialorder %v6809, 0.5
        %v6815 = vsel %vm6814, 1, 0
        %vm6816 = vcmp.eq.s32.totalorder %v6815, 1
        %vm6817 = vmand %vm6810, %vm6816
        %vm6818 = vmand %vm6811, %vm6816
        %vm6819 = vmand %vm6812, %vm6816
        %vm6820 = vmand %vm6813, %vm6816
        %v6821 = vsel %vm6817, 0.0, %v6777
        %v6822 = vsel %vm6818, 0.0, %v6778
        %v6823 = vsel %vm6819, 0.0, %v6779
        %v6824 = vsel %vm6820, 0.0, %v6780
        %s6825 = sadd.s32 %s6781, 1
        %v6826 = vstv %s6825
        %vm6827 = vcmp.eq.s32.totalorder %v1570, %v6826
        %vm6828 = vcmp.eq.s32.totalorder %v1571, %v6826
        %vm6829 = vcmp.eq.s32.totalorder %v1572, %v6826
        %vm6830 = vcmp.eq.s32.totalorder %v1573, %v6826
        %v6831 = vsel %vm6827, %v6821, 0.0
        %v6832 = vsel %vm6828, %v6822, 0.0
        %v6833 = vsel %vm6829, %v6823, 0.0
        %v6834 = vsel %vm6830, %v6824, 0.0
        %v6835 = vsel %vm6800, %v6831, -inf
        %v6836 = vsel %vm6800, %v6832, -inf
        %v6837 = vsel %vm6800, %v6833, -inf
        %v6838 = vsel %vm6800, %v6834, -inf
        %v6839 = vmax.f32 %v6835, %v6836
        %v6840 = vmax.f32 %v6837, %v6838
        %v6841 = vmax.f32 %v6839, %v6840
        %6842 = vmax.xlane.f32.xlu0 %v6841
        %v6843 = vpop.xlane.xlu0 %6842
        %vm6844 = vcmp.gt.f32.partialorder %v6843, 0.5
        %v6845 = vsel %vm6844, 1, 0
        %vm6846 = vcmp.eq.s32.totalorder %v6845, 1
        %v6847 = vsel %vm6846, 1, 0
        %v6848 = vrot.slane %v6847, 7
        %vm6849 = vcmp.ne.s32.totalorder %v6848, 0
        %vm6850 = vmand %vm6810, %vm6849
        %vm6851 = vmand %vm6811, %vm6849
        %vm6852 = vmand %vm6812, %vm6849
        %vm6853 = vmand %vm6813, %vm6849
        %v6858 = vrot.slane %v6821, 7
        %v6859 = vrot.slane %v6822, 7
        %v6860 = vrot.slane %v6823, 7
        %v6861 = vrot.slane %v6824, 7
        %v6866 = vsel %vm6850, 0.0, %v6858
        %v6867 = vsel %vm6851, 0.0, %v6859
        %v6868 = vsel %vm6852, 0.0, %v6860
        %v6869 = vsel %vm6853, 0.0, %v6861
        %s6870 = sadd.s32 %s6781, 2
        %v6871 = vstv %s6870
        %vm6872 = vcmp.eq.s32.totalorder %v1570, %v6871
        %vm6873 = vcmp.eq.s32.totalorder %v1571, %v6871
        %vm6874 = vcmp.eq.s32.totalorder %v1572, %v6871
        %vm6875 = vcmp.eq.s32.totalorder %v1573, %v6871
        %v6876 = vsel %vm6872, %v6866, 0.0
        %v6877 = vsel %vm6873, %v6867, 0.0
        %v6878 = vsel %vm6874, %v6868, 0.0
        %v6879 = vsel %vm6875, %v6869, 0.0
        %vm6880 = vcmask 1041409
        %v6881 = vsel %vm6880, %v6876, -inf
        %v6882 = vsel %vm6880, %v6877, -inf
        %v6883 = vsel %vm6880, %v6878, -inf
        %v6884 = vsel %vm6880, %v6879, -inf
        %v6885 = vmax.f32 %v6881, %v6882
        %v6886 = vmax.f32 %v6883, %v6884
        %v6887 = vmax.f32 %v6885, %v6886
        %6888 = vmax.xlane.f32.xlu0 %v6887
        %v6889 = vpop.xlane.xlu0 %6888
        %vm6890 = vcmp.gt.f32.partialorder %v6889, 0.5
        %v6891 = vsel %vm6890, 1, 0
        %vm6892 = vcmp.eq.s32.totalorder %v6891, 1
        %v6893 = vsel %vm6892, 1, 0
        %v6894 = vrot.slane %v6893, 7
        %vm6895 = vcmp.ne.s32.totalorder %v6894, 0
        %vm6896 = vmand %vm6810, %vm6895
        %vm6897 = vmand %vm6811, %vm6895
        %vm6898 = vmand %vm6812, %vm6895
        %vm6899 = vmand %vm6813, %vm6895
        %v6904 = vrot.slane %v6866, 7
        %v6905 = vrot.slane %v6867, 7
        %v6906 = vrot.slane %v6868, 7
        %v6907 = vrot.slane %v6869, 7
        %v6912 = vsel %vm6896, 0.0, %v6904
        %v6913 = vsel %vm6897, 0.0, %v6905
        %v6914 = vsel %vm6898, 0.0, %v6906
        %v6915 = vsel %vm6899, 0.0, %v6907
        %s6916 = sadd.s32 %s6781, 3
        %v6917 = vstv %s6916
        %vm6918 = vcmp.eq.s32.totalorder %v1570, %v6917
        %vm6919 = vcmp.eq.s32.totalorder %v1571, %v6917
        %vm6920 = vcmp.eq.s32.totalorder %v1572, %v6917
        %vm6921 = vcmp.eq.s32.totalorder %v1573, %v6917
        %v6922 = vsel %vm6918, %v6912, 0.0
        %v6923 = vsel %vm6919, %v6913, 0.0
        %v6924 = vsel %vm6920, %v6914, 0.0
        %v6925 = vsel %vm6921, %v6915, 0.0
        %vm6926 = vcmask 1042434
        %v6927 = vsel %vm6926, %v6922, -inf
        %v6928 = vsel %vm6926, %v6923, -inf
        %v6929 = vsel %vm6926, %v6924, -inf
        %v6930 = vsel %vm6926, %v6925, -inf
        %v6931 = vmax.f32 %v6927, %v6928
        %v6932 = vmax.f32 %v6929, %v6930
        %v6933 = vmax.f32 %v6931, %v6932
        %6934 = vmax.xlane.f32.xlu0 %v6933
        %v6935 = vpop.xlane.xlu0 %6934
        %vm6936 = vcmp.gt.f32.partialorder %v6935, 0.5
        %v6937 = vsel %vm6936, 1, 0
        %vm6938 = vcmp.eq.s32.totalorder %v6937, 1
        %v6939 = vsel %vm6938, 1, 0
        %v6940 = vrot.slane %v6939, 7
        %vm6941 = vcmp.ne.s32.totalorder %v6940, 0
        %vm6942 = vmand %vm6810, %vm6941
        %vm6943 = vmand %vm6811, %vm6941
        %vm6944 = vmand %vm6812, %vm6941
        %vm6945 = vmand %vm6813, %vm6941
        %v6950 = vrot.slane %v6912, 7
        %v6951 = vrot.slane %v6913, 7
        %v6952 = vrot.slane %v6914, 7
        %v6953 = vrot.slane %v6915, 7
        %v6958 = vsel %vm6942, 0.0, %v6950
        %v6959 = vsel %vm6943, 0.0, %v6951
        %v6960 = vsel %vm6944, 0.0, %v6952
        %v6961 = vsel %vm6945, 0.0, %v6953
        %s6962 = sadd.s32 %s6781, 4
        %v6963 = vstv %s6962
        %vm6964 = vcmp.eq.s32.totalorder %v1570, %v6963
        %vm6965 = vcmp.eq.s32.totalorder %v1571, %v6963
        %vm6966 = vcmp.eq.s32.totalorder %v1572, %v6963
        %vm6967 = vcmp.eq.s32.totalorder %v1573, %v6963
        %v6968 = vsel %vm6964, %v6958, 0.0
        %v6969 = vsel %vm6965, %v6959, 0.0
        %v6970 = vsel %vm6966, %v6960, 0.0
        %v6971 = vsel %vm6967, %v6961, 0.0
        %vm6972 = vcmask 1043459
        %v6973 = vsel %vm6972, %v6968, -inf
        %v6974 = vsel %vm6972, %v6969, -inf
        %v6975 = vsel %vm6972, %v6970, -inf
        %v6976 = vsel %vm6972, %v6971, -inf
        %v6977 = vmax.f32 %v6973, %v6974
        %v6978 = vmax.f32 %v6975, %v6976
        %v6979 = vmax.f32 %v6977, %v6978
        %6980 = vmax.xlane.f32.xlu0 %v6979
        %v6981 = vpop.xlane.xlu0 %6980
        %vm6982 = vcmp.gt.f32.partialorder %v6981, 0.5
        %v6983 = vsel %vm6982, 1, 0
        %vm6984 = vcmp.eq.s32.totalorder %v6983, 1
        %v6985 = vsel %vm6984, 1, 0
        %v6986 = vrot.slane %v6985, 7
        %vm6987 = vcmp.ne.s32.totalorder %v6986, 0
        %vm6988 = vmand %vm6810, %vm6987
        %vm6989 = vmand %vm6811, %vm6987
        %vm6990 = vmand %vm6812, %vm6987
        %vm6991 = vmand %vm6813, %vm6987
        %v6996 = vrot.slane %v6958, 7
        %v6997 = vrot.slane %v6959, 7
        %v6998 = vrot.slane %v6960, 7
        %v6999 = vrot.slane %v6961, 7
        %v7004 = vsel %vm6988, 0.0, %v6996
        %v7005 = vsel %vm6989, 0.0, %v6997
        %v7006 = vsel %vm6990, 0.0, %v6998
        %v7007 = vsel %vm6991, 0.0, %v6999
        %s7008 = sadd.s32 %s6781, 5
        %v7009 = vstv %s7008
        %vm7010 = vcmp.eq.s32.totalorder %v1570, %v7009
        %vm7011 = vcmp.eq.s32.totalorder %v1571, %v7009
        %vm7012 = vcmp.eq.s32.totalorder %v1572, %v7009
        %vm7013 = vcmp.eq.s32.totalorder %v1573, %v7009
        %v7014 = vsel %vm7010, %v7004, 0.0
        %v7015 = vsel %vm7011, %v7005, 0.0
        %v7016 = vsel %vm7012, %v7006, 0.0
        %v7017 = vsel %vm7013, %v7007, 0.0
        %vm7018 = vcmask 1044484
        %v7019 = vsel %vm7018, %v7014, -inf
        %v7020 = vsel %vm7018, %v7015, -inf
        %v7021 = vsel %vm7018, %v7016, -inf
        %v7022 = vsel %vm7018, %v7017, -inf
        %v7023 = vmax.f32 %v7019, %v7020
        %v7024 = vmax.f32 %v7021, %v7022
        %v7025 = vmax.f32 %v7023, %v7024
        %7026 = vmax.xlane.f32.xlu0 %v7025
        %v7027 = vpop.xlane.xlu0 %7026
        %vm7028 = vcmp.gt.f32.partialorder %v7027, 0.5
        %v7029 = vsel %vm7028, 1, 0
        %vm7030 = vcmp.eq.s32.totalorder %v7029, 1
        %v7031 = vsel %vm7030, 1, 0
        %v7032 = vrot.slane %v7031, 7
        %vm7033 = vcmp.ne.s32.totalorder %v7032, 0
        %vm7034 = vmand %vm6810, %vm7033
        %vm7035 = vmand %vm6811, %vm7033
        %vm7036 = vmand %vm6812, %vm7033
        %vm7037 = vmand %vm6813, %vm7033
        %v7042 = vrot.slane %v7004, 7
        %v7043 = vrot.slane %v7005, 7
        %v7044 = vrot.slane %v7006, 7
        %v7045 = vrot.slane %v7007, 7
        %v7050 = vsel %vm7034, 0.0, %v7042
        %v7051 = vsel %vm7035, 0.0, %v7043
        %v7052 = vsel %vm7036, 0.0, %v7044
        %v7053 = vsel %vm7037, 0.0, %v7045
        %s7054 = sadd.s32 %s6781, 6
        %v7055 = vstv %s7054
        %vm7056 = vcmp.eq.s32.totalorder %v1570, %v7055
        %vm7057 = vcmp.eq.s32.totalorder %v1571, %v7055
        %vm7058 = vcmp.eq.s32.totalorder %v1572, %v7055
        %vm7059 = vcmp.eq.s32.totalorder %v1573, %v7055
        %v7060 = vsel %vm7056, %v7050, 0.0
        %v7061 = vsel %vm7057, %v7051, 0.0
        %v7062 = vsel %vm7058, %v7052, 0.0
        %v7063 = vsel %vm7059, %v7053, 0.0
        %vm7064 = vcmask 1045509
        %v7065 = vsel %vm7064, %v7060, -inf
        %v7066 = vsel %vm7064, %v7061, -inf
        %v7067 = vsel %vm7064, %v7062, -inf
        %v7068 = vsel %vm7064, %v7063, -inf
        %v7069 = vmax.f32 %v7065, %v7066
        %v7070 = vmax.f32 %v7067, %v7068
        %v7071 = vmax.f32 %v7069, %v7070
        %7072 = vmax.xlane.f32.xlu0 %v7071
        %v7073 = vpop.xlane.xlu0 %7072
        %vm7074 = vcmp.gt.f32.partialorder %v7073, 0.5
        %v7075 = vsel %vm7074, 1, 0
        %vm7076 = vcmp.eq.s32.totalorder %v7075, 1
        %v7077 = vsel %vm7076, 1, 0
        %v7078 = vrot.slane %v7077, 7
        %vm7079 = vcmp.ne.s32.totalorder %v7078, 0
        %vm7080 = vmand %vm6810, %vm7079
        %vm7081 = vmand %vm6811, %vm7079
        %vm7082 = vmand %vm6812, %vm7079
        %vm7083 = vmand %vm6813, %vm7079
        %v7088 = vrot.slane %v7050, 7
        %v7089 = vrot.slane %v7051, 7
        %v7090 = vrot.slane %v7052, 7
        %v7091 = vrot.slane %v7053, 7
        %v7096 = vsel %vm7080, 0.0, %v7088
        %v7097 = vsel %vm7081, 0.0, %v7089
        %v7098 = vsel %vm7082, 0.0, %v7090
        %v7099 = vsel %vm7083, 0.0, %v7091
        %s7100 = sadd.s32 %s6781, 7
        %v7101 = vstv %s7100
        %vm7102 = vcmp.eq.s32.totalorder %v1570, %v7101
        %vm7103 = vcmp.eq.s32.totalorder %v1571, %v7101
        %vm7104 = vcmp.eq.s32.totalorder %v1572, %v7101
        %vm7105 = vcmp.eq.s32.totalorder %v1573, %v7101
        %v7106 = vsel %vm7102, %v7096, 0.0
        %v7107 = vsel %vm7103, %v7097, 0.0
        %v7108 = vsel %vm7104, %v7098, 0.0
        %v7109 = vsel %vm7105, %v7099, 0.0
        %vm7110 = vcmask 1046534
        %v7111 = vsel %vm7110, %v7106, -inf
        %v7112 = vsel %vm7110, %v7107, -inf
        %v7113 = vsel %vm7110, %v7108, -inf
        %v7114 = vsel %vm7110, %v7109, -inf
        %v7115 = vmax.f32 %v7111, %v7112
        %v7116 = vmax.f32 %v7113, %v7114
        %v7117 = vmax.f32 %v7115, %v7116
        %7118 = vmax.xlane.f32.xlu0 %v7117
        %v7119 = vpop.xlane.xlu0 %7118
        %vm7120 = vcmp.gt.f32.partialorder %v7119, 0.5
        %v7121 = vsel %vm7120, 1, 0
        %vm7122 = vcmp.eq.s32.totalorder %v7121, 1
        %v7123 = vsel %vm7122, 1, 0
        %v7124 = vrot.slane %v7123, 7
        %vm7125 = vcmp.ne.s32.totalorder %v7124, 0
        %vm7126 = vmand %vm6810, %vm7125
        %vm7127 = vmand %vm6811, %vm7125
        %vm7128 = vmand %vm6812, %vm7125
        %vm7129 = vmand %vm6813, %vm7125
        %v7134 = vrot.slane %v7096, 7
        %v7135 = vrot.slane %v7097, 7
        %v7136 = vrot.slane %v7098, 7
        %v7137 = vrot.slane %v7099, 7
        %v7142 = vsel %vm7126, 0.0, %v7134
        %v7143 = vsel %vm7127, 0.0, %v7135
        %v7144 = vsel %vm7128, 0.0, %v7136
        %v7145 = vsel %vm7129, 0.0, %v7137
        %v7150 = vrot.slane %v7142, 7
        %v7151 = vrot.slane %v7143, 7
        %v7152 = vrot.slane %v7144, 7
        %v7153 = vrot.slane %v7145, 7
      $region37: #{end2end_rv_two_models.3} parent=31 // loop_footer
        %s6776 = sadd.s32 1, %s6772
      $region38: #{end2end_rv_two_models.3} parent=31 // loop_footer_branch
        %6771 = sbr.rel target = $region34
      $region39: #{end2end_rv_two_models.3} parent=31 // loop_exit
        _
      %v7162 = vrot.slane %v6778, 7
      %v7163 = vrot.slane %v6779, 6
      %v7164 = vrot.slane %v6780, 5
      %vm7165 = vcmask 1040384
      %v7166 = vsel %vm7165, %v6777, %v7162
      %vm7167 = vcmask 1042434
      %v7168 = vsel %vm7167, %v7163, %v7164
      %vm7169 = vcmask 1041408
      %v7170 = vsel %vm7169, %v7166, %v7168
      %v7172 = vlaneseq
      %vm7173 = vcmp.ge.s32.totalorder %v7172, 0
      %vm7174 = vcmp.lt.s32.totalorder %v7172, 512
      %vm7175 = vmand %vm7173, %vm7174
      %7176 = vst.msk [vmem:[%s205] sm:$0xf] %vm7175, %v7170
      %p7177 = scmp.lt.s32.totalorder %s14, 1
      %s7178 = scalar_select %p7177, %s14, 1
      %s7179 = smul.addr %s7178, 4
      %s7180 = scalar_lea.vmem %s3, %s7179
      // Predicated region
      $region40: #{end2end_rv_two_models.3} parent=31 // pred_check
        %p7181 = pneg %p110
      $region41: #{end2end_rv_two_models.3} parent=31 // pred_check_branch
        %7183 = sbr.rel (%p7181) target = $region43
      $region42: #{end2end_rv_two_models.3} parent=31 // pred_region
        _
      $region43: #{end2end_rv_two_models.3} parent=31 // pred_fallthru
        _
    $region32: #{end2end_rv_two_models.3} parent=5 // pred_fallthru
      _
    %p7184 = scmp.le.s32.totalorder 2, %s9
    // Predicated region
    $region44: #{end2end_rv_two_models.3} parent=5 // pred_check
      %p7185 = pneg %p7184
    $region45: #{end2end_rv_two_models.3} parent=5 // pred_check_branch
      %7187 = sbr.rel (%p7185) target = $region47
    $region46: #{end2end_rv_two_models.3} parent=5 // pred_region
      %s7188 = ssub.s32 %s9, 2
      // Predicated region
      $region48: #{end2end_rv_two_models.3} parent=46 // pred_check
        %p7189 = pneg %p116
      $region49: #{end2end_rv_two_models.3} parent=46 // pred_check_branch
        %7191 = sbr.rel (%p7189) target = $region51
      $region50: #{end2end_rv_two_models.3} parent=46 // pred_region
        %p7192 = scmp.lt.s32.totalorder %s15, 1
        %s7193 = scalar_select %p7192, %s15, 1
        %s7194 = smul.addr %s7193, 4
        %s7195 = scalar_lea.vmem %s3, %s7194
      $region51: #{end2end_rv_two_models.3} parent=46 // pred_fallthru
        _
    $region47: #{end2end_rv_two_models.3} parent=5 // pred_fallthru
      _
  $region6: #{end2end_rv_two_models.3} parent=0 // loop_footer
    %s13 = sadd.s32 1, %s9
  $region7: #{end2end_rv_two_models.3} parent=0 // loop_footer_branch
    %8 = sbr.rel target = $region3
  $region8: #{end2end_rv_two_models.3} parent=0 // loop_exit
    _

</llo_original>
